<compile_context>
chip_gen: v5e
topology: v5e:2x2
jax: 0.10.0
libtpu: 0.0.40
codegen_flags: <defaults>
</compile_context>

<pallas_src>
import functools
import numpy as np
import jax
import jax.numpy as jnp
from jax import lax
from jax.experimental import pallas as pl
from jax.experimental.pallas import tpu as pltpu


# ----------------------------- Pallas kernel --------------------------------
def _convlstm_encoder_kernel(xcol_ref, w0x_ref, wrec_ref, winp_ref, bias_ref,
                             mask_ref, out_ref, hpad_ref, c_ref, *,
                             num_layers, kernel_size, hidden, hwp, wp,
                             interior_off):
    """Fused ConvLSTM encoder step for one (batch, time) grid point.

    xcol_ref : (1, 1, hwp, cin_pad) bf16   tap-folded layer-0 input patches
    w0x_ref  : (cin_pad, 4*hidden)  bf16   folded layer-0 input weights
    wrec_ref : (L, K*K, hidden, 4*hidden) bf16   recurrent (h) weights
    winp_ref : (max(L-1,1), K*K, hidden, 4*hidden) bf16  layer>=1 input weights
    bias_ref : (L, 1, 4*hidden) f32
    mask_ref : (hwp, 1) f32    1.0 on valid columns of the H x Wp grid
    out_ref  : (1, hwp, hidden) f32        last layer's h at the final timestep
    hpad_ref : (L, pad_rows, hidden) f32   zero-padded, row-flattened h state
    c_ref    : (L, hwp, hidden) f32        cell state
    """
    t_idx = pl.program_id(1)
    taps = [ky * wp + kx for ky in range(kernel_size) for kx in range(kernel_size)]

    # New batch element (time loop restarts): reset the recurrent state.
    @pl.when(t_idx == 0)
    def _init():
        hpad_ref[...] = jnp.zeros(hpad_ref.shape, hpad_ref.dtype)
        c_ref[...] = jnp.zeros(c_ref.shape, c_ref.dtype)

    mask = mask_ref[...]                                   # (hwp, 1) f32
    h_new = None
    for l in range(num_layers):
        # ---- input-path pre-activation: (hwp, 4*hidden) f32 ----
        if l == 0:
            z = jnp.dot(xcol_ref[0, 0], w0x_ref[...],
                        preferred_element_type=jnp.float32)
        else:
            z = jnp.zeros((hwp, 4 * hidden), jnp.float32)
            for tap_i, off in enumerate(taps):
                lhs = hpad_ref[l - 1, off:off + hwp, :].astype(jnp.bfloat16)
                z = z + jnp.dot(lhs, winp_ref[l - 1, tap_i],
                                preferred_element_type=jnp.float32)

        # ---- recurrent path (previous-timestep h of this layer) ----
        for tap_i, off in enumerate(taps):
            lhs = hpad_ref[l, off:off + hwp, :].astype(jnp.bfloat16)
            z = z + jnp.dot(lhs, wrec_ref[l, tap_i],
                            preferred_element_type=jnp.float32)

        z = z + bias_ref[l]                                # (1, 4*hidden) bcast

        # ---- gates / cell update (f32, VPU + EUP) ----
        i_g = jax.nn.sigmoid(z[:, 0 * hidden:1 * hidden])
        f_g = jax.nn.sigmoid(z[:, 1 * hidden:2 * hidden])
        o_g = jax.nn.sigmoid(z[:, 2 * hidden:3 * hidden])
        g_g = jnp.tanh(z[:, 3 * hidden:4 * hidden])
        c_new = f_g * c_ref[l] + i_g * g_g
        h_new = o_g * jnp.tanh(c_new)
        c_ref[l] = c_new
        # Write h into the interior of the padded/flattened buffer.  Masking
        # zeroes the Wp-grid junk columns so the zero border stays intact.
        hpad_ref[l, interior_off:interior_off + hwp, :] = h_new * mask

    @pl.when(t_idx == pl.num_programs(1) - 1)
    def _store():
        out_ref[0] = h_new                                  # last layer, last t


# ------------------------------- JAX glue ------------------------------------
def init_params(key, input_dim, hidden_dim, kernel_size, num_layers):
    """Deterministic synthetic parameters (PyTorch Conv2d-style OIHW weights + bias)."""
    params = []
    for i in range(num_layers):
        cin = (input_dim if i == 0 else hidden_dim) + hidden_dim
        cout = 4 * hidden_dim
        bound = 1.0 / np.sqrt(cin * kernel_size * kernel_size)
        key, kw, kb = jax.random.split(key, 3)
        w_oikk = jax.random.uniform(kw, (cout, cin, kernel_size, kernel_size),
                                    jnp.float32, -bound, bound)
        bias = jax.random.uniform(kb, (cout,), jnp.float32, -bound, bound)
        params.append((w_oikk, bias))
    return params


def prepare_params(params, input_dim, hidden_dim, kernel_size, num_layers):
    """One-time repack of PyTorch OIHW weights into the kernel's matmul layout."""
    kk = kernel_size * kernel_size
    cin_fold = kk * input_dim
    cin_pad = ((cin_fold + 127) // 128) * 128

    def fold(wpart):  # (4H, C, K, K) -> (K*K, C, 4H), tap-major / channel-minor
        return jnp.transpose(wpart, (2, 3, 1, 0)).reshape(kk, wpart.shape[1],
                                                          wpart.shape[0])

    # Layer-0 input weights, tap-folded into a single (K*K*Cin_pad, 4H) matrix.
    w0 = params[0][0]
    w0x = jnp.transpose(w0[:, :input_dim], (2, 3, 1, 0)).reshape(cin_fold,
                                                                 4 * hidden_dim)
    w0x = jnp.pad(w0x, ((0, cin_pad - cin_fold), (0, 0))).astype(jnp.bfloat16)

    # Recurrent (h) weights for every layer.
    wrec = jnp.stack(
        [fold(params[l][0][:, (input_dim if l == 0 else hidden_dim):])
         for l in range(num_layers)]).astype(jnp.bfloat16)

    # Input weights for layers >= 1 (their input is the previous layer's h).
    if num_layers > 1:
        winp = jnp.stack([fold(params[l][0][:, :hidden_dim])
                          for l in range(1, num_layers)]).astype(jnp.bfloat16)
    else:
        winp = jnp.zeros((1, kk, hidden_dim, 4 * hidden_dim), jnp.bfloat16)

    bias = jnp.stack([params[l][1] for l in range(num_layers)]).reshape(
        num_layers, 1, 4 * hidden_dim).astype(jnp.float32)
    return w0x, wrec, winp, bias


@functools.partial(jax.jit,
                   static_argnames=("hidden_dim", "kernel_size", "num_layers"))
def convlstm_encoder_forward(x, w0x, wrec, winp, bias, *,
                             hidden_dim, kernel_size, num_layers):
    """ConvLSTMEncoder.forward: x [B, T, C, H, W] -> h_t[-1] [B, hidden, H, W]."""
    b, t, c_in, h, w = x.shape
    pad = kernel_size // 2
    hp, wp = h + 2 * pad, w + 2 * pad
    hwp = h * wp                      # rows of the flattened H x Wp work grid
    pad_rows = hp * wp + wp           # flattened padded buffer (+ tail slack)
    interior = pad * wp + pad         # flat offset of padded-image interior
    kk = kernel_size * kernel_size
    cin_pad = w0x.shape[0]

    # --- tap-folded, lane-padded layer-0 input columns: (B, T, hwp, cin_pad) ---
    xs = jnp.transpose(x, (0, 1, 3, 4, 2))                               # NHWC
    xp = jnp.pad(xs, ((0, 0), (0, 0), (pad, pad), (pad, pad), (0, 0)))
    xf = xp.reshape(b, t, hp * wp, c_in)
    xf = jnp.pad(xf, ((0, 0), (0, 0), (0, pad_rows - hp * wp), (0, 0)))
    cols = [xf[:, :, ky * wp + kx: ky * wp + kx + hwp, :]
            for ky in range(kernel_size) for kx in range(kernel_size)]
    xcol = jnp.concatenate(cols, axis=-1)                                # tap-major
    xcol = jnp.pad(xcol, ((0, 0), (0, 0), (0, 0),
                          (0, cin_pad - kk * c_in))).astype(jnp.bfloat16)

    # Valid-column mask on the H x Wp grid (zeros on the 2*pad junk columns).
    mask = ((jnp.arange(hwp, dtype=jnp.int32) % wp) < w).astype(
        jnp.float32).reshape(hwp, 1)

    kernel = functools.partial(
        _convlstm_encoder_kernel, num_layers=num_layers,
        kernel_size=kernel_size, hidden=hidden_dim, hwp=hwp, wp=wp,
        interior_off=interior)

    out_flat = pl.pallas_call(
        kernel,
        out_shape=jax.ShapeDtypeStruct((b, hwp, hidden_dim), jnp.float32),
        grid_spec=pltpu.PrefetchScalarGridSpec(
            num_scalar_prefetch=0,
            grid=(b, t),
            in_specs=[
                pl.BlockSpec((1, 1, hwp, cin_pad),
                             lambda bi, ti: (bi, ti, 0, 0)),               # xcol
                pl.BlockSpec((cin_pad, 4 * hidden_dim),
                             lambda bi, ti: (0, 0)),                       # w0x
                pl.BlockSpec((num_layers, kk, hidden_dim, 4 * hidden_dim),
                             lambda bi, ti: (0, 0, 0, 0)),                 # wrec
                pl.BlockSpec((max(num_layers - 1, 1), kk, hidden_dim,
                              4 * hidden_dim),
                             lambda bi, ti: (0, 0, 0, 0)),                 # winp
                pl.BlockSpec((num_layers, 1, 4 * hidden_dim),
                             lambda bi, ti: (0, 0, 0)),                    # bias
                pl.BlockSpec((hwp, 1), lambda bi, ti: (0, 0)),             # mask
            ],
            out_specs=pl.BlockSpec((1, hwp, hidden_dim),
                                   lambda bi, ti: (bi, 0, 0)),
            scratch_shapes=[
                pltpu.VMEM((num_layers, pad_rows, hidden_dim), jnp.float32),
                pltpu.VMEM((num_layers, hwp, hidden_dim), jnp.float32),
            ],
        ),
        compiler_params=pltpu.CompilerParams(
            dimension_semantics=("parallel", "arbitrary")),
    )(xcol, w0x, wrec, winp, bias, mask)

    out = out_flat.reshape(b, h, wp, hidden_dim)[:, :, :w, :]   # drop junk cols
    return jnp.transpose(out, (0, 3, 1, 2))                     # NHWC -> NCHW


# -------------------------- pure-JAX reference --------------------------------
def reference_forward(x, params, hidden_dim, kernel_size, num_layers):
    b, t, _, h, w = x.shape
    pad = kernel_size // 2
    h_t = [jnp.zeros((b, hidden_dim, h, w), jnp.float32) for _ in range(num_layers)]
    c_t = [jnp.zeros((b, hidden_dim, h, w), jnp.float32) for _ in range(num_layers)]
    for time in range(t):
        inp = x[:, time]
        for i in range(num_layers):
            wo, bias = params[i]
            combined = jnp.concatenate([inp, h_t[i]], axis=1)
            conv = lax.conv_general_dilated(
                combined, wo, window_strides=(1, 1),
                padding=[(pad, pad), (pad, pad)],
                dimension_numbers=("NCHW", "OIHW", "NCHW"))
            conv = conv + bias[None, :, None, None]
            cc_i, cc_f, cc_o, cc_g = jnp.split(conv, 4, axis=1)
            i_g, f_g = jax.nn.sigmoid(cc_i), jax.nn.sigmoid(cc_f)
            o_g, g_g = jax.nn.sigmoid(cc_o), jnp.tanh(cc_g)
            c_t[i] = f_g * c_t[i] + i_g * g_g
            h_t[i] = o_g * jnp.tanh(c_t[i])
            inp = h_t[i]
    return h_t[-1]


if __name__ == "__main__":
    B, T, C_IN, H, W = 2, 8, 4, 16, 16
    HIDDEN, KSIZE, NLAYERS = 32, 3, 2

    key = jax.random.PRNGKey(0)
    kx, kp = jax.random.split(key)
    x = jax.random.normal(kx, (B, T, C_IN, H, W), jnp.float32)
    params = init_params(kp, C_IN, HIDDEN, KSIZE, NLAYERS)

    # One-time weight repack (hoisted out of the jitted forward).
    packed = prepare_params(params, C_IN, HIDDEN, KSIZE, NLAYERS)

    out = convlstm_encoder_forward(x, *packed, hidden_dim=HIDDEN,
                                   kernel_size=KSIZE, num_layers=NLAYERS)
    out = jax.block_until_ready(out)

    ref = jax.block_until_ready(reference_forward(x, params, HIDDEN, KSIZE, NLAYERS))
    assert out.shape == (B, HIDDEN, H, W)
    # bf16 MXU operands (f32 accumulation) -> looser tolerance than pure-f32.
    np.testing.assert_allclose(np.asarray(out), np.asarray(ref),
                               rtol=5e-2, atol=5e-2)
    print("KERNEL_OK")
</pallas_src>

<mosaic_0001>
module attributes {stable_mosaic.version = 11 : i64} {
  func.func @_convlstm_encoder_kernel(%arg0: i32, %arg1: i32, %arg2: memref<1x1x288x128xbf16, #tpu.memory_space<vmem>>, %arg3: memref<128x128xbf16, #tpu.memory_space<vmem>>, %arg4: memref<2x9x32x128xbf16, #tpu.memory_space<vmem>>, %arg5: memref<1x9x32x128xbf16, #tpu.memory_space<vmem>>, %arg6: memref<2x1x128xf32, #tpu.memory_space<vmem>>, %arg7: memref<288x1xf32, #tpu.memory_space<vmem>>, %arg8: memref<1x288x32xf32, #tpu.memory_space<vmem>>, %arg9: memref<2x342x32xf32, #tpu.memory_space<vmem>>, %arg10: memref<2x288x32xf32, #tpu.memory_space<vmem>>) attributes {dimension_semantics = [#tpu.dimension_semantics<parallel>, #tpu.dimension_semantics<arbitrary>], iteration_bounds = array<i64: 2, 8>, scalar_prefetch = 0 : i64, scratch_operands = 2 : i64, tpu.core_type = #tpu.core_type<tc>, window_params = [{transform_indices = @transform_0, window_bounds = array<i64: 1, 1, 288, 128>}, {pipeline_mode = #tpu.pipeline_mode<synchronous>, transform_indices = @transform_1, window_bounds = array<i64: 128, 128>}, {pipeline_mode = #tpu.pipeline_mode<synchronous>, transform_indices = @transform_2, window_bounds = array<i64: 2, 9, 32, 128>}, {pipeline_mode = #tpu.pipeline_mode<synchronous>, transform_indices = @transform_3, window_bounds = array<i64: 1, 9, 32, 128>}, {pipeline_mode = #tpu.pipeline_mode<synchronous>, transform_indices = @transform_4, window_bounds = array<i64: 2, 1, 128>}, {pipeline_mode = #tpu.pipeline_mode<synchronous>, transform_indices = @transform_5, window_bounds = array<i64: 288, 1>}, {transform_indices = @transform_6, window_bounds = array<i64: 1, 288, 32>}]} {
    %c0_i32 = arith.constant 0 : i32
    %0 = arith.cmpi eq, %arg1, %c0_i32 : i32
    %1 = arith.extui %0 : i1 to i32
    %c0_i32_0 = arith.constant 0 : i32
    %2 = arith.cmpi ne, %1, %c0_i32_0 : i32
    scf.if %2 {
      %cst_242 = arith.constant 0.000000e+00 : f32
      %279 = vector.broadcast %cst_242 : f32 to vector<2x342x32xf32>
      %c0_243 = arith.constant 0 : index
      %c0_244 = arith.constant 0 : index
      %c0_245 = arith.constant 0 : index
      %280 = vector.load %arg9[%c0_243, %c0_244, %c0_245] : memref<2x342x32xf32, #tpu.memory_space<vmem>>, vector<2x342x32xf32>
      tpu.vector_store %arg9[%c0_243, %c0_244, %c0_245], %279 {strides = array<i32>} : memref<2x342x32xf32, #tpu.memory_space<vmem>>, vector<2x342x32xf32>,
      %cst_246 = arith.constant 0.000000e+00 : f32
      %281 = vector.broadcast %cst_246 : f32 to vector<2x288x32xf32>
      %c0_247 = arith.constant 0 : index
      %c0_248 = arith.constant 0 : index
      %c0_249 = arith.constant 0 : index
      %282 = vector.load %arg10[%c0_247, %c0_248, %c0_249] : memref<2x288x32xf32, #tpu.memory_space<vmem>>, vector<2x288x32xf32>
      tpu.vector_store %arg10[%c0_247, %c0_248, %c0_249], %281 {strides = array<i32>} : memref<2x288x32xf32, #tpu.memory_space<vmem>>, vector<2x288x32xf32>,
    } else {
    }
    %c0 = arith.constant 0 : index
    %c0_1 = arith.constant 0 : index
    %3 = vector.load %arg7[%c0, %c0_1] : memref<288x1xf32, #tpu.memory_space<vmem>>, vector<288x1xf32>
    %c0_2 = arith.constant 0 : index
    %c0_3 = arith.constant 0 : index
    %c0_4 = arith.constant 0 : index
    %c0_5 = arith.constant 0 : index
    %4 = vector.load %arg2[%c0_2, %c0_3, %c0_4, %c0_5] : memref<1x1x288x128xbf16, #tpu.memory_space<vmem>>, vector<1x1x288x128xbf16>
    %5 = vector.shape_cast %4 : vector<1x1x288x128xbf16> to vector<288x128xbf16>
    %c0_6 = arith.constant 0 : index
    %c0_7 = arith.constant 0 : index
    %6 = vector.load %arg3[%c0_6, %c0_7] : memref<128x128xbf16, #tpu.memory_space<vmem>>, vector<128x128xbf16>
    %cst = arith.constant dense<0.000000e+00> : vector<288x128xf32>
    %7 = tpu.matmul %5, %6, %cst {dimension_numbers = #tpu.dot_dimension_numbers<[1], [0], [0], [1], [0, 0, 1, 1], [], []>} : vector<288x128xbf16>, vector<128x128xbf16>, vector<288x128xf32> -> vector<288x128xf32>
    %c0_8 = arith.constant 0 : index
    %c0_9 = arith.constant 0 : index
    %c0_10 = arith.constant 0 : index
    %8 = vector.load %arg9[%c0_8, %c0_9, %c0_10] : memref<2x342x32xf32, #tpu.memory_space<vmem>>, vector<1x288x32xf32>
    %9 = vector.shape_cast %8 : vector<1x288x32xf32> to vector<288x32xf32>
    %10 = arith.truncf %9 : vector<288x32xf32> to vector<288x32xbf16>
    %c0_11 = arith.constant 0 : index
    %c0_12 = arith.constant 0 : index
    %c0_13 = arith.constant 0 : index
    %c0_14 = arith.constant 0 : index
    %11 = vector.load %arg4[%c0_11, %c0_12, %c0_13, %c0_14] : memref<2x9x32x128xbf16, #tpu.memory_space<vmem>>, vector<1x1x32x128xbf16>
    %12 = vector.shape_cast %11 : vector<1x1x32x128xbf16> to vector<32x128xbf16>
    %cst_15 = arith.constant dense<0.000000e+00> : vector<288x128xf32>
    %13 = tpu.matmul %10, %12, %cst_15 {dimension_numbers = #tpu.dot_dimension_numbers<[1], [0], [0], [1], [0, 0, 1, 1], [], []>} : vector<288x32xbf16>, vector<32x128xbf16>, vector<288x128xf32> -> vector<288x128xf32>
    %14 = arith.addf %7, %13 : vector<288x128xf32>
    %c0_16 = arith.constant 0 : index
    %c1 = arith.constant 1 : index
    %c0_17 = arith.constant 0 : index
    %15 = vector.load %arg9[%c0_16, %c1, %c0_17] : memref<2x342x32xf32, #tpu.memory_space<vmem>>, vector<1x288x32xf32>
    %16 = vector.shape_cast %15 : vector<1x288x32xf32> to vector<288x32xf32>
    %17 = arith.truncf %16 : vector<288x32xf32> to vector<288x32xbf16>
    %c0_18 = arith.constant 0 : index
    %c1_19 = arith.constant 1 : index
    %c0_20 = arith.constant 0 : index
    %c0_21 = arith.constant 0 : index
    %18 = vector.load %arg4[%c0_18, %c1_19, %c0_20, %c0_21] : memref<2x9x32x128xbf16, #tpu.memory_space<vmem>>, vector<1x1x32x128xbf16>
    %19 = vector.shape_cast %18 : vector<1x1x32x128xbf16> to vector<32x128xbf16>
    %cst_22 = arith.constant dense<0.000000e+00> : vector<288x128xf32>
    %20 = tpu.matmul %17, %19, %cst_22 {dimension_numbers = #tpu.dot_dimension_numbers<[1], [0], [0], [1], [0, 0, 1, 1], [], []>} : vector<288x32xbf16>, vector<32x128xbf16>, vector<288x128xf32> -> vector<288x128xf32>
    %21 = arith.addf %14, %20 : vector<288x128xf32>
    %c0_23 = arith.constant 0 : index
    %c2 = arith.constant 2 : index
    %c0_24 = arith.constant 0 : index
    %22 = vector.load %arg9[%c0_23, %c2, %c0_24] : memref<2x342x32xf32, #tpu.memory_space<vmem>>, vector<1x288x32xf32>
    %23 = vector.shape_cast %22 : vector<1x288x32xf32> to vector<288x32xf32>
    %24 = arith.truncf %23 : vector<288x32xf32> to vector<288x32xbf16>
    %c0_25 = arith.constant 0 : index
    %c2_26 = arith.constant 2 : index
    %c0_27 = arith.constant 0 : index
    %c0_28 = arith.constant 0 : index
    %25 = vector.load %arg4[%c0_25, %c2_26, %c0_27, %c0_28] : memref<2x9x32x128xbf16, #tpu.memory_space<vmem>>, vector<1x1x32x128xbf16>
    %26 = vector.shape_cast %25 : vector<1x1x32x128xbf16> to vector<32x128xbf16>
    %cst_29 = arith.constant dense<0.000000e+00> : vector<288x128xf32>
    %27 = tpu.matmul %24, %26, %cst_29 {dimension_numbers = #tpu.dot_dimension_numbers<[1], [0], [0], [1], [0, 0, 1, 1], [], []>} : vector<288x32xbf16>, vector<32x128xbf16>, vector<288x128xf32> -> vector<288x128xf32>
    %28 = arith.addf %21, %27 : vector<288x128xf32>
    %c0_30 = arith.constant 0 : index
    %c18 = arith.constant 18 : index
    %c0_31 = arith.constant 0 : index
    %29 = vector.load %arg9[%c0_30, %c18, %c0_31] : memref<2x342x32xf32, #tpu.memory_space<vmem>>, vector<1x288x32xf32>
    %30 = vector.shape_cast %29 : vector<1x288x32xf32> to vector<288x32xf32>
    %31 = arith.truncf %30 : vector<288x32xf32> to vector<288x32xbf16>
    %c0_32 = arith.constant 0 : index
    %c3 = arith.constant 3 : index
    %c0_33 = arith.constant 0 : index
    %c0_34 = arith.constant 0 : index
    %32 = vector.load %arg4[%c0_32, %c3, %c0_33, %c0_34] : memref<2x9x32x128xbf16, #tpu.memory_space<vmem>>, vector<1x1x32x128xbf16>
    %33 = vector.shape_cast %32 : vector<1x1x32x128xbf16> to vector<32x128xbf16>
    %cst_35 = arith.constant dense<0.000000e+00> : vector<288x128xf32>
    %34 = tpu.matmul %31, %33, %cst_35 {dimension_numbers = #tpu.dot_dimension_numbers<[1], [0], [0], [1], [0, 0, 1, 1], [], []>} : vector<288x32xbf16>, vector<32x128xbf16>, vector<288x128xf32> -> vector<288x128xf32>
    %35 = arith.addf %28, %34 : vector<288x128xf32>
    %c0_36 = arith.constant 0 : index
    %c19 = arith.constant 19 : index
    %c0_37 = arith.constant 0 : index
    %36 = vector.load %arg9[%c0_36, %c19, %c0_37] : memref<2x342x32xf32, #tpu.memory_space<vmem>>, vector<1x288x32xf32>
    %37 = vector.shape_cast %36 : vector<1x288x32xf32> to vector<288x32xf32>
    %38 = arith.truncf %37 : vector<288x32xf32> to vector<288x32xbf16>
    %c0_38 = arith.constant 0 : index
    %c4 = arith.constant 4 : index
    %c0_39 = arith.constant 0 : index
    %c0_40 = arith.constant 0 : index
    %39 = vector.load %arg4[%c0_38, %c4, %c0_39, %c0_40] : memref<2x9x32x128xbf16, #tpu.memory_space<vmem>>, vector<1x1x32x128xbf16>
    %40 = vector.shape_cast %39 : vector<1x1x32x128xbf16> to vector<32x128xbf16>
    %cst_41 = arith.constant dense<0.000000e+00> : vector<288x128xf32>
    %41 = tpu.matmul %38, %40, %cst_41 {dimension_numbers = #tpu.dot_dimension_numbers<[1], [0], [0], [1], [0, 0, 1, 1], [], []>} : vector<288x32xbf16>, vector<32x128xbf16>, vector<288x128xf32> -> vector<288x128xf32>
    %42 = arith.addf %35, %41 : vector<288x128xf32>
    %c0_42 = arith.constant 0 : index
    %c20 = arith.constant 20 : index
    %c0_43 = arith.constant 0 : index
    %43 = vector.load %arg9[%c0_42, %c20, %c0_43] : memref<2x342x32xf32, #tpu.memory_space<vmem>>, vector<1x288x32xf32>
    %44 = vector.shape_cast %43 : vector<1x288x32xf32> to vector<288x32xf32>
    %45 = arith.truncf %44 : vector<288x32xf32> to vector<288x32xbf16>
    %c0_44 = arith.constant 0 : index
    %c5 = arith.constant 5 : index
    %c0_45 = arith.constant 0 : index
    %c0_46 = arith.constant 0 : index
    %46 = vector.load %arg4[%c0_44, %c5, %c0_45, %c0_46] : memref<2x9x32x128xbf16, #tpu.memory_space<vmem>>, vector<1x1x32x128xbf16>
    %47 = vector.shape_cast %46 : vector<1x1x32x128xbf16> to vector<32x128xbf16>
    %cst_47 = arith.constant dense<0.000000e+00> : vector<288x128xf32>
    %48 = tpu.matmul %45, %47, %cst_47 {dimension_numbers = #tpu.dot_dimension_numbers<[1], [0], [0], [1], [0, 0, 1, 1], [], []>} : vector<288x32xbf16>, vector<32x128xbf16>, vector<288x128xf32> -> vector<288x128xf32>
    %49 = arith.addf %42, %48 : vector<288x128xf32>
    %c0_48 = arith.constant 0 : index
    %c36 = arith.constant 36 : index
    %c0_49 = arith.constant 0 : index
    %50 = vector.load %arg9[%c0_48, %c36, %c0_49] : memref<2x342x32xf32, #tpu.memory_space<vmem>>, vector<1x288x32xf32>
    %51 = vector.shape_cast %50 : vector<1x288x32xf32> to vector<288x32xf32>
    %52 = arith.truncf %51 : vector<288x32xf32> to vector<288x32xbf16>
    %c0_50 = arith.constant 0 : index
    %c6 = arith.constant 6 : index
    %c0_51 = arith.constant 0 : index
    %c0_52 = arith.constant 0 : index
    %53 = vector.load %arg4[%c0_50, %c6, %c0_51, %c0_52] : memref<2x9x32x128xbf16, #tpu.memory_space<vmem>>, vector<1x1x32x128xbf16>
    %54 = vector.shape_cast %53 : vector<1x1x32x128xbf16> to vector<32x128xbf16>
    %cst_53 = arith.constant dense<0.000000e+00> : vector<288x128xf32>
    %55 = tpu.matmul %52, %54, %cst_53 {dimension_numbers = #tpu.dot_dimension_numbers<[1], [0], [0], [1], [0, 0, 1, 1], [], []>} : vector<288x32xbf16>, vector<32x128xbf16>, vector<288x128xf32> -> vector<288x128xf32>
    %56 = arith.addf %49, %55 : vector<288x128xf32>
    %c0_54 = arith.constant 0 : index
    %c37 = arith.constant 37 : index
    %c0_55 = arith.constant 0 : index
    %57 = vector.load %arg9[%c0_54, %c37, %c0_55] : memref<2x342x32xf32, #tpu.memory_space<vmem>>, vector<1x288x32xf32>
    %58 = vector.shape_cast %57 : vector<1x288x32xf32> to vector<288x32xf32>
    %59 = arith.truncf %58 : vector<288x32xf32> to vector<288x32xbf16>
    %c0_56 = arith.constant 0 : index
    %c7 = arith.constant 7 : index
    %c0_57 = arith.constant 0 : index
    %c0_58 = arith.constant 0 : index
    %60 = vector.load %arg4[%c0_56, %c7, %c0_57, %c0_58] : memref<2x9x32x128xbf16, #tpu.memory_space<vmem>>, vector<1x1x32x128xbf16>
    %61 = vector.shape_cast %60 : vector<1x1x32x128xbf16> to vector<32x128xbf16>
    %cst_59 = arith.constant dense<0.000000e+00> : vector<288x128xf32>
    %62 = tpu.matmul %59, %61, %cst_59 {dimension_numbers = #tpu.dot_dimension_numbers<[1], [0], [0], [1], [0, 0, 1, 1], [], []>} : vector<288x32xbf16>, vector<32x128xbf16>, vector<288x128xf32> -> vector<288x128xf32>
    %63 = arith.addf %56, %62 : vector<288x128xf32>
    %c0_60 = arith.constant 0 : index
    %c38 = arith.constant 38 : index
    %c0_61 = arith.constant 0 : index
    %64 = vector.load %arg9[%c0_60, %c38, %c0_61] : memref<2x342x32xf32, #tpu.memory_space<vmem>>, vector<1x288x32xf32>
    %65 = vector.shape_cast %64 : vector<1x288x32xf32> to vector<288x32xf32>
    %66 = arith.truncf %65 : vector<288x32xf32> to vector<288x32xbf16>
    %c0_62 = arith.constant 0 : index
    %c8 = arith.constant 8 : index
    %c0_63 = arith.constant 0 : index
    %c0_64 = arith.constant 0 : index
    %67 = vector.load %arg4[%c0_62, %c8, %c0_63, %c0_64] : memref<2x9x32x128xbf16, #tpu.memory_space<vmem>>, vector<1x1x32x128xbf16>
    %68 = vector.shape_cast %67 : vector<1x1x32x128xbf16> to vector<32x128xbf16>
    %cst_65 = arith.constant dense<0.000000e+00> : vector<288x128xf32>
    %69 = tpu.matmul %66, %68, %cst_65 {dimension_numbers = #tpu.dot_dimension_numbers<[1], [0], [0], [1], [0, 0, 1, 1], [], []>} : vector<288x32xbf16>, vector<32x128xbf16>, vector<288x128xf32> -> vector<288x128xf32>
    %70 = arith.addf %63, %69 : vector<288x128xf32>
    %c0_66 = arith.constant 0 : index
    %c0_67 = arith.constant 0 : index
    %c0_68 = arith.constant 0 : index
    %71 = vector.load %arg6[%c0_66, %c0_67, %c0_68] : memref<2x1x128xf32, #tpu.memory_space<vmem>>, vector<1x1x128xf32>
    %72 = vector.shape_cast %71 : vector<1x1x128xf32> to vector<1x128xf32>
    %73 = vector.broadcast %72 : vector<1x128xf32> to vector<288x128xf32>
    %74 = arith.addf %70, %73 : vector<288x128xf32>
    %75 = vector.extract_strided_slice %74 {offsets = [0, 0], sizes = [288, 32], strides = [1, 1]} : vector<288x128xf32> to vector<288x32xf32>
    %76 = arith.negf %75 : vector<288x32xf32>
    %77 = math.exp %76 : vector<288x32xf32>
    %cst_69 = arith.constant 1.000000e+00 : f32
    %78 = vector.broadcast %cst_69 : f32 to vector<288x32xf32>
    %79 = arith.addf %78, %77 : vector<288x32xf32>
    %80 = arith.divf %78, %79 : vector<288x32xf32>
    %81 = vector.extract_strided_slice %74 {offsets = [0, 32], sizes = [288, 32], strides = [1, 1]} : vector<288x128xf32> to vector<288x32xf32>
    %82 = arith.negf %81 : vector<288x32xf32>
    %83 = math.exp %82 : vector<288x32xf32>
    %cst_70 = arith.constant 1.000000e+00 : f32
    %84 = vector.broadcast %cst_70 : f32 to vector<288x32xf32>
    %85 = arith.addf %84, %83 : vector<288x32xf32>
    %86 = arith.divf %84, %85 : vector<288x32xf32>
    %87 = vector.extract_strided_slice %74 {offsets = [0, 64], sizes = [288, 32], strides = [1, 1]} : vector<288x128xf32> to vector<288x32xf32>
    %88 = arith.negf %87 : vector<288x32xf32>
    %89 = math.exp %88 : vector<288x32xf32>
    %cst_71 = arith.constant 1.000000e+00 : f32
    %90 = vector.broadcast %cst_71 : f32 to vector<288x32xf32>
    %91 = arith.addf %90, %89 : vector<288x32xf32>
    %92 = arith.divf %90, %91 : vector<288x32xf32>
    %93 = vector.extract_strided_slice %74 {offsets = [0, 96], sizes = [288, 32], strides = [1, 1]} : vector<288x128xf32> to vector<288x32xf32>
    %94 = math.tanh %93 : vector<288x32xf32>
    %c0_72 = arith.constant 0 : index
    %c0_73 = arith.constant 0 : index
    %c0_74 = arith.constant 0 : index
    %95 = vector.load %arg10[%c0_72, %c0_73, %c0_74] : memref<2x288x32xf32, #tpu.memory_space<vmem>>, vector<1x288x32xf32>
    %96 = vector.shape_cast %95 : vector<1x288x32xf32> to vector<288x32xf32>
    %97 = arith.mulf %86, %96 : vector<288x32xf32>
    %98 = arith.mulf %80, %94 : vector<288x32xf32>
    %99 = arith.addf %97, %98 : vector<288x32xf32>
    %100 = math.tanh %99 : vector<288x32xf32>
    %101 = arith.mulf %92, %100 : vector<288x32xf32>
    %c0_75 = arith.constant 0 : index
    %c0_76 = arith.constant 0 : index
    %c0_77 = arith.constant 0 : index
    %102 = vector.load %arg10[%c0_75, %c0_76, %c0_77] : memref<2x288x32xf32, #tpu.memory_space<vmem>>, vector<1x288x32xf32>
    %103 = vector.shape_cast %102 : vector<1x288x32xf32> to vector<288x32xf32>
    %104 = vector.shape_cast %99 : vector<288x32xf32> to vector<1x288x32xf32>
    tpu.vector_store %arg10[%c0_75, %c0_76, %c0_77], %104 {strides = array<i32>} : memref<2x288x32xf32, #tpu.memory_space<vmem>>, vector<1x288x32xf32>,
    %105 = vector.broadcast %3 : vector<288x1xf32> to vector<288x32xf32>
    %106 = arith.mulf %101, %105 : vector<288x32xf32>
    %c0_78 = arith.constant 0 : index
    %c19_79 = arith.constant 19 : index
    %c0_80 = arith.constant 0 : index
    %107 = vector.load %arg9[%c0_78, %c19_79, %c0_80] : memref<2x342x32xf32, #tpu.memory_space<vmem>>, vector<1x288x32xf32>
    %108 = vector.shape_cast %107 : vector<1x288x32xf32> to vector<288x32xf32>
    %109 = vector.shape_cast %106 : vector<288x32xf32> to vector<1x288x32xf32>
    tpu.vector_store %arg9[%c0_78, %c19_79, %c0_80], %109 {strides = array<i32>} : memref<2x342x32xf32, #tpu.memory_space<vmem>>, vector<1x288x32xf32>,
    %cst_81 = arith.constant 0.000000e+00 : f32
    %110 = vector.broadcast %cst_81 : f32 to vector<288x128xf32>
    %c0_82 = arith.constant 0 : index
    %c0_83 = arith.constant 0 : index
    %c0_84 = arith.constant 0 : index
    %111 = vector.load %arg9[%c0_82, %c0_83, %c0_84] : memref<2x342x32xf32, #tpu.memory_space<vmem>>, vector<1x288x32xf32>
    %112 = vector.shape_cast %111 : vector<1x288x32xf32> to vector<288x32xf32>
    %113 = arith.truncf %112 : vector<288x32xf32> to vector<288x32xbf16>
    %c0_85 = arith.constant 0 : index
    %c0_86 = arith.constant 0 : index
    %c0_87 = arith.constant 0 : index
    %c0_88 = arith.constant 0 : index
    %114 = vector.load %arg5[%c0_85, %c0_86, %c0_87, %c0_88] : memref<1x9x32x128xbf16, #tpu.memory_space<vmem>>, vector<1x1x32x128xbf16>
    %115 = vector.shape_cast %114 : vector<1x1x32x128xbf16> to vector<32x128xbf16>
    %cst_89 = arith.constant dense<0.000000e+00> : vector<288x128xf32>
    %116 = tpu.matmul %113, %115, %cst_89 {dimension_numbers = #tpu.dot_dimension_numbers<[1], [0], [0], [1], [0, 0, 1, 1], [], []>} : vector<288x32xbf16>, vector<32x128xbf16>, vector<288x128xf32> -> vector<288x128xf32>
    %117 = arith.addf %110, %116 : vector<288x128xf32>
    %c0_90 = arith.constant 0 : index
    %c1_91 = arith.constant 1 : index
    %c0_92 = arith.constant 0 : index
    %118 = vector.load %arg9[%c0_90, %c1_91, %c0_92] : memref<2x342x32xf32, #tpu.memory_space<vmem>>, vector<1x288x32xf32>
    %119 = vector.shape_cast %118 : vector<1x288x32xf32> to vector<288x32xf32>
    %120 = arith.truncf %119 : vector<288x32xf32> to vector<288x32xbf16>
    %c0_93 = arith.constant 0 : index
    %c1_94 = arith.constant 1 : index
    %c0_95 = arith.constant 0 : index
    %c0_96 = arith.constant 0 : index
    %121 = vector.load %arg5[%c0_93, %c1_94, %c0_95, %c0_96] : memref<1x9x32x128xbf16, #tpu.memory_space<vmem>>, vector<1x1x32x128xbf16>
    %122 = vector.shape_cast %121 : vector<1x1x32x128xbf16> to vector<32x128xbf16>
    %cst_97 = arith.constant dense<0.000000e+00> : vector<288x128xf32>
    %123 = tpu.matmul %120, %122, %cst_97 {dimension_numbers = #tpu.dot_dimension_numbers<[1], [0], [0], [1], [0, 0, 1, 1], [], []>} : vector<288x32xbf16>, vector<32x128xbf16>, vector<288x128xf32> -> vector<288x128xf32>
    %124 = arith.addf %117, %123 : vector<288x128xf32>
    %c0_98 = arith.constant 0 : index
    %c2_99 = arith.constant 2 : index
    %c0_100 = arith.constant 0 : index
    %125 = vector.load %arg9[%c0_98, %c2_99, %c0_100] : memref<2x342x32xf32, #tpu.memory_space<vmem>>, vector<1x288x32xf32>
    %126 = vector.shape_cast %125 : vector<1x288x32xf32> to vector<288x32xf32>
    %127 = arith.truncf %126 : vector<288x32xf32> to vector<288x32xbf16>
    %c0_101 = arith.constant 0 : index
    %c2_102 = arith.constant 2 : index
    %c0_103 = arith.constant 0 : index
    %c0_104 = arith.constant 0 : index
    %128 = vector.load %arg5[%c0_101, %c2_102, %c0_103, %c0_104] : memref<1x9x32x128xbf16, #tpu.memory_space<vmem>>, vector<1x1x32x128xbf16>
    %129 = vector.shape_cast %128 : vector<1x1x32x128xbf16> to vector<32x128xbf16>
    %cst_105 = arith.constant dense<0.000000e+00> : vector<288x128xf32>
    %130 = tpu.matmul %127, %129, %cst_105 {dimension_numbers = #tpu.dot_dimension_numbers<[1], [0], [0], [1], [0, 0, 1, 1], [], []>} : vector<288x32xbf16>, vector<32x128xbf16>, vector<288x128xf32> -> vector<288x128xf32>
    %131 = arith.addf %124, %130 : vector<288x128xf32>
    %c0_106 = arith.constant 0 : index
    %c18_107 = arith.constant 18 : index
    %c0_108 = arith.constant 0 : index
    %132 = vector.load %arg9[%c0_106, %c18_107, %c0_108] : memref<2x342x32xf32, #tpu.memory_space<vmem>>, vector<1x288x32xf32>
    %133 = vector.shape_cast %132 : vector<1x288x32xf32> to vector<288x32xf32>
    %134 = arith.truncf %133 : vector<288x32xf32> to vector<288x32xbf16>
    %c0_109 = arith.constant 0 : index
    %c3_110 = arith.constant 3 : index
    %c0_111 = arith.constant 0 : index
    %c0_112 = arith.constant 0 : index
    %135 = vector.load %arg5[%c0_109, %c3_110, %c0_111, %c0_112] : memref<1x9x32x128xbf16, #tpu.memory_space<vmem>>, vector<1x1x32x128xbf16>
    %136 = vector.shape_cast %135 : vector<1x1x32x128xbf16> to vector<32x128xbf16>
    %cst_113 = arith.constant dense<0.000000e+00> : vector<288x128xf32>
    %137 = tpu.matmul %134, %136, %cst_113 {dimension_numbers = #tpu.dot_dimension_numbers<[1], [0], [0], [1], [0, 0, 1, 1], [], []>} : vector<288x32xbf16>, vector<32x128xbf16>, vector<288x128xf32> -> vector<288x128xf32>
    %138 = arith.addf %131, %137 : vector<288x128xf32>
    %c0_114 = arith.constant 0 : index
    %c19_115 = arith.constant 19 : index
    %c0_116 = arith.constant 0 : index
    %139 = vector.load %arg9[%c0_114, %c19_115, %c0_116] : memref<2x342x32xf32, #tpu.memory_space<vmem>>, vector<1x288x32xf32>
    %140 = vector.shape_cast %139 : vector<1x288x32xf32> to vector<288x32xf32>
    %141 = arith.truncf %140 : vector<288x32xf32> to vector<288x32xbf16>
    %c0_117 = arith.constant 0 : index
    %c4_118 = arith.constant 4 : index
    %c0_119 = arith.constant 0 : index
    %c0_120 = arith.constant 0 : index
    %142 = vector.load %arg5[%c0_117, %c4_118, %c0_119, %c0_120] : memref<1x9x32x128xbf16, #tpu.memory_space<vmem>>, vector<1x1x32x128xbf16>
    %143 = vector.shape_cast %142 : vector<1x1x32x128xbf16> to vector<32x128xbf16>
    %cst_121 = arith.constant dense<0.000000e+00> : vector<288x128xf32>
    %144 = tpu.matmul %141, %143, %cst_121 {dimension_numbers = #tpu.dot_dimension_numbers<[1], [0], [0], [1], [0, 0, 1, 1], [], []>} : vector<288x32xbf16>, vector<32x128xbf16>, vector<288x128xf32> -> vector<288x128xf32>
    %145 = arith.addf %138, %144 : vector<288x128xf32>
    %c0_122 = arith.constant 0 : index
    %c20_123 = arith.constant 20 : index
    %c0_124 = arith.constant 0 : index
    %146 = vector.load %arg9[%c0_122, %c20_123, %c0_124] : memref<2x342x32xf32, #tpu.memory_space<vmem>>, vector<1x288x32xf32>
    %147 = vector.shape_cast %146 : vector<1x288x32xf32> to vector<288x32xf32>
    %148 = arith.truncf %147 : vector<288x32xf32> to vector<288x32xbf16>
    %c0_125 = arith.constant 0 : index
    %c5_126 = arith.constant 5 : index
    %c0_127 = arith.constant 0 : index
    %c0_128 = arith.constant 0 : index
    %149 = vector.load %arg5[%c0_125, %c5_126, %c0_127, %c0_128] : memref<1x9x32x128xbf16, #tpu.memory_space<vmem>>, vector<1x1x32x128xbf16>
    %150 = vector.shape_cast %149 : vector<1x1x32x128xbf16> to vector<32x128xbf16>
    %cst_129 = arith.constant dense<0.000000e+00> : vector<288x128xf32>
    %151 = tpu.matmul %148, %150, %cst_129 {dimension_numbers = #tpu.dot_dimension_numbers<[1], [0], [0], [1], [0, 0, 1, 1], [], []>} : vector<288x32xbf16>, vector<32x128xbf16>, vector<288x128xf32> -> vector<288x128xf32>
    %152 = arith.addf %145, %151 : vector<288x128xf32>
    %c0_130 = arith.constant 0 : index
    %c36_131 = arith.constant 36 : index
    %c0_132 = arith.constant 0 : index
    %153 = vector.load %arg9[%c0_130, %c36_131, %c0_132] : memref<2x342x32xf32, #tpu.memory_space<vmem>>, vector<1x288x32xf32>
    %154 = vector.shape_cast %153 : vector<1x288x32xf32> to vector<288x32xf32>
    %155 = arith.truncf %154 : vector<288x32xf32> to vector<288x32xbf16>
    %c0_133 = arith.constant 0 : index
    %c6_134 = arith.constant 6 : index
    %c0_135 = arith.constant 0 : index
    %c0_136 = arith.constant 0 : index
    %156 = vector.load %arg5[%c0_133, %c6_134, %c0_135, %c0_136] : memref<1x9x32x128xbf16, #tpu.memory_space<vmem>>, vector<1x1x32x128xbf16>
    %157 = vector.shape_cast %156 : vector<1x1x32x128xbf16> to vector<32x128xbf16>
    %cst_137 = arith.constant dense<0.000000e+00> : vector<288x128xf32>
    %158 = tpu.matmul %155, %157, %cst_137 {dimension_numbers = #tpu.dot_dimension_numbers<[1], [0], [0], [1], [0, 0, 1, 1], [], []>} : vector<288x32xbf16>, vector<32x128xbf16>, vector<288x128xf32> -> vector<288x128xf32>
    %159 = arith.addf %152, %158 : vector<288x128xf32>
    %c0_138 = arith.constant 0 : index
    %c37_139 = arith.constant 37 : index
    %c0_140 = arith.constant 0 : index
    %160 = vector.load %arg9[%c0_138, %c37_139, %c0_140] : memref<2x342x32xf32, #tpu.memory_space<vmem>>, vector<1x288x32xf32>
    %161 = vector.shape_cast %160 : vector<1x288x32xf32> to vector<288x32xf32>
    %162 = arith.truncf %161 : vector<288x32xf32> to vector<288x32xbf16>
    %c0_141 = arith.constant 0 : index
    %c7_142 = arith.constant 7 : index
    %c0_143 = arith.constant 0 : index
    %c0_144 = arith.constant 0 : index
    %163 = vector.load %arg5[%c0_141, %c7_142, %c0_143, %c0_144] : memref<1x9x32x128xbf16, #tpu.memory_space<vmem>>, vector<1x1x32x128xbf16>
    %164 = vector.shape_cast %163 : vector<1x1x32x128xbf16> to vector<32x128xbf16>
    %cst_145 = arith.constant dense<0.000000e+00> : vector<288x128xf32>
    %165 = tpu.matmul %162, %164, %cst_145 {dimension_numbers = #tpu.dot_dimension_numbers<[1], [0], [0], [1], [0, 0, 1, 1], [], []>} : vector<288x32xbf16>, vector<32x128xbf16>, vector<288x128xf32> -> vector<288x128xf32>
    %166 = arith.addf %159, %165 : vector<288x128xf32>
    %c0_146 = arith.constant 0 : index
    %c38_147 = arith.constant 38 : index
    %c0_148 = arith.constant 0 : index
    %167 = vector.load %arg9[%c0_146, %c38_147, %c0_148] : memref<2x342x32xf32, #tpu.memory_space<vmem>>, vector<1x288x32xf32>
    %168 = vector.shape_cast %167 : vector<1x288x32xf32> to vector<288x32xf32>
    %169 = arith.truncf %168 : vector<288x32xf32> to vector<288x32xbf16>
    %c0_149 = arith.constant 0 : index
    %c8_150 = arith.constant 8 : index
    %c0_151 = arith.constant 0 : index
    %c0_152 = arith.constant 0 : index
    %170 = vector.load %arg5[%c0_149, %c8_150, %c0_151, %c0_152] : memref<1x9x32x128xbf16, #tpu.memory_space<vmem>>, vector<1x1x32x128xbf16>
    %171 = vector.shape_cast %170 : vector<1x1x32x128xbf16> to vector<32x128xbf16>
    %cst_153 = arith.constant dense<0.000000e+00> : vector<288x128xf32>
    %172 = tpu.matmul %169, %171, %cst_153 {dimension_numbers = #tpu.dot_dimension_numbers<[1], [0], [0], [1], [0, 0, 1, 1], [], []>} : vector<288x32xbf16>, vector<32x128xbf16>, vector<288x128xf32> -> vector<288x128xf32>
    %173 = arith.addf %166, %172 : vector<288x128xf32>
    %c1_154 = arith.constant 1 : index
    %c0_155 = arith.constant 0 : index
    %c0_156 = arith.constant 0 : index
    %174 = vector.load %arg9[%c1_154, %c0_155, %c0_156] : memref<2x342x32xf32, #tpu.memory_space<vmem>>, vector<1x288x32xf32>
    %175 = vector.shape_cast %174 : vector<1x288x32xf32> to vector<288x32xf32>
    %176 = arith.truncf %175 : vector<288x32xf32> to vector<288x32xbf16>
    %c1_157 = arith.constant 1 : index
    %c0_158 = arith.constant 0 : index
    %c0_159 = arith.constant 0 : index
    %c0_160 = arith.constant 0 : index
    %177 = vector.load %arg4[%c1_157, %c0_158, %c0_159, %c0_160] : memref<2x9x32x128xbf16, #tpu.memory_space<vmem>>, vector<1x1x32x128xbf16>
    %178 = vector.shape_cast %177 : vector<1x1x32x128xbf16> to vector<32x128xbf16>
    %cst_161 = arith.constant dense<0.000000e+00> : vector<288x128xf32>
    %179 = tpu.matmul %176, %178, %cst_161 {dimension_numbers = #tpu.dot_dimension_numbers<[1], [0], [0], [1], [0, 0, 1, 1], [], []>} : vector<288x32xbf16>, vector<32x128xbf16>, vector<288x128xf32> -> vector<288x128xf32>
    %180 = arith.addf %173, %179 : vector<288x128xf32>
    %c1_162 = arith.constant 1 : index
    %c1_163 = arith.constant 1 : index
    %c0_164 = arith.constant 0 : index
    %181 = vector.load %arg9[%c1_162, %c1_163, %c0_164] : memref<2x342x32xf32, #tpu.memory_space<vmem>>, vector<1x288x32xf32>
    %182 = vector.shape_cast %181 : vector<1x288x32xf32> to vector<288x32xf32>
    %183 = arith.truncf %182 : vector<288x32xf32> to vector<288x32xbf16>
    %c1_165 = arith.constant 1 : index
    %c1_166 = arith.constant 1 : index
    %c0_167 = arith.constant 0 : index
    %c0_168 = arith.constant 0 : index
    %184 = vector.load %arg4[%c1_165, %c1_166, %c0_167, %c0_168] : memref<2x9x32x128xbf16, #tpu.memory_space<vmem>>, vector<1x1x32x128xbf16>
    %185 = vector.shape_cast %184 : vector<1x1x32x128xbf16> to vector<32x128xbf16>
    %cst_169 = arith.constant dense<0.000000e+00> : vector<288x128xf32>
    %186 = tpu.matmul %183, %185, %cst_169 {dimension_numbers = #tpu.dot_dimension_numbers<[1], [0], [0], [1], [0, 0, 1, 1], [], []>} : vector<288x32xbf16>, vector<32x128xbf16>, vector<288x128xf32> -> vector<288x128xf32>
    %187 = arith.addf %180, %186 : vector<288x128xf32>
    %c1_170 = arith.constant 1 : index
    %c2_171 = arith.constant 2 : index
    %c0_172 = arith.constant 0 : index
    %188 = vector.load %arg9[%c1_170, %c2_171, %c0_172] : memref<2x342x32xf32, #tpu.memory_space<vmem>>, vector<1x288x32xf32>
    %189 = vector.shape_cast %188 : vector<1x288x32xf32> to vector<288x32xf32>
    %190 = arith.truncf %189 : vector<288x32xf32> to vector<288x32xbf16>
    %c1_173 = arith.constant 1 : index
    %c2_174 = arith.constant 2 : index
    %c0_175 = arith.constant 0 : index
    %c0_176 = arith.constant 0 : index
    %191 = vector.load %arg4[%c1_173, %c2_174, %c0_175, %c0_176] : memref<2x9x32x128xbf16, #tpu.memory_space<vmem>>, vector<1x1x32x128xbf16>
    %192 = vector.shape_cast %191 : vector<1x1x32x128xbf16> to vector<32x128xbf16>
    %cst_177 = arith.constant dense<0.000000e+00> : vector<288x128xf32>
    %193 = tpu.matmul %190, %192, %cst_177 {dimension_numbers = #tpu.dot_dimension_numbers<[1], [0], [0], [1], [0, 0, 1, 1], [], []>} : vector<288x32xbf16>, vector<32x128xbf16>, vector<288x128xf32> -> vector<288x128xf32>
    %194 = arith.addf %187, %193 : vector<288x128xf32>
    %c1_178 = arith.constant 1 : index
    %c18_179 = arith.constant 18 : index
    %c0_180 = arith.constant 0 : index
    %195 = vector.load %arg9[%c1_178, %c18_179, %c0_180] : memref<2x342x32xf32, #tpu.memory_space<vmem>>, vector<1x288x32xf32>
    %196 = vector.shape_cast %195 : vector<1x288x32xf32> to vector<288x32xf32>
    %197 = arith.truncf %196 : vector<288x32xf32> to vector<288x32xbf16>
    %c1_181 = arith.constant 1 : index
    %c3_182 = arith.constant 3 : index
    %c0_183 = arith.constant 0 : index
    %c0_184 = arith.constant 0 : index
    %198 = vector.load %arg4[%c1_181, %c3_182, %c0_183, %c0_184] : memref<2x9x32x128xbf16, #tpu.memory_space<vmem>>, vector<1x1x32x128xbf16>
    %199 = vector.shape_cast %198 : vector<1x1x32x128xbf16> to vector<32x128xbf16>
    %cst_185 = arith.constant dense<0.000000e+00> : vector<288x128xf32>
    %200 = tpu.matmul %197, %199, %cst_185 {dimension_numbers = #tpu.dot_dimension_numbers<[1], [0], [0], [1], [0, 0, 1, 1], [], []>} : vector<288x32xbf16>, vector<32x128xbf16>, vector<288x128xf32> -> vector<288x128xf32>
    %201 = arith.addf %194, %200 : vector<288x128xf32>
    %c1_186 = arith.constant 1 : index
    %c19_187 = arith.constant 19 : index
    %c0_188 = arith.constant 0 : index
    %202 = vector.load %arg9[%c1_186, %c19_187, %c0_188] : memref<2x342x32xf32, #tpu.memory_space<vmem>>, vector<1x288x32xf32>
    %203 = vector.shape_cast %202 : vector<1x288x32xf32> to vector<288x32xf32>
    %204 = arith.truncf %203 : vector<288x32xf32> to vector<288x32xbf16>
    %c1_189 = arith.constant 1 : index
    %c4_190 = arith.constant 4 : index
    %c0_191 = arith.constant 0 : index
    %c0_192 = arith.constant 0 : index
    %205 = vector.load %arg4[%c1_189, %c4_190, %c0_191, %c0_192] : memref<2x9x32x128xbf16, #tpu.memory_space<vmem>>, vector<1x1x32x128xbf16>
    %206 = vector.shape_cast %205 : vector<1x1x32x128xbf16> to vector<32x128xbf16>
    %cst_193 = arith.constant dense<0.000000e+00> : vector<288x128xf32>
    %207 = tpu.matmul %204, %206, %cst_193 {dimension_numbers = #tpu.dot_dimension_numbers<[1], [0], [0], [1], [0, 0, 1, 1], [], []>} : vector<288x32xbf16>, vector<32x128xbf16>, vector<288x128xf32> -> vector<288x128xf32>
    %208 = arith.addf %201, %207 : vector<288x128xf32>
    %c1_194 = arith.constant 1 : index
    %c20_195 = arith.constant 20 : index
    %c0_196 = arith.constant 0 : index
    %209 = vector.load %arg9[%c1_194, %c20_195, %c0_196] : memref<2x342x32xf32, #tpu.memory_space<vmem>>, vector<1x288x32xf32>
    %210 = vector.shape_cast %209 : vector<1x288x32xf32> to vector<288x32xf32>
    %211 = arith.truncf %210 : vector<288x32xf32> to vector<288x32xbf16>
    %c1_197 = arith.constant 1 : index
    %c5_198 = arith.constant 5 : index
    %c0_199 = arith.constant 0 : index
    %c0_200 = arith.constant 0 : index
    %212 = vector.load %arg4[%c1_197, %c5_198, %c0_199, %c0_200] : memref<2x9x32x128xbf16, #tpu.memory_space<vmem>>, vector<1x1x32x128xbf16>
    %213 = vector.shape_cast %212 : vector<1x1x32x128xbf16> to vector<32x128xbf16>
    %cst_201 = arith.constant dense<0.000000e+00> : vector<288x128xf32>
    %214 = tpu.matmul %211, %213, %cst_201 {dimension_numbers = #tpu.dot_dimension_numbers<[1], [0], [0], [1], [0, 0, 1, 1], [], []>} : vector<288x32xbf16>, vector<32x128xbf16>, vector<288x128xf32> -> vector<288x128xf32>
    %215 = arith.addf %208, %214 : vector<288x128xf32>
    %c1_202 = arith.constant 1 : index
    %c36_203 = arith.constant 36 : index
    %c0_204 = arith.constant 0 : index
    %216 = vector.load %arg9[%c1_202, %c36_203, %c0_204] : memref<2x342x32xf32, #tpu.memory_space<vmem>>, vector<1x288x32xf32>
    %217 = vector.shape_cast %216 : vector<1x288x32xf32> to vector<288x32xf32>
    %218 = arith.truncf %217 : vector<288x32xf32> to vector<288x32xbf16>
    %c1_205 = arith.constant 1 : index
    %c6_206 = arith.constant 6 : index
    %c0_207 = arith.constant 0 : index
    %c0_208 = arith.constant 0 : index
    %219 = vector.load %arg4[%c1_205, %c6_206, %c0_207, %c0_208] : memref<2x9x32x128xbf16, #tpu.memory_space<vmem>>, vector<1x1x32x128xbf16>
    %220 = vector.shape_cast %219 : vector<1x1x32x128xbf16> to vector<32x128xbf16>
    %cst_209 = arith.constant dense<0.000000e+00> : vector<288x128xf32>
    %221 = tpu.matmul %218, %220, %cst_209 {dimension_numbers = #tpu.dot_dimension_numbers<[1], [0], [0], [1], [0, 0, 1, 1], [], []>} : vector<288x32xbf16>, vector<32x128xbf16>, vector<288x128xf32> -> vector<288x128xf32>
    %222 = arith.addf %215, %221 : vector<288x128xf32>
    %c1_210 = arith.constant 1 : index
    %c37_211 = arith.constant 37 : index
    %c0_212 = arith.constant 0 : index
    %223 = vector.load %arg9[%c1_210, %c37_211, %c0_212] : memref<2x342x32xf32, #tpu.memory_space<vmem>>, vector<1x288x32xf32>
    %224 = vector.shape_cast %223 : vector<1x288x32xf32> to vector<288x32xf32>
    %225 = arith.truncf %224 : vector<288x32xf32> to vector<288x32xbf16>
    %c1_213 = arith.constant 1 : index
    %c7_214 = arith.constant 7 : index
    %c0_215 = arith.constant 0 : index
    %c0_216 = arith.constant 0 : index
    %226 = vector.load %arg4[%c1_213, %c7_214, %c0_215, %c0_216] : memref<2x9x32x128xbf16, #tpu.memory_space<vmem>>, vector<1x1x32x128xbf16>
    %227 = vector.shape_cast %226 : vector<1x1x32x128xbf16> to vector<32x128xbf16>
    %cst_217 = arith.constant dense<0.000000e+00> : vector<288x128xf32>
    %228 = tpu.matmul %225, %227, %cst_217 {dimension_numbers = #tpu.dot_dimension_numbers<[1], [0], [0], [1], [0, 0, 1, 1], [], []>} : vector<288x32xbf16>, vector<32x128xbf16>, vector<288x128xf32> -> vector<288x128xf32>
    %229 = arith.addf %222, %228 : vector<288x128xf32>
    %c1_218 = arith.constant 1 : index
    %c38_219 = arith.constant 38 : index
    %c0_220 = arith.constant 0 : index
    %230 = vector.load %arg9[%c1_218, %c38_219, %c0_220] : memref<2x342x32xf32, #tpu.memory_space<vmem>>, vector<1x288x32xf32>
    %231 = vector.shape_cast %230 : vector<1x288x32xf32> to vector<288x32xf32>
    %232 = arith.truncf %231 : vector<288x32xf32> to vector<288x32xbf16>
    %c1_221 = arith.constant 1 : index
    %c8_222 = arith.constant 8 : index
    %c0_223 = arith.constant 0 : index
    %c0_224 = arith.constant 0 : index
    %233 = vector.load %arg4[%c1_221, %c8_222, %c0_223, %c0_224] : memref<2x9x32x128xbf16, #tpu.memory_space<vmem>>, vector<1x1x32x128xbf16>
    %234 = vector.shape_cast %233 : vector<1x1x32x128xbf16> to vector<32x128xbf16>
    %cst_225 = arith.constant dense<0.000000e+00> : vector<288x128xf32>
    %235 = tpu.matmul %232, %234, %cst_225 {dimension_numbers = #tpu.dot_dimension_numbers<[1], [0], [0], [1], [0, 0, 1, 1], [], []>} : vector<288x32xbf16>, vector<32x128xbf16>, vector<288x128xf32> -> vector<288x128xf32>
    %236 = arith.addf %229, %235 : vector<288x128xf32>
    %c1_226 = arith.constant 1 : index
    %c0_227 = arith.constant 0 : index
    %c0_228 = arith.constant 0 : index
    %237 = vector.load %arg6[%c1_226, %c0_227, %c0_228] : memref<2x1x128xf32, #tpu.memory_space<vmem>>, vector<1x1x128xf32>
    %238 = vector.shape_cast %237 : vector<1x1x128xf32> to vector<1x128xf32>
    %239 = vector.broadcast %238 : vector<1x128xf32> to vector<288x128xf32>
    %240 = arith.addf %236, %239 : vector<288x128xf32>
    %241 = vector.extract_strided_slice %240 {offsets = [0, 0], sizes = [288, 32], strides = [1, 1]} : vector<288x128xf32> to vector<288x32xf32>
    %242 = arith.negf %241 : vector<288x32xf32>
    %243 = math.exp %242 : vector<288x32xf32>
    %cst_229 = arith.constant 1.000000e+00 : f32
    %244 = vector.broadcast %cst_229 : f32 to vector<288x32xf32>
    %245 = arith.addf %244, %243 : vector<288x32xf32>
    %246 = arith.divf %244, %245 : vector<288x32xf32>
    %247 = vector.extract_strided_slice %240 {offsets = [0, 32], sizes = [288, 32], strides = [1, 1]} : vector<288x128xf32> to vector<288x32xf32>
    %248 = arith.negf %247 : vector<288x32xf32>
    %249 = math.exp %248 : vector<288x32xf32>
    %cst_230 = arith.constant 1.000000e+00 : f32
    %250 = vector.broadcast %cst_230 : f32 to vector<288x32xf32>
    %251 = arith.addf %250, %249 : vector<288x32xf32>
    %252 = arith.divf %250, %251 : vector<288x32xf32>
    %253 = vector.extract_strided_slice %240 {offsets = [0, 64], sizes = [288, 32], strides = [1, 1]} : vector<288x128xf32> to vector<288x32xf32>
    %254 = arith.negf %253 : vector<288x32xf32>
    %255 = math.exp %254 : vector<288x32xf32>
    %cst_231 = arith.constant 1.000000e+00 : f32
    %256 = vector.broadcast %cst_231 : f32 to vector<288x32xf32>
    %257 = arith.addf %256, %255 : vector<288x32xf32>
    %258 = arith.divf %256, %257 : vector<288x32xf32>
    %259 = vector.extract_strided_slice %240 {offsets = [0, 96], sizes = [288, 32], strides = [1, 1]} : vector<288x128xf32> to vector<288x32xf32>
    %260 = math.tanh %259 : vector<288x32xf32>
    %c1_232 = arith.constant 1 : index
    %c0_233 = arith.constant 0 : index
    %c0_234 = arith.constant 0 : index
    %261 = vector.load %arg10[%c1_232, %c0_233, %c0_234] : memref<2x288x32xf32, #tpu.memory_space<vmem>>, vector<1x288x32xf32>
    %262 = vector.shape_cast %261 : vector<1x288x32xf32> to vector<288x32xf32>
    %263 = arith.mulf %252, %262 : vector<288x32xf32>
    %264 = arith.mulf %246, %260 : vector<288x32xf32>
    %265 = arith.addf %263, %264 : vector<288x32xf32>
    %266 = math.tanh %265 : vector<288x32xf32>
    %267 = arith.mulf %258, %266 : vector<288x32xf32>
    %c1_235 = arith.constant 1 : index
    %c0_236 = arith.constant 0 : index
    %c0_237 = arith.constant 0 : index
    %268 = vector.load %arg10[%c1_235, %c0_236, %c0_237] : memref<2x288x32xf32, #tpu.memory_space<vmem>>, vector<1x288x32xf32>
    %269 = vector.shape_cast %268 : vector<1x288x32xf32> to vector<288x32xf32>
    %270 = vector.shape_cast %265 : vector<288x32xf32> to vector<1x288x32xf32>
    tpu.vector_store %arg10[%c1_235, %c0_236, %c0_237], %270 {strides = array<i32>} : memref<2x288x32xf32, #tpu.memory_space<vmem>>, vector<1x288x32xf32>,
    %271 = vector.broadcast %3 : vector<288x1xf32> to vector<288x32xf32>
    %272 = arith.mulf %267, %271 : vector<288x32xf32>
    %c1_238 = arith.constant 1 : index
    %c19_239 = arith.constant 19 : index
    %c0_240 = arith.constant 0 : index
    %273 = vector.load %arg9[%c1_238, %c19_239, %c0_240] : memref<2x342x32xf32, #tpu.memory_space<vmem>>, vector<1x288x32xf32>
    %274 = vector.shape_cast %273 : vector<1x288x32xf32> to vector<288x32xf32>
    %275 = vector.shape_cast %272 : vector<288x32xf32> to vector<1x288x32xf32>
    tpu.vector_store %arg9[%c1_238, %c19_239, %c0_240], %275 {strides = array<i32>} : memref<2x342x32xf32, #tpu.memory_space<vmem>>, vector<1x288x32xf32>,
    %c7_i32 = arith.constant 7 : i32
    %276 = arith.cmpi eq, %arg1, %c7_i32 : i32
    %277 = arith.extui %276 : i1 to i32
    %c0_i32_241 = arith.constant 0 : i32
    %278 = arith.cmpi ne, %277, %c0_i32_241 : i32
    scf.if %278 {
      %c0_242 = arith.constant 0 : index
      %c0_243 = arith.constant 0 : index
      %c0_244 = arith.constant 0 : index
      %279 = vector.load %arg8[%c0_242, %c0_243, %c0_244] : memref<1x288x32xf32, #tpu.memory_space<vmem>>, vector<1x288x32xf32>
      %280 = vector.shape_cast %279 : vector<1x288x32xf32> to vector<288x32xf32>
      %281 = vector.shape_cast %267 : vector<288x32xf32> to vector<1x288x32xf32>
      tpu.vector_store %arg8[%c0_242, %c0_243, %c0_244], %281 {strides = array<i32>} : memref<1x288x32xf32, #tpu.memory_space<vmem>>, vector<1x288x32xf32>,
    } else {
    }
    return
  }
  func.func @transform_0(%arg0: i32, %arg1: i32) -> (i32, i32, i32, i32) {
    %c0_i32 = arith.constant 0 : i32
    %c0_i32_0 = arith.constant 0 : i32
    %c0_i32_1 = arith.constant 0 : i32
    return %arg0, %arg1, %c0_i32, %c0_i32_0 : i32, i32, i32, i32
  }
  func.func @transform_1(%arg0: i32, %arg1: i32) -> (i32, i32) {
    %c0_i32 = arith.constant 0 : i32
    %c0_i32_0 = arith.constant 0 : i32
    %c0_i32_1 = arith.constant 0 : i32
    return %c0_i32, %c0_i32_0 : i32, i32
  }
  func.func @transform_2(%arg0: i32, %arg1: i32) -> (i32, i32, i32, i32) {
    %c0_i32 = arith.constant 0 : i32
    %c0_i32_0 = arith.constant 0 : i32
    %c0_i32_1 = arith.constant 0 : i32
    %c0_i32_2 = arith.constant 0 : i32
    %c0_i32_3 = arith.constant 0 : i32
    return %c0_i32, %c0_i32_0, %c0_i32_1, %c0_i32_2 : i32, i32, i32, i32
  }
  func.func @transform_3(%arg0: i32, %arg1: i32) -> (i32, i32, i32, i32) {
    %c0_i32 = arith.constant 0 : i32
    %c0_i32_0 = arith.constant 0 : i32
    %c0_i32_1 = arith.constant 0 : i32
    %c0_i32_2 = arith.constant 0 : i32
    %c0_i32_3 = arith.constant 0 : i32
    return %c0_i32, %c0_i32_0, %c0_i32_1, %c0_i32_2 : i32, i32, i32, i32
  }
  func.func @transform_4(%arg0: i32, %arg1: i32) -> (i32, i32, i32) {
    %c0_i32 = arith.constant 0 : i32
    %c0_i32_0 = arith.constant 0 : i32
    %c0_i32_1 = arith.constant 0 : i32
    %c0_i32_2 = arith.constant 0 : i32
    return %c0_i32, %c0_i32_0, %c0_i32_1 : i32, i32, i32
  }
  func.func @transform_5(%arg0: i32, %arg1: i32) -> (i32, i32) {
    %c0_i32 = arith.constant 0 : i32
    %c0_i32_0 = arith.constant 0 : i32
    %c0_i32_1 = arith.constant 0 : i32
    return %c0_i32, %c0_i32_0 : i32, i32
  }
  func.func @transform_6(%arg0: i32, %arg1: i32) -> (i32, i32, i32) {
    %c0_i32 = arith.constant 0 : i32
    %c0_i32_0 = arith.constant 0 : i32
    %c0_i32_1 = arith.constant 0 : i32
    return %arg0, %c0_i32, %c0_i32_0 : i32, i32, i32
  }
}

</mosaic_0001>

<llo_original>
// kernel: convlstm_encoder_forward.1
$region0: #{convlstm_encoder_forward.1}
  #allocation0 [shape = 'u32[]', space=smem, size = 0x4, offset = 0x4, fixed_abs, tag = 'smem constant byte address 0x4 - core index']
  #allocation1 [shape = 'u32[72,128]{1,0:T(1,128)}', space=vmem, size = 0x9000, scoped, tag = 'internal scratch']
  #allocation2 [shape = 'f32[2,342,32]{2,1,0:T(8,128)}', space=vmem, size = 0x56000, scoped, tag = 'scratch operand']
  #allocation3 [shape = 'f32[2,288,32]{2,1,0:T(8,128)}', space=vmem, size = 0x48000, scoped, tag = 'scratch operand']
  %s0 = inlined_call_operand.vmem [shape: bf16[2,8,288,128], index: 0, kind: input, shape index: {}]
  %s1 = inlined_call_operand.vmem [shape: bf16[128,128], index: 1, kind: input, shape index: {}]
  %s2 = inlined_call_operand.vmem [shape: bf16[2,9,32,128], index: 2, kind: input, shape index: {}]
  %s3 = inlined_call_operand.vmem [shape: bf16[1,9,32,128], index: 3, kind: input, shape index: {}]
  %s4 = inlined_call_operand.vmem [shape: f32[2,1,128], index: 4, kind: input, shape index: {}]
  %s5 = inlined_call_operand.vmem [shape: f32[288,1], index: 5, kind: input, shape index: {}]
  %s6 = inlined_call_operand.vmem [shape: f32[2,288,32], index: 6, kind: output, shape index: {}]
  %s7 = sld [smem:[#allocation0]]
  $region65: #{convlstm_encoder_forward.1} parent=0
    _
  %s9 = ssub.s32 1, %s7
  %s10 = scalar_select 0, %s9, %s7
  loop: start=0, step=1, limit=18
  $region2: #{convlstm_encoder_forward.1} parent=0 // loop_pre_header
    _
  $region3: #{convlstm_encoder_forward.1} parent=0 // loop_header
    %s12 = sphi 0, %s16
    %p13 = scmp.ge.s32.totalorder %s12, 18
    %s19 = sphi 0, %s31
    %s20 = sphi 0, %s27
    %s21 = sphi 0, %s19
    %s22 = sphi 0, %s20
    %s23 = sphi 0, %s21
    %s24 = sphi 0, %s22
    %s36 = sphi 0, %s38
    %s39 = sphi 0, %s36
    %s40 = sphi 0, %s39
    %s56 = sphi 0, %s40
    %s60 = sphi 0, %s60
    %s62 = sphi 0, %s60
    %s63 = sphi 0, %s62
    %s77 = sphi 0, %s63
    %s81 = sphi 0, %s81
    %s83 = sphi 0, %s81
    %s84 = sphi 0, %s83
    %s98 = sphi 0, %s84
    %s102 = sphi 0, %s102
    %s104 = sphi 0, %s102
    %s105 = sphi 0, %s104
    %s119 = sphi 0, %s105
    %s123 = sphi 0, %s123
    %s125 = sphi 0, %s123
    %s126 = sphi 0, %s125
    %s140 = sphi 0, %s126
    %s144 = sphi 0, %s144
    %s146 = sphi 0, %s144
    %s147 = sphi 0, %s146
    %s161 = sphi 0, %s147
    %s167 = sphi 0, %s169
    %s170 = sphi 0, %s167
    %s171 = sphi 0, %s170
    %s187 = sphi 0, %s171
  $region4: #{convlstm_encoder_forward.1} parent=0 // loop_header_branch
    %15 = sbr.rel (%p13) target = $region8
  $region5: #{convlstm_encoder_forward.1} parent=0 // loop_body
    %s17 = ssub.s32 %s12, 1
    %s18 = ssub.s32 %s12, 2
    %s25 = sadd.s32 1, %s20
    %p26 = scmp.ge.s32.totalorder %s25, 8
    %s27 = scalar_select %p26, 0, %s25
    %s28 = sadd.s32 1, %s19
    %s29 = scalar_select %p26, %s28, %s19
    %p30 = scmp.ge.s32.totalorder %s29, 2
    %s31 = scalar_select %p30, 0, %s29
    %s32 = ssub.s32 %s19, %s31
    %s33 = ssub.s32 %s20, %s27
    %s34 = sor.u32 %s32, %s33
    %p35 = scmp.eq.s32.totalorder %s34, 0
    %s37 = sadd.s32 %s36, 1
    %s38 = scalar_select %p35, %s36, %s37
    %p41 = pneg %p35
    %p42 = scmp.eq.s32.totalorder %s12, 15
    %p43 = por %p41, %p42
    %p44 = scmp.ne.s32.totalorder %s36, %s39
    %p45 = scmp.eq.s32.totalorder %s12, 0
    %p46 = por %p44, %p45
    %p47 = scmp.ne.s32.totalorder %s36, %s39
    %p48 = scmp.eq.s32.totalorder %s17, 15
    %p49 = por %p47, %p48
    %p50 = scmp.ne.s32.totalorder %s39, %s40
    %p51 = scmp.eq.s32.totalorder %s17, 0
    %p52 = por %p50, %p51
    %p53 = scmp.ne.s32.totalorder %s39, %s40
    %p54 = scmp.eq.s32.totalorder %s18, 15
    %p55 = por %p53, %p54
    %p57 = scmp.ne.s32.totalorder %s40, %s56
    %p58 = scmp.eq.s32.totalorder %s18, 0
    %p59 = por %p57, %p58
    %s61 = sadd.s32 %s60, 1
    %p64 = scmp.eq.s32.totalorder %s12, 15
    %p65 = scmp.ne.s32.totalorder %s60, %s62
    %p66 = scmp.eq.s32.totalorder %s12, 0
    %p67 = por %p65, %p66
    %p68 = scmp.ne.s32.totalorder %s60, %s62
    %p69 = scmp.eq.s32.totalorder %s17, 15
    %p70 = por %p68, %p69
    %p71 = scmp.ne.s32.totalorder %s62, %s63
    %p72 = scmp.eq.s32.totalorder %s17, 0
    %p73 = por %p71, %p72
    %p74 = scmp.ne.s32.totalorder %s62, %s63
    %p75 = scmp.eq.s32.totalorder %s18, 15
    %p76 = por %p74, %p75
    %p78 = scmp.ne.s32.totalorder %s63, %s77
    %p79 = scmp.eq.s32.totalorder %s18, 0
    %p80 = por %p78, %p79
    %s82 = sadd.s32 %s81, 1
    %p85 = scmp.eq.s32.totalorder %s12, 15
    %p86 = scmp.ne.s32.totalorder %s81, %s83
    %p87 = scmp.eq.s32.totalorder %s12, 0
    %p88 = por %p86, %p87
    %p89 = scmp.ne.s32.totalorder %s81, %s83
    %p90 = scmp.eq.s32.totalorder %s17, 15
    %p91 = por %p89, %p90
    %p92 = scmp.ne.s32.totalorder %s83, %s84
    %p93 = scmp.eq.s32.totalorder %s17, 0
    %p94 = por %p92, %p93
    %p95 = scmp.ne.s32.totalorder %s83, %s84
    %p96 = scmp.eq.s32.totalorder %s18, 15
    %p97 = por %p95, %p96
    %p99 = scmp.ne.s32.totalorder %s84, %s98
    %p100 = scmp.eq.s32.totalorder %s18, 0
    %p101 = por %p99, %p100
    %s103 = sadd.s32 %s102, 1
    %p106 = scmp.eq.s32.totalorder %s12, 15
    %p107 = scmp.ne.s32.totalorder %s102, %s104
    %p108 = scmp.eq.s32.totalorder %s12, 0
    %p109 = por %p107, %p108
    %p110 = scmp.ne.s32.totalorder %s102, %s104
    %p111 = scmp.eq.s32.totalorder %s17, 15
    %p112 = por %p110, %p111
    %p113 = scmp.ne.s32.totalorder %s104, %s105
    %p114 = scmp.eq.s32.totalorder %s17, 0
    %p115 = por %p113, %p114
    %p116 = scmp.ne.s32.totalorder %s104, %s105
    %p117 = scmp.eq.s32.totalorder %s18, 15
    %p118 = por %p116, %p117
    %p120 = scmp.ne.s32.totalorder %s105, %s119
    %p121 = scmp.eq.s32.totalorder %s18, 0
    %p122 = por %p120, %p121
    %s124 = sadd.s32 %s123, 1
    %p127 = scmp.eq.s32.totalorder %s12, 15
    %p128 = scmp.ne.s32.totalorder %s123, %s125
    %p129 = scmp.eq.s32.totalorder %s12, 0
    %p130 = por %p128, %p129
    %p131 = scmp.ne.s32.totalorder %s123, %s125
    %p132 = scmp.eq.s32.totalorder %s17, 15
    %p133 = por %p131, %p132
    %p134 = scmp.ne.s32.totalorder %s125, %s126
    %p135 = scmp.eq.s32.totalorder %s17, 0
    %p136 = por %p134, %p135
    %p137 = scmp.ne.s32.totalorder %s125, %s126
    %p138 = scmp.eq.s32.totalorder %s18, 15
    %p139 = por %p137, %p138
    %p141 = scmp.ne.s32.totalorder %s126, %s140
    %p142 = scmp.eq.s32.totalorder %s18, 0
    %p143 = por %p141, %p142
    %s145 = sadd.s32 %s144, 1
    %p148 = scmp.eq.s32.totalorder %s12, 15
    %p149 = scmp.ne.s32.totalorder %s144, %s146
    %p150 = scmp.eq.s32.totalorder %s12, 0
    %p151 = por %p149, %p150
    %p152 = scmp.ne.s32.totalorder %s144, %s146
    %p153 = scmp.eq.s32.totalorder %s17, 15
    %p154 = por %p152, %p153
    %p155 = scmp.ne.s32.totalorder %s146, %s147
    %p156 = scmp.eq.s32.totalorder %s17, 0
    %p157 = por %p155, %p156
    %p158 = scmp.ne.s32.totalorder %s146, %s147
    %p159 = scmp.eq.s32.totalorder %s18, 15
    %p160 = por %p158, %p159
    %p162 = scmp.ne.s32.totalorder %s147, %s161
    %p163 = scmp.eq.s32.totalorder %s18, 0
    %p164 = por %p162, %p163
    %s165 = ssub.s32 %s19, %s31
    %p166 = scmp.eq.s32.totalorder %s165, 0
    %s168 = sadd.s32 %s167, 1
    %s169 = scalar_select %p166, %s167, %s168
    %p172 = pneg %p166
    %p173 = scmp.eq.s32.totalorder %s12, 15
    %p174 = por %p172, %p173
    %p175 = scmp.ne.s32.totalorder %s167, %s170
    %p176 = scmp.eq.s32.totalorder %s12, 0
    %p177 = por %p175, %p176
    %p178 = scmp.ne.s32.totalorder %s167, %s170
    %p179 = scmp.eq.s32.totalorder %s17, 15
    %p180 = por %p178, %p179
    %p181 = scmp.ne.s32.totalorder %s170, %s171
    %p182 = scmp.eq.s32.totalorder %s17, 0
    %p183 = por %p181, %p182
    %p184 = scmp.ne.s32.totalorder %s170, %s171
    %p185 = scmp.eq.s32.totalorder %s18, 15
    %p186 = por %p184, %p185
    %p188 = scmp.ne.s32.totalorder %s171, %s187
    %p189 = scmp.eq.s32.totalorder %s18, 0
    %p190 = por %p188, %p189
    %p191 = scmp.le.s32.totalorder 1, %s12
    %p192 = scmp.lt.s32.totalorder %s12, 17
    %p193 = pnand %p191, %p192
    %p194 = pneg %p193
    // Predicated region
    $region9: #{convlstm_encoder_forward.1} parent=5 // pred_check
      _
    $region10: #{convlstm_encoder_forward.1} parent=5 // pred_check_branch
      %196 = sbr.rel (%p193) target = $region12
    $region11: #{convlstm_encoder_forward.1} parent=5 // pred_region
      %s197 = ssub.s32 %s12, 1
      // Predicated region
      $region13: #{convlstm_encoder_forward.1} parent=11 // pred_check
        %p198 = pneg %p73
      $region14: #{convlstm_encoder_forward.1} parent=11 // pred_check_branch
        %200 = sbr.rel (%p198) target = $region16
      $region15: #{convlstm_encoder_forward.1} parent=11 // pred_region
        _
      $region16: #{convlstm_encoder_forward.1} parent=11 // pred_fallthru
        _
      // Predicated region
      $region17: #{convlstm_encoder_forward.1} parent=11 // pred_check
        %p201 = pneg %p94
      $region18: #{convlstm_encoder_forward.1} parent=11 // pred_check_branch
        %203 = sbr.rel (%p201) target = $region20
      $region19: #{convlstm_encoder_forward.1} parent=11 // pred_region
        _
      $region20: #{convlstm_encoder_forward.1} parent=11 // pred_fallthru
        _
      // Predicated region
      $region21: #{convlstm_encoder_forward.1} parent=11 // pred_check
        %p204 = pneg %p115
      $region22: #{convlstm_encoder_forward.1} parent=11 // pred_check_branch
        %206 = sbr.rel (%p204) target = $region24
      $region23: #{convlstm_encoder_forward.1} parent=11 // pred_region
        _
      $region24: #{convlstm_encoder_forward.1} parent=11 // pred_fallthru
        _
      // Predicated region
      $region25: #{convlstm_encoder_forward.1} parent=11 // pred_check
        %p207 = pneg %p136
      $region26: #{convlstm_encoder_forward.1} parent=11 // pred_check_branch
        %209 = sbr.rel (%p207) target = $region28
      $region27: #{convlstm_encoder_forward.1} parent=11 // pred_region
        _
      $region28: #{convlstm_encoder_forward.1} parent=11 // pred_fallthru
        _
      // Predicated region
      $region29: #{convlstm_encoder_forward.1} parent=11 // pred_check
        %p210 = pneg %p157
      $region30: #{convlstm_encoder_forward.1} parent=11 // pred_check_branch
        %212 = sbr.rel (%p210) target = $region32
      $region31: #{convlstm_encoder_forward.1} parent=11 // pred_region
        _
      $region32: #{convlstm_encoder_forward.1} parent=11 // pred_fallthru
        _
    $region12: #{convlstm_encoder_forward.1} parent=5 // pred_fallthru
      _
    %p213 = scmp.lt.s32.totalorder %s12, 16
    // Predicated region
    $region33: #{convlstm_encoder_forward.1} parent=5 // pred_check
      %p214 = pneg %p213
    $region34: #{convlstm_encoder_forward.1} parent=5 // pred_check_branch
      %216 = sbr.rel (%p214) target = $region36
    $region35: #{convlstm_encoder_forward.1} parent=5 // pred_region
      // Predicated region
      $region37: #{convlstm_encoder_forward.1} parent=35 // pred_check
        %p217 = pneg %p46
      $region38: #{convlstm_encoder_forward.1} parent=35 // pred_check_branch
        %219 = sbr.rel (%p217) target = $region40
      $region39: #{convlstm_encoder_forward.1} parent=35 // pred_region
        %p220 = scmp.lt.s32.totalorder %s19, 1
        %s221 = scalar_select %p220, %s19, 1
        %p222 = scmp.lt.s32.totalorder %s20, 7
        %s223 = scalar_select %p222, %s20, 7
        %s224 = smul.addr %s223, 36
        %s225 = smul.addr %s221, 288
        %s226 = sadd.s32 %s224, %s225
        %s227 = smul.addr %s226, 4
        %s228 = scalar_lea.vmem %s0, %s227
      $region40: #{convlstm_encoder_forward.1} parent=35 // pred_fallthru
        _
    $region36: #{convlstm_encoder_forward.1} parent=5 // pred_fallthru
      _
    %p229 = scmp.le.s32.totalorder 1, %s12
    %p230 = scmp.lt.s32.totalorder %s12, 17
    %p231 = pnand %p229, %p230
    %p232 = pneg %p231
    // Predicated region
    $region41: #{convlstm_encoder_forward.1} parent=5 // pred_check
      _
    $region42: #{convlstm_encoder_forward.1} parent=5 // pred_check_branch
      %234 = sbr.rel (%p231) target = $region44
    $region43: #{convlstm_encoder_forward.1} parent=5 // pred_region
      %s235 = ssub.s32 %s12, 1
      %p236 = scmp.lt.s32.totalorder %s21, 1
      %s237 = scalar_select %p236, %s21, 1
      %p238 = scmp.lt.s32.totalorder %s22, 7
      %s239 = scalar_select %p238, %s22, 7
      %s240 = smul.addr %s239, 36
      %s241 = smul.addr %s237, 288
      %s242 = sadd.s32 %s240, %s241
      %s243 = smul.addr %s242, 4
      %s244 = scalar_lea.vmem %s0, %s243
      %p245 = pneg %p52
      %p246 = pneg %p49
      %p247 = pneg %p73
      %p248 = pneg %p70
      %p249 = pneg %p94
      %p250 = pneg %p91
      %p251 = pneg %p115
      %p252 = pneg %p112
      %p253 = pneg %p136
      %p254 = pneg %p133
      %p255 = pneg %p157
      %p256 = pneg %p154
      %p257 = pneg %p183
      %p258 = pneg %p180
      %p259 = scmp.lt.s32.totalorder %s21, 1
      %s260 = scalar_select %p259, %s21, 1
      %s261 = smul.addr %s260, 36
      %s262 = smul.addr %s261, 8
      %s263 = scalar_lea.vmem %s6, %s262
      %p264 = scmp.lt.s32.totalorder %s21, 1
      %s265 = scalar_select %p264, %s21, 1
      %p266 = scmp.lt.s32.totalorder %s22, 7
      %s267 = scalar_select %p266, %s22, 7
      %s268 = smul.addr %s267, 36
      %s269 = smul.addr %s265, 288
      %s270 = sadd.s32 %s268, %s269
      %s271 = smul.addr %s270, 4
      %s272 = scalar_lea.vmem %s0, %s271
      %p273 = scmp.lt.s32.totalorder %s21, 1
      %s274 = scalar_select %p273, %s21, 1
      %s275 = smul.addr %s274, 36
      %s276 = smul.addr %s275, 8
      %s277 = scalar_lea.vmem %s6, %s276
      %p279 = scmp.eq.s32.totalorder %s22, 0
      // Predicated region
      $region45: #{convlstm_encoder_forward.1} parent=43 // pred_check
        %p280 = pneg %p279
      $region46: #{convlstm_encoder_forward.1} parent=43 // pred_check_branch
        %282 = sbr.rel (%p280) target = $region48
      $region47: #{convlstm_encoder_forward.1} parent=43 // pred_region
        %vm283 = vcmask 261120
        %284 = vst.msk [vmem:[#allocation2] sm:$0xff] %vm283, 0.0
        %285 = vst.msk [vmem:[#allocation2 + $0x8] sm:$0xff] %vm283, 0.0
        %286 = vst.msk [vmem:[#allocation2 + $0x10] sm:$0xff] %vm283, 0.0
        %287 = vst.msk [vmem:[#allocation2 + $0x18] sm:$0xff] %vm283, 0.0
        %288 = vst.msk [vmem:[#allocation2 + $0x20] sm:$0xff] %vm283, 0.0
        %289 = vst.msk [vmem:[#allocation2 + $0x28] sm:$0xff] %vm283, 0.0
        %290 = vst.msk [vmem:[#allocation2 + $0x30] sm:$0xff] %vm283, 0.0
        %291 = vst.msk [vmem:[#allocation2 + $0x38] sm:$0xff] %vm283, 0.0
        %292 = vst.msk [vmem:[#allocation2 + $0x40] sm:$0xff] %vm283, 0.0
        %293 = vst.msk [vmem:[#allocation2 + $0x48] sm:$0xff] %vm283, 0.0
        %294 = vst.msk [vmem:[#allocation2 + $0x50] sm:$0xff] %vm283, 0.0
        %295 = vst.msk [vmem:[#allocation2 + $0x58] sm:$0xff] %vm283, 0.0
        %296 = vst.msk [vmem:[#allocation2 + $0x60] sm:$0xff] %vm283, 0.0
        %297 = vst.msk [vmem:[#allocation2 + $0x68] sm:$0xff] %vm283, 0.0
        %298 = vst.msk [vmem:[#allocation2 + $0x70] sm:$0xff] %vm283, 0.0
        %299 = vst.msk [vmem:[#allocation2 + $0x78] sm:$0xff] %vm283, 0.0
        %300 = vst.msk [vmem:[#allocation2 + $0x80] sm:$0xff] %vm283, 0.0
        %301 = vst.msk [vmem:[#allocation2 + $0x88] sm:$0xff] %vm283, 0.0
        %302 = vst.msk [vmem:[#allocation2 + $0x90] sm:$0xff] %vm283, 0.0
        %303 = vst.msk [vmem:[#allocation2 + $0x98] sm:$0xff] %vm283, 0.0
        %304 = vst.msk [vmem:[#allocation2 + $0xa0] sm:$0xff] %vm283, 0.0
        %305 = vst.msk [vmem:[#allocation2 + $0xa8] sm:$0xff] %vm283, 0.0
        %306 = vst.msk [vmem:[#allocation2 + $0xb0] sm:$0xff] %vm283, 0.0
        %307 = vst.msk [vmem:[#allocation2 + $0xb8] sm:$0xff] %vm283, 0.0
        %308 = vst.msk [vmem:[#allocation2 + $0xc0] sm:$0xff] %vm283, 0.0
        %309 = vst.msk [vmem:[#allocation2 + $0xc8] sm:$0xff] %vm283, 0.0
        %310 = vst.msk [vmem:[#allocation2 + $0xd0] sm:$0xff] %vm283, 0.0
        %311 = vst.msk [vmem:[#allocation2 + $0xd8] sm:$0xff] %vm283, 0.0
        %312 = vst.msk [vmem:[#allocation2 + $0xe0] sm:$0xff] %vm283, 0.0
        %313 = vst.msk [vmem:[#allocation2 + $0xe8] sm:$0xff] %vm283, 0.0
        %314 = vst.msk [vmem:[#allocation2 + $0xf0] sm:$0xff] %vm283, 0.0
        %315 = vst.msk [vmem:[#allocation2 + $0xf8] sm:$0xff] %vm283, 0.0
        %316 = vst.msk [vmem:[#allocation2 + $0x100] sm:$0xff] %vm283, 0.0
        %317 = vst.msk [vmem:[#allocation2 + $0x108] sm:$0xff] %vm283, 0.0
        %318 = vst.msk [vmem:[#allocation2 + $0x110] sm:$0xff] %vm283, 0.0
        %319 = vst.msk [vmem:[#allocation2 + $0x118] sm:$0xff] %vm283, 0.0
        %320 = vst.msk [vmem:[#allocation2 + $0x120] sm:$0xff] %vm283, 0.0
        %321 = vst.msk [vmem:[#allocation2 + $0x128] sm:$0xff] %vm283, 0.0
        %322 = vst.msk [vmem:[#allocation2 + $0x130] sm:$0xff] %vm283, 0.0
        %323 = vst.msk [vmem:[#allocation2 + $0x138] sm:$0xff] %vm283, 0.0
        %324 = vst.msk [vmem:[#allocation2 + $0x140] sm:$0xff] %vm283, 0.0
        %325 = vst.msk [vmem:[#allocation2 + $0x148] sm:$0xff] %vm283, 0.0
        %vm326 = vcmask 259072
        %327 = vst.msk [vmem:[#allocation2 + $0x150] sm:$0x3f] %vm326, 0.0
        %328 = vst.msk [vmem:[#allocation2 + $0x158] sm:$0xff] %vm283, 0.0
        %329 = vst.msk [vmem:[#allocation2 + $0x160] sm:$0xff] %vm283, 0.0
        %330 = vst.msk [vmem:[#allocation2 + $0x168] sm:$0xff] %vm283, 0.0
        %331 = vst.msk [vmem:[#allocation2 + $0x170] sm:$0xff] %vm283, 0.0
        %332 = vst.msk [vmem:[#allocation2 + $0x178] sm:$0xff] %vm283, 0.0
        %333 = vst.msk [vmem:[#allocation2 + $0x180] sm:$0xff] %vm283, 0.0
        %334 = vst.msk [vmem:[#allocation2 + $0x188] sm:$0xff] %vm283, 0.0
        %335 = vst.msk [vmem:[#allocation2 + $0x190] sm:$0xff] %vm283, 0.0
        %336 = vst.msk [vmem:[#allocation2 + $0x198] sm:$0xff] %vm283, 0.0
        %337 = vst.msk [vmem:[#allocation2 + $0x1a0] sm:$0xff] %vm283, 0.0
        %338 = vst.msk [vmem:[#allocation2 + $0x1a8] sm:$0xff] %vm283, 0.0
        %339 = vst.msk [vmem:[#allocation2 + $0x1b0] sm:$0xff] %vm283, 0.0
        %340 = vst.msk [vmem:[#allocation2 + $0x1b8] sm:$0xff] %vm283, 0.0
        %341 = vst.msk [vmem:[#allocation2 + $0x1c0] sm:$0xff] %vm283, 0.0
        %342 = vst.msk [vmem:[#allocation2 + $0x1c8] sm:$0xff] %vm283, 0.0
        %343 = vst.msk [vmem:[#allocation2 + $0x1d0] sm:$0xff] %vm283, 0.0
        %344 = vst.msk [vmem:[#allocation2 + $0x1d8] sm:$0xff] %vm283, 0.0
        %345 = vst.msk [vmem:[#allocation2 + $0x1e0] sm:$0xff] %vm283, 0.0
        %346 = vst.msk [vmem:[#allocation2 + $0x1e8] sm:$0xff] %vm283, 0.0
        %347 = vst.msk [vmem:[#allocation2 + $0x1f0] sm:$0xff] %vm283, 0.0
        %348 = vst.msk [vmem:[#allocation2 + $0x1f8] sm:$0xff] %vm283, 0.0
        %349 = vst.msk [vmem:[#allocation2 + $0x200] sm:$0xff] %vm283, 0.0
        %350 = vst.msk [vmem:[#allocation2 + $0x208] sm:$0xff] %vm283, 0.0
        %351 = vst.msk [vmem:[#allocation2 + $0x210] sm:$0xff] %vm283, 0.0
        %352 = vst.msk [vmem:[#allocation2 + $0x218] sm:$0xff] %vm283, 0.0
        %353 = vst.msk [vmem:[#allocation2 + $0x220] sm:$0xff] %vm283, 0.0
        %354 = vst.msk [vmem:[#allocation2 + $0x228] sm:$0xff] %vm283, 0.0
        %355 = vst.msk [vmem:[#allocation2 + $0x230] sm:$0xff] %vm283, 0.0
        %356 = vst.msk [vmem:[#allocation2 + $0x238] sm:$0xff] %vm283, 0.0
        %357 = vst.msk [vmem:[#allocation2 + $0x240] sm:$0xff] %vm283, 0.0
        %358 = vst.msk [vmem:[#allocation2 + $0x248] sm:$0xff] %vm283, 0.0
        %359 = vst.msk [vmem:[#allocation2 + $0x250] sm:$0xff] %vm283, 0.0
        %360 = vst.msk [vmem:[#allocation2 + $0x258] sm:$0xff] %vm283, 0.0
        %361 = vst.msk [vmem:[#allocation2 + $0x260] sm:$0xff] %vm283, 0.0
        %362 = vst.msk [vmem:[#allocation2 + $0x268] sm:$0xff] %vm283, 0.0
        %363 = vst.msk [vmem:[#allocation2 + $0x270] sm:$0xff] %vm283, 0.0
        %364 = vst.msk [vmem:[#allocation2 + $0x278] sm:$0xff] %vm283, 0.0
        %365 = vst.msk [vmem:[#allocation2 + $0x280] sm:$0xff] %vm283, 0.0
        %366 = vst.msk [vmem:[#allocation2 + $0x288] sm:$0xff] %vm283, 0.0
        %367 = vst.msk [vmem:[#allocation2 + $0x290] sm:$0xff] %vm283, 0.0
        %368 = vst.msk [vmem:[#allocation2 + $0x298] sm:$0xff] %vm283, 0.0
        %369 = vst.msk [vmem:[#allocation2 + $0x2a0] sm:$0xff] %vm283, 0.0
        %370 = vst.msk [vmem:[#allocation2 + $0x2a8] sm:$0x3f] %vm326, 0.0
        %371 = vst.msk [vmem:[#allocation3] sm:$0xff] %vm283, 0.0
        %372 = vst.msk [vmem:[#allocation3 + $0x8] sm:$0xff] %vm283, 0.0
        %373 = vst.msk [vmem:[#allocation3 + $0x10] sm:$0xff] %vm283, 0.0
        %374 = vst.msk [vmem:[#allocation3 + $0x18] sm:$0xff] %vm283, 0.0
        %375 = vst.msk [vmem:[#allocation3 + $0x20] sm:$0xff] %vm283, 0.0
        %376 = vst.msk [vmem:[#allocation3 + $0x28] sm:$0xff] %vm283, 0.0
        %377 = vst.msk [vmem:[#allocation3 + $0x30] sm:$0xff] %vm283, 0.0
        %378 = vst.msk [vmem:[#allocation3 + $0x38] sm:$0xff] %vm283, 0.0
        %379 = vst.msk [vmem:[#allocation3 + $0x40] sm:$0xff] %vm283, 0.0
        %380 = vst.msk [vmem:[#allocation3 + $0x48] sm:$0xff] %vm283, 0.0
        %381 = vst.msk [vmem:[#allocation3 + $0x50] sm:$0xff] %vm283, 0.0
        %382 = vst.msk [vmem:[#allocation3 + $0x58] sm:$0xff] %vm283, 0.0
        %383 = vst.msk [vmem:[#allocation3 + $0x60] sm:$0xff] %vm283, 0.0
        %384 = vst.msk [vmem:[#allocation3 + $0x68] sm:$0xff] %vm283, 0.0
        %385 = vst.msk [vmem:[#allocation3 + $0x70] sm:$0xff] %vm283, 0.0
        %386 = vst.msk [vmem:[#allocation3 + $0x78] sm:$0xff] %vm283, 0.0
        %387 = vst.msk [vmem:[#allocation3 + $0x80] sm:$0xff] %vm283, 0.0
        %388 = vst.msk [vmem:[#allocation3 + $0x88] sm:$0xff] %vm283, 0.0
        %389 = vst.msk [vmem:[#allocation3 + $0x90] sm:$0xff] %vm283, 0.0
        %390 = vst.msk [vmem:[#allocation3 + $0x98] sm:$0xff] %vm283, 0.0
        %391 = vst.msk [vmem:[#allocation3 + $0xa0] sm:$0xff] %vm283, 0.0
        %392 = vst.msk [vmem:[#allocation3 + $0xa8] sm:$0xff] %vm283, 0.0
        %393 = vst.msk [vmem:[#allocation3 + $0xb0] sm:$0xff] %vm283, 0.0
        %394 = vst.msk [vmem:[#allocation3 + $0xb8] sm:$0xff] %vm283, 0.0
        %395 = vst.msk [vmem:[#allocation3 + $0xc0] sm:$0xff] %vm283, 0.0
        %396 = vst.msk [vmem:[#allocation3 + $0xc8] sm:$0xff] %vm283, 0.0
        %397 = vst.msk [vmem:[#allocation3 + $0xd0] sm:$0xff] %vm283, 0.0
        %398 = vst.msk [vmem:[#allocation3 + $0xd8] sm:$0xff] %vm283, 0.0
        %399 = vst.msk [vmem:[#allocation3 + $0xe0] sm:$0xff] %vm283, 0.0
        %400 = vst.msk [vmem:[#allocation3 + $0xe8] sm:$0xff] %vm283, 0.0
        %401 = vst.msk [vmem:[#allocation3 + $0xf0] sm:$0xff] %vm283, 0.0
        %402 = vst.msk [vmem:[#allocation3 + $0xf8] sm:$0xff] %vm283, 0.0
        %403 = vst.msk [vmem:[#allocation3 + $0x100] sm:$0xff] %vm283, 0.0
        %404 = vst.msk [vmem:[#allocation3 + $0x108] sm:$0xff] %vm283, 0.0
        %405 = vst.msk [vmem:[#allocation3 + $0x110] sm:$0xff] %vm283, 0.0
        %406 = vst.msk [vmem:[#allocation3 + $0x118] sm:$0xff] %vm283, 0.0
        %407 = vst.msk [vmem:[#allocation3 + $0x120] sm:$0xff] %vm283, 0.0
        %408 = vst.msk [vmem:[#allocation3 + $0x128] sm:$0xff] %vm283, 0.0
        %409 = vst.msk [vmem:[#allocation3 + $0x130] sm:$0xff] %vm283, 0.0
        %410 = vst.msk [vmem:[#allocation3 + $0x138] sm:$0xff] %vm283, 0.0
        %411 = vst.msk [vmem:[#allocation3 + $0x140] sm:$0xff] %vm283, 0.0
        %412 = vst.msk [vmem:[#allocation3 + $0x148] sm:$0xff] %vm283, 0.0
        %413 = vst.msk [vmem:[#allocation3 + $0x150] sm:$0xff] %vm283, 0.0
        %414 = vst.msk [vmem:[#allocation3 + $0x158] sm:$0xff] %vm283, 0.0
        %415 = vst.msk [vmem:[#allocation3 + $0x160] sm:$0xff] %vm283, 0.0
        %416 = vst.msk [vmem:[#allocation3 + $0x168] sm:$0xff] %vm283, 0.0
        %417 = vst.msk [vmem:[#allocation3 + $0x170] sm:$0xff] %vm283, 0.0
        %418 = vst.msk [vmem:[#allocation3 + $0x178] sm:$0xff] %vm283, 0.0
        %419 = vst.msk [vmem:[#allocation3 + $0x180] sm:$0xff] %vm283, 0.0
        %420 = vst.msk [vmem:[#allocation3 + $0x188] sm:$0xff] %vm283, 0.0
        %421 = vst.msk [vmem:[#allocation3 + $0x190] sm:$0xff] %vm283, 0.0
        %422 = vst.msk [vmem:[#allocation3 + $0x198] sm:$0xff] %vm283, 0.0
        %423 = vst.msk [vmem:[#allocation3 + $0x1a0] sm:$0xff] %vm283, 0.0
        %424 = vst.msk [vmem:[#allocation3 + $0x1a8] sm:$0xff] %vm283, 0.0
        %425 = vst.msk [vmem:[#allocation3 + $0x1b0] sm:$0xff] %vm283, 0.0
        %426 = vst.msk [vmem:[#allocation3 + $0x1b8] sm:$0xff] %vm283, 0.0
        %427 = vst.msk [vmem:[#allocation3 + $0x1c0] sm:$0xff] %vm283, 0.0
        %428 = vst.msk [vmem:[#allocation3 + $0x1c8] sm:$0xff] %vm283, 0.0
        %429 = vst.msk [vmem:[#allocation3 + $0x1d0] sm:$0xff] %vm283, 0.0
        %430 = vst.msk [vmem:[#allocation3 + $0x1d8] sm:$0xff] %vm283, 0.0
        %431 = vst.msk [vmem:[#allocation3 + $0x1e0] sm:$0xff] %vm283, 0.0
        %432 = vst.msk [vmem:[#allocation3 + $0x1e8] sm:$0xff] %vm283, 0.0
        %433 = vst.msk [vmem:[#allocation3 + $0x1f0] sm:$0xff] %vm283, 0.0
        %434 = vst.msk [vmem:[#allocation3 + $0x1f8] sm:$0xff] %vm283, 0.0
        %435 = vst.msk [vmem:[#allocation3 + $0x200] sm:$0xff] %vm283, 0.0
        %436 = vst.msk [vmem:[#allocation3 + $0x208] sm:$0xff] %vm283, 0.0
        %437 = vst.msk [vmem:[#allocation3 + $0x210] sm:$0xff] %vm283, 0.0
        %438 = vst.msk [vmem:[#allocation3 + $0x218] sm:$0xff] %vm283, 0.0
        %439 = vst.msk [vmem:[#allocation3 + $0x220] sm:$0xff] %vm283, 0.0
        %440 = vst.msk [vmem:[#allocation3 + $0x228] sm:$0xff] %vm283, 0.0
        %441 = vst.msk [vmem:[#allocation3 + $0x230] sm:$0xff] %vm283, 0.0
        %442 = vst.msk [vmem:[#allocation3 + $0x238] sm:$0xff] %vm283, 0.0
      $region48: #{convlstm_encoder_forward.1} parent=43 // pred_fallthru
        _
      %v443 = vld [vmem:[%s5] sm:$0xff]
      %v444 = vld [vmem:[%s5 + $0x8] sm:$0xff]
      %v445 = vld [vmem:[%s5 + $0x10] sm:$0xff]
      %v446 = vld [vmem:[%s5 + $0x18] sm:$0xff]
      %v447 = vld [vmem:[%s5 + $0x20] sm:$0xff]
      %v448 = vld [vmem:[%s5 + $0x28] sm:$0xff]
      %v449 = vld [vmem:[%s5 + $0x30] sm:$0xff]
      %v450 = vld [vmem:[%s5 + $0x38] sm:$0xff]
      %v451 = vld [vmem:[%s5 + $0x40] sm:$0xff]
      %v452 = vld [vmem:[%s5 + $0x48] sm:$0xff]
      %v453 = vld [vmem:[%s5 + $0x50] sm:$0xff]
      %v454 = vld [vmem:[%s5 + $0x58] sm:$0xff]
      %v455 = vld [vmem:[%s5 + $0x60] sm:$0xff]
      %v456 = vld [vmem:[%s5 + $0x68] sm:$0xff]
      %v457 = vld [vmem:[%s5 + $0x70] sm:$0xff]
      %v458 = vld [vmem:[%s5 + $0x78] sm:$0xff]
      %v459 = vld [vmem:[%s5 + $0x80] sm:$0xff]
      %v460 = vld [vmem:[%s5 + $0x88] sm:$0xff]
      %v461 = vld [vmem:[%s5 + $0x90] sm:$0xff]
      %v462 = vld [vmem:[%s5 + $0x98] sm:$0xff]
      %v463 = vld [vmem:[%s5 + $0xa0] sm:$0xff]
      %v464 = vld [vmem:[%s5 + $0xa8] sm:$0xff]
      %v465 = vld [vmem:[%s5 + $0xb0] sm:$0xff]
      %v466 = vld [vmem:[%s5 + $0xb8] sm:$0xff]
      %v467 = vld [vmem:[%s5 + $0xc0] sm:$0xff]
      %v468 = vld [vmem:[%s5 + $0xc8] sm:$0xff]
      %v469 = vld [vmem:[%s5 + $0xd0] sm:$0xff]
      %v470 = vld [vmem:[%s5 + $0xd8] sm:$0xff]
      %v471 = vld [vmem:[%s5 + $0xe0] sm:$0xff]
      %v472 = vld [vmem:[%s5 + $0xe8] sm:$0xff]
      %v473 = vld [vmem:[%s5 + $0xf0] sm:$0xff]
      %v474 = vld [vmem:[%s5 + $0xf8] sm:$0xff]
      %v475 = vld [vmem:[%s5 + $0x100] sm:$0xff]
      %v476 = vld [vmem:[%s5 + $0x108] sm:$0xff]
      %v477 = vld [vmem:[%s5 + $0x110] sm:$0xff]
      %v478 = vld [vmem:[%s5 + $0x118] sm:$0xff]
      %v479 = vld [vmem:[%s272] sm:$0xf]
      %v480 = vld [vmem:[%s272 + $0x4] sm:$0xf]
      %v481 = vld [vmem:[%s272 + $0x8] sm:$0xf]
      %v482 = vld [vmem:[%s272 + $0xc] sm:$0xf]
      %v483 = vld [vmem:[%s272 + $0x10] sm:$0xf]
      %v484 = vld [vmem:[%s272 + $0x14] sm:$0xf]
      %v485 = vld [vmem:[%s272 + $0x18] sm:$0xf]
      %v486 = vld [vmem:[%s272 + $0x1c] sm:$0xf]
      %v487 = vld [vmem:[%s272 + $0x20] sm:$0xf]
      %v488 = vld [vmem:[%s272 + $0x24] sm:$0xf]
      %v489 = vld [vmem:[%s272 + $0x28] sm:$0xf]
      %v490 = vld [vmem:[%s272 + $0x2c] sm:$0xf]
      %v491 = vld [vmem:[%s272 + $0x30] sm:$0xf]
      %v492 = vld [vmem:[%s272 + $0x34] sm:$0xf]
      %v493 = vld [vmem:[%s272 + $0x38] sm:$0xf]
      %v494 = vld [vmem:[%s272 + $0x3c] sm:$0xf]
      %v495 = vld [vmem:[%s272 + $0x40] sm:$0xf]
      %v496 = vld [vmem:[%s272 + $0x44] sm:$0xf]
      %v497 = vld [vmem:[%s272 + $0x48] sm:$0xf]
      %v498 = vld [vmem:[%s272 + $0x4c] sm:$0xf]
      %v499 = vld [vmem:[%s272 + $0x50] sm:$0xf]
      %v500 = vld [vmem:[%s272 + $0x54] sm:$0xf]
      %v501 = vld [vmem:[%s272 + $0x58] sm:$0xf]
      %v502 = vld [vmem:[%s272 + $0x5c] sm:$0xf]
      %v503 = vld [vmem:[%s272 + $0x60] sm:$0xf]
      %v504 = vld [vmem:[%s272 + $0x64] sm:$0xf]
      %v505 = vld [vmem:[%s272 + $0x68] sm:$0xf]
      %v506 = vld [vmem:[%s272 + $0x6c] sm:$0xf]
      %v507 = vld [vmem:[%s272 + $0x70] sm:$0xf]
      %v508 = vld [vmem:[%s272 + $0x74] sm:$0xf]
      %v509 = vld [vmem:[%s272 + $0x78] sm:$0xf]
      %v510 = vld [vmem:[%s272 + $0x7c] sm:$0xf]
      %v511 = vld [vmem:[%s272 + $0x80] sm:$0xf]
      %v512 = vld [vmem:[%s272 + $0x84] sm:$0xf]
      %v513 = vld [vmem:[%s272 + $0x88] sm:$0xf]
      %v514 = vld [vmem:[%s272 + $0x8c] sm:$0xf]
      %v515 = vld [vmem:[%s1] sm:$0xf]
      %v516 = vld [vmem:[%s1 + $0x4] sm:$0xf]
      %v517 = vld [vmem:[%s1 + $0x8] sm:$0xf]
      %v518 = vld [vmem:[%s1 + $0xc] sm:$0xf]
      %v519 = vld [vmem:[%s1 + $0x10] sm:$0xf]
      %v520 = vld [vmem:[%s1 + $0x14] sm:$0xf]
      %v521 = vld [vmem:[%s1 + $0x18] sm:$0xf]
      %v522 = vld [vmem:[%s1 + $0x1c] sm:$0xf]
      %v523 = vld [vmem:[%s1 + $0x20] sm:$0xf]
      %v524 = vld [vmem:[%s1 + $0x24] sm:$0xf]
      %v525 = vld [vmem:[%s1 + $0x28] sm:$0xf]
      %v526 = vld [vmem:[%s1 + $0x2c] sm:$0xf]
      %v527 = vld [vmem:[%s1 + $0x30] sm:$0xf]
      %v528 = vld [vmem:[%s1 + $0x34] sm:$0xf]
      %v529 = vld [vmem:[%s1 + $0x38] sm:$0xf]
      %v530 = vld [vmem:[%s1 + $0x3c] sm:$0xf]
      %v531 = vld [vmem:[#allocation2] sm:$0xff]
      %v532 = vld [vmem:[#allocation2 + $0x8] sm:$0xff]
      %v533 = vld [vmem:[#allocation2 + $0x10] sm:$0xff]
      %v534 = vld [vmem:[#allocation2 + $0x18] sm:$0xff]
      %v535 = vld [vmem:[#allocation2 + $0x20] sm:$0xff]
      %v536 = vld [vmem:[#allocation2 + $0x28] sm:$0xff]
      %v537 = vld [vmem:[#allocation2 + $0x30] sm:$0xff]
      %v538 = vld [vmem:[#allocation2 + $0x38] sm:$0xff]
      %v539 = vld [vmem:[#allocation2 + $0x40] sm:$0xff]
      %v540 = vld [vmem:[#allocation2 + $0x48] sm:$0xff]
      %v541 = vld [vmem:[#allocation2 + $0x50] sm:$0xff]
      %v542 = vld [vmem:[#allocation2 + $0x58] sm:$0xff]
      %v543 = vld [vmem:[#allocation2 + $0x60] sm:$0xff]
      %v544 = vld [vmem:[#allocation2 + $0x68] sm:$0xff]
      %v545 = vld [vmem:[#allocation2 + $0x70] sm:$0xff]
      %v546 = vld [vmem:[#allocation2 + $0x78] sm:$0xff]
      %v547 = vld [vmem:[#allocation2 + $0x80] sm:$0xff]
      %v548 = vld [vmem:[#allocation2 + $0x88] sm:$0xff]
      %v549 = vld [vmem:[#allocation2 + $0x90] sm:$0xff]
      %v550 = vld [vmem:[#allocation2 + $0x98] sm:$0xff]
      %v551 = vld [vmem:[#allocation2 + $0xa0] sm:$0xff]
      %v552 = vld [vmem:[#allocation2 + $0xa8] sm:$0xff]
      %v553 = vld [vmem:[#allocation2 + $0xb0] sm:$0xff]
      %v554 = vld [vmem:[#allocation2 + $0xb8] sm:$0xff]
      %v555 = vld [vmem:[#allocation2 + $0xc0] sm:$0xff]
      %v556 = vld [vmem:[#allocation2 + $0xc8] sm:$0xff]
      %v557 = vld [vmem:[#allocation2 + $0xd0] sm:$0xff]
      %v558 = vld [vmem:[#allocation2 + $0xd8] sm:$0xff]
      %v559 = vld [vmem:[#allocation2 + $0xe0] sm:$0xff]
      %v560 = vld [vmem:[#allocation2 + $0xe8] sm:$0xff]
      %v561 = vld [vmem:[#allocation2 + $0xf0] sm:$0xff]
      %v562 = vld [vmem:[#allocation2 + $0xf8] sm:$0xff]
      %v563 = vld [vmem:[#allocation2 + $0x100] sm:$0xff]
      %v564 = vld [vmem:[#allocation2 + $0x108] sm:$0xff]
      %v565 = vld [vmem:[#allocation2 + $0x110] sm:$0xff]
      %v566 = vld [vmem:[#allocation2 + $0x118] sm:$0xff]
      %v567 = vpack.c.bf16 %v532, %v531
      %v568 = vpack.c.bf16 %v534, %v533
      %v569 = vpack.c.bf16 %v536, %v535
      %v570 = vpack.c.bf16 %v538, %v537
      %v571 = vpack.c.bf16 %v540, %v539
      %v572 = vpack.c.bf16 %v542, %v541
      %v573 = vpack.c.bf16 %v544, %v543
      %v574 = vpack.c.bf16 %v546, %v545
      %v575 = vpack.c.bf16 %v548, %v547
      %v576 = vpack.c.bf16 %v550, %v549
      %v577 = vpack.c.bf16 %v552, %v551
      %v578 = vpack.c.bf16 %v554, %v553
      %v579 = vpack.c.bf16 %v556, %v555
      %v580 = vpack.c.bf16 %v558, %v557
      %v581 = vpack.c.bf16 %v560, %v559
      %v582 = vpack.c.bf16 %v562, %v561
      %v583 = vpack.c.bf16 %v564, %v563
      %v584 = vpack.c.bf16 %v566, %v565
      %v585 = vld [vmem:[%s2] sm:$0xf]
      %v586 = vld [vmem:[%s2 + $0x4] sm:$0xf]
      %v587 = vld [vmem:[%s2 + $0x8] sm:$0xf]
      %v588 = vld [vmem:[%s2 + $0xc] sm:$0xf]
      %v593 = vunpack.c.l.b16 %v585
      %v594 = vunpack.c.l.b16 %v586
      %v595 = vunpack.c.l.b16 %v587
      %v596 = vunpack.c.l.b16 %v588
      %v597 = vpack.c.b16 %v594, %v593
      %v598 = vpack.c.b16 %v596, %v595
      %vm601 = vcmask 261120
      %v603 = vsel %vm601, %v567, 0
      %v606 = vsel %vm601, %v568, 0
      %v609 = vsel %vm601, %v569, 0
      %v612 = vsel %vm601, %v570, 0
      %v615 = vsel %vm601, %v571, 0
      %v618 = vsel %vm601, %v572, 0
      %v621 = vsel %vm601, %v573, 0
      %v624 = vsel %vm601, %v574, 0
      %v627 = vsel %vm601, %v575, 0
      %v630 = vsel %vm601, %v576, 0
      %v633 = vsel %vm601, %v577, 0
      %v636 = vsel %vm601, %v578, 0
      %v639 = vsel %vm601, %v579, 0
      %v642 = vsel %vm601, %v580, 0
      %v645 = vsel %vm601, %v581, 0
      %v648 = vsel %vm601, %v582, 0
      %v651 = vsel %vm601, %v583, 0
      %v654 = vsel %vm601, %v584, 0
      %656 = vmatpush.bf16.msra.mxu0 0
      %657 = vmatpush.bf16.msra.mxu0 0
      %658 = vmatpush.bf16.msra.mxu0 0
      %659 = vmatpush.bf16.msra.mxu0 0
      %660 = vmatpush.bf16.msra.mxu0 0
      %661 = vmatpush.bf16.msra.mxu0 0
      %662 = vmatpush.bf16.msra.mxu0 %v598
      %663 = vmatpush.bf16.msra.mxu0 %v597
      %664 = vmatmul.bf16.gmra.mxu0 %v603
      %v665 = vpop.f32.mrf.mxu0
      %v666 = vadd.f32 0.0, %v665
      %v667 = vpop.f32.mrf.mxu0
      %v668 = vadd.f32 0.0, %v667
      %669 = vmatmul.bf16.gmra.mxu0 %v606
      %v670 = vpop.f32.mrf.mxu0
      %v671 = vadd.f32 0.0, %v670
      %v672 = vpop.f32.mrf.mxu0
      %v673 = vadd.f32 0.0, %v672
      %674 = vmatmul.bf16.gmra.mxu0 %v609
      %v675 = vpop.f32.mrf.mxu0
      %v676 = vadd.f32 0.0, %v675
      %v677 = vpop.f32.mrf.mxu0
      %v678 = vadd.f32 0.0, %v677
      %679 = vmatmul.bf16.gmra.mxu0 %v612
      %v680 = vpop.f32.mrf.mxu0
      %v681 = vadd.f32 0.0, %v680
      %v682 = vpop.f32.mrf.mxu0
      %v683 = vadd.f32 0.0, %v682
      %684 = vmatmul.bf16.gmra.mxu0 %v615
      %v685 = vpop.f32.mrf.mxu0
      %v686 = vadd.f32 0.0, %v685
      %v687 = vpop.f32.mrf.mxu0
      %v688 = vadd.f32 0.0, %v687
      %689 = vmatmul.bf16.gmra.mxu0 %v618
      %v690 = vpop.f32.mrf.mxu0
      %v691 = vadd.f32 0.0, %v690
      %v692 = vpop.f32.mrf.mxu0
      %v693 = vadd.f32 0.0, %v692
      %694 = vmatmul.bf16.gmra.mxu0 %v621
      %v695 = vpop.f32.mrf.mxu0
      %v696 = vadd.f32 0.0, %v695
      %v697 = vpop.f32.mrf.mxu0
      %v698 = vadd.f32 0.0, %v697
      %699 = vmatmul.bf16.gmra.mxu0 %v624
      %v700 = vpop.f32.mrf.mxu0
      %v701 = vadd.f32 0.0, %v700
      %v702 = vpop.f32.mrf.mxu0
      %v703 = vadd.f32 0.0, %v702
      %704 = vmatmul.bf16.gmra.mxu0 %v627
      %v705 = vpop.f32.mrf.mxu0
      %v706 = vadd.f32 0.0, %v705
      %v707 = vpop.f32.mrf.mxu0
      %v708 = vadd.f32 0.0, %v707
      %709 = vmatmul.bf16.gmra.mxu0 %v630
      %v710 = vpop.f32.mrf.mxu0
      %v711 = vadd.f32 0.0, %v710
      %v712 = vpop.f32.mrf.mxu0
      %v713 = vadd.f32 0.0, %v712
      %714 = vmatmul.bf16.gmra.mxu0 %v633
      %v715 = vpop.f32.mrf.mxu0
      %v716 = vadd.f32 0.0, %v715
      %v717 = vpop.f32.mrf.mxu0
      %v718 = vadd.f32 0.0, %v717
      %719 = vmatmul.bf16.gmra.mxu0 %v636
      %v720 = vpop.f32.mrf.mxu0
      %v721 = vadd.f32 0.0, %v720
      %v722 = vpop.f32.mrf.mxu0
      %v723 = vadd.f32 0.0, %v722
      %724 = vmatmul.bf16.gmra.mxu0 %v639
      %v725 = vpop.f32.mrf.mxu0
      %v726 = vadd.f32 0.0, %v725
      %v727 = vpop.f32.mrf.mxu0
      %v728 = vadd.f32 0.0, %v727
      %729 = vmatmul.bf16.gmra.mxu0 %v642
      %v730 = vpop.f32.mrf.mxu0
      %v731 = vadd.f32 0.0, %v730
      %v732 = vpop.f32.mrf.mxu0
      %v733 = vadd.f32 0.0, %v732
      %734 = vmatmul.bf16.gmra.mxu0 %v645
      %v735 = vpop.f32.mrf.mxu0
      %v736 = vadd.f32 0.0, %v735
      %v737 = vpop.f32.mrf.mxu0
      %v738 = vadd.f32 0.0, %v737
      %739 = vmatmul.bf16.gmra.mxu0 %v648
      %v740 = vpop.f32.mrf.mxu0
      %v741 = vadd.f32 0.0, %v740
      %v742 = vpop.f32.mrf.mxu0
      %v743 = vadd.f32 0.0, %v742
      %744 = vmatmul.bf16.gmra.mxu0 %v651
      %v745 = vpop.f32.mrf.mxu0
      %v746 = vadd.f32 0.0, %v745
      %v747 = vpop.f32.mrf.mxu0
      %v748 = vadd.f32 0.0, %v747
      %749 = vmatmul.bf16.gmra.mxu0 %v654
      %v750 = vpop.f32.mrf.mxu0
      %v751 = vadd.f32 0.0, %v750
      %v752 = vpop.f32.mrf.mxu0
      %v753 = vadd.f32 0.0, %v752
      %754 = vdwg.mxu0
      %v791 = vunpack.c.l.b16 %v479
      %v792 = vunpack.c.l.b16 %v480
      %v793 = vunpack.c.l.b16 %v481
      %v794 = vunpack.c.l.b16 %v482
      %v795 = vunpack.c.l.b16 %v483
      %v796 = vunpack.c.l.b16 %v484
      %v797 = vunpack.c.l.b16 %v485
      %v798 = vunpack.c.l.b16 %v486
      %v799 = vunpack.c.l.b16 %v487
      %v800 = vunpack.c.l.b16 %v488
      %v801 = vunpack.c.l.b16 %v489
      %v802 = vunpack.c.l.b16 %v490
      %v803 = vunpack.c.l.b16 %v491
      %v804 = vunpack.c.l.b16 %v492
      %v805 = vunpack.c.l.b16 %v493
      %v806 = vunpack.c.l.b16 %v494
      %v807 = vunpack.c.l.b16 %v495
      %v808 = vunpack.c.l.b16 %v496
      %v809 = vunpack.c.l.b16 %v497
      %v810 = vunpack.c.l.b16 %v498
      %v811 = vunpack.c.l.b16 %v499
      %v812 = vunpack.c.l.b16 %v500
      %v813 = vunpack.c.l.b16 %v501
      %v814 = vunpack.c.l.b16 %v502
      %v815 = vunpack.c.l.b16 %v503
      %v816 = vunpack.c.l.b16 %v504
      %v817 = vunpack.c.l.b16 %v505
      %v818 = vunpack.c.l.b16 %v506
      %v819 = vunpack.c.l.b16 %v507
      %v820 = vunpack.c.l.b16 %v508
      %v821 = vunpack.c.l.b16 %v509
      %v822 = vunpack.c.l.b16 %v510
      %v823 = vunpack.c.l.b16 %v511
      %v824 = vunpack.c.l.b16 %v512
      %v825 = vunpack.c.l.b16 %v513
      %v826 = vunpack.c.l.b16 %v514
      %v827 = vpack.c.b16 %v792, %v791
      %v828 = vpack.c.b16 %v794, %v793
      %v829 = vpack.c.b16 %v796, %v795
      %v830 = vpack.c.b16 %v798, %v797
      %v831 = vpack.c.b16 %v800, %v799
      %v832 = vpack.c.b16 %v802, %v801
      %v833 = vpack.c.b16 %v804, %v803
      %v834 = vpack.c.b16 %v806, %v805
      %v835 = vpack.c.b16 %v808, %v807
      %v836 = vpack.c.b16 %v810, %v809
      %v837 = vpack.c.b16 %v812, %v811
      %v838 = vpack.c.b16 %v814, %v813
      %v839 = vpack.c.b16 %v816, %v815
      %v840 = vpack.c.b16 %v818, %v817
      %v841 = vpack.c.b16 %v820, %v819
      %v842 = vpack.c.b16 %v822, %v821
      %v843 = vpack.c.b16 %v824, %v823
      %v844 = vpack.c.b16 %v826, %v825
      %v879 = vunpack.c.l.b16 %v515
      %v880 = vunpack.c.l.b16 %v516
      %v881 = vunpack.c.l.b16 %v517
      %v882 = vunpack.c.l.b16 %v518
      %v883 = vunpack.c.l.b16 %v519
      %v884 = vunpack.c.l.b16 %v520
      %v885 = vunpack.c.l.b16 %v521
      %v886 = vunpack.c.l.b16 %v522
      %v887 = vunpack.c.l.b16 %v523
      %v888 = vunpack.c.l.b16 %v524
      %v889 = vunpack.c.l.b16 %v525
      %v890 = vunpack.c.l.b16 %v526
      %v891 = vunpack.c.l.b16 %v527
      %v892 = vunpack.c.l.b16 %v528
      %v893 = vunpack.c.l.b16 %v529
      %v894 = vunpack.c.l.b16 %v530
      %v895 = vpack.c.b16 %v880, %v879
      %v896 = vpack.c.b16 %v882, %v881
      %v897 = vpack.c.b16 %v884, %v883
      %v898 = vpack.c.b16 %v886, %v885
      %v899 = vpack.c.b16 %v888, %v887
      %v900 = vpack.c.b16 %v890, %v889
      %v901 = vpack.c.b16 %v892, %v891
      %v902 = vpack.c.b16 %v894, %v893
      %911 = vmatpush.bf16.msra.mxu0 %v902
      %912 = vmatpush.bf16.msra.mxu0 %v901
      %913 = vmatpush.bf16.msra.mxu0 %v900
      %914 = vmatpush.bf16.msra.mxu0 %v899
      %915 = vmatpush.bf16.msra.mxu0 %v898
      %916 = vmatpush.bf16.msra.mxu0 %v897
      %917 = vmatpush.bf16.msra.mxu0 %v896
      %918 = vmatpush.bf16.msra.mxu0 %v895
      %919 = vmatmul.bf16.gmra.mxu0 %v827
      %v920 = vpop.f32.mrf.mxu0
      %v921 = vadd.f32 %v666, %v920
      %v922 = vpop.f32.mrf.mxu0
      %v923 = vadd.f32 %v668, %v922
      %924 = vmatmul.bf16.gmra.mxu0 %v828
      %v925 = vpop.f32.mrf.mxu0
      %v926 = vadd.f32 %v671, %v925
      %v927 = vpop.f32.mrf.mxu0
      %v928 = vadd.f32 %v673, %v927
      %929 = vmatmul.bf16.gmra.mxu0 %v829
      %v930 = vpop.f32.mrf.mxu0
      %v931 = vadd.f32 %v676, %v930
      %v932 = vpop.f32.mrf.mxu0
      %v933 = vadd.f32 %v678, %v932
      %934 = vmatmul.bf16.gmra.mxu0 %v830
      %v935 = vpop.f32.mrf.mxu0
      %v936 = vadd.f32 %v681, %v935
      %v937 = vpop.f32.mrf.mxu0
      %v938 = vadd.f32 %v683, %v937
      %939 = vmatmul.bf16.gmra.mxu0 %v831
      %v940 = vpop.f32.mrf.mxu0
      %v941 = vadd.f32 %v686, %v940
      %v942 = vpop.f32.mrf.mxu0
      %v943 = vadd.f32 %v688, %v942
      %944 = vmatmul.bf16.gmra.mxu0 %v832
      %v945 = vpop.f32.mrf.mxu0
      %v946 = vadd.f32 %v691, %v945
      %v947 = vpop.f32.mrf.mxu0
      %v948 = vadd.f32 %v693, %v947
      %949 = vmatmul.bf16.gmra.mxu0 %v833
      %v950 = vpop.f32.mrf.mxu0
      %v951 = vadd.f32 %v696, %v950
      %v952 = vpop.f32.mrf.mxu0
      %v953 = vadd.f32 %v698, %v952
      %954 = vmatmul.bf16.gmra.mxu0 %v834
      %v955 = vpop.f32.mrf.mxu0
      %v956 = vadd.f32 %v701, %v955
      %v957 = vpop.f32.mrf.mxu0
      %v958 = vadd.f32 %v703, %v957
      %959 = vmatmul.bf16.gmra.mxu0 %v835
      %v960 = vpop.f32.mrf.mxu0
      %v961 = vadd.f32 %v706, %v960
      %v962 = vpop.f32.mrf.mxu0
      %v963 = vadd.f32 %v708, %v962
      %964 = vmatmul.bf16.gmra.mxu0 %v836
      %v965 = vpop.f32.mrf.mxu0
      %v966 = vadd.f32 %v711, %v965
      %v967 = vpop.f32.mrf.mxu0
      %v968 = vadd.f32 %v713, %v967
      %969 = vmatmul.bf16.gmra.mxu0 %v837
      %v970 = vpop.f32.mrf.mxu0
      %v971 = vadd.f32 %v716, %v970
      %v972 = vpop.f32.mrf.mxu0
      %v973 = vadd.f32 %v718, %v972
      %974 = vmatmul.bf16.gmra.mxu0 %v838
      %v975 = vpop.f32.mrf.mxu0
      %v976 = vadd.f32 %v721, %v975
      %v977 = vpop.f32.mrf.mxu0
      %v978 = vadd.f32 %v723, %v977
      %979 = vmatmul.bf16.gmra.mxu0 %v839
      %v980 = vpop.f32.mrf.mxu0
      %v981 = vadd.f32 %v726, %v980
      %v982 = vpop.f32.mrf.mxu0
      %v983 = vadd.f32 %v728, %v982
      %984 = vmatmul.bf16.gmra.mxu0 %v840
      %v985 = vpop.f32.mrf.mxu0
      %v986 = vadd.f32 %v731, %v985
      %v987 = vpop.f32.mrf.mxu0
      %v988 = vadd.f32 %v733, %v987
      %989 = vmatmul.bf16.gmra.mxu0 %v841
      %v990 = vpop.f32.mrf.mxu0
      %v991 = vadd.f32 %v736, %v990
      %v992 = vpop.f32.mrf.mxu0
      %v993 = vadd.f32 %v738, %v992
      %994 = vmatmul.bf16.gmra.mxu0 %v842
      %v995 = vpop.f32.mrf.mxu0
      %v996 = vadd.f32 %v741, %v995
      %v997 = vpop.f32.mrf.mxu0
      %v998 = vadd.f32 %v743, %v997
      %999 = vmatmul.bf16.gmra.mxu0 %v843
      %v1000 = vpop.f32.mrf.mxu0
      %v1001 = vadd.f32 %v746, %v1000
      %v1002 = vpop.f32.mrf.mxu0
      %v1003 = vadd.f32 %v748, %v1002
      %1004 = vmatmul.bf16.gmra.mxu0 %v844
      %v1005 = vpop.f32.mrf.mxu0
      %v1006 = vadd.f32 %v751, %v1005
      %v1007 = vpop.f32.mrf.mxu0
      %v1008 = vadd.f32 %v753, %v1007
      %1009 = vdwg.mxu0
      %v1010 = vld [vmem:[#allocation2 + $0x1] sm:$0xff]
      %v1011 = vld [vmem:[#allocation2 + $0x9] sm:$0xff]
      %v1012 = vld [vmem:[#allocation2 + $0x11] sm:$0xff]
      %v1013 = vld [vmem:[#allocation2 + $0x19] sm:$0xff]
      %v1014 = vld [vmem:[#allocation2 + $0x21] sm:$0xff]
      %v1015 = vld [vmem:[#allocation2 + $0x29] sm:$0xff]
      %v1016 = vld [vmem:[#allocation2 + $0x31] sm:$0xff]
      %v1017 = vld [vmem:[#allocation2 + $0x39] sm:$0xff]
      %v1018 = vld [vmem:[#allocation2 + $0x41] sm:$0xff]
      %v1019 = vld [vmem:[#allocation2 + $0x49] sm:$0xff]
      %v1020 = vld [vmem:[#allocation2 + $0x51] sm:$0xff]
      %v1021 = vld [vmem:[#allocation2 + $0x59] sm:$0xff]
      %v1022 = vld [vmem:[#allocation2 + $0x61] sm:$0xff]
      %v1023 = vld [vmem:[#allocation2 + $0x69] sm:$0xff]
      %v1024 = vld [vmem:[#allocation2 + $0x71] sm:$0xff]
      %v1025 = vld [vmem:[#allocation2 + $0x79] sm:$0xff]
      %v1026 = vld [vmem:[#allocation2 + $0x81] sm:$0xff]
      %v1027 = vld [vmem:[#allocation2 + $0x89] sm:$0xff]
      %v1028 = vld [vmem:[#allocation2 + $0x91] sm:$0xff]
      %v1029 = vld [vmem:[#allocation2 + $0x99] sm:$0xff]
      %v1030 = vld [vmem:[#allocation2 + $0xa1] sm:$0xff]
      %v1031 = vld [vmem:[#allocation2 + $0xa9] sm:$0xff]
      %v1032 = vld [vmem:[#allocation2 + $0xb1] sm:$0xff]
      %v1033 = vld [vmem:[#allocation2 + $0xb9] sm:$0xff]
      %v1034 = vld [vmem:[#allocation2 + $0xc1] sm:$0xff]
      %v1035 = vld [vmem:[#allocation2 + $0xc9] sm:$0xff]
      %v1036 = vld [vmem:[#allocation2 + $0xd1] sm:$0xff]
      %v1037 = vld [vmem:[#allocation2 + $0xd9] sm:$0xff]
      %v1038 = vld [vmem:[#allocation2 + $0xe1] sm:$0xff]
      %v1039 = vld [vmem:[#allocation2 + $0xe9] sm:$0xff]
      %v1040 = vld [vmem:[#allocation2 + $0xf1] sm:$0xff]
      %v1041 = vld [vmem:[#allocation2 + $0xf9] sm:$0xff]
      %v1042 = vld [vmem:[#allocation2 + $0x101] sm:$0xff]
      %v1043 = vld [vmem:[#allocation2 + $0x109] sm:$0xff]
      %v1044 = vld [vmem:[#allocation2 + $0x111] sm:$0xff]
      %v1045 = vld [vmem:[#allocation2 + $0x119] sm:$0xff]
      %v1046 = vpack.c.bf16 %v1011, %v1010
      %v1047 = vpack.c.bf16 %v1013, %v1012
      %v1048 = vpack.c.bf16 %v1015, %v1014
      %v1049 = vpack.c.bf16 %v1017, %v1016
      %v1050 = vpack.c.bf16 %v1019, %v1018
      %v1051 = vpack.c.bf16 %v1021, %v1020
      %v1052 = vpack.c.bf16 %v1023, %v1022
      %v1053 = vpack.c.bf16 %v1025, %v1024
      %v1054 = vpack.c.bf16 %v1027, %v1026
      %v1055 = vpack.c.bf16 %v1029, %v1028
      %v1056 = vpack.c.bf16 %v1031, %v1030
      %v1057 = vpack.c.bf16 %v1033, %v1032
      %v1058 = vpack.c.bf16 %v1035, %v1034
      %v1059 = vpack.c.bf16 %v1037, %v1036
      %v1060 = vpack.c.bf16 %v1039, %v1038
      %v1061 = vpack.c.bf16 %v1041, %v1040
      %v1062 = vpack.c.bf16 %v1043, %v1042
      %v1063 = vpack.c.bf16 %v1045, %v1044
      %s1064 = scalar_lea.vmem %s2, 16
      %v1065 = vld [vmem:[%s1064] sm:$0xf]
      %v1066 = vld [vmem:[%s1064 + $0x4] sm:$0xf]
      %v1067 = vld [vmem:[%s1064 + $0x8] sm:$0xf]
      %v1068 = vld [vmem:[%s1064 + $0xc] sm:$0xf]
      %v1073 = vunpack.c.l.b16 %v1065
      %v1074 = vunpack.c.l.b16 %v1066
      %v1075 = vunpack.c.l.b16 %v1067
      %v1076 = vunpack.c.l.b16 %v1068
      %v1077 = vpack.c.b16 %v1074, %v1073
      %v1078 = vpack.c.b16 %v1076, %v1075
      %v1082 = vsel %vm601, %v1046, 0
      %v1085 = vsel %vm601, %v1047, 0
      %v1088 = vsel %vm601, %v1048, 0
      %v1091 = vsel %vm601, %v1049, 0
      %v1094 = vsel %vm601, %v1050, 0
      %v1097 = vsel %vm601, %v1051, 0
      %v1100 = vsel %vm601, %v1052, 0
      %v1103 = vsel %vm601, %v1053, 0
      %v1106 = vsel %vm601, %v1054, 0
      %v1109 = vsel %vm601, %v1055, 0
      %v1112 = vsel %vm601, %v1056, 0
      %v1115 = vsel %vm601, %v1057, 0
      %v1118 = vsel %vm601, %v1058, 0
      %v1121 = vsel %vm601, %v1059, 0
      %v1124 = vsel %vm601, %v1060, 0
      %v1127 = vsel %vm601, %v1061, 0
      %v1130 = vsel %vm601, %v1062, 0
      %v1133 = vsel %vm601, %v1063, 0
      %1135 = vmatpush.bf16.msra.mxu0 0
      %1136 = vmatpush.bf16.msra.mxu0 0
      %1137 = vmatpush.bf16.msra.mxu0 0
      %1138 = vmatpush.bf16.msra.mxu0 0
      %1139 = vmatpush.bf16.msra.mxu0 0
      %1140 = vmatpush.bf16.msra.mxu0 0
      %1141 = vmatpush.bf16.msra.mxu0 %v1078
      %1142 = vmatpush.bf16.msra.mxu0 %v1077
      %1143 = vmatmul.bf16.gmra.mxu0 %v1082
      %v1144 = vpop.f32.mrf.mxu0
      %v1145 = vadd.f32 0.0, %v1144
      %v1146 = vpop.f32.mrf.mxu0
      %v1147 = vadd.f32 0.0, %v1146
      %1148 = vmatmul.bf16.gmra.mxu0 %v1085
      %v1149 = vpop.f32.mrf.mxu0
      %v1150 = vadd.f32 0.0, %v1149
      %v1151 = vpop.f32.mrf.mxu0
      %v1152 = vadd.f32 0.0, %v1151
      %1153 = vmatmul.bf16.gmra.mxu0 %v1088
      %v1154 = vpop.f32.mrf.mxu0
      %v1155 = vadd.f32 0.0, %v1154
      %v1156 = vpop.f32.mrf.mxu0
      %v1157 = vadd.f32 0.0, %v1156
      %1158 = vmatmul.bf16.gmra.mxu0 %v1091
      %v1159 = vpop.f32.mrf.mxu0
      %v1160 = vadd.f32 0.0, %v1159
      %v1161 = vpop.f32.mrf.mxu0
      %v1162 = vadd.f32 0.0, %v1161
      %1163 = vmatmul.bf16.gmra.mxu0 %v1094
      %v1164 = vpop.f32.mrf.mxu0
      %v1165 = vadd.f32 0.0, %v1164
      %v1166 = vpop.f32.mrf.mxu0
      %v1167 = vadd.f32 0.0, %v1166
      %1168 = vmatmul.bf16.gmra.mxu0 %v1097
      %v1169 = vpop.f32.mrf.mxu0
      %v1170 = vadd.f32 0.0, %v1169
      %v1171 = vpop.f32.mrf.mxu0
      %v1172 = vadd.f32 0.0, %v1171
      %1173 = vmatmul.bf16.gmra.mxu0 %v1100
      %v1174 = vpop.f32.mrf.mxu0
      %v1175 = vadd.f32 0.0, %v1174
      %v1176 = vpop.f32.mrf.mxu0
      %v1177 = vadd.f32 0.0, %v1176
      %1178 = vmatmul.bf16.gmra.mxu0 %v1103
      %v1179 = vpop.f32.mrf.mxu0
      %v1180 = vadd.f32 0.0, %v1179
      %v1181 = vpop.f32.mrf.mxu0
      %v1182 = vadd.f32 0.0, %v1181
      %1183 = vmatmul.bf16.gmra.mxu0 %v1106
      %v1184 = vpop.f32.mrf.mxu0
      %v1185 = vadd.f32 0.0, %v1184
      %v1186 = vpop.f32.mrf.mxu0
      %v1187 = vadd.f32 0.0, %v1186
      %1188 = vmatmul.bf16.gmra.mxu0 %v1109
      %v1189 = vpop.f32.mrf.mxu0
      %v1190 = vadd.f32 0.0, %v1189
      %v1191 = vpop.f32.mrf.mxu0
      %v1192 = vadd.f32 0.0, %v1191
      %1193 = vmatmul.bf16.gmra.mxu0 %v1112
      %v1194 = vpop.f32.mrf.mxu0
      %v1195 = vadd.f32 0.0, %v1194
      %v1196 = vpop.f32.mrf.mxu0
      %v1197 = vadd.f32 0.0, %v1196
      %1198 = vmatmul.bf16.gmra.mxu0 %v1115
      %v1199 = vpop.f32.mrf.mxu0
      %v1200 = vadd.f32 0.0, %v1199
      %v1201 = vpop.f32.mrf.mxu0
      %v1202 = vadd.f32 0.0, %v1201
      %1203 = vmatmul.bf16.gmra.mxu0 %v1118
      %v1204 = vpop.f32.mrf.mxu0
      %v1205 = vadd.f32 0.0, %v1204
      %v1206 = vpop.f32.mrf.mxu0
      %v1207 = vadd.f32 0.0, %v1206
      %1208 = vmatmul.bf16.gmra.mxu0 %v1121
      %v1209 = vpop.f32.mrf.mxu0
      %v1210 = vadd.f32 0.0, %v1209
      %v1211 = vpop.f32.mrf.mxu0
      %v1212 = vadd.f32 0.0, %v1211
      %1213 = vmatmul.bf16.gmra.mxu0 %v1124
      %v1214 = vpop.f32.mrf.mxu0
      %v1215 = vadd.f32 0.0, %v1214
      %v1216 = vpop.f32.mrf.mxu0
      %v1217 = vadd.f32 0.0, %v1216
      %1218 = vmatmul.bf16.gmra.mxu0 %v1127
      %v1219 = vpop.f32.mrf.mxu0
      %v1220 = vadd.f32 0.0, %v1219
      %v1221 = vpop.f32.mrf.mxu0
      %v1222 = vadd.f32 0.0, %v1221
      %1223 = vmatmul.bf16.gmra.mxu0 %v1130
      %v1224 = vpop.f32.mrf.mxu0
      %v1225 = vadd.f32 0.0, %v1224
      %v1226 = vpop.f32.mrf.mxu0
      %v1227 = vadd.f32 0.0, %v1226
      %1228 = vmatmul.bf16.gmra.mxu0 %v1133
      %v1229 = vpop.f32.mrf.mxu0
      %v1230 = vadd.f32 0.0, %v1229
      %v1231 = vpop.f32.mrf.mxu0
      %v1232 = vadd.f32 0.0, %v1231
      %1233 = vdwg.mxu0
      %v1234 = vadd.f32 %v921, %v1145
      %v1235 = vadd.f32 %v923, %v1147
      %v1236 = vadd.f32 %v926, %v1150
      %v1237 = vadd.f32 %v928, %v1152
      %v1238 = vadd.f32 %v931, %v1155
      %v1239 = vadd.f32 %v933, %v1157
      %v1240 = vadd.f32 %v936, %v1160
      %v1241 = vadd.f32 %v938, %v1162
      %v1242 = vadd.f32 %v941, %v1165
      %v1243 = vadd.f32 %v943, %v1167
      %v1244 = vadd.f32 %v946, %v1170
      %v1245 = vadd.f32 %v948, %v1172
      %v1246 = vadd.f32 %v951, %v1175
      %v1247 = vadd.f32 %v953, %v1177
      %v1248 = vadd.f32 %v956, %v1180
      %v1249 = vadd.f32 %v958, %v1182
      %v1250 = vadd.f32 %v961, %v1185
      %v1251 = vadd.f32 %v963, %v1187
      %v1252 = vadd.f32 %v966, %v1190
      %v1253 = vadd.f32 %v968, %v1192
      %v1254 = vadd.f32 %v971, %v1195
      %v1255 = vadd.f32 %v973, %v1197
      %v1256 = vadd.f32 %v976, %v1200
      %v1257 = vadd.f32 %v978, %v1202
      %v1258 = vadd.f32 %v981, %v1205
      %v1259 = vadd.f32 %v983, %v1207
      %v1260 = vadd.f32 %v986, %v1210
      %v1261 = vadd.f32 %v988, %v1212
      %v1262 = vadd.f32 %v991, %v1215
      %v1263 = vadd.f32 %v993, %v1217
      %v1264 = vadd.f32 %v996, %v1220
      %v1265 = vadd.f32 %v998, %v1222
      %v1266 = vadd.f32 %v1001, %v1225
      %v1267 = vadd.f32 %v1003, %v1227
      %v1268 = vadd.f32 %v1006, %v1230
      %v1269 = vadd.f32 %v1008, %v1232
      %v1270 = vld [vmem:[#allocation2 + $0x2] sm:$0xff]
      %v1271 = vld [vmem:[#allocation2 + $0xa] sm:$0xff]
      %v1272 = vld [vmem:[#allocation2 + $0x12] sm:$0xff]
      %v1273 = vld [vmem:[#allocation2 + $0x1a] sm:$0xff]
      %v1274 = vld [vmem:[#allocation2 + $0x22] sm:$0xff]
      %v1275 = vld [vmem:[#allocation2 + $0x2a] sm:$0xff]
      %v1276 = vld [vmem:[#allocation2 + $0x32] sm:$0xff]
      %v1277 = vld [vmem:[#allocation2 + $0x3a] sm:$0xff]
      %v1278 = vld [vmem:[#allocation2 + $0x42] sm:$0xff]
      %v1279 = vld [vmem:[#allocation2 + $0x4a] sm:$0xff]
      %v1280 = vld [vmem:[#allocation2 + $0x52] sm:$0xff]
      %v1281 = vld [vmem:[#allocation2 + $0x5a] sm:$0xff]
      %v1282 = vld [vmem:[#allocation2 + $0x62] sm:$0xff]
      %v1283 = vld [vmem:[#allocation2 + $0x6a] sm:$0xff]
      %v1284 = vld [vmem:[#allocation2 + $0x72] sm:$0xff]
      %v1285 = vld [vmem:[#allocation2 + $0x7a] sm:$0xff]
      %v1286 = vld [vmem:[#allocation2 + $0x82] sm:$0xff]
      %v1287 = vld [vmem:[#allocation2 + $0x8a] sm:$0xff]
      %v1288 = vld [vmem:[#allocation2 + $0x92] sm:$0xff]
      %v1289 = vld [vmem:[#allocation2 + $0x9a] sm:$0xff]
      %v1290 = vld [vmem:[#allocation2 + $0xa2] sm:$0xff]
      %v1291 = vld [vmem:[#allocation2 + $0xaa] sm:$0xff]
      %v1292 = vld [vmem:[#allocation2 + $0xb2] sm:$0xff]
      %v1293 = vld [vmem:[#allocation2 + $0xba] sm:$0xff]
      %v1294 = vld [vmem:[#allocation2 + $0xc2] sm:$0xff]
      %v1295 = vld [vmem:[#allocation2 + $0xca] sm:$0xff]
      %v1296 = vld [vmem:[#allocation2 + $0xd2] sm:$0xff]
      %v1297 = vld [vmem:[#allocation2 + $0xda] sm:$0xff]
      %v1298 = vld [vmem:[#allocation2 + $0xe2] sm:$0xff]
      %v1299 = vld [vmem:[#allocation2 + $0xea] sm:$0xff]
      %v1300 = vld [vmem:[#allocation2 + $0xf2] sm:$0xff]
      %v1301 = vld [vmem:[#allocation2 + $0xfa] sm:$0xff]
      %v1302 = vld [vmem:[#allocation2 + $0x102] sm:$0xff]
      %v1303 = vld [vmem:[#allocation2 + $0x10a] sm:$0xff]
      %v1304 = vld [vmem:[#allocation2 + $0x112] sm:$0xff]
      %v1305 = vld [vmem:[#allocation2 + $0x11a] sm:$0xff]
      %v1306 = vpack.c.bf16 %v1271, %v1270
      %v1307 = vpack.c.bf16 %v1273, %v1272
      %v1308 = vpack.c.bf16 %v1275, %v1274
      %v1309 = vpack.c.bf16 %v1277, %v1276
      %v1310 = vpack.c.bf16 %v1279, %v1278
      %v1311 = vpack.c.bf16 %v1281, %v1280
      %v1312 = vpack.c.bf16 %v1283, %v1282
      %v1313 = vpack.c.bf16 %v1285, %v1284
      %v1314 = vpack.c.bf16 %v1287, %v1286
      %v1315 = vpack.c.bf16 %v1289, %v1288
      %v1316 = vpack.c.bf16 %v1291, %v1290
      %v1317 = vpack.c.bf16 %v1293, %v1292
      %v1318 = vpack.c.bf16 %v1295, %v1294
      %v1319 = vpack.c.bf16 %v1297, %v1296
      %v1320 = vpack.c.bf16 %v1299, %v1298
      %v1321 = vpack.c.bf16 %v1301, %v1300
      %v1322 = vpack.c.bf16 %v1303, %v1302
      %v1323 = vpack.c.bf16 %v1305, %v1304
      %s1324 = scalar_lea.vmem %s2, 32
      %v1325 = vld [vmem:[%s1324] sm:$0xf]
      %v1326 = vld [vmem:[%s1324 + $0x4] sm:$0xf]
      %v1327 = vld [vmem:[%s1324 + $0x8] sm:$0xf]
      %v1328 = vld [vmem:[%s1324 + $0xc] sm:$0xf]
      %v1333 = vunpack.c.l.b16 %v1325
      %v1334 = vunpack.c.l.b16 %v1326
      %v1335 = vunpack.c.l.b16 %v1327
      %v1336 = vunpack.c.l.b16 %v1328
      %v1337 = vpack.c.b16 %v1334, %v1333
      %v1338 = vpack.c.b16 %v1336, %v1335
      %v1342 = vsel %vm601, %v1306, 0
      %v1345 = vsel %vm601, %v1307, 0
      %v1348 = vsel %vm601, %v1308, 0
      %v1351 = vsel %vm601, %v1309, 0
      %v1354 = vsel %vm601, %v1310, 0
      %v1357 = vsel %vm601, %v1311, 0
      %v1360 = vsel %vm601, %v1312, 0
      %v1363 = vsel %vm601, %v1313, 0
      %v1366 = vsel %vm601, %v1314, 0
      %v1369 = vsel %vm601, %v1315, 0
      %v1372 = vsel %vm601, %v1316, 0
      %v1375 = vsel %vm601, %v1317, 0
      %v1378 = vsel %vm601, %v1318, 0
      %v1381 = vsel %vm601, %v1319, 0
      %v1384 = vsel %vm601, %v1320, 0
      %v1387 = vsel %vm601, %v1321, 0
      %v1390 = vsel %vm601, %v1322, 0
      %v1393 = vsel %vm601, %v1323, 0
      %1395 = vmatpush.bf16.msra.mxu0 0
      %1396 = vmatpush.bf16.msra.mxu0 0
      %1397 = vmatpush.bf16.msra.mxu0 0
      %1398 = vmatpush.bf16.msra.mxu0 0
      %1399 = vmatpush.bf16.msra.mxu0 0
      %1400 = vmatpush.bf16.msra.mxu0 0
      %1401 = vmatpush.bf16.msra.mxu0 %v1338
      %1402 = vmatpush.bf16.msra.mxu0 %v1337
      %1403 = vmatmul.bf16.gmra.mxu0 %v1342
      %v1404 = vpop.f32.mrf.mxu0
      %v1405 = vadd.f32 0.0, %v1404
      %v1406 = vpop.f32.mrf.mxu0
      %v1407 = vadd.f32 0.0, %v1406
      %1408 = vmatmul.bf16.gmra.mxu0 %v1345
      %v1409 = vpop.f32.mrf.mxu0
      %v1410 = vadd.f32 0.0, %v1409
      %v1411 = vpop.f32.mrf.mxu0
      %v1412 = vadd.f32 0.0, %v1411
      %1413 = vmatmul.bf16.gmra.mxu0 %v1348
      %v1414 = vpop.f32.mrf.mxu0
      %v1415 = vadd.f32 0.0, %v1414
      %v1416 = vpop.f32.mrf.mxu0
      %v1417 = vadd.f32 0.0, %v1416
      %1418 = vmatmul.bf16.gmra.mxu0 %v1351
      %v1419 = vpop.f32.mrf.mxu0
      %v1420 = vadd.f32 0.0, %v1419
      %v1421 = vpop.f32.mrf.mxu0
      %v1422 = vadd.f32 0.0, %v1421
      %1423 = vmatmul.bf16.gmra.mxu0 %v1354
      %v1424 = vpop.f32.mrf.mxu0
      %v1425 = vadd.f32 0.0, %v1424
      %v1426 = vpop.f32.mrf.mxu0
      %v1427 = vadd.f32 0.0, %v1426
      %1428 = vmatmul.bf16.gmra.mxu0 %v1357
      %v1429 = vpop.f32.mrf.mxu0
      %v1430 = vadd.f32 0.0, %v1429
      %v1431 = vpop.f32.mrf.mxu0
      %v1432 = vadd.f32 0.0, %v1431
      %1433 = vmatmul.bf16.gmra.mxu0 %v1360
      %v1434 = vpop.f32.mrf.mxu0
      %v1435 = vadd.f32 0.0, %v1434
      %v1436 = vpop.f32.mrf.mxu0
      %v1437 = vadd.f32 0.0, %v1436
      %1438 = vmatmul.bf16.gmra.mxu0 %v1363
      %v1439 = vpop.f32.mrf.mxu0
      %v1440 = vadd.f32 0.0, %v1439
      %v1441 = vpop.f32.mrf.mxu0
      %v1442 = vadd.f32 0.0, %v1441
      %1443 = vmatmul.bf16.gmra.mxu0 %v1366
      %v1444 = vpop.f32.mrf.mxu0
      %v1445 = vadd.f32 0.0, %v1444
      %v1446 = vpop.f32.mrf.mxu0
      %v1447 = vadd.f32 0.0, %v1446
      %1448 = vmatmul.bf16.gmra.mxu0 %v1369
      %v1449 = vpop.f32.mrf.mxu0
      %v1450 = vadd.f32 0.0, %v1449
      %v1451 = vpop.f32.mrf.mxu0
      %v1452 = vadd.f32 0.0, %v1451
      %1453 = vmatmul.bf16.gmra.mxu0 %v1372
      %v1454 = vpop.f32.mrf.mxu0
      %v1455 = vadd.f32 0.0, %v1454
      %v1456 = vpop.f32.mrf.mxu0
      %v1457 = vadd.f32 0.0, %v1456
      %1458 = vmatmul.bf16.gmra.mxu0 %v1375
      %v1459 = vpop.f32.mrf.mxu0
      %v1460 = vadd.f32 0.0, %v1459
      %v1461 = vpop.f32.mrf.mxu0
      %v1462 = vadd.f32 0.0, %v1461
      %1463 = vmatmul.bf16.gmra.mxu0 %v1378
      %v1464 = vpop.f32.mrf.mxu0
      %v1465 = vadd.f32 0.0, %v1464
      %v1466 = vpop.f32.mrf.mxu0
      %v1467 = vadd.f32 0.0, %v1466
      %1468 = vmatmul.bf16.gmra.mxu0 %v1381
      %v1469 = vpop.f32.mrf.mxu0
      %v1470 = vadd.f32 0.0, %v1469
      %v1471 = vpop.f32.mrf.mxu0
      %v1472 = vadd.f32 0.0, %v1471
      %1473 = vmatmul.bf16.gmra.mxu0 %v1384
      %v1474 = vpop.f32.mrf.mxu0
      %v1475 = vadd.f32 0.0, %v1474
      %v1476 = vpop.f32.mrf.mxu0
      %v1477 = vadd.f32 0.0, %v1476
      %1478 = vmatmul.bf16.gmra.mxu0 %v1387
      %v1479 = vpop.f32.mrf.mxu0
      %v1480 = vadd.f32 0.0, %v1479
      %v1481 = vpop.f32.mrf.mxu0
      %v1482 = vadd.f32 0.0, %v1481
      %1483 = vmatmul.bf16.gmra.mxu0 %v1390
      %v1484 = vpop.f32.mrf.mxu0
      %v1485 = vadd.f32 0.0, %v1484
      %v1486 = vpop.f32.mrf.mxu0
      %v1487 = vadd.f32 0.0, %v1486
      %1488 = vmatmul.bf16.gmra.mxu0 %v1393
      %v1489 = vpop.f32.mrf.mxu0
      %v1490 = vadd.f32 0.0, %v1489
      %v1491 = vpop.f32.mrf.mxu0
      %v1492 = vadd.f32 0.0, %v1491
      %1493 = vdwg.mxu0
      %v1494 = vadd.f32 %v1234, %v1405
      %v1495 = vadd.f32 %v1235, %v1407
      %v1496 = vadd.f32 %v1236, %v1410
      %v1497 = vadd.f32 %v1237, %v1412
      %v1498 = vadd.f32 %v1238, %v1415
      %v1499 = vadd.f32 %v1239, %v1417
      %v1500 = vadd.f32 %v1240, %v1420
      %v1501 = vadd.f32 %v1241, %v1422
      %v1502 = vadd.f32 %v1242, %v1425
      %v1503 = vadd.f32 %v1243, %v1427
      %v1504 = vadd.f32 %v1244, %v1430
      %v1505 = vadd.f32 %v1245, %v1432
      %v1506 = vadd.f32 %v1246, %v1435
      %v1507 = vadd.f32 %v1247, %v1437
      %v1508 = vadd.f32 %v1248, %v1440
      %v1509 = vadd.f32 %v1249, %v1442
      %v1510 = vadd.f32 %v1250, %v1445
      %v1511 = vadd.f32 %v1251, %v1447
      %v1512 = vadd.f32 %v1252, %v1450
      %v1513 = vadd.f32 %v1253, %v1452
      %v1514 = vadd.f32 %v1254, %v1455
      %v1515 = vadd.f32 %v1255, %v1457
      %v1516 = vadd.f32 %v1256, %v1460
      %v1517 = vadd.f32 %v1257, %v1462
      %v1518 = vadd.f32 %v1258, %v1465
      %v1519 = vadd.f32 %v1259, %v1467
      %v1520 = vadd.f32 %v1260, %v1470
      %v1521 = vadd.f32 %v1261, %v1472
      %v1522 = vadd.f32 %v1262, %v1475
      %v1523 = vadd.f32 %v1263, %v1477
      %v1524 = vadd.f32 %v1264, %v1480
      %v1525 = vadd.f32 %v1265, %v1482
      %v1526 = vadd.f32 %v1266, %v1485
      %v1527 = vadd.f32 %v1267, %v1487
      %v1528 = vadd.f32 %v1268, %v1490
      %v1529 = vadd.f32 %v1269, %v1492
      %v1530 = vld [vmem:[#allocation2 + $0x12] sm:$0xff]
      %v1531 = vld [vmem:[#allocation2 + $0x1a] sm:$0xff]
      %v1532 = vld [vmem:[#allocation2 + $0x22] sm:$0xff]
      %v1533 = vld [vmem:[#allocation2 + $0x2a] sm:$0xff]
      %v1534 = vld [vmem:[#allocation2 + $0x32] sm:$0xff]
      %v1535 = vld [vmem:[#allocation2 + $0x3a] sm:$0xff]
      %v1536 = vld [vmem:[#allocation2 + $0x42] sm:$0xff]
      %v1537 = vld [vmem:[#allocation2 + $0x4a] sm:$0xff]
      %v1538 = vld [vmem:[#allocation2 + $0x52] sm:$0xff]
      %v1539 = vld [vmem:[#allocation2 + $0x5a] sm:$0xff]
      %v1540 = vld [vmem:[#allocation2 + $0x62] sm:$0xff]
      %v1541 = vld [vmem:[#allocation2 + $0x6a] sm:$0xff]
      %v1542 = vld [vmem:[#allocation2 + $0x72] sm:$0xff]
      %v1543 = vld [vmem:[#allocation2 + $0x7a] sm:$0xff]
      %v1544 = vld [vmem:[#allocation2 + $0x82] sm:$0xff]
      %v1545 = vld [vmem:[#allocation2 + $0x8a] sm:$0xff]
      %v1546 = vld [vmem:[#allocation2 + $0x92] sm:$0xff]
      %v1547 = vld [vmem:[#allocation2 + $0x9a] sm:$0xff]
      %v1548 = vld [vmem:[#allocation2 + $0xa2] sm:$0xff]
      %v1549 = vld [vmem:[#allocation2 + $0xaa] sm:$0xff]
      %v1550 = vld [vmem:[#allocation2 + $0xb2] sm:$0xff]
      %v1551 = vld [vmem:[#allocation2 + $0xba] sm:$0xff]
      %v1552 = vld [vmem:[#allocation2 + $0xc2] sm:$0xff]
      %v1553 = vld [vmem:[#allocation2 + $0xca] sm:$0xff]
      %v1554 = vld [vmem:[#allocation2 + $0xd2] sm:$0xff]
      %v1555 = vld [vmem:[#allocation2 + $0xda] sm:$0xff]
      %v1556 = vld [vmem:[#allocation2 + $0xe2] sm:$0xff]
      %v1557 = vld [vmem:[#allocation2 + $0xea] sm:$0xff]
      %v1558 = vld [vmem:[#allocation2 + $0xf2] sm:$0xff]
      %v1559 = vld [vmem:[#allocation2 + $0xfa] sm:$0xff]
      %v1560 = vld [vmem:[#allocation2 + $0x102] sm:$0xff]
      %v1561 = vld [vmem:[#allocation2 + $0x10a] sm:$0xff]
      %v1562 = vld [vmem:[#allocation2 + $0x112] sm:$0xff]
      %v1563 = vld [vmem:[#allocation2 + $0x11a] sm:$0xff]
      %v1564 = vld [vmem:[#allocation2 + $0x122] sm:$0xff]
      %v1565 = vld [vmem:[#allocation2 + $0x12a] sm:$0xff]
      %v1566 = vpack.c.bf16 %v1531, %v1530
      %v1567 = vpack.c.bf16 %v1533, %v1532
      %v1568 = vpack.c.bf16 %v1535, %v1534
      %v1569 = vpack.c.bf16 %v1537, %v1536
      %v1570 = vpack.c.bf16 %v1539, %v1538
      %v1571 = vpack.c.bf16 %v1541, %v1540
      %v1572 = vpack.c.bf16 %v1543, %v1542
      %v1573 = vpack.c.bf16 %v1545, %v1544
      %v1574 = vpack.c.bf16 %v1547, %v1546
      %v1575 = vpack.c.bf16 %v1549, %v1548
      %v1576 = vpack.c.bf16 %v1551, %v1550
      %v1577 = vpack.c.bf16 %v1553, %v1552
      %v1578 = vpack.c.bf16 %v1555, %v1554
      %v1579 = vpack.c.bf16 %v1557, %v1556
      %v1580 = vpack.c.bf16 %v1559, %v1558
      %v1581 = vpack.c.bf16 %v1561, %v1560
      %v1582 = vpack.c.bf16 %v1563, %v1562
      %v1583 = vpack.c.bf16 %v1565, %v1564
      %s1584 = scalar_lea.vmem %s2, 48
      %v1585 = vld [vmem:[%s1584] sm:$0xf]
      %v1586 = vld [vmem:[%s1584 + $0x4] sm:$0xf]
      %v1587 = vld [vmem:[%s1584 + $0x8] sm:$0xf]
      %v1588 = vld [vmem:[%s1584 + $0xc] sm:$0xf]
      %v1593 = vunpack.c.l.b16 %v1585
      %v1594 = vunpack.c.l.b16 %v1586
      %v1595 = vunpack.c.l.b16 %v1587
      %v1596 = vunpack.c.l.b16 %v1588
      %v1597 = vpack.c.b16 %v1594, %v1593
      %v1598 = vpack.c.b16 %v1596, %v1595
      %v1602 = vsel %vm601, %v1566, 0
      %v1605 = vsel %vm601, %v1567, 0
      %v1608 = vsel %vm601, %v1568, 0
      %v1611 = vsel %vm601, %v1569, 0
      %v1614 = vsel %vm601, %v1570, 0
      %v1617 = vsel %vm601, %v1571, 0
      %v1620 = vsel %vm601, %v1572, 0
      %v1623 = vsel %vm601, %v1573, 0
      %v1626 = vsel %vm601, %v1574, 0
      %v1629 = vsel %vm601, %v1575, 0
      %v1632 = vsel %vm601, %v1576, 0
      %v1635 = vsel %vm601, %v1577, 0
      %v1638 = vsel %vm601, %v1578, 0
      %v1641 = vsel %vm601, %v1579, 0
      %v1644 = vsel %vm601, %v1580, 0
      %v1647 = vsel %vm601, %v1581, 0
      %v1650 = vsel %vm601, %v1582, 0
      %v1653 = vsel %vm601, %v1583, 0
      %1655 = vmatpush.bf16.msra.mxu0 0
      %1656 = vmatpush.bf16.msra.mxu0 0
      %1657 = vmatpush.bf16.msra.mxu0 0
      %1658 = vmatpush.bf16.msra.mxu0 0
      %1659 = vmatpush.bf16.msra.mxu0 0
      %1660 = vmatpush.bf16.msra.mxu0 0
      %1661 = vmatpush.bf16.msra.mxu0 %v1598
      %1662 = vmatpush.bf16.msra.mxu0 %v1597
      %1663 = vmatmul.bf16.gmra.mxu0 %v1602
      %v1664 = vpop.f32.mrf.mxu0
      %v1665 = vadd.f32 0.0, %v1664
      %v1666 = vpop.f32.mrf.mxu0
      %v1667 = vadd.f32 0.0, %v1666
      %1668 = vmatmul.bf16.gmra.mxu0 %v1605
      %v1669 = vpop.f32.mrf.mxu0
      %v1670 = vadd.f32 0.0, %v1669
      %v1671 = vpop.f32.mrf.mxu0
      %v1672 = vadd.f32 0.0, %v1671
      %1673 = vmatmul.bf16.gmra.mxu0 %v1608
      %v1674 = vpop.f32.mrf.mxu0
      %v1675 = vadd.f32 0.0, %v1674
      %v1676 = vpop.f32.mrf.mxu0
      %v1677 = vadd.f32 0.0, %v1676
      %1678 = vmatmul.bf16.gmra.mxu0 %v1611
      %v1679 = vpop.f32.mrf.mxu0
      %v1680 = vadd.f32 0.0, %v1679
      %v1681 = vpop.f32.mrf.mxu0
      %v1682 = vadd.f32 0.0, %v1681
      %1683 = vmatmul.bf16.gmra.mxu0 %v1614
      %v1684 = vpop.f32.mrf.mxu0
      %v1685 = vadd.f32 0.0, %v1684
      %v1686 = vpop.f32.mrf.mxu0
      %v1687 = vadd.f32 0.0, %v1686
      %1688 = vmatmul.bf16.gmra.mxu0 %v1617
      %v1689 = vpop.f32.mrf.mxu0
      %v1690 = vadd.f32 0.0, %v1689
      %v1691 = vpop.f32.mrf.mxu0
      %v1692 = vadd.f32 0.0, %v1691
      %1693 = vmatmul.bf16.gmra.mxu0 %v1620
      %v1694 = vpop.f32.mrf.mxu0
      %v1695 = vadd.f32 0.0, %v1694
      %v1696 = vpop.f32.mrf.mxu0
      %v1697 = vadd.f32 0.0, %v1696
      %1698 = vmatmul.bf16.gmra.mxu0 %v1623
      %v1699 = vpop.f32.mrf.mxu0
      %v1700 = vadd.f32 0.0, %v1699
      %v1701 = vpop.f32.mrf.mxu0
      %v1702 = vadd.f32 0.0, %v1701
      %1703 = vmatmul.bf16.gmra.mxu0 %v1626
      %v1704 = vpop.f32.mrf.mxu0
      %v1705 = vadd.f32 0.0, %v1704
      %v1706 = vpop.f32.mrf.mxu0
      %v1707 = vadd.f32 0.0, %v1706
      %1708 = vmatmul.bf16.gmra.mxu0 %v1629
      %v1709 = vpop.f32.mrf.mxu0
      %v1710 = vadd.f32 0.0, %v1709
      %v1711 = vpop.f32.mrf.mxu0
      %v1712 = vadd.f32 0.0, %v1711
      %1713 = vmatmul.bf16.gmra.mxu0 %v1632
      %v1714 = vpop.f32.mrf.mxu0
      %v1715 = vadd.f32 0.0, %v1714
      %v1716 = vpop.f32.mrf.mxu0
      %v1717 = vadd.f32 0.0, %v1716
      %1718 = vmatmul.bf16.gmra.mxu0 %v1635
      %v1719 = vpop.f32.mrf.mxu0
      %v1720 = vadd.f32 0.0, %v1719
      %v1721 = vpop.f32.mrf.mxu0
      %v1722 = vadd.f32 0.0, %v1721
      %1723 = vmatmul.bf16.gmra.mxu0 %v1638
      %v1724 = vpop.f32.mrf.mxu0
      %v1725 = vadd.f32 0.0, %v1724
      %v1726 = vpop.f32.mrf.mxu0
      %v1727 = vadd.f32 0.0, %v1726
      %1728 = vmatmul.bf16.gmra.mxu0 %v1641
      %v1729 = vpop.f32.mrf.mxu0
      %v1730 = vadd.f32 0.0, %v1729
      %v1731 = vpop.f32.mrf.mxu0
      %v1732 = vadd.f32 0.0, %v1731
      %1733 = vmatmul.bf16.gmra.mxu0 %v1644
      %v1734 = vpop.f32.mrf.mxu0
      %v1735 = vadd.f32 0.0, %v1734
      %v1736 = vpop.f32.mrf.mxu0
      %v1737 = vadd.f32 0.0, %v1736
      %1738 = vmatmul.bf16.gmra.mxu0 %v1647
      %v1739 = vpop.f32.mrf.mxu0
      %v1740 = vadd.f32 0.0, %v1739
      %v1741 = vpop.f32.mrf.mxu0
      %v1742 = vadd.f32 0.0, %v1741
      %1743 = vmatmul.bf16.gmra.mxu0 %v1650
      %v1744 = vpop.f32.mrf.mxu0
      %v1745 = vadd.f32 0.0, %v1744
      %v1746 = vpop.f32.mrf.mxu0
      %v1747 = vadd.f32 0.0, %v1746
      %1748 = vmatmul.bf16.gmra.mxu0 %v1653
      %v1749 = vpop.f32.mrf.mxu0
      %v1750 = vadd.f32 0.0, %v1749
      %v1751 = vpop.f32.mrf.mxu0
      %v1752 = vadd.f32 0.0, %v1751
      %1753 = vdwg.mxu0
      %v1754 = vadd.f32 %v1494, %v1665
      %v1755 = vadd.f32 %v1495, %v1667
      %v1756 = vadd.f32 %v1496, %v1670
      %v1757 = vadd.f32 %v1497, %v1672
      %v1758 = vadd.f32 %v1498, %v1675
      %v1759 = vadd.f32 %v1499, %v1677
      %v1760 = vadd.f32 %v1500, %v1680
      %v1761 = vadd.f32 %v1501, %v1682
      %v1762 = vadd.f32 %v1502, %v1685
      %v1763 = vadd.f32 %v1503, %v1687
      %v1764 = vadd.f32 %v1504, %v1690
      %v1765 = vadd.f32 %v1505, %v1692
      %v1766 = vadd.f32 %v1506, %v1695
      %v1767 = vadd.f32 %v1507, %v1697
      %v1768 = vadd.f32 %v1508, %v1700
      %v1769 = vadd.f32 %v1509, %v1702
      %v1770 = vadd.f32 %v1510, %v1705
      %v1771 = vadd.f32 %v1511, %v1707
      %v1772 = vadd.f32 %v1512, %v1710
      %v1773 = vadd.f32 %v1513, %v1712
      %v1774 = vadd.f32 %v1514, %v1715
      %v1775 = vadd.f32 %v1515, %v1717
      %v1776 = vadd.f32 %v1516, %v1720
      %v1777 = vadd.f32 %v1517, %v1722
      %v1778 = vadd.f32 %v1518, %v1725
      %v1779 = vadd.f32 %v1519, %v1727
      %v1780 = vadd.f32 %v1520, %v1730
      %v1781 = vadd.f32 %v1521, %v1732
      %v1782 = vadd.f32 %v1522, %v1735
      %v1783 = vadd.f32 %v1523, %v1737
      %v1784 = vadd.f32 %v1524, %v1740
      %v1785 = vadd.f32 %v1525, %v1742
      %v1786 = vadd.f32 %v1526, %v1745
      %v1787 = vadd.f32 %v1527, %v1747
      %v1788 = vadd.f32 %v1528, %v1750
      %v1789 = vadd.f32 %v1529, %v1752
      %v1790 = vld [vmem:[#allocation2 + $0x13] sm:$0xff]
      %v1791 = vld [vmem:[#allocation2 + $0x1b] sm:$0xff]
      %v1792 = vld [vmem:[#allocation2 + $0x23] sm:$0xff]
      %v1793 = vld [vmem:[#allocation2 + $0x2b] sm:$0xff]
      %v1794 = vld [vmem:[#allocation2 + $0x33] sm:$0xff]
      %v1795 = vld [vmem:[#allocation2 + $0x3b] sm:$0xff]
      %v1796 = vld [vmem:[#allocation2 + $0x43] sm:$0xff]
      %v1797 = vld [vmem:[#allocation2 + $0x4b] sm:$0xff]
      %v1798 = vld [vmem:[#allocation2 + $0x53] sm:$0xff]
      %v1799 = vld [vmem:[#allocation2 + $0x5b] sm:$0xff]
      %v1800 = vld [vmem:[#allocation2 + $0x63] sm:$0xff]
      %v1801 = vld [vmem:[#allocation2 + $0x6b] sm:$0xff]
      %v1802 = vld [vmem:[#allocation2 + $0x73] sm:$0xff]
      %v1803 = vld [vmem:[#allocation2 + $0x7b] sm:$0xff]
      %v1804 = vld [vmem:[#allocation2 + $0x83] sm:$0xff]
      %v1805 = vld [vmem:[#allocation2 + $0x8b] sm:$0xff]
      %v1806 = vld [vmem:[#allocation2 + $0x93] sm:$0xff]
      %v1807 = vld [vmem:[#allocation2 + $0x9b] sm:$0xff]
      %v1808 = vld [vmem:[#allocation2 + $0xa3] sm:$0xff]
      %v1809 = vld [vmem:[#allocation2 + $0xab] sm:$0xff]
      %v1810 = vld [vmem:[#allocation2 + $0xb3] sm:$0xff]
      %v1811 = vld [vmem:[#allocation2 + $0xbb] sm:$0xff]
      %v1812 = vld [vmem:[#allocation2 + $0xc3] sm:$0xff]
      %v1813 = vld [vmem:[#allocation2 + $0xcb] sm:$0xff]
      %v1814 = vld [vmem:[#allocation2 + $0xd3] sm:$0xff]
      %v1815 = vld [vmem:[#allocation2 + $0xdb] sm:$0xff]
      %v1816 = vld [vmem:[#allocation2 + $0xe3] sm:$0xff]
      %v1817 = vld [vmem:[#allocation2 + $0xeb] sm:$0xff]
      %v1818 = vld [vmem:[#allocation2 + $0xf3] sm:$0xff]
      %v1819 = vld [vmem:[#allocation2 + $0xfb] sm:$0xff]
      %v1820 = vld [vmem:[#allocation2 + $0x103] sm:$0xff]
      %v1821 = vld [vmem:[#allocation2 + $0x10b] sm:$0xff]
      %v1822 = vld [vmem:[#allocation2 + $0x113] sm:$0xff]
      %v1823 = vld [vmem:[#allocation2 + $0x11b] sm:$0xff]
      %v1824 = vld [vmem:[#allocation2 + $0x123] sm:$0xff]
      %v1825 = vld [vmem:[#allocation2 + $0x12b] sm:$0xff]
      %v1826 = vpack.c.bf16 %v1791, %v1790
      %v1827 = vpack.c.bf16 %v1793, %v1792
      %v1828 = vpack.c.bf16 %v1795, %v1794
      %v1829 = vpack.c.bf16 %v1797, %v1796
      %v1830 = vpack.c.bf16 %v1799, %v1798
      %v1831 = vpack.c.bf16 %v1801, %v1800
      %v1832 = vpack.c.bf16 %v1803, %v1802
      %v1833 = vpack.c.bf16 %v1805, %v1804
      %v1834 = vpack.c.bf16 %v1807, %v1806
      %v1835 = vpack.c.bf16 %v1809, %v1808
      %v1836 = vpack.c.bf16 %v1811, %v1810
      %v1837 = vpack.c.bf16 %v1813, %v1812
      %v1838 = vpack.c.bf16 %v1815, %v1814
      %v1839 = vpack.c.bf16 %v1817, %v1816
      %v1840 = vpack.c.bf16 %v1819, %v1818
      %v1841 = vpack.c.bf16 %v1821, %v1820
      %v1842 = vpack.c.bf16 %v1823, %v1822
      %v1843 = vpack.c.bf16 %v1825, %v1824
      %s1844 = scalar_lea.vmem %s2, 64
      %v1845 = vld [vmem:[%s1844] sm:$0xf]
      %v1846 = vld [vmem:[%s1844 + $0x4] sm:$0xf]
      %v1847 = vld [vmem:[%s1844 + $0x8] sm:$0xf]
      %v1848 = vld [vmem:[%s1844 + $0xc] sm:$0xf]
      %v1853 = vunpack.c.l.b16 %v1845
      %v1854 = vunpack.c.l.b16 %v1846
      %v1855 = vunpack.c.l.b16 %v1847
      %v1856 = vunpack.c.l.b16 %v1848
      %v1857 = vpack.c.b16 %v1854, %v1853
      %v1858 = vpack.c.b16 %v1856, %v1855
      %v1862 = vsel %vm601, %v1826, 0
      %v1865 = vsel %vm601, %v1827, 0
      %v1868 = vsel %vm601, %v1828, 0
      %v1871 = vsel %vm601, %v1829, 0
      %v1874 = vsel %vm601, %v1830, 0
      %v1877 = vsel %vm601, %v1831, 0
      %v1880 = vsel %vm601, %v1832, 0
      %v1883 = vsel %vm601, %v1833, 0
      %v1886 = vsel %vm601, %v1834, 0
      %v1889 = vsel %vm601, %v1835, 0
      %v1892 = vsel %vm601, %v1836, 0
      %v1895 = vsel %vm601, %v1837, 0
      %v1898 = vsel %vm601, %v1838, 0
      %v1901 = vsel %vm601, %v1839, 0
      %v1904 = vsel %vm601, %v1840, 0
      %v1907 = vsel %vm601, %v1841, 0
      %v1910 = vsel %vm601, %v1842, 0
      %v1913 = vsel %vm601, %v1843, 0
      %1915 = vmatpush.bf16.msra.mxu0 0
      %1916 = vmatpush.bf16.msra.mxu0 0
      %1917 = vmatpush.bf16.msra.mxu0 0
      %1918 = vmatpush.bf16.msra.mxu0 0
      %1919 = vmatpush.bf16.msra.mxu0 0
      %1920 = vmatpush.bf16.msra.mxu0 0
      %1921 = vmatpush.bf16.msra.mxu0 %v1858
      %1922 = vmatpush.bf16.msra.mxu0 %v1857
      %1923 = vmatmul.bf16.gmra.mxu0 %v1862
      %v1924 = vpop.f32.mrf.mxu0
      %v1925 = vadd.f32 0.0, %v1924
      %v1926 = vpop.f32.mrf.mxu0
      %v1927 = vadd.f32 0.0, %v1926
      %1928 = vmatmul.bf16.gmra.mxu0 %v1865
      %v1929 = vpop.f32.mrf.mxu0
      %v1930 = vadd.f32 0.0, %v1929
      %v1931 = vpop.f32.mrf.mxu0
      %v1932 = vadd.f32 0.0, %v1931
      %1933 = vmatmul.bf16.gmra.mxu0 %v1868
      %v1934 = vpop.f32.mrf.mxu0
      %v1935 = vadd.f32 0.0, %v1934
      %v1936 = vpop.f32.mrf.mxu0
      %v1937 = vadd.f32 0.0, %v1936
      %1938 = vmatmul.bf16.gmra.mxu0 %v1871
      %v1939 = vpop.f32.mrf.mxu0
      %v1940 = vadd.f32 0.0, %v1939
      %v1941 = vpop.f32.mrf.mxu0
      %v1942 = vadd.f32 0.0, %v1941
      %1943 = vmatmul.bf16.gmra.mxu0 %v1874
      %v1944 = vpop.f32.mrf.mxu0
      %v1945 = vadd.f32 0.0, %v1944
      %v1946 = vpop.f32.mrf.mxu0
      %v1947 = vadd.f32 0.0, %v1946
      %1948 = vmatmul.bf16.gmra.mxu0 %v1877
      %v1949 = vpop.f32.mrf.mxu0
      %v1950 = vadd.f32 0.0, %v1949
      %v1951 = vpop.f32.mrf.mxu0
      %v1952 = vadd.f32 0.0, %v1951
      %1953 = vmatmul.bf16.gmra.mxu0 %v1880
      %v1954 = vpop.f32.mrf.mxu0
      %v1955 = vadd.f32 0.0, %v1954
      %v1956 = vpop.f32.mrf.mxu0
      %v1957 = vadd.f32 0.0, %v1956
      %1958 = vmatmul.bf16.gmra.mxu0 %v1883
      %v1959 = vpop.f32.mrf.mxu0
      %v1960 = vadd.f32 0.0, %v1959
      %v1961 = vpop.f32.mrf.mxu0
      %v1962 = vadd.f32 0.0, %v1961
      %1963 = vmatmul.bf16.gmra.mxu0 %v1886
      %v1964 = vpop.f32.mrf.mxu0
      %v1965 = vadd.f32 0.0, %v1964
      %v1966 = vpop.f32.mrf.mxu0
      %v1967 = vadd.f32 0.0, %v1966
      %1968 = vmatmul.bf16.gmra.mxu0 %v1889
      %v1969 = vpop.f32.mrf.mxu0
      %v1970 = vadd.f32 0.0, %v1969
      %v1971 = vpop.f32.mrf.mxu0
      %v1972 = vadd.f32 0.0, %v1971
      %1973 = vmatmul.bf16.gmra.mxu0 %v1892
      %v1974 = vpop.f32.mrf.mxu0
      %v1975 = vadd.f32 0.0, %v1974
      %v1976 = vpop.f32.mrf.mxu0
      %v1977 = vadd.f32 0.0, %v1976
      %1978 = vmatmul.bf16.gmra.mxu0 %v1895
      %v1979 = vpop.f32.mrf.mxu0
      %v1980 = vadd.f32 0.0, %v1979
      %v1981 = vpop.f32.mrf.mxu0
      %v1982 = vadd.f32 0.0, %v1981
      %1983 = vmatmul.bf16.gmra.mxu0 %v1898
      %v1984 = vpop.f32.mrf.mxu0
      %v1985 = vadd.f32 0.0, %v1984
      %v1986 = vpop.f32.mrf.mxu0
      %v1987 = vadd.f32 0.0, %v1986
      %1988 = vmatmul.bf16.gmra.mxu0 %v1901
      %v1989 = vpop.f32.mrf.mxu0
      %v1990 = vadd.f32 0.0, %v1989
      %v1991 = vpop.f32.mrf.mxu0
      %v1992 = vadd.f32 0.0, %v1991
      %1993 = vmatmul.bf16.gmra.mxu0 %v1904
      %v1994 = vpop.f32.mrf.mxu0
      %v1995 = vadd.f32 0.0, %v1994
      %v1996 = vpop.f32.mrf.mxu0
      %v1997 = vadd.f32 0.0, %v1996
      %1998 = vmatmul.bf16.gmra.mxu0 %v1907
      %v1999 = vpop.f32.mrf.mxu0
      %v2000 = vadd.f32 0.0, %v1999
      %v2001 = vpop.f32.mrf.mxu0
      %v2002 = vadd.f32 0.0, %v2001
      %2003 = vmatmul.bf16.gmra.mxu0 %v1910
      %v2004 = vpop.f32.mrf.mxu0
      %v2005 = vadd.f32 0.0, %v2004
      %v2006 = vpop.f32.mrf.mxu0
      %v2007 = vadd.f32 0.0, %v2006
      %2008 = vmatmul.bf16.gmra.mxu0 %v1913
      %v2009 = vpop.f32.mrf.mxu0
      %v2010 = vadd.f32 0.0, %v2009
      %v2011 = vpop.f32.mrf.mxu0
      %v2012 = vadd.f32 0.0, %v2011
      %2013 = vdwg.mxu0
      %v2014 = vadd.f32 %v1754, %v1925
      %v2015 = vadd.f32 %v1755, %v1927
      %v2016 = vadd.f32 %v1756, %v1930
      %v2017 = vadd.f32 %v1757, %v1932
      %v2018 = vadd.f32 %v1758, %v1935
      %v2019 = vadd.f32 %v1759, %v1937
      %v2020 = vadd.f32 %v1760, %v1940
      %v2021 = vadd.f32 %v1761, %v1942
      %v2022 = vadd.f32 %v1762, %v1945
      %v2023 = vadd.f32 %v1763, %v1947
      %v2024 = vadd.f32 %v1764, %v1950
      %v2025 = vadd.f32 %v1765, %v1952
      %v2026 = vadd.f32 %v1766, %v1955
      %v2027 = vadd.f32 %v1767, %v1957
      %v2028 = vadd.f32 %v1768, %v1960
      %v2029 = vadd.f32 %v1769, %v1962
      %v2030 = vadd.f32 %v1770, %v1965
      %v2031 = vadd.f32 %v1771, %v1967
      %v2032 = vadd.f32 %v1772, %v1970
      %v2033 = vadd.f32 %v1773, %v1972
      %v2034 = vadd.f32 %v1774, %v1975
      %v2035 = vadd.f32 %v1775, %v1977
      %v2036 = vadd.f32 %v1776, %v1980
      %v2037 = vadd.f32 %v1777, %v1982
      %v2038 = vadd.f32 %v1778, %v1985
      %v2039 = vadd.f32 %v1779, %v1987
      %v2040 = vadd.f32 %v1780, %v1990
      %v2041 = vadd.f32 %v1781, %v1992
      %v2042 = vadd.f32 %v1782, %v1995
      %v2043 = vadd.f32 %v1783, %v1997
      %v2044 = vadd.f32 %v1784, %v2000
      %v2045 = vadd.f32 %v1785, %v2002
      %v2046 = vadd.f32 %v1786, %v2005
      %v2047 = vadd.f32 %v1787, %v2007
      %v2048 = vadd.f32 %v1788, %v2010
      %v2049 = vadd.f32 %v1789, %v2012
      %v2050 = vld [vmem:[#allocation2 + $0x14] sm:$0xff]
      %v2051 = vld [vmem:[#allocation2 + $0x1c] sm:$0xff]
      %v2052 = vld [vmem:[#allocation2 + $0x24] sm:$0xff]
      %v2053 = vld [vmem:[#allocation2 + $0x2c] sm:$0xff]
      %v2054 = vld [vmem:[#allocation2 + $0x34] sm:$0xff]
      %v2055 = vld [vmem:[#allocation2 + $0x3c] sm:$0xff]
      %v2056 = vld [vmem:[#allocation2 + $0x44] sm:$0xff]
      %v2057 = vld [vmem:[#allocation2 + $0x4c] sm:$0xff]
      %v2058 = vld [vmem:[#allocation2 + $0x54] sm:$0xff]
      %v2059 = vld [vmem:[#allocation2 + $0x5c] sm:$0xff]
      %v2060 = vld [vmem:[#allocation2 + $0x64] sm:$0xff]
      %v2061 = vld [vmem:[#allocation2 + $0x6c] sm:$0xff]
      %v2062 = vld [vmem:[#allocation2 + $0x74] sm:$0xff]
      %v2063 = vld [vmem:[#allocation2 + $0x7c] sm:$0xff]
      %v2064 = vld [vmem:[#allocation2 + $0x84] sm:$0xff]
      %v2065 = vld [vmem:[#allocation2 + $0x8c] sm:$0xff]
      %v2066 = vld [vmem:[#allocation2 + $0x94] sm:$0xff]
      %v2067 = vld [vmem:[#allocation2 + $0x9c] sm:$0xff]
      %v2068 = vld [vmem:[#allocation2 + $0xa4] sm:$0xff]
      %v2069 = vld [vmem:[#allocation2 + $0xac] sm:$0xff]
      %v2070 = vld [vmem:[#allocation2 + $0xb4] sm:$0xff]
      %v2071 = vld [vmem:[#allocation2 + $0xbc] sm:$0xff]
      %v2072 = vld [vmem:[#allocation2 + $0xc4] sm:$0xff]
      %v2073 = vld [vmem:[#allocation2 + $0xcc] sm:$0xff]
      %v2074 = vld [vmem:[#allocation2 + $0xd4] sm:$0xff]
      %v2075 = vld [vmem:[#allocation2 + $0xdc] sm:$0xff]
      %v2076 = vld [vmem:[#allocation2 + $0xe4] sm:$0xff]
      %v2077 = vld [vmem:[#allocation2 + $0xec] sm:$0xff]
      %v2078 = vld [vmem:[#allocation2 + $0xf4] sm:$0xff]
      %v2079 = vld [vmem:[#allocation2 + $0xfc] sm:$0xff]
      %v2080 = vld [vmem:[#allocation2 + $0x104] sm:$0xff]
      %v2081 = vld [vmem:[#allocation2 + $0x10c] sm:$0xff]
      %v2082 = vld [vmem:[#allocation2 + $0x114] sm:$0xff]
      %v2083 = vld [vmem:[#allocation2 + $0x11c] sm:$0xff]
      %v2084 = vld [vmem:[#allocation2 + $0x124] sm:$0xff]
      %v2085 = vld [vmem:[#allocation2 + $0x12c] sm:$0xff]
      %v2086 = vpack.c.bf16 %v2051, %v2050
      %v2087 = vpack.c.bf16 %v2053, %v2052
      %v2088 = vpack.c.bf16 %v2055, %v2054
      %v2089 = vpack.c.bf16 %v2057, %v2056
      %v2090 = vpack.c.bf16 %v2059, %v2058
      %v2091 = vpack.c.bf16 %v2061, %v2060
      %v2092 = vpack.c.bf16 %v2063, %v2062
      %v2093 = vpack.c.bf16 %v2065, %v2064
      %v2094 = vpack.c.bf16 %v2067, %v2066
      %v2095 = vpack.c.bf16 %v2069, %v2068
      %v2096 = vpack.c.bf16 %v2071, %v2070
      %v2097 = vpack.c.bf16 %v2073, %v2072
      %v2098 = vpack.c.bf16 %v2075, %v2074
      %v2099 = vpack.c.bf16 %v2077, %v2076
      %v2100 = vpack.c.bf16 %v2079, %v2078
      %v2101 = vpack.c.bf16 %v2081, %v2080
      %v2102 = vpack.c.bf16 %v2083, %v2082
      %v2103 = vpack.c.bf16 %v2085, %v2084
      %s2104 = scalar_lea.vmem %s2, 80
      %v2105 = vld [vmem:[%s2104] sm:$0xf]
      %v2106 = vld [vmem:[%s2104 + $0x4] sm:$0xf]
      %v2107 = vld [vmem:[%s2104 + $0x8] sm:$0xf]
      %v2108 = vld [vmem:[%s2104 + $0xc] sm:$0xf]
      %v2113 = vunpack.c.l.b16 %v2105
      %v2114 = vunpack.c.l.b16 %v2106
      %v2115 = vunpack.c.l.b16 %v2107
      %v2116 = vunpack.c.l.b16 %v2108
      %v2117 = vpack.c.b16 %v2114, %v2113
      %v2118 = vpack.c.b16 %v2116, %v2115
      %v2122 = vsel %vm601, %v2086, 0
      %v2125 = vsel %vm601, %v2087, 0
      %v2128 = vsel %vm601, %v2088, 0
      %v2131 = vsel %vm601, %v2089, 0
      %v2134 = vsel %vm601, %v2090, 0
      %v2137 = vsel %vm601, %v2091, 0
      %v2140 = vsel %vm601, %v2092, 0
      %v2143 = vsel %vm601, %v2093, 0
      %v2146 = vsel %vm601, %v2094, 0
      %v2149 = vsel %vm601, %v2095, 0
      %v2152 = vsel %vm601, %v2096, 0
      %v2155 = vsel %vm601, %v2097, 0
      %v2158 = vsel %vm601, %v2098, 0
      %v2161 = vsel %vm601, %v2099, 0
      %v2164 = vsel %vm601, %v2100, 0
      %v2167 = vsel %vm601, %v2101, 0
      %v2170 = vsel %vm601, %v2102, 0
      %v2173 = vsel %vm601, %v2103, 0
      %2175 = vmatpush.bf16.msra.mxu0 0
      %2176 = vmatpush.bf16.msra.mxu0 0
      %2177 = vmatpush.bf16.msra.mxu0 0
      %2178 = vmatpush.bf16.msra.mxu0 0
      %2179 = vmatpush.bf16.msra.mxu0 0
      %2180 = vmatpush.bf16.msra.mxu0 0
      %2181 = vmatpush.bf16.msra.mxu0 %v2118
      %2182 = vmatpush.bf16.msra.mxu0 %v2117
      %2183 = vmatmul.bf16.gmra.mxu0 %v2122
      %v2184 = vpop.f32.mrf.mxu0
      %v2185 = vadd.f32 0.0, %v2184
      %v2186 = vpop.f32.mrf.mxu0
      %v2187 = vadd.f32 0.0, %v2186
      %2188 = vmatmul.bf16.gmra.mxu0 %v2125
      %v2189 = vpop.f32.mrf.mxu0
      %v2190 = vadd.f32 0.0, %v2189
      %v2191 = vpop.f32.mrf.mxu0
      %v2192 = vadd.f32 0.0, %v2191
      %2193 = vmatmul.bf16.gmra.mxu0 %v2128
      %v2194 = vpop.f32.mrf.mxu0
      %v2195 = vadd.f32 0.0, %v2194
      %v2196 = vpop.f32.mrf.mxu0
      %v2197 = vadd.f32 0.0, %v2196
      %2198 = vmatmul.bf16.gmra.mxu0 %v2131
      %v2199 = vpop.f32.mrf.mxu0
      %v2200 = vadd.f32 0.0, %v2199
      %v2201 = vpop.f32.mrf.mxu0
      %v2202 = vadd.f32 0.0, %v2201
      %2203 = vmatmul.bf16.gmra.mxu0 %v2134
      %v2204 = vpop.f32.mrf.mxu0
      %v2205 = vadd.f32 0.0, %v2204
      %v2206 = vpop.f32.mrf.mxu0
      %v2207 = vadd.f32 0.0, %v2206
      %2208 = vmatmul.bf16.gmra.mxu0 %v2137
      %v2209 = vpop.f32.mrf.mxu0
      %v2210 = vadd.f32 0.0, %v2209
      %v2211 = vpop.f32.mrf.mxu0
      %v2212 = vadd.f32 0.0, %v2211
      %2213 = vmatmul.bf16.gmra.mxu0 %v2140
      %v2214 = vpop.f32.mrf.mxu0
      %v2215 = vadd.f32 0.0, %v2214
      %v2216 = vpop.f32.mrf.mxu0
      %v2217 = vadd.f32 0.0, %v2216
      %2218 = vmatmul.bf16.gmra.mxu0 %v2143
      %v2219 = vpop.f32.mrf.mxu0
      %v2220 = vadd.f32 0.0, %v2219
      %v2221 = vpop.f32.mrf.mxu0
      %v2222 = vadd.f32 0.0, %v2221
      %2223 = vmatmul.bf16.gmra.mxu0 %v2146
      %v2224 = vpop.f32.mrf.mxu0
      %v2225 = vadd.f32 0.0, %v2224
      %v2226 = vpop.f32.mrf.mxu0
      %v2227 = vadd.f32 0.0, %v2226
      %2228 = vmatmul.bf16.gmra.mxu0 %v2149
      %v2229 = vpop.f32.mrf.mxu0
      %v2230 = vadd.f32 0.0, %v2229
      %v2231 = vpop.f32.mrf.mxu0
      %v2232 = vadd.f32 0.0, %v2231
      %2233 = vmatmul.bf16.gmra.mxu0 %v2152
      %v2234 = vpop.f32.mrf.mxu0
      %v2235 = vadd.f32 0.0, %v2234
      %v2236 = vpop.f32.mrf.mxu0
      %v2237 = vadd.f32 0.0, %v2236
      %2238 = vmatmul.bf16.gmra.mxu0 %v2155
      %v2239 = vpop.f32.mrf.mxu0
      %v2240 = vadd.f32 0.0, %v2239
      %v2241 = vpop.f32.mrf.mxu0
      %v2242 = vadd.f32 0.0, %v2241
      %2243 = vmatmul.bf16.gmra.mxu0 %v2158
      %v2244 = vpop.f32.mrf.mxu0
      %v2245 = vadd.f32 0.0, %v2244
      %v2246 = vpop.f32.mrf.mxu0
      %v2247 = vadd.f32 0.0, %v2246
      %2248 = vmatmul.bf16.gmra.mxu0 %v2161
      %v2249 = vpop.f32.mrf.mxu0
      %v2250 = vadd.f32 0.0, %v2249
      %v2251 = vpop.f32.mrf.mxu0
      %v2252 = vadd.f32 0.0, %v2251
      %2253 = vmatmul.bf16.gmra.mxu0 %v2164
      %v2254 = vpop.f32.mrf.mxu0
      %v2255 = vadd.f32 0.0, %v2254
      %v2256 = vpop.f32.mrf.mxu0
      %v2257 = vadd.f32 0.0, %v2256
      %2258 = vmatmul.bf16.gmra.mxu0 %v2167
      %v2259 = vpop.f32.mrf.mxu0
      %v2260 = vadd.f32 0.0, %v2259
      %v2261 = vpop.f32.mrf.mxu0
      %v2262 = vadd.f32 0.0, %v2261
      %2263 = vmatmul.bf16.gmra.mxu0 %v2170
      %v2264 = vpop.f32.mrf.mxu0
      %v2265 = vadd.f32 0.0, %v2264
      %v2266 = vpop.f32.mrf.mxu0
      %v2267 = vadd.f32 0.0, %v2266
      %2268 = vmatmul.bf16.gmra.mxu0 %v2173
      %v2269 = vpop.f32.mrf.mxu0
      %v2270 = vadd.f32 0.0, %v2269
      %v2271 = vpop.f32.mrf.mxu0
      %v2272 = vadd.f32 0.0, %v2271
      %2273 = vdwg.mxu0
      %v2274 = vadd.f32 %v2014, %v2185
      %v2275 = vadd.f32 %v2015, %v2187
      %v2276 = vadd.f32 %v2016, %v2190
      %v2277 = vadd.f32 %v2017, %v2192
      %v2278 = vadd.f32 %v2018, %v2195
      %v2279 = vadd.f32 %v2019, %v2197
      %v2280 = vadd.f32 %v2020, %v2200
      %v2281 = vadd.f32 %v2021, %v2202
      %v2282 = vadd.f32 %v2022, %v2205
      %v2283 = vadd.f32 %v2023, %v2207
      %v2284 = vadd.f32 %v2024, %v2210
      %v2285 = vadd.f32 %v2025, %v2212
      %v2286 = vadd.f32 %v2026, %v2215
      %v2287 = vadd.f32 %v2027, %v2217
      %v2288 = vadd.f32 %v2028, %v2220
      %v2289 = vadd.f32 %v2029, %v2222
      %v2290 = vadd.f32 %v2030, %v2225
      %v2291 = vadd.f32 %v2031, %v2227
      %v2292 = vadd.f32 %v2032, %v2230
      %v2293 = vadd.f32 %v2033, %v2232
      %v2294 = vadd.f32 %v2034, %v2235
      %v2295 = vadd.f32 %v2035, %v2237
      %v2296 = vadd.f32 %v2036, %v2240
      %v2297 = vadd.f32 %v2037, %v2242
      %v2298 = vadd.f32 %v2038, %v2245
      %v2299 = vadd.f32 %v2039, %v2247
      %v2300 = vadd.f32 %v2040, %v2250
      %v2301 = vadd.f32 %v2041, %v2252
      %v2302 = vadd.f32 %v2042, %v2255
      %v2303 = vadd.f32 %v2043, %v2257
      %v2304 = vadd.f32 %v2044, %v2260
      %v2305 = vadd.f32 %v2045, %v2262
      %v2306 = vadd.f32 %v2046, %v2265
      %v2307 = vadd.f32 %v2047, %v2267
      %v2308 = vadd.f32 %v2048, %v2270
      %v2309 = vadd.f32 %v2049, %v2272
      %v2310 = vld [vmem:[#allocation2 + $0x24] sm:$0xff]
      %v2311 = vld [vmem:[#allocation2 + $0x2c] sm:$0xff]
      %v2312 = vld [vmem:[#allocation2 + $0x34] sm:$0xff]
      %v2313 = vld [vmem:[#allocation2 + $0x3c] sm:$0xff]
      %v2314 = vld [vmem:[#allocation2 + $0x44] sm:$0xff]
      %v2315 = vld [vmem:[#allocation2 + $0x4c] sm:$0xff]
      %v2316 = vld [vmem:[#allocation2 + $0x54] sm:$0xff]
      %v2317 = vld [vmem:[#allocation2 + $0x5c] sm:$0xff]
      %v2318 = vld [vmem:[#allocation2 + $0x64] sm:$0xff]
      %v2319 = vld [vmem:[#allocation2 + $0x6c] sm:$0xff]
      %v2320 = vld [vmem:[#allocation2 + $0x74] sm:$0xff]
      %v2321 = vld [vmem:[#allocation2 + $0x7c] sm:$0xff]
      %v2322 = vld [vmem:[#allocation2 + $0x84] sm:$0xff]
      %v2323 = vld [vmem:[#allocation2 + $0x8c] sm:$0xff]
      %v2324 = vld [vmem:[#allocation2 + $0x94] sm:$0xff]
      %v2325 = vld [vmem:[#allocation2 + $0x9c] sm:$0xff]
      %v2326 = vld [vmem:[#allocation2 + $0xa4] sm:$0xff]
      %v2327 = vld [vmem:[#allocation2 + $0xac] sm:$0xff]
      %v2328 = vld [vmem:[#allocation2 + $0xb4] sm:$0xff]
      %v2329 = vld [vmem:[#allocation2 + $0xbc] sm:$0xff]
      %v2330 = vld [vmem:[#allocation2 + $0xc4] sm:$0xff]
      %v2331 = vld [vmem:[#allocation2 + $0xcc] sm:$0xff]
      %v2332 = vld [vmem:[#allocation2 + $0xd4] sm:$0xff]
      %v2333 = vld [vmem:[#allocation2 + $0xdc] sm:$0xff]
      %v2334 = vld [vmem:[#allocation2 + $0xe4] sm:$0xff]
      %v2335 = vld [vmem:[#allocation2 + $0xec] sm:$0xff]
      %v2336 = vld [vmem:[#allocation2 + $0xf4] sm:$0xff]
      %v2337 = vld [vmem:[#allocation2 + $0xfc] sm:$0xff]
      %v2338 = vld [vmem:[#allocation2 + $0x104] sm:$0xff]
      %v2339 = vld [vmem:[#allocation2 + $0x10c] sm:$0xff]
      %v2340 = vld [vmem:[#allocation2 + $0x114] sm:$0xff]
      %v2341 = vld [vmem:[#allocation2 + $0x11c] sm:$0xff]
      %v2342 = vld [vmem:[#allocation2 + $0x124] sm:$0xff]
      %v2343 = vld [vmem:[#allocation2 + $0x12c] sm:$0xff]
      %v2344 = vld [vmem:[#allocation2 + $0x134] sm:$0xff]
      %v2345 = vld [vmem:[#allocation2 + $0x13c] sm:$0xff]
      %v2346 = vpack.c.bf16 %v2311, %v2310
      %v2347 = vpack.c.bf16 %v2313, %v2312
      %v2348 = vpack.c.bf16 %v2315, %v2314
      %v2349 = vpack.c.bf16 %v2317, %v2316
      %v2350 = vpack.c.bf16 %v2319, %v2318
      %v2351 = vpack.c.bf16 %v2321, %v2320
      %v2352 = vpack.c.bf16 %v2323, %v2322
      %v2353 = vpack.c.bf16 %v2325, %v2324
      %v2354 = vpack.c.bf16 %v2327, %v2326
      %v2355 = vpack.c.bf16 %v2329, %v2328
      %v2356 = vpack.c.bf16 %v2331, %v2330
      %v2357 = vpack.c.bf16 %v2333, %v2332
      %v2358 = vpack.c.bf16 %v2335, %v2334
      %v2359 = vpack.c.bf16 %v2337, %v2336
      %v2360 = vpack.c.bf16 %v2339, %v2338
      %v2361 = vpack.c.bf16 %v2341, %v2340
      %v2362 = vpack.c.bf16 %v2343, %v2342
      %v2363 = vpack.c.bf16 %v2345, %v2344
      %s2364 = scalar_lea.vmem %s2, 96
      %v2365 = vld [vmem:[%s2364] sm:$0xf]
      %v2366 = vld [vmem:[%s2364 + $0x4] sm:$0xf]
      %v2367 = vld [vmem:[%s2364 + $0x8] sm:$0xf]
      %v2368 = vld [vmem:[%s2364 + $0xc] sm:$0xf]
      %v2373 = vunpack.c.l.b16 %v2365
      %v2374 = vunpack.c.l.b16 %v2366
      %v2375 = vunpack.c.l.b16 %v2367
      %v2376 = vunpack.c.l.b16 %v2368
      %v2377 = vpack.c.b16 %v2374, %v2373
      %v2378 = vpack.c.b16 %v2376, %v2375
      %v2382 = vsel %vm601, %v2346, 0
      %v2385 = vsel %vm601, %v2347, 0
      %v2388 = vsel %vm601, %v2348, 0
      %v2391 = vsel %vm601, %v2349, 0
      %v2394 = vsel %vm601, %v2350, 0
      %v2397 = vsel %vm601, %v2351, 0
      %v2400 = vsel %vm601, %v2352, 0
      %v2403 = vsel %vm601, %v2353, 0
      %v2406 = vsel %vm601, %v2354, 0
      %v2409 = vsel %vm601, %v2355, 0
      %v2412 = vsel %vm601, %v2356, 0
      %v2415 = vsel %vm601, %v2357, 0
      %v2418 = vsel %vm601, %v2358, 0
      %v2421 = vsel %vm601, %v2359, 0
      %v2424 = vsel %vm601, %v2360, 0
      %v2427 = vsel %vm601, %v2361, 0
      %v2430 = vsel %vm601, %v2362, 0
      %v2433 = vsel %vm601, %v2363, 0
      %2435 = vmatpush.bf16.msra.mxu0 0
      %2436 = vmatpush.bf16.msra.mxu0 0
      %2437 = vmatpush.bf16.msra.mxu0 0
      %2438 = vmatpush.bf16.msra.mxu0 0
      %2439 = vmatpush.bf16.msra.mxu0 0
      %2440 = vmatpush.bf16.msra.mxu0 0
      %2441 = vmatpush.bf16.msra.mxu0 %v2378
      %2442 = vmatpush.bf16.msra.mxu0 %v2377
      %2443 = vmatmul.bf16.gmra.mxu0 %v2382
      %v2444 = vpop.f32.mrf.mxu0
      %v2445 = vadd.f32 0.0, %v2444
      %v2446 = vpop.f32.mrf.mxu0
      %v2447 = vadd.f32 0.0, %v2446
      %2448 = vmatmul.bf16.gmra.mxu0 %v2385
      %v2449 = vpop.f32.mrf.mxu0
      %v2450 = vadd.f32 0.0, %v2449
      %v2451 = vpop.f32.mrf.mxu0
      %v2452 = vadd.f32 0.0, %v2451
      %2453 = vmatmul.bf16.gmra.mxu0 %v2388
      %v2454 = vpop.f32.mrf.mxu0
      %v2455 = vadd.f32 0.0, %v2454
      %v2456 = vpop.f32.mrf.mxu0
      %v2457 = vadd.f32 0.0, %v2456
      %2458 = vmatmul.bf16.gmra.mxu0 %v2391
      %v2459 = vpop.f32.mrf.mxu0
      %v2460 = vadd.f32 0.0, %v2459
      %v2461 = vpop.f32.mrf.mxu0
      %v2462 = vadd.f32 0.0, %v2461
      %2463 = vmatmul.bf16.gmra.mxu0 %v2394
      %v2464 = vpop.f32.mrf.mxu0
      %v2465 = vadd.f32 0.0, %v2464
      %v2466 = vpop.f32.mrf.mxu0
      %v2467 = vadd.f32 0.0, %v2466
      %2468 = vmatmul.bf16.gmra.mxu0 %v2397
      %v2469 = vpop.f32.mrf.mxu0
      %v2470 = vadd.f32 0.0, %v2469
      %v2471 = vpop.f32.mrf.mxu0
      %v2472 = vadd.f32 0.0, %v2471
      %2473 = vmatmul.bf16.gmra.mxu0 %v2400
      %v2474 = vpop.f32.mrf.mxu0
      %v2475 = vadd.f32 0.0, %v2474
      %v2476 = vpop.f32.mrf.mxu0
      %v2477 = vadd.f32 0.0, %v2476
      %2478 = vmatmul.bf16.gmra.mxu0 %v2403
      %v2479 = vpop.f32.mrf.mxu0
      %v2480 = vadd.f32 0.0, %v2479
      %v2481 = vpop.f32.mrf.mxu0
      %v2482 = vadd.f32 0.0, %v2481
      %2483 = vmatmul.bf16.gmra.mxu0 %v2406
      %v2484 = vpop.f32.mrf.mxu0
      %v2485 = vadd.f32 0.0, %v2484
      %v2486 = vpop.f32.mrf.mxu0
      %v2487 = vadd.f32 0.0, %v2486
      %2488 = vmatmul.bf16.gmra.mxu0 %v2409
      %v2489 = vpop.f32.mrf.mxu0
      %v2490 = vadd.f32 0.0, %v2489
      %v2491 = vpop.f32.mrf.mxu0
      %v2492 = vadd.f32 0.0, %v2491
      %2493 = vmatmul.bf16.gmra.mxu0 %v2412
      %v2494 = vpop.f32.mrf.mxu0
      %v2495 = vadd.f32 0.0, %v2494
      %v2496 = vpop.f32.mrf.mxu0
      %v2497 = vadd.f32 0.0, %v2496
      %2498 = vmatmul.bf16.gmra.mxu0 %v2415
      %v2499 = vpop.f32.mrf.mxu0
      %v2500 = vadd.f32 0.0, %v2499
      %v2501 = vpop.f32.mrf.mxu0
      %v2502 = vadd.f32 0.0, %v2501
      %2503 = vmatmul.bf16.gmra.mxu0 %v2418
      %v2504 = vpop.f32.mrf.mxu0
      %v2505 = vadd.f32 0.0, %v2504
      %v2506 = vpop.f32.mrf.mxu0
      %v2507 = vadd.f32 0.0, %v2506
      %2508 = vmatmul.bf16.gmra.mxu0 %v2421
      %v2509 = vpop.f32.mrf.mxu0
      %v2510 = vadd.f32 0.0, %v2509
      %v2511 = vpop.f32.mrf.mxu0
      %v2512 = vadd.f32 0.0, %v2511
      %2513 = vmatmul.bf16.gmra.mxu0 %v2424
      %v2514 = vpop.f32.mrf.mxu0
      %v2515 = vadd.f32 0.0, %v2514
      %v2516 = vpop.f32.mrf.mxu0
      %v2517 = vadd.f32 0.0, %v2516
      %2518 = vmatmul.bf16.gmra.mxu0 %v2427
      %v2519 = vpop.f32.mrf.mxu0
      %v2520 = vadd.f32 0.0, %v2519
      %v2521 = vpop.f32.mrf.mxu0
      %v2522 = vadd.f32 0.0, %v2521
      %2523 = vmatmul.bf16.gmra.mxu0 %v2430
      %v2524 = vpop.f32.mrf.mxu0
      %v2525 = vadd.f32 0.0, %v2524
      %v2526 = vpop.f32.mrf.mxu0
      %v2527 = vadd.f32 0.0, %v2526
      %2528 = vmatmul.bf16.gmra.mxu0 %v2433
      %v2529 = vpop.f32.mrf.mxu0
      %v2530 = vadd.f32 0.0, %v2529
      %v2531 = vpop.f32.mrf.mxu0
      %v2532 = vadd.f32 0.0, %v2531
      %2533 = vdwg.mxu0
      %v2534 = vadd.f32 %v2274, %v2445
      %v2535 = vadd.f32 %v2275, %v2447
      %v2536 = vadd.f32 %v2276, %v2450
      %v2537 = vadd.f32 %v2277, %v2452
      %v2538 = vadd.f32 %v2278, %v2455
      %v2539 = vadd.f32 %v2279, %v2457
      %v2540 = vadd.f32 %v2280, %v2460
      %v2541 = vadd.f32 %v2281, %v2462
      %v2542 = vadd.f32 %v2282, %v2465
      %v2543 = vadd.f32 %v2283, %v2467
      %v2544 = vadd.f32 %v2284, %v2470
      %v2545 = vadd.f32 %v2285, %v2472
      %v2546 = vadd.f32 %v2286, %v2475
      %v2547 = vadd.f32 %v2287, %v2477
      %v2548 = vadd.f32 %v2288, %v2480
      %v2549 = vadd.f32 %v2289, %v2482
      %v2550 = vadd.f32 %v2290, %v2485
      %v2551 = vadd.f32 %v2291, %v2487
      %v2552 = vadd.f32 %v2292, %v2490
      %v2553 = vadd.f32 %v2293, %v2492
      %v2554 = vadd.f32 %v2294, %v2495
      %v2555 = vadd.f32 %v2295, %v2497
      %v2556 = vadd.f32 %v2296, %v2500
      %v2557 = vadd.f32 %v2297, %v2502
      %v2558 = vadd.f32 %v2298, %v2505
      %v2559 = vadd.f32 %v2299, %v2507
      %v2560 = vadd.f32 %v2300, %v2510
      %v2561 = vadd.f32 %v2301, %v2512
      %v2562 = vadd.f32 %v2302, %v2515
      %v2563 = vadd.f32 %v2303, %v2517
      %v2564 = vadd.f32 %v2304, %v2520
      %v2565 = vadd.f32 %v2305, %v2522
      %v2566 = vadd.f32 %v2306, %v2525
      %v2567 = vadd.f32 %v2307, %v2527
      %v2568 = vadd.f32 %v2308, %v2530
      %v2569 = vadd.f32 %v2309, %v2532
      %v2570 = vld [vmem:[#allocation2 + $0x25] sm:$0xff]
      %v2571 = vld [vmem:[#allocation2 + $0x2d] sm:$0xff]
      %v2572 = vld [vmem:[#allocation2 + $0x35] sm:$0xff]
      %v2573 = vld [vmem:[#allocation2 + $0x3d] sm:$0xff]
      %v2574 = vld [vmem:[#allocation2 + $0x45] sm:$0xff]
      %v2575 = vld [vmem:[#allocation2 + $0x4d] sm:$0xff]
      %v2576 = vld [vmem:[#allocation2 + $0x55] sm:$0xff]
      %v2577 = vld [vmem:[#allocation2 + $0x5d] sm:$0xff]
      %v2578 = vld [vmem:[#allocation2 + $0x65] sm:$0xff]
      %v2579 = vld [vmem:[#allocation2 + $0x6d] sm:$0xff]
      %v2580 = vld [vmem:[#allocation2 + $0x75] sm:$0xff]
      %v2581 = vld [vmem:[#allocation2 + $0x7d] sm:$0xff]
      %v2582 = vld [vmem:[#allocation2 + $0x85] sm:$0xff]
      %v2583 = vld [vmem:[#allocation2 + $0x8d] sm:$0xff]
      %v2584 = vld [vmem:[#allocation2 + $0x95] sm:$0xff]
      %v2585 = vld [vmem:[#allocation2 + $0x9d] sm:$0xff]
      %v2586 = vld [vmem:[#allocation2 + $0xa5] sm:$0xff]
      %v2587 = vld [vmem:[#allocation2 + $0xad] sm:$0xff]
      %v2588 = vld [vmem:[#allocation2 + $0xb5] sm:$0xff]
      %v2589 = vld [vmem:[#allocation2 + $0xbd] sm:$0xff]
      %v2590 = vld [vmem:[#allocation2 + $0xc5] sm:$0xff]
      %v2591 = vld [vmem:[#allocation2 + $0xcd] sm:$0xff]
      %v2592 = vld [vmem:[#allocation2 + $0xd5] sm:$0xff]
      %v2593 = vld [vmem:[#allocation2 + $0xdd] sm:$0xff]
      %v2594 = vld [vmem:[#allocation2 + $0xe5] sm:$0xff]
      %v2595 = vld [vmem:[#allocation2 + $0xed] sm:$0xff]
      %v2596 = vld [vmem:[#allocation2 + $0xf5] sm:$0xff]
      %v2597 = vld [vmem:[#allocation2 + $0xfd] sm:$0xff]
      %v2598 = vld [vmem:[#allocation2 + $0x105] sm:$0xff]
      %v2599 = vld [vmem:[#allocation2 + $0x10d] sm:$0xff]
      %v2600 = vld [vmem:[#allocation2 + $0x115] sm:$0xff]
      %v2601 = vld [vmem:[#allocation2 + $0x11d] sm:$0xff]
      %v2602 = vld [vmem:[#allocation2 + $0x125] sm:$0xff]
      %v2603 = vld [vmem:[#allocation2 + $0x12d] sm:$0xff]
      %v2604 = vld [vmem:[#allocation2 + $0x135] sm:$0xff]
      %v2605 = vld [vmem:[#allocation2 + $0x13d] sm:$0xff]
      %v2606 = vpack.c.bf16 %v2571, %v2570
      %v2607 = vpack.c.bf16 %v2573, %v2572
      %v2608 = vpack.c.bf16 %v2575, %v2574
      %v2609 = vpack.c.bf16 %v2577, %v2576
      %v2610 = vpack.c.bf16 %v2579, %v2578
      %v2611 = vpack.c.bf16 %v2581, %v2580
      %v2612 = vpack.c.bf16 %v2583, %v2582
      %v2613 = vpack.c.bf16 %v2585, %v2584
      %v2614 = vpack.c.bf16 %v2587, %v2586
      %v2615 = vpack.c.bf16 %v2589, %v2588
      %v2616 = vpack.c.bf16 %v2591, %v2590
      %v2617 = vpack.c.bf16 %v2593, %v2592
      %v2618 = vpack.c.bf16 %v2595, %v2594
      %v2619 = vpack.c.bf16 %v2597, %v2596
      %v2620 = vpack.c.bf16 %v2599, %v2598
      %v2621 = vpack.c.bf16 %v2601, %v2600
      %v2622 = vpack.c.bf16 %v2603, %v2602
      %v2623 = vpack.c.bf16 %v2605, %v2604
      %s2624 = scalar_lea.vmem %s2, 112
      %v2625 = vld [vmem:[%s2624] sm:$0xf]
      %v2626 = vld [vmem:[%s2624 + $0x4] sm:$0xf]
      %v2627 = vld [vmem:[%s2624 + $0x8] sm:$0xf]
      %v2628 = vld [vmem:[%s2624 + $0xc] sm:$0xf]
      %v2633 = vunpack.c.l.b16 %v2625
      %v2634 = vunpack.c.l.b16 %v2626
      %v2635 = vunpack.c.l.b16 %v2627
      %v2636 = vunpack.c.l.b16 %v2628
      %v2637 = vpack.c.b16 %v2634, %v2633
      %v2638 = vpack.c.b16 %v2636, %v2635
      %v2642 = vsel %vm601, %v2606, 0
      %v2645 = vsel %vm601, %v2607, 0
      %v2648 = vsel %vm601, %v2608, 0
      %v2651 = vsel %vm601, %v2609, 0
      %v2654 = vsel %vm601, %v2610, 0
      %v2657 = vsel %vm601, %v2611, 0
      %v2660 = vsel %vm601, %v2612, 0
      %v2663 = vsel %vm601, %v2613, 0
      %v2666 = vsel %vm601, %v2614, 0
      %v2669 = vsel %vm601, %v2615, 0
      %v2672 = vsel %vm601, %v2616, 0
      %v2675 = vsel %vm601, %v2617, 0
      %v2678 = vsel %vm601, %v2618, 0
      %v2681 = vsel %vm601, %v2619, 0
      %v2684 = vsel %vm601, %v2620, 0
      %v2687 = vsel %vm601, %v2621, 0
      %v2690 = vsel %vm601, %v2622, 0
      %v2693 = vsel %vm601, %v2623, 0
      %2695 = vmatpush.bf16.msra.mxu0 0
      %2696 = vmatpush.bf16.msra.mxu0 0
      %2697 = vmatpush.bf16.msra.mxu0 0
      %2698 = vmatpush.bf16.msra.mxu0 0
      %2699 = vmatpush.bf16.msra.mxu0 0
      %2700 = vmatpush.bf16.msra.mxu0 0
      %2701 = vmatpush.bf16.msra.mxu0 %v2638
      %2702 = vmatpush.bf16.msra.mxu0 %v2637
      %2703 = vmatmul.bf16.gmra.mxu0 %v2642
      %v2704 = vpop.f32.mrf.mxu0
      %v2705 = vadd.f32 0.0, %v2704
      %v2706 = vpop.f32.mrf.mxu0
      %v2707 = vadd.f32 0.0, %v2706
      %2708 = vmatmul.bf16.gmra.mxu0 %v2645
      %v2709 = vpop.f32.mrf.mxu0
      %v2710 = vadd.f32 0.0, %v2709
      %v2711 = vpop.f32.mrf.mxu0
      %v2712 = vadd.f32 0.0, %v2711
      %2713 = vmatmul.bf16.gmra.mxu0 %v2648
      %v2714 = vpop.f32.mrf.mxu0
      %v2715 = vadd.f32 0.0, %v2714
      %v2716 = vpop.f32.mrf.mxu0
      %v2717 = vadd.f32 0.0, %v2716
      %2718 = vmatmul.bf16.gmra.mxu0 %v2651
      %v2719 = vpop.f32.mrf.mxu0
      %v2720 = vadd.f32 0.0, %v2719
      %v2721 = vpop.f32.mrf.mxu0
      %v2722 = vadd.f32 0.0, %v2721
      %2723 = vmatmul.bf16.gmra.mxu0 %v2654
      %v2724 = vpop.f32.mrf.mxu0
      %v2725 = vadd.f32 0.0, %v2724
      %v2726 = vpop.f32.mrf.mxu0
      %v2727 = vadd.f32 0.0, %v2726
      %2728 = vmatmul.bf16.gmra.mxu0 %v2657
      %v2729 = vpop.f32.mrf.mxu0
      %v2730 = vadd.f32 0.0, %v2729
      %v2731 = vpop.f32.mrf.mxu0
      %v2732 = vadd.f32 0.0, %v2731
      %2733 = vmatmul.bf16.gmra.mxu0 %v2660
      %v2734 = vpop.f32.mrf.mxu0
      %v2735 = vadd.f32 0.0, %v2734
      %v2736 = vpop.f32.mrf.mxu0
      %v2737 = vadd.f32 0.0, %v2736
      %2738 = vmatmul.bf16.gmra.mxu0 %v2663
      %v2739 = vpop.f32.mrf.mxu0
      %v2740 = vadd.f32 0.0, %v2739
      %v2741 = vpop.f32.mrf.mxu0
      %v2742 = vadd.f32 0.0, %v2741
      %2743 = vmatmul.bf16.gmra.mxu0 %v2666
      %v2744 = vpop.f32.mrf.mxu0
      %v2745 = vadd.f32 0.0, %v2744
      %v2746 = vpop.f32.mrf.mxu0
      %v2747 = vadd.f32 0.0, %v2746
      %2748 = vmatmul.bf16.gmra.mxu0 %v2669
      %v2749 = vpop.f32.mrf.mxu0
      %v2750 = vadd.f32 0.0, %v2749
      %v2751 = vpop.f32.mrf.mxu0
      %v2752 = vadd.f32 0.0, %v2751
      %2753 = vmatmul.bf16.gmra.mxu0 %v2672
      %v2754 = vpop.f32.mrf.mxu0
      %v2755 = vadd.f32 0.0, %v2754
      %v2756 = vpop.f32.mrf.mxu0
      %v2757 = vadd.f32 0.0, %v2756
      %2758 = vmatmul.bf16.gmra.mxu0 %v2675
      %v2759 = vpop.f32.mrf.mxu0
      %v2760 = vadd.f32 0.0, %v2759
      %v2761 = vpop.f32.mrf.mxu0
      %v2762 = vadd.f32 0.0, %v2761
      %2763 = vmatmul.bf16.gmra.mxu0 %v2678
      %v2764 = vpop.f32.mrf.mxu0
      %v2765 = vadd.f32 0.0, %v2764
      %v2766 = vpop.f32.mrf.mxu0
      %v2767 = vadd.f32 0.0, %v2766
      %2768 = vmatmul.bf16.gmra.mxu0 %v2681
      %v2769 = vpop.f32.mrf.mxu0
      %v2770 = vadd.f32 0.0, %v2769
      %v2771 = vpop.f32.mrf.mxu0
      %v2772 = vadd.f32 0.0, %v2771
      %2773 = vmatmul.bf16.gmra.mxu0 %v2684
      %v2774 = vpop.f32.mrf.mxu0
      %v2775 = vadd.f32 0.0, %v2774
      %v2776 = vpop.f32.mrf.mxu0
      %v2777 = vadd.f32 0.0, %v2776
      %2778 = vmatmul.bf16.gmra.mxu0 %v2687
      %v2779 = vpop.f32.mrf.mxu0
      %v2780 = vadd.f32 0.0, %v2779
      %v2781 = vpop.f32.mrf.mxu0
      %v2782 = vadd.f32 0.0, %v2781
      %2783 = vmatmul.bf16.gmra.mxu0 %v2690
      %v2784 = vpop.f32.mrf.mxu0
      %v2785 = vadd.f32 0.0, %v2784
      %v2786 = vpop.f32.mrf.mxu0
      %v2787 = vadd.f32 0.0, %v2786
      %2788 = vmatmul.bf16.gmra.mxu0 %v2693
      %v2789 = vpop.f32.mrf.mxu0
      %v2790 = vadd.f32 0.0, %v2789
      %v2791 = vpop.f32.mrf.mxu0
      %v2792 = vadd.f32 0.0, %v2791
      %2793 = vdwg.mxu0
      %v2794 = vadd.f32 %v2534, %v2705
      %v2795 = vadd.f32 %v2535, %v2707
      %v2796 = vadd.f32 %v2536, %v2710
      %v2797 = vadd.f32 %v2537, %v2712
      %v2798 = vadd.f32 %v2538, %v2715
      %v2799 = vadd.f32 %v2539, %v2717
      %v2800 = vadd.f32 %v2540, %v2720
      %v2801 = vadd.f32 %v2541, %v2722
      %v2802 = vadd.f32 %v2542, %v2725
      %v2803 = vadd.f32 %v2543, %v2727
      %v2804 = vadd.f32 %v2544, %v2730
      %v2805 = vadd.f32 %v2545, %v2732
      %v2806 = vadd.f32 %v2546, %v2735
      %v2807 = vadd.f32 %v2547, %v2737
      %v2808 = vadd.f32 %v2548, %v2740
      %v2809 = vadd.f32 %v2549, %v2742
      %v2810 = vadd.f32 %v2550, %v2745
      %v2811 = vadd.f32 %v2551, %v2747
      %v2812 = vadd.f32 %v2552, %v2750
      %v2813 = vadd.f32 %v2553, %v2752
      %v2814 = vadd.f32 %v2554, %v2755
      %v2815 = vadd.f32 %v2555, %v2757
      %v2816 = vadd.f32 %v2556, %v2760
      %v2817 = vadd.f32 %v2557, %v2762
      %v2818 = vadd.f32 %v2558, %v2765
      %v2819 = vadd.f32 %v2559, %v2767
      %v2820 = vadd.f32 %v2560, %v2770
      %v2821 = vadd.f32 %v2561, %v2772
      %v2822 = vadd.f32 %v2562, %v2775
      %v2823 = vadd.f32 %v2563, %v2777
      %v2824 = vadd.f32 %v2564, %v2780
      %v2825 = vadd.f32 %v2565, %v2782
      %v2826 = vadd.f32 %v2566, %v2785
      %v2827 = vadd.f32 %v2567, %v2787
      %v2828 = vadd.f32 %v2568, %v2790
      %v2829 = vadd.f32 %v2569, %v2792
      %v2830 = vld [vmem:[#allocation2 + $0x26] sm:$0xff]
      %v2831 = vld [vmem:[#allocation2 + $0x2e] sm:$0xff]
      %v2832 = vld [vmem:[#allocation2 + $0x36] sm:$0xff]
      %v2833 = vld [vmem:[#allocation2 + $0x3e] sm:$0xff]
      %v2834 = vld [vmem:[#allocation2 + $0x46] sm:$0xff]
      %v2835 = vld [vmem:[#allocation2 + $0x4e] sm:$0xff]
      %v2836 = vld [vmem:[#allocation2 + $0x56] sm:$0xff]
      %v2837 = vld [vmem:[#allocation2 + $0x5e] sm:$0xff]
      %v2838 = vld [vmem:[#allocation2 + $0x66] sm:$0xff]
      %v2839 = vld [vmem:[#allocation2 + $0x6e] sm:$0xff]
      %v2840 = vld [vmem:[#allocation2 + $0x76] sm:$0xff]
      %v2841 = vld [vmem:[#allocation2 + $0x7e] sm:$0xff]
      %v2842 = vld [vmem:[#allocation2 + $0x86] sm:$0xff]
      %v2843 = vld [vmem:[#allocation2 + $0x8e] sm:$0xff]
      %v2844 = vld [vmem:[#allocation2 + $0x96] sm:$0xff]
      %v2845 = vld [vmem:[#allocation2 + $0x9e] sm:$0xff]
      %v2846 = vld [vmem:[#allocation2 + $0xa6] sm:$0xff]
      %v2847 = vld [vmem:[#allocation2 + $0xae] sm:$0xff]
      %v2848 = vld [vmem:[#allocation2 + $0xb6] sm:$0xff]
      %v2849 = vld [vmem:[#allocation2 + $0xbe] sm:$0xff]
      %v2850 = vld [vmem:[#allocation2 + $0xc6] sm:$0xff]
      %v2851 = vld [vmem:[#allocation2 + $0xce] sm:$0xff]
      %v2852 = vld [vmem:[#allocation2 + $0xd6] sm:$0xff]
      %v2853 = vld [vmem:[#allocation2 + $0xde] sm:$0xff]
      %v2854 = vld [vmem:[#allocation2 + $0xe6] sm:$0xff]
      %v2855 = vld [vmem:[#allocation2 + $0xee] sm:$0xff]
      %v2856 = vld [vmem:[#allocation2 + $0xf6] sm:$0xff]
      %v2857 = vld [vmem:[#allocation2 + $0xfe] sm:$0xff]
      %v2858 = vld [vmem:[#allocation2 + $0x106] sm:$0xff]
      %v2859 = vld [vmem:[#allocation2 + $0x10e] sm:$0xff]
      %v2860 = vld [vmem:[#allocation2 + $0x116] sm:$0xff]
      %v2861 = vld [vmem:[#allocation2 + $0x11e] sm:$0xff]
      %v2862 = vld [vmem:[#allocation2 + $0x126] sm:$0xff]
      %v2863 = vld [vmem:[#allocation2 + $0x12e] sm:$0xff]
      %v2864 = vld [vmem:[#allocation2 + $0x136] sm:$0xff]
      %v2865 = vld [vmem:[#allocation2 + $0x13e] sm:$0xff]
      %v2866 = vpack.c.bf16 %v2831, %v2830
      %v2867 = vpack.c.bf16 %v2833, %v2832
      %v2868 = vpack.c.bf16 %v2835, %v2834
      %v2869 = vpack.c.bf16 %v2837, %v2836
      %v2870 = vpack.c.bf16 %v2839, %v2838
      %v2871 = vpack.c.bf16 %v2841, %v2840
      %v2872 = vpack.c.bf16 %v2843, %v2842
      %v2873 = vpack.c.bf16 %v2845, %v2844
      %v2874 = vpack.c.bf16 %v2847, %v2846
      %v2875 = vpack.c.bf16 %v2849, %v2848
      %v2876 = vpack.c.bf16 %v2851, %v2850
      %v2877 = vpack.c.bf16 %v2853, %v2852
      %v2878 = vpack.c.bf16 %v2855, %v2854
      %v2879 = vpack.c.bf16 %v2857, %v2856
      %v2880 = vpack.c.bf16 %v2859, %v2858
      %v2881 = vpack.c.bf16 %v2861, %v2860
      %v2882 = vpack.c.bf16 %v2863, %v2862
      %v2883 = vpack.c.bf16 %v2865, %v2864
      %s2884 = scalar_lea.vmem %s2, 128
      %v2885 = vld [vmem:[%s2884] sm:$0xf]
      %v2886 = vld [vmem:[%s2884 + $0x4] sm:$0xf]
      %v2887 = vld [vmem:[%s2884 + $0x8] sm:$0xf]
      %v2888 = vld [vmem:[%s2884 + $0xc] sm:$0xf]
      %v2893 = vunpack.c.l.b16 %v2885
      %v2894 = vunpack.c.l.b16 %v2886
      %v2895 = vunpack.c.l.b16 %v2887
      %v2896 = vunpack.c.l.b16 %v2888
      %v2897 = vpack.c.b16 %v2894, %v2893
      %v2898 = vpack.c.b16 %v2896, %v2895
      %v2902 = vsel %vm601, %v2866, 0
      %v2905 = vsel %vm601, %v2867, 0
      %v2908 = vsel %vm601, %v2868, 0
      %v2911 = vsel %vm601, %v2869, 0
      %v2914 = vsel %vm601, %v2870, 0
      %v2917 = vsel %vm601, %v2871, 0
      %v2920 = vsel %vm601, %v2872, 0
      %v2923 = vsel %vm601, %v2873, 0
      %v2926 = vsel %vm601, %v2874, 0
      %v2929 = vsel %vm601, %v2875, 0
      %v2932 = vsel %vm601, %v2876, 0
      %v2935 = vsel %vm601, %v2877, 0
      %v2938 = vsel %vm601, %v2878, 0
      %v2941 = vsel %vm601, %v2879, 0
      %v2944 = vsel %vm601, %v2880, 0
      %v2947 = vsel %vm601, %v2881, 0
      %v2950 = vsel %vm601, %v2882, 0
      %v2953 = vsel %vm601, %v2883, 0
      %2955 = vmatpush.bf16.msra.mxu0 0
      %2956 = vmatpush.bf16.msra.mxu0 0
      %2957 = vmatpush.bf16.msra.mxu0 0
      %2958 = vmatpush.bf16.msra.mxu0 0
      %2959 = vmatpush.bf16.msra.mxu0 0
      %2960 = vmatpush.bf16.msra.mxu0 0
      %2961 = vmatpush.bf16.msra.mxu0 %v2898
      %2962 = vmatpush.bf16.msra.mxu0 %v2897
      %2963 = vmatmul.bf16.gmra.mxu0 %v2902
      %v2964 = vpop.f32.mrf.mxu0
      %v2965 = vadd.f32 0.0, %v2964
      %v2966 = vpop.f32.mrf.mxu0
      %v2967 = vadd.f32 0.0, %v2966
      %2968 = vmatmul.bf16.gmra.mxu0 %v2905
      %v2969 = vpop.f32.mrf.mxu0
      %v2970 = vadd.f32 0.0, %v2969
      %v2971 = vpop.f32.mrf.mxu0
      %v2972 = vadd.f32 0.0, %v2971
      %2973 = vmatmul.bf16.gmra.mxu0 %v2908
      %v2974 = vpop.f32.mrf.mxu0
      %v2975 = vadd.f32 0.0, %v2974
      %v2976 = vpop.f32.mrf.mxu0
      %v2977 = vadd.f32 0.0, %v2976
      %2978 = vmatmul.bf16.gmra.mxu0 %v2911
      %v2979 = vpop.f32.mrf.mxu0
      %v2980 = vadd.f32 0.0, %v2979
      %v2981 = vpop.f32.mrf.mxu0
      %v2982 = vadd.f32 0.0, %v2981
      %2983 = vmatmul.bf16.gmra.mxu0 %v2914
      %v2984 = vpop.f32.mrf.mxu0
      %v2985 = vadd.f32 0.0, %v2984
      %v2986 = vpop.f32.mrf.mxu0
      %v2987 = vadd.f32 0.0, %v2986
      %2988 = vmatmul.bf16.gmra.mxu0 %v2917
      %v2989 = vpop.f32.mrf.mxu0
      %v2990 = vadd.f32 0.0, %v2989
      %v2991 = vpop.f32.mrf.mxu0
      %v2992 = vadd.f32 0.0, %v2991
      %2993 = vmatmul.bf16.gmra.mxu0 %v2920
      %v2994 = vpop.f32.mrf.mxu0
      %v2995 = vadd.f32 0.0, %v2994
      %v2996 = vpop.f32.mrf.mxu0
      %v2997 = vadd.f32 0.0, %v2996
      %2998 = vmatmul.bf16.gmra.mxu0 %v2923
      %v2999 = vpop.f32.mrf.mxu0
      %v3000 = vadd.f32 0.0, %v2999
      %v3001 = vpop.f32.mrf.mxu0
      %v3002 = vadd.f32 0.0, %v3001
      %3003 = vmatmul.bf16.gmra.mxu0 %v2926
      %v3004 = vpop.f32.mrf.mxu0
      %v3005 = vadd.f32 0.0, %v3004
      %v3006 = vpop.f32.mrf.mxu0
      %v3007 = vadd.f32 0.0, %v3006
      %3008 = vmatmul.bf16.gmra.mxu0 %v2929
      %v3009 = vpop.f32.mrf.mxu0
      %v3010 = vadd.f32 0.0, %v3009
      %v3011 = vpop.f32.mrf.mxu0
      %v3012 = vadd.f32 0.0, %v3011
      %3013 = vmatmul.bf16.gmra.mxu0 %v2932
      %v3014 = vpop.f32.mrf.mxu0
      %v3015 = vadd.f32 0.0, %v3014
      %v3016 = vpop.f32.mrf.mxu0
      %v3017 = vadd.f32 0.0, %v3016
      %3018 = vmatmul.bf16.gmra.mxu0 %v2935
      %v3019 = vpop.f32.mrf.mxu0
      %v3020 = vadd.f32 0.0, %v3019
      %v3021 = vpop.f32.mrf.mxu0
      %v3022 = vadd.f32 0.0, %v3021
      %3023 = vmatmul.bf16.gmra.mxu0 %v2938
      %v3024 = vpop.f32.mrf.mxu0
      %v3025 = vadd.f32 0.0, %v3024
      %v3026 = vpop.f32.mrf.mxu0
      %v3027 = vadd.f32 0.0, %v3026
      %3028 = vmatmul.bf16.gmra.mxu0 %v2941
      %v3029 = vpop.f32.mrf.mxu0
      %v3030 = vadd.f32 0.0, %v3029
      %v3031 = vpop.f32.mrf.mxu0
      %v3032 = vadd.f32 0.0, %v3031
      %3033 = vmatmul.bf16.gmra.mxu0 %v2944
      %v3034 = vpop.f32.mrf.mxu0
      %v3035 = vadd.f32 0.0, %v3034
      %v3036 = vpop.f32.mrf.mxu0
      %v3037 = vadd.f32 0.0, %v3036
      %3038 = vmatmul.bf16.gmra.mxu0 %v2947
      %v3039 = vpop.f32.mrf.mxu0
      %v3040 = vadd.f32 0.0, %v3039
      %v3041 = vpop.f32.mrf.mxu0
      %v3042 = vadd.f32 0.0, %v3041
      %3043 = vmatmul.bf16.gmra.mxu0 %v2950
      %v3044 = vpop.f32.mrf.mxu0
      %v3045 = vadd.f32 0.0, %v3044
      %v3046 = vpop.f32.mrf.mxu0
      %v3047 = vadd.f32 0.0, %v3046
      %3048 = vmatmul.bf16.gmra.mxu0 %v2953
      %v3049 = vpop.f32.mrf.mxu0
      %v3050 = vadd.f32 0.0, %v3049
      %v3051 = vpop.f32.mrf.mxu0
      %v3052 = vadd.f32 0.0, %v3051
      %3053 = vdwg.mxu0
      %v3054 = vadd.f32 %v2794, %v2965
      %v3055 = vadd.f32 %v2795, %v2967
      %v3056 = vadd.f32 %v2796, %v2970
      %v3057 = vadd.f32 %v2797, %v2972
      %v3058 = vadd.f32 %v2798, %v2975
      %v3059 = vadd.f32 %v2799, %v2977
      %v3060 = vadd.f32 %v2800, %v2980
      %v3061 = vadd.f32 %v2801, %v2982
      %v3062 = vadd.f32 %v2802, %v2985
      %v3063 = vadd.f32 %v2803, %v2987
      %v3064 = vadd.f32 %v2804, %v2990
      %v3065 = vadd.f32 %v2805, %v2992
      %v3066 = vadd.f32 %v2806, %v2995
      %v3067 = vadd.f32 %v2807, %v2997
      %v3068 = vadd.f32 %v2808, %v3000
      %v3069 = vadd.f32 %v2809, %v3002
      %v3070 = vadd.f32 %v2810, %v3005
      %v3071 = vadd.f32 %v2811, %v3007
      %v3072 = vadd.f32 %v2812, %v3010
      %v3073 = vadd.f32 %v2813, %v3012
      %v3074 = vadd.f32 %v2814, %v3015
      %v3075 = vadd.f32 %v2815, %v3017
      %v3076 = vadd.f32 %v2816, %v3020
      %v3077 = vadd.f32 %v2817, %v3022
      %v3078 = vadd.f32 %v2818, %v3025
      %v3079 = vadd.f32 %v2819, %v3027
      %v3080 = vadd.f32 %v2820, %v3030
      %v3081 = vadd.f32 %v2821, %v3032
      %v3082 = vadd.f32 %v2822, %v3035
      %v3083 = vadd.f32 %v2823, %v3037
      %v3084 = vadd.f32 %v2824, %v3040
      %v3085 = vadd.f32 %v2825, %v3042
      %v3086 = vadd.f32 %v2826, %v3045
      %v3087 = vadd.f32 %v2827, %v3047
      %v3088 = vadd.f32 %v2828, %v3050
      %v3089 = vadd.f32 %v2829, %v3052
      %v3090 = vld [vmem:[%s4] sm:$0x1]
      %v3092 = vperm.slane %v3090, 0
      %v3094 = vadd.f32 %v3054, %v3092
      %v3095 = vadd.f32 %v3055, %v3092
      %v3096 = vadd.f32 %v3056, %v3092
      %v3097 = vadd.f32 %v3057, %v3092
      %v3098 = vadd.f32 %v3058, %v3092
      %v3099 = vadd.f32 %v3059, %v3092
      %v3100 = vadd.f32 %v3060, %v3092
      %v3101 = vadd.f32 %v3061, %v3092
      %v3102 = vadd.f32 %v3062, %v3092
      %v3103 = vadd.f32 %v3063, %v3092
      %v3104 = vadd.f32 %v3064, %v3092
      %v3105 = vadd.f32 %v3065, %v3092
      %v3106 = vadd.f32 %v3066, %v3092
      %v3107 = vadd.f32 %v3067, %v3092
      %v3108 = vadd.f32 %v3068, %v3092
      %v3109 = vadd.f32 %v3069, %v3092
      %v3110 = vadd.f32 %v3070, %v3092
      %v3111 = vadd.f32 %v3071, %v3092
      %v3112 = vadd.f32 %v3072, %v3092
      %v3113 = vadd.f32 %v3073, %v3092
      %v3114 = vadd.f32 %v3074, %v3092
      %v3115 = vadd.f32 %v3075, %v3092
      %v3116 = vadd.f32 %v3076, %v3092
      %v3117 = vadd.f32 %v3077, %v3092
      %v3118 = vadd.f32 %v3078, %v3092
      %v3119 = vadd.f32 %v3079, %v3092
      %v3120 = vadd.f32 %v3080, %v3092
      %v3121 = vadd.f32 %v3081, %v3092
      %v3122 = vadd.f32 %v3082, %v3092
      %v3123 = vadd.f32 %v3083, %v3092
      %v3124 = vadd.f32 %v3084, %v3092
      %v3125 = vadd.f32 %v3085, %v3092
      %v3126 = vadd.f32 %v3086, %v3092
      %v3127 = vadd.f32 %v3087, %v3092
      %v3128 = vadd.f32 %v3088, %v3092
      %v3129 = vadd.f32 %v3089, %v3092
      %v3130 = vxor.u32 %v3094, 2147483648
      %v3131 = vxor.u32 %v3095, 2147483648
      %v3132 = vxor.u32 %v3096, 2147483648
      %v3133 = vxor.u32 %v3097, 2147483648
      %v3134 = vxor.u32 %v3098, 2147483648
      %v3135 = vxor.u32 %v3099, 2147483648
      %v3136 = vxor.u32 %v3100, 2147483648
      %v3137 = vxor.u32 %v3101, 2147483648
      %v3138 = vxor.u32 %v3102, 2147483648
      %v3139 = vxor.u32 %v3103, 2147483648
      %v3140 = vxor.u32 %v3104, 2147483648
      %v3141 = vxor.u32 %v3105, 2147483648
      %v3142 = vxor.u32 %v3106, 2147483648
      %v3143 = vxor.u32 %v3107, 2147483648
      %v3144 = vxor.u32 %v3108, 2147483648
      %v3145 = vxor.u32 %v3109, 2147483648
      %v3146 = vxor.u32 %v3110, 2147483648
      %v3147 = vxor.u32 %v3111, 2147483648
      %v3148 = vxor.u32 %v3112, 2147483648
      %v3149 = vxor.u32 %v3113, 2147483648
      %v3150 = vxor.u32 %v3114, 2147483648
      %v3151 = vxor.u32 %v3115, 2147483648
      %v3152 = vxor.u32 %v3116, 2147483648
      %v3153 = vxor.u32 %v3117, 2147483648
      %v3154 = vxor.u32 %v3118, 2147483648
      %v3155 = vxor.u32 %v3119, 2147483648
      %v3156 = vxor.u32 %v3120, 2147483648
      %v3157 = vxor.u32 %v3121, 2147483648
      %v3158 = vxor.u32 %v3122, 2147483648
      %v3159 = vxor.u32 %v3123, 2147483648
      %v3160 = vxor.u32 %v3124, 2147483648
      %v3161 = vxor.u32 %v3125, 2147483648
      %v3162 = vxor.u32 %v3126, 2147483648
      %v3163 = vxor.u32 %v3127, 2147483648
      %v3164 = vxor.u32 %v3128, 2147483648
      %v3165 = vxor.u32 %v3129, 2147483648
      %v3166 = vmul.f32 %v3130, 1.442695
      %v3167 = vpow.pop %v3166
      %v3168 = vmul.f32 %v3131, 1.442695
      %v3169 = vpow.pop %v3168
      %v3170 = vmul.f32 %v3132, 1.442695
      %v3171 = vpow.pop %v3170
      %v3172 = vmul.f32 %v3133, 1.442695
      %v3173 = vpow.pop %v3172
      %v3174 = vmul.f32 %v3134, 1.442695
      %v3175 = vpow.pop %v3174
      %v3176 = vmul.f32 %v3135, 1.442695
      %v3177 = vpow.pop %v3176
      %v3178 = vmul.f32 %v3136, 1.442695
      %v3179 = vpow.pop %v3178
      %v3180 = vmul.f32 %v3137, 1.442695
      %v3181 = vpow.pop %v3180
      %v3182 = vmul.f32 %v3138, 1.442695
      %v3183 = vpow.pop %v3182
      %v3184 = vmul.f32 %v3139, 1.442695
      %v3185 = vpow.pop %v3184
      %v3186 = vmul.f32 %v3140, 1.442695
      %v3187 = vpow.pop %v3186
      %v3188 = vmul.f32 %v3141, 1.442695
      %v3189 = vpow.pop %v3188
      %v3190 = vmul.f32 %v3142, 1.442695
      %v3191 = vpow.pop %v3190
      %v3192 = vmul.f32 %v3143, 1.442695
      %v3193 = vpow.pop %v3192
      %v3194 = vmul.f32 %v3144, 1.442695
      %v3195 = vpow.pop %v3194
      %v3196 = vmul.f32 %v3145, 1.442695
      %v3197 = vpow.pop %v3196
      %v3198 = vmul.f32 %v3146, 1.442695
      %v3199 = vpow.pop %v3198
      %v3200 = vmul.f32 %v3147, 1.442695
      %v3201 = vpow.pop %v3200
      %v3202 = vmul.f32 %v3148, 1.442695
      %v3203 = vpow.pop %v3202
      %v3204 = vmul.f32 %v3149, 1.442695
      %v3205 = vpow.pop %v3204
      %v3206 = vmul.f32 %v3150, 1.442695
      %v3207 = vpow.pop %v3206
      %v3208 = vmul.f32 %v3151, 1.442695
      %v3209 = vpow.pop %v3208
      %v3210 = vmul.f32 %v3152, 1.442695
      %v3211 = vpow.pop %v3210
      %v3212 = vmul.f32 %v3153, 1.442695
      %v3213 = vpow.pop %v3212
      %v3214 = vmul.f32 %v3154, 1.442695
      %v3215 = vpow.pop %v3214
      %v3216 = vmul.f32 %v3155, 1.442695
      %v3217 = vpow.pop %v3216
      %v3218 = vmul.f32 %v3156, 1.442695
      %v3219 = vpow.pop %v3218
      %v3220 = vmul.f32 %v3157, 1.442695
      %v3221 = vpow.pop %v3220
      %v3222 = vmul.f32 %v3158, 1.442695
      %v3223 = vpow.pop %v3222
      %v3224 = vmul.f32 %v3159, 1.442695
      %v3225 = vpow.pop %v3224
      %v3226 = vmul.f32 %v3160, 1.442695
      %v3227 = vpow.pop %v3226
      %v3228 = vmul.f32 %v3161, 1.442695
      %v3229 = vpow.pop %v3228
      %v3230 = vmul.f32 %v3162, 1.442695
      %v3231 = vpow.pop %v3230
      %v3232 = vmul.f32 %v3163, 1.442695
      %v3233 = vpow.pop %v3232
      %v3234 = vmul.f32 %v3164, 1.442695
      %v3235 = vpow.pop %v3234
      %v3236 = vmul.f32 %v3165, 1.442695
      %v3237 = vpow.pop %v3236
      %v3238 = vadd.f32 %v3167, 1.0
      %v3239 = vadd.f32 %v3169, 1.0
      %v3240 = vadd.f32 %v3171, 1.0
      %v3241 = vadd.f32 %v3173, 1.0
      %v3242 = vadd.f32 %v3175, 1.0
      %v3243 = vadd.f32 %v3177, 1.0
      %v3244 = vadd.f32 %v3179, 1.0
      %v3245 = vadd.f32 %v3181, 1.0
      %v3246 = vadd.f32 %v3183, 1.0
      %v3247 = vadd.f32 %v3185, 1.0
      %v3248 = vadd.f32 %v3187, 1.0
      %v3249 = vadd.f32 %v3189, 1.0
      %v3250 = vadd.f32 %v3191, 1.0
      %v3251 = vadd.f32 %v3193, 1.0
      %v3252 = vadd.f32 %v3195, 1.0
      %v3253 = vadd.f32 %v3197, 1.0
      %v3254 = vadd.f32 %v3199, 1.0
      %v3255 = vadd.f32 %v3201, 1.0
      %v3256 = vadd.f32 %v3203, 1.0
      %v3257 = vadd.f32 %v3205, 1.0
      %v3258 = vadd.f32 %v3207, 1.0
      %v3259 = vadd.f32 %v3209, 1.0
      %v3260 = vadd.f32 %v3211, 1.0
      %v3261 = vadd.f32 %v3213, 1.0
      %v3262 = vadd.f32 %v3215, 1.0
      %v3263 = vadd.f32 %v3217, 1.0
      %v3264 = vadd.f32 %v3219, 1.0
      %v3265 = vadd.f32 %v3221, 1.0
      %v3266 = vadd.f32 %v3223, 1.0
      %v3267 = vadd.f32 %v3225, 1.0
      %v3268 = vadd.f32 %v3227, 1.0
      %v3269 = vadd.f32 %v3229, 1.0
      %v3270 = vadd.f32 %v3231, 1.0
      %v3271 = vadd.f32 %v3233, 1.0
      %v3272 = vadd.f32 %v3235, 1.0
      %v3273 = vadd.f32 %v3237, 1.0
      %v3274 = vrcp.pop %v3238
      %v3275 = vmul.f32 %v3238, %v3274
      %v3276 = vsub.f32 1.0, %v3275
      %v3277 = vmul.f32 %v3274, %v3276
      %v3278 = vadd.f32 %v3274, %v3277
      %vm3279 = vweird.f32 %v3238
      %vm3280 = vweird.f32 %v3274
      %vm3281 = vmor %vm3279, %vm3280
      %v3282 = vsel %vm3281, %v3274, %v3278
      %v3283 = vand.u32 2147483647, %v3238
      %vm3284 = vcmp.eq.f32.partialorder %v3283, 8.507059e+37
      %v3285 = vand.u32 %v3238, 2147483648
      %v3286 = vor.u32 1.1754944e-38, %v3285
      %v3287 = vsel %vm3284, %v3286, %v3282
      %v3288 = vmul.f32 1.0, %v3287
      %v3289 = vrcp.pop %v3239
      %v3290 = vmul.f32 %v3239, %v3289
      %v3291 = vsub.f32 1.0, %v3290
      %v3292 = vmul.f32 %v3289, %v3291
      %v3293 = vadd.f32 %v3289, %v3292
      %vm3294 = vweird.f32 %v3239
      %vm3295 = vweird.f32 %v3289
      %vm3296 = vmor %vm3294, %vm3295
      %v3297 = vsel %vm3296, %v3289, %v3293
      %v3298 = vand.u32 2147483647, %v3239
      %vm3299 = vcmp.eq.f32.partialorder %v3298, 8.507059e+37
      %v3300 = vand.u32 %v3239, 2147483648
      %v3301 = vor.u32 1.1754944e-38, %v3300
      %v3302 = vsel %vm3299, %v3301, %v3297
      %v3303 = vmul.f32 1.0, %v3302
      %v3304 = vrcp.pop %v3240
      %v3305 = vmul.f32 %v3240, %v3304
      %v3306 = vsub.f32 1.0, %v3305
      %v3307 = vmul.f32 %v3304, %v3306
      %v3308 = vadd.f32 %v3304, %v3307
      %vm3309 = vweird.f32 %v3240
      %vm3310 = vweird.f32 %v3304
      %vm3311 = vmor %vm3309, %vm3310
      %v3312 = vsel %vm3311, %v3304, %v3308
      %v3313 = vand.u32 2147483647, %v3240
      %vm3314 = vcmp.eq.f32.partialorder %v3313, 8.507059e+37
      %v3315 = vand.u32 %v3240, 2147483648
      %v3316 = vor.u32 1.1754944e-38, %v3315
      %v3317 = vsel %vm3314, %v3316, %v3312
      %v3318 = vmul.f32 1.0, %v3317
      %v3319 = vrcp.pop %v3241
      %v3320 = vmul.f32 %v3241, %v3319
      %v3321 = vsub.f32 1.0, %v3320
      %v3322 = vmul.f32 %v3319, %v3321
      %v3323 = vadd.f32 %v3319, %v3322
      %vm3324 = vweird.f32 %v3241
      %vm3325 = vweird.f32 %v3319
      %vm3326 = vmor %vm3324, %vm3325
      %v3327 = vsel %vm3326, %v3319, %v3323
      %v3328 = vand.u32 2147483647, %v3241
      %vm3329 = vcmp.eq.f32.partialorder %v3328, 8.507059e+37
      %v3330 = vand.u32 %v3241, 2147483648
      %v3331 = vor.u32 1.1754944e-38, %v3330
      %v3332 = vsel %vm3329, %v3331, %v3327
      %v3333 = vmul.f32 1.0, %v3332
      %v3334 = vrcp.pop %v3242
      %v3335 = vmul.f32 %v3242, %v3334
      %v3336 = vsub.f32 1.0, %v3335
      %v3337 = vmul.f32 %v3334, %v3336
      %v3338 = vadd.f32 %v3334, %v3337
      %vm3339 = vweird.f32 %v3242
      %vm3340 = vweird.f32 %v3334
      %vm3341 = vmor %vm3339, %vm3340
      %v3342 = vsel %vm3341, %v3334, %v3338
      %v3343 = vand.u32 2147483647, %v3242
      %vm3344 = vcmp.eq.f32.partialorder %v3343, 8.507059e+37
      %v3345 = vand.u32 %v3242, 2147483648
      %v3346 = vor.u32 1.1754944e-38, %v3345
      %v3347 = vsel %vm3344, %v3346, %v3342
      %v3348 = vmul.f32 1.0, %v3347
      %v3349 = vrcp.pop %v3243
      %v3350 = vmul.f32 %v3243, %v3349
      %v3351 = vsub.f32 1.0, %v3350
      %v3352 = vmul.f32 %v3349, %v3351
      %v3353 = vadd.f32 %v3349, %v3352
      %vm3354 = vweird.f32 %v3243
      %vm3355 = vweird.f32 %v3349
      %vm3356 = vmor %vm3354, %vm3355
      %v3357 = vsel %vm3356, %v3349, %v3353
      %v3358 = vand.u32 2147483647, %v3243
      %vm3359 = vcmp.eq.f32.partialorder %v3358, 8.507059e+37
      %v3360 = vand.u32 %v3243, 2147483648
      %v3361 = vor.u32 1.1754944e-38, %v3360
      %v3362 = vsel %vm3359, %v3361, %v3357
      %v3363 = vmul.f32 1.0, %v3362
      %v3364 = vrcp.pop %v3244
      %v3365 = vmul.f32 %v3244, %v3364
      %v3366 = vsub.f32 1.0, %v3365
      %v3367 = vmul.f32 %v3364, %v3366
      %v3368 = vadd.f32 %v3364, %v3367
      %vm3369 = vweird.f32 %v3244
      %vm3370 = vweird.f32 %v3364
      %vm3371 = vmor %vm3369, %vm3370
      %v3372 = vsel %vm3371, %v3364, %v3368
      %v3373 = vand.u32 2147483647, %v3244
      %vm3374 = vcmp.eq.f32.partialorder %v3373, 8.507059e+37
      %v3375 = vand.u32 %v3244, 2147483648
      %v3376 = vor.u32 1.1754944e-38, %v3375
      %v3377 = vsel %vm3374, %v3376, %v3372
      %v3378 = vmul.f32 1.0, %v3377
      %v3379 = vrcp.pop %v3245
      %v3380 = vmul.f32 %v3245, %v3379
      %v3381 = vsub.f32 1.0, %v3380
      %v3382 = vmul.f32 %v3379, %v3381
      %v3383 = vadd.f32 %v3379, %v3382
      %vm3384 = vweird.f32 %v3245
      %vm3385 = vweird.f32 %v3379
      %vm3386 = vmor %vm3384, %vm3385
      %v3387 = vsel %vm3386, %v3379, %v3383
      %v3388 = vand.u32 2147483647, %v3245
      %vm3389 = vcmp.eq.f32.partialorder %v3388, 8.507059e+37
      %v3390 = vand.u32 %v3245, 2147483648
      %v3391 = vor.u32 1.1754944e-38, %v3390
      %v3392 = vsel %vm3389, %v3391, %v3387
      %v3393 = vmul.f32 1.0, %v3392
      %v3394 = vrcp.pop %v3246
      %v3395 = vmul.f32 %v3246, %v3394
      %v3396 = vsub.f32 1.0, %v3395
      %v3397 = vmul.f32 %v3394, %v3396
      %v3398 = vadd.f32 %v3394, %v3397
      %vm3399 = vweird.f32 %v3246
      %vm3400 = vweird.f32 %v3394
      %vm3401 = vmor %vm3399, %vm3400
      %v3402 = vsel %vm3401, %v3394, %v3398
      %v3403 = vand.u32 2147483647, %v3246
      %vm3404 = vcmp.eq.f32.partialorder %v3403, 8.507059e+37
      %v3405 = vand.u32 %v3246, 2147483648
      %v3406 = vor.u32 1.1754944e-38, %v3405
      %v3407 = vsel %vm3404, %v3406, %v3402
      %v3408 = vmul.f32 1.0, %v3407
      %v3409 = vrcp.pop %v3247
      %v3410 = vmul.f32 %v3247, %v3409
      %v3411 = vsub.f32 1.0, %v3410
      %v3412 = vmul.f32 %v3409, %v3411
      %v3413 = vadd.f32 %v3409, %v3412
      %vm3414 = vweird.f32 %v3247
      %vm3415 = vweird.f32 %v3409
      %vm3416 = vmor %vm3414, %vm3415
      %v3417 = vsel %vm3416, %v3409, %v3413
      %v3418 = vand.u32 2147483647, %v3247
      %vm3419 = vcmp.eq.f32.partialorder %v3418, 8.507059e+37
      %v3420 = vand.u32 %v3247, 2147483648
      %v3421 = vor.u32 1.1754944e-38, %v3420
      %v3422 = vsel %vm3419, %v3421, %v3417
      %v3423 = vmul.f32 1.0, %v3422
      %v3424 = vrcp.pop %v3248
      %v3425 = vmul.f32 %v3248, %v3424
      %v3426 = vsub.f32 1.0, %v3425
      %v3427 = vmul.f32 %v3424, %v3426
      %v3428 = vadd.f32 %v3424, %v3427
      %vm3429 = vweird.f32 %v3248
      %vm3430 = vweird.f32 %v3424
      %vm3431 = vmor %vm3429, %vm3430
      %v3432 = vsel %vm3431, %v3424, %v3428
      %v3433 = vand.u32 2147483647, %v3248
      %vm3434 = vcmp.eq.f32.partialorder %v3433, 8.507059e+37
      %v3435 = vand.u32 %v3248, 2147483648
      %v3436 = vor.u32 1.1754944e-38, %v3435
      %v3437 = vsel %vm3434, %v3436, %v3432
      %v3438 = vmul.f32 1.0, %v3437
      %v3439 = vrcp.pop %v3249
      %v3440 = vmul.f32 %v3249, %v3439
      %v3441 = vsub.f32 1.0, %v3440
      %v3442 = vmul.f32 %v3439, %v3441
      %v3443 = vadd.f32 %v3439, %v3442
      %vm3444 = vweird.f32 %v3249
      %vm3445 = vweird.f32 %v3439
      %vm3446 = vmor %vm3444, %vm3445
      %v3447 = vsel %vm3446, %v3439, %v3443
      %v3448 = vand.u32 2147483647, %v3249
      %vm3449 = vcmp.eq.f32.partialorder %v3448, 8.507059e+37
      %v3450 = vand.u32 %v3249, 2147483648
      %v3451 = vor.u32 1.1754944e-38, %v3450
      %v3452 = vsel %vm3449, %v3451, %v3447
      %v3453 = vmul.f32 1.0, %v3452
      %v3454 = vrcp.pop %v3250
      %v3455 = vmul.f32 %v3250, %v3454
      %v3456 = vsub.f32 1.0, %v3455
      %v3457 = vmul.f32 %v3454, %v3456
      %v3458 = vadd.f32 %v3454, %v3457
      %vm3459 = vweird.f32 %v3250
      %vm3460 = vweird.f32 %v3454
      %vm3461 = vmor %vm3459, %vm3460
      %v3462 = vsel %vm3461, %v3454, %v3458
      %v3463 = vand.u32 2147483647, %v3250
      %vm3464 = vcmp.eq.f32.partialorder %v3463, 8.507059e+37
      %v3465 = vand.u32 %v3250, 2147483648
      %v3466 = vor.u32 1.1754944e-38, %v3465
      %v3467 = vsel %vm3464, %v3466, %v3462
      %v3468 = vmul.f32 1.0, %v3467
      %v3469 = vrcp.pop %v3251
      %v3470 = vmul.f32 %v3251, %v3469
      %v3471 = vsub.f32 1.0, %v3470
      %v3472 = vmul.f32 %v3469, %v3471
      %v3473 = vadd.f32 %v3469, %v3472
      %vm3474 = vweird.f32 %v3251
      %vm3475 = vweird.f32 %v3469
      %vm3476 = vmor %vm3474, %vm3475
      %v3477 = vsel %vm3476, %v3469, %v3473
      %v3478 = vand.u32 2147483647, %v3251
      %vm3479 = vcmp.eq.f32.partialorder %v3478, 8.507059e+37
      %v3480 = vand.u32 %v3251, 2147483648
      %v3481 = vor.u32 1.1754944e-38, %v3480
      %v3482 = vsel %vm3479, %v3481, %v3477
      %v3483 = vmul.f32 1.0, %v3482
      %v3484 = vrcp.pop %v3252
      %v3485 = vmul.f32 %v3252, %v3484
      %v3486 = vsub.f32 1.0, %v3485
      %v3487 = vmul.f32 %v3484, %v3486
      %v3488 = vadd.f32 %v3484, %v3487
      %vm3489 = vweird.f32 %v3252
      %vm3490 = vweird.f32 %v3484
      %vm3491 = vmor %vm3489, %vm3490
      %v3492 = vsel %vm3491, %v3484, %v3488
      %v3493 = vand.u32 2147483647, %v3252
      %vm3494 = vcmp.eq.f32.partialorder %v3493, 8.507059e+37
      %v3495 = vand.u32 %v3252, 2147483648
      %v3496 = vor.u32 1.1754944e-38, %v3495
      %v3497 = vsel %vm3494, %v3496, %v3492
      %v3498 = vmul.f32 1.0, %v3497
      %v3499 = vrcp.pop %v3253
      %v3500 = vmul.f32 %v3253, %v3499
      %v3501 = vsub.f32 1.0, %v3500
      %v3502 = vmul.f32 %v3499, %v3501
      %v3503 = vadd.f32 %v3499, %v3502
      %vm3504 = vweird.f32 %v3253
      %vm3505 = vweird.f32 %v3499
      %vm3506 = vmor %vm3504, %vm3505
      %v3507 = vsel %vm3506, %v3499, %v3503
      %v3508 = vand.u32 2147483647, %v3253
      %vm3509 = vcmp.eq.f32.partialorder %v3508, 8.507059e+37
      %v3510 = vand.u32 %v3253, 2147483648
      %v3511 = vor.u32 1.1754944e-38, %v3510
      %v3512 = vsel %vm3509, %v3511, %v3507
      %v3513 = vmul.f32 1.0, %v3512
      %v3514 = vrcp.pop %v3254
      %v3515 = vmul.f32 %v3254, %v3514
      %v3516 = vsub.f32 1.0, %v3515
      %v3517 = vmul.f32 %v3514, %v3516
      %v3518 = vadd.f32 %v3514, %v3517
      %vm3519 = vweird.f32 %v3254
      %vm3520 = vweird.f32 %v3514
      %vm3521 = vmor %vm3519, %vm3520
      %v3522 = vsel %vm3521, %v3514, %v3518
      %v3523 = vand.u32 2147483647, %v3254
      %vm3524 = vcmp.eq.f32.partialorder %v3523, 8.507059e+37
      %v3525 = vand.u32 %v3254, 2147483648
      %v3526 = vor.u32 1.1754944e-38, %v3525
      %v3527 = vsel %vm3524, %v3526, %v3522
      %v3528 = vmul.f32 1.0, %v3527
      %v3529 = vrcp.pop %v3255
      %v3530 = vmul.f32 %v3255, %v3529
      %v3531 = vsub.f32 1.0, %v3530
      %v3532 = vmul.f32 %v3529, %v3531
      %v3533 = vadd.f32 %v3529, %v3532
      %vm3534 = vweird.f32 %v3255
      %vm3535 = vweird.f32 %v3529
      %vm3536 = vmor %vm3534, %vm3535
      %v3537 = vsel %vm3536, %v3529, %v3533
      %v3538 = vand.u32 2147483647, %v3255
      %vm3539 = vcmp.eq.f32.partialorder %v3538, 8.507059e+37
      %v3540 = vand.u32 %v3255, 2147483648
      %v3541 = vor.u32 1.1754944e-38, %v3540
      %v3542 = vsel %vm3539, %v3541, %v3537
      %v3543 = vmul.f32 1.0, %v3542
      %v3544 = vrcp.pop %v3256
      %v3545 = vmul.f32 %v3256, %v3544
      %v3546 = vsub.f32 1.0, %v3545
      %v3547 = vmul.f32 %v3544, %v3546
      %v3548 = vadd.f32 %v3544, %v3547
      %vm3549 = vweird.f32 %v3256
      %vm3550 = vweird.f32 %v3544
      %vm3551 = vmor %vm3549, %vm3550
      %v3552 = vsel %vm3551, %v3544, %v3548
      %v3553 = vand.u32 2147483647, %v3256
      %vm3554 = vcmp.eq.f32.partialorder %v3553, 8.507059e+37
      %v3555 = vand.u32 %v3256, 2147483648
      %v3556 = vor.u32 1.1754944e-38, %v3555
      %v3557 = vsel %vm3554, %v3556, %v3552
      %v3558 = vmul.f32 1.0, %v3557
      %v3559 = vrcp.pop %v3257
      %v3560 = vmul.f32 %v3257, %v3559
      %v3561 = vsub.f32 1.0, %v3560
      %v3562 = vmul.f32 %v3559, %v3561
      %v3563 = vadd.f32 %v3559, %v3562
      %vm3564 = vweird.f32 %v3257
      %vm3565 = vweird.f32 %v3559
      %vm3566 = vmor %vm3564, %vm3565
      %v3567 = vsel %vm3566, %v3559, %v3563
      %v3568 = vand.u32 2147483647, %v3257
      %vm3569 = vcmp.eq.f32.partialorder %v3568, 8.507059e+37
      %v3570 = vand.u32 %v3257, 2147483648
      %v3571 = vor.u32 1.1754944e-38, %v3570
      %v3572 = vsel %vm3569, %v3571, %v3567
      %v3573 = vmul.f32 1.0, %v3572
      %v3574 = vrcp.pop %v3258
      %v3575 = vmul.f32 %v3258, %v3574
      %v3576 = vsub.f32 1.0, %v3575
      %v3577 = vmul.f32 %v3574, %v3576
      %v3578 = vadd.f32 %v3574, %v3577
      %vm3579 = vweird.f32 %v3258
      %vm3580 = vweird.f32 %v3574
      %vm3581 = vmor %vm3579, %vm3580
      %v3582 = vsel %vm3581, %v3574, %v3578
      %v3583 = vand.u32 2147483647, %v3258
      %vm3584 = vcmp.eq.f32.partialorder %v3583, 8.507059e+37
      %v3585 = vand.u32 %v3258, 2147483648
      %v3586 = vor.u32 1.1754944e-38, %v3585
      %v3587 = vsel %vm3584, %v3586, %v3582
      %v3588 = vmul.f32 1.0, %v3587
      %v3589 = vrcp.pop %v3259
      %v3590 = vmul.f32 %v3259, %v3589
      %v3591 = vsub.f32 1.0, %v3590
      %v3592 = vmul.f32 %v3589, %v3591
      %v3593 = vadd.f32 %v3589, %v3592
      %vm3594 = vweird.f32 %v3259
      %vm3595 = vweird.f32 %v3589
      %vm3596 = vmor %vm3594, %vm3595
      %v3597 = vsel %vm3596, %v3589, %v3593
      %v3598 = vand.u32 2147483647, %v3259
      %vm3599 = vcmp.eq.f32.partialorder %v3598, 8.507059e+37
      %v3600 = vand.u32 %v3259, 2147483648
      %v3601 = vor.u32 1.1754944e-38, %v3600
      %v3602 = vsel %vm3599, %v3601, %v3597
      %v3603 = vmul.f32 1.0, %v3602
      %v3604 = vrcp.pop %v3260
      %v3605 = vmul.f32 %v3260, %v3604
      %v3606 = vsub.f32 1.0, %v3605
      %v3607 = vmul.f32 %v3604, %v3606
      %v3608 = vadd.f32 %v3604, %v3607
      %vm3609 = vweird.f32 %v3260
      %vm3610 = vweird.f32 %v3604
      %vm3611 = vmor %vm3609, %vm3610
      %v3612 = vsel %vm3611, %v3604, %v3608
      %v3613 = vand.u32 2147483647, %v3260
      %vm3614 = vcmp.eq.f32.partialorder %v3613, 8.507059e+37
      %v3615 = vand.u32 %v3260, 2147483648
      %v3616 = vor.u32 1.1754944e-38, %v3615
      %v3617 = vsel %vm3614, %v3616, %v3612
      %v3618 = vmul.f32 1.0, %v3617
      %v3619 = vrcp.pop %v3261
      %v3620 = vmul.f32 %v3261, %v3619
      %v3621 = vsub.f32 1.0, %v3620
      %v3622 = vmul.f32 %v3619, %v3621
      %v3623 = vadd.f32 %v3619, %v3622
      %vm3624 = vweird.f32 %v3261
      %vm3625 = vweird.f32 %v3619
      %vm3626 = vmor %vm3624, %vm3625
      %v3627 = vsel %vm3626, %v3619, %v3623
      %v3628 = vand.u32 2147483647, %v3261
      %vm3629 = vcmp.eq.f32.partialorder %v3628, 8.507059e+37
      %v3630 = vand.u32 %v3261, 2147483648
      %v3631 = vor.u32 1.1754944e-38, %v3630
      %v3632 = vsel %vm3629, %v3631, %v3627
      %v3633 = vmul.f32 1.0, %v3632
      %v3634 = vrcp.pop %v3262
      %v3635 = vmul.f32 %v3262, %v3634
      %v3636 = vsub.f32 1.0, %v3635
      %v3637 = vmul.f32 %v3634, %v3636
      %v3638 = vadd.f32 %v3634, %v3637
      %vm3639 = vweird.f32 %v3262
      %vm3640 = vweird.f32 %v3634
      %vm3641 = vmor %vm3639, %vm3640
      %v3642 = vsel %vm3641, %v3634, %v3638
      %v3643 = vand.u32 2147483647, %v3262
      %vm3644 = vcmp.eq.f32.partialorder %v3643, 8.507059e+37
      %v3645 = vand.u32 %v3262, 2147483648
      %v3646 = vor.u32 1.1754944e-38, %v3645
      %v3647 = vsel %vm3644, %v3646, %v3642
      %v3648 = vmul.f32 1.0, %v3647
      %v3649 = vrcp.pop %v3263
      %v3650 = vmul.f32 %v3263, %v3649
      %v3651 = vsub.f32 1.0, %v3650
      %v3652 = vmul.f32 %v3649, %v3651
      %v3653 = vadd.f32 %v3649, %v3652
      %vm3654 = vweird.f32 %v3263
      %vm3655 = vweird.f32 %v3649
      %vm3656 = vmor %vm3654, %vm3655
      %v3657 = vsel %vm3656, %v3649, %v3653
      %v3658 = vand.u32 2147483647, %v3263
      %vm3659 = vcmp.eq.f32.partialorder %v3658, 8.507059e+37
      %v3660 = vand.u32 %v3263, 2147483648
      %v3661 = vor.u32 1.1754944e-38, %v3660
      %v3662 = vsel %vm3659, %v3661, %v3657
      %v3663 = vmul.f32 1.0, %v3662
      %v3664 = vrcp.pop %v3264
      %v3665 = vmul.f32 %v3264, %v3664
      %v3666 = vsub.f32 1.0, %v3665
      %v3667 = vmul.f32 %v3664, %v3666
      %v3668 = vadd.f32 %v3664, %v3667
      %vm3669 = vweird.f32 %v3264
      %vm3670 = vweird.f32 %v3664
      %vm3671 = vmor %vm3669, %vm3670
      %v3672 = vsel %vm3671, %v3664, %v3668
      %v3673 = vand.u32 2147483647, %v3264
      %vm3674 = vcmp.eq.f32.partialorder %v3673, 8.507059e+37
      %v3675 = vand.u32 %v3264, 2147483648
      %v3676 = vor.u32 1.1754944e-38, %v3675
      %v3677 = vsel %vm3674, %v3676, %v3672
      %v3678 = vmul.f32 1.0, %v3677
      %v3679 = vrcp.pop %v3265
      %v3680 = vmul.f32 %v3265, %v3679
      %v3681 = vsub.f32 1.0, %v3680
      %v3682 = vmul.f32 %v3679, %v3681
      %v3683 = vadd.f32 %v3679, %v3682
      %vm3684 = vweird.f32 %v3265
      %vm3685 = vweird.f32 %v3679
      %vm3686 = vmor %vm3684, %vm3685
      %v3687 = vsel %vm3686, %v3679, %v3683
      %v3688 = vand.u32 2147483647, %v3265
      %vm3689 = vcmp.eq.f32.partialorder %v3688, 8.507059e+37
      %v3690 = vand.u32 %v3265, 2147483648
      %v3691 = vor.u32 1.1754944e-38, %v3690
      %v3692 = vsel %vm3689, %v3691, %v3687
      %v3693 = vmul.f32 1.0, %v3692
      %v3694 = vrcp.pop %v3266
      %v3695 = vmul.f32 %v3266, %v3694
      %v3696 = vsub.f32 1.0, %v3695
      %v3697 = vmul.f32 %v3694, %v3696
      %v3698 = vadd.f32 %v3694, %v3697
      %vm3699 = vweird.f32 %v3266
      %vm3700 = vweird.f32 %v3694
      %vm3701 = vmor %vm3699, %vm3700
      %v3702 = vsel %vm3701, %v3694, %v3698
      %v3703 = vand.u32 2147483647, %v3266
      %vm3704 = vcmp.eq.f32.partialorder %v3703, 8.507059e+37
      %v3705 = vand.u32 %v3266, 2147483648
      %v3706 = vor.u32 1.1754944e-38, %v3705
      %v3707 = vsel %vm3704, %v3706, %v3702
      %v3708 = vmul.f32 1.0, %v3707
      %v3709 = vrcp.pop %v3267
      %v3710 = vmul.f32 %v3267, %v3709
      %v3711 = vsub.f32 1.0, %v3710
      %v3712 = vmul.f32 %v3709, %v3711
      %v3713 = vadd.f32 %v3709, %v3712
      %vm3714 = vweird.f32 %v3267
      %vm3715 = vweird.f32 %v3709
      %vm3716 = vmor %vm3714, %vm3715
      %v3717 = vsel %vm3716, %v3709, %v3713
      %v3718 = vand.u32 2147483647, %v3267
      %vm3719 = vcmp.eq.f32.partialorder %v3718, 8.507059e+37
      %v3720 = vand.u32 %v3267, 2147483648
      %v3721 = vor.u32 1.1754944e-38, %v3720
      %v3722 = vsel %vm3719, %v3721, %v3717
      %v3723 = vmul.f32 1.0, %v3722
      %v3724 = vrcp.pop %v3268
      %v3725 = vmul.f32 %v3268, %v3724
      %v3726 = vsub.f32 1.0, %v3725
      %v3727 = vmul.f32 %v3724, %v3726
      %v3728 = vadd.f32 %v3724, %v3727
      %vm3729 = vweird.f32 %v3268
      %vm3730 = vweird.f32 %v3724
      %vm3731 = vmor %vm3729, %vm3730
      %v3732 = vsel %vm3731, %v3724, %v3728
      %v3733 = vand.u32 2147483647, %v3268
      %vm3734 = vcmp.eq.f32.partialorder %v3733, 8.507059e+37
      %v3735 = vand.u32 %v3268, 2147483648
      %v3736 = vor.u32 1.1754944e-38, %v3735
      %v3737 = vsel %vm3734, %v3736, %v3732
      %v3738 = vmul.f32 1.0, %v3737
      %v3739 = vrcp.pop %v3269
      %v3740 = vmul.f32 %v3269, %v3739
      %v3741 = vsub.f32 1.0, %v3740
      %v3742 = vmul.f32 %v3739, %v3741
      %v3743 = vadd.f32 %v3739, %v3742
      %vm3744 = vweird.f32 %v3269
      %vm3745 = vweird.f32 %v3739
      %vm3746 = vmor %vm3744, %vm3745
      %v3747 = vsel %vm3746, %v3739, %v3743
      %v3748 = vand.u32 2147483647, %v3269
      %vm3749 = vcmp.eq.f32.partialorder %v3748, 8.507059e+37
      %v3750 = vand.u32 %v3269, 2147483648
      %v3751 = vor.u32 1.1754944e-38, %v3750
      %v3752 = vsel %vm3749, %v3751, %v3747
      %v3753 = vmul.f32 1.0, %v3752
      %v3754 = vrcp.pop %v3270
      %v3755 = vmul.f32 %v3270, %v3754
      %v3756 = vsub.f32 1.0, %v3755
      %v3757 = vmul.f32 %v3754, %v3756
      %v3758 = vadd.f32 %v3754, %v3757
      %vm3759 = vweird.f32 %v3270
      %vm3760 = vweird.f32 %v3754
      %vm3761 = vmor %vm3759, %vm3760
      %v3762 = vsel %vm3761, %v3754, %v3758
      %v3763 = vand.u32 2147483647, %v3270
      %vm3764 = vcmp.eq.f32.partialorder %v3763, 8.507059e+37
      %v3765 = vand.u32 %v3270, 2147483648
      %v3766 = vor.u32 1.1754944e-38, %v3765
      %v3767 = vsel %vm3764, %v3766, %v3762
      %v3768 = vmul.f32 1.0, %v3767
      %v3769 = vrcp.pop %v3271
      %v3770 = vmul.f32 %v3271, %v3769
      %v3771 = vsub.f32 1.0, %v3770
      %v3772 = vmul.f32 %v3769, %v3771
      %v3773 = vadd.f32 %v3769, %v3772
      %vm3774 = vweird.f32 %v3271
      %vm3775 = vweird.f32 %v3769
      %vm3776 = vmor %vm3774, %vm3775
      %v3777 = vsel %vm3776, %v3769, %v3773
      %v3778 = vand.u32 2147483647, %v3271
      %vm3779 = vcmp.eq.f32.partialorder %v3778, 8.507059e+37
      %v3780 = vand.u32 %v3271, 2147483648
      %v3781 = vor.u32 1.1754944e-38, %v3780
      %v3782 = vsel %vm3779, %v3781, %v3777
      %v3783 = vmul.f32 1.0, %v3782
      %v3784 = vrcp.pop %v3272
      %v3785 = vmul.f32 %v3272, %v3784
      %v3786 = vsub.f32 1.0, %v3785
      %v3787 = vmul.f32 %v3784, %v3786
      %v3788 = vadd.f32 %v3784, %v3787
      %vm3789 = vweird.f32 %v3272
      %vm3790 = vweird.f32 %v3784
      %vm3791 = vmor %vm3789, %vm3790
      %v3792 = vsel %vm3791, %v3784, %v3788
      %v3793 = vand.u32 2147483647, %v3272
      %vm3794 = vcmp.eq.f32.partialorder %v3793, 8.507059e+37
      %v3795 = vand.u32 %v3272, 2147483648
      %v3796 = vor.u32 1.1754944e-38, %v3795
      %v3797 = vsel %vm3794, %v3796, %v3792
      %v3798 = vmul.f32 1.0, %v3797
      %v3799 = vrcp.pop %v3273
      %v3800 = vmul.f32 %v3273, %v3799
      %v3801 = vsub.f32 1.0, %v3800
      %v3802 = vmul.f32 %v3799, %v3801
      %v3803 = vadd.f32 %v3799, %v3802
      %vm3804 = vweird.f32 %v3273
      %vm3805 = vweird.f32 %v3799
      %vm3806 = vmor %vm3804, %vm3805
      %v3807 = vsel %vm3806, %v3799, %v3803
      %v3808 = vand.u32 2147483647, %v3273
      %vm3809 = vcmp.eq.f32.partialorder %v3808, 8.507059e+37
      %v3810 = vand.u32 %v3273, 2147483648
      %v3811 = vor.u32 1.1754944e-38, %v3810
      %v3812 = vsel %vm3809, %v3811, %v3807
      %v3813 = vmul.f32 1.0, %v3812
      %v3814 = vtanh.pop %v3094
      %v3815 = vtanh.pop %v3095
      %v3816 = vtanh.pop %v3096
      %v3817 = vtanh.pop %v3097
      %v3818 = vtanh.pop %v3098
      %v3819 = vtanh.pop %v3099
      %v3820 = vtanh.pop %v3100
      %v3821 = vtanh.pop %v3101
      %v3822 = vtanh.pop %v3102
      %v3823 = vtanh.pop %v3103
      %v3824 = vtanh.pop %v3104
      %v3825 = vtanh.pop %v3105
      %v3826 = vtanh.pop %v3106
      %v3827 = vtanh.pop %v3107
      %v3828 = vtanh.pop %v3108
      %v3829 = vtanh.pop %v3109
      %v3830 = vtanh.pop %v3110
      %v3831 = vtanh.pop %v3111
      %v3832 = vtanh.pop %v3112
      %v3833 = vtanh.pop %v3113
      %v3834 = vtanh.pop %v3114
      %v3835 = vtanh.pop %v3115
      %v3836 = vtanh.pop %v3116
      %v3837 = vtanh.pop %v3117
      %v3838 = vtanh.pop %v3118
      %v3839 = vtanh.pop %v3119
      %v3840 = vtanh.pop %v3120
      %v3841 = vtanh.pop %v3121
      %v3842 = vtanh.pop %v3122
      %v3843 = vtanh.pop %v3123
      %v3844 = vtanh.pop %v3124
      %v3845 = vtanh.pop %v3125
      %v3846 = vtanh.pop %v3126
      %v3847 = vtanh.pop %v3127
      %v3848 = vtanh.pop %v3128
      %v3849 = vtanh.pop %v3129
      %v3850 = vld [vmem:[#allocation3] sm:$0xff]
      %v3851 = vld [vmem:[#allocation3 + $0x8] sm:$0xff]
      %v3852 = vld [vmem:[#allocation3 + $0x10] sm:$0xff]
      %v3853 = vld [vmem:[#allocation3 + $0x18] sm:$0xff]
      %v3854 = vld [vmem:[#allocation3 + $0x20] sm:$0xff]
      %v3855 = vld [vmem:[#allocation3 + $0x28] sm:$0xff]
      %v3856 = vld [vmem:[#allocation3 + $0x30] sm:$0xff]
      %v3857 = vld [vmem:[#allocation3 + $0x38] sm:$0xff]
      %v3858 = vld [vmem:[#allocation3 + $0x40] sm:$0xff]
      %v3859 = vld [vmem:[#allocation3 + $0x48] sm:$0xff]
      %v3860 = vld [vmem:[#allocation3 + $0x50] sm:$0xff]
      %v3861 = vld [vmem:[#allocation3 + $0x58] sm:$0xff]
      %v3862 = vld [vmem:[#allocation3 + $0x60] sm:$0xff]
      %v3863 = vld [vmem:[#allocation3 + $0x68] sm:$0xff]
      %v3864 = vld [vmem:[#allocation3 + $0x70] sm:$0xff]
      %v3865 = vld [vmem:[#allocation3 + $0x78] sm:$0xff]
      %v3866 = vld [vmem:[#allocation3 + $0x80] sm:$0xff]
      %v3867 = vld [vmem:[#allocation3 + $0x88] sm:$0xff]
      %v3868 = vld [vmem:[#allocation3 + $0x90] sm:$0xff]
      %v3869 = vld [vmem:[#allocation3 + $0x98] sm:$0xff]
      %v3870 = vld [vmem:[#allocation3 + $0xa0] sm:$0xff]
      %v3871 = vld [vmem:[#allocation3 + $0xa8] sm:$0xff]
      %v3872 = vld [vmem:[#allocation3 + $0xb0] sm:$0xff]
      %v3873 = vld [vmem:[#allocation3 + $0xb8] sm:$0xff]
      %v3874 = vld [vmem:[#allocation3 + $0xc0] sm:$0xff]
      %v3875 = vld [vmem:[#allocation3 + $0xc8] sm:$0xff]
      %v3876 = vld [vmem:[#allocation3 + $0xd0] sm:$0xff]
      %v3877 = vld [vmem:[#allocation3 + $0xd8] sm:$0xff]
      %v3878 = vld [vmem:[#allocation3 + $0xe0] sm:$0xff]
      %v3879 = vld [vmem:[#allocation3 + $0xe8] sm:$0xff]
      %v3880 = vld [vmem:[#allocation3 + $0xf0] sm:$0xff]
      %v3881 = vld [vmem:[#allocation3 + $0xf8] sm:$0xff]
      %v3882 = vld [vmem:[#allocation3 + $0x100] sm:$0xff]
      %v3883 = vld [vmem:[#allocation3 + $0x108] sm:$0xff]
      %v3884 = vld [vmem:[#allocation3 + $0x110] sm:$0xff]
      %v3885 = vld [vmem:[#allocation3 + $0x118] sm:$0xff]
      %3922 = vrot.lane.b32.xlu0 %v3850, 32
      %v3923 = vpop.permute.xlu0 %3922
      %3924 = vrot.lane.b32.xlu0 %v3851, 32
      %v3925 = vpop.permute.xlu0 %3924
      %3926 = vrot.lane.b32.xlu0 %v3852, 32
      %v3927 = vpop.permute.xlu0 %3926
      %3928 = vrot.lane.b32.xlu0 %v3853, 32
      %v3929 = vpop.permute.xlu0 %3928
      %3930 = vrot.lane.b32.xlu0 %v3854, 32
      %v3931 = vpop.permute.xlu0 %3930
      %3932 = vrot.lane.b32.xlu0 %v3855, 32
      %v3933 = vpop.permute.xlu0 %3932
      %3934 = vrot.lane.b32.xlu0 %v3856, 32
      %v3935 = vpop.permute.xlu0 %3934
      %3936 = vrot.lane.b32.xlu0 %v3857, 32
      %v3937 = vpop.permute.xlu0 %3936
      %3938 = vrot.lane.b32.xlu0 %v3858, 32
      %v3939 = vpop.permute.xlu0 %3938
      %3940 = vrot.lane.b32.xlu0 %v3859, 32
      %v3941 = vpop.permute.xlu0 %3940
      %3942 = vrot.lane.b32.xlu0 %v3860, 32
      %v3943 = vpop.permute.xlu0 %3942
      %3944 = vrot.lane.b32.xlu0 %v3861, 32
      %v3945 = vpop.permute.xlu0 %3944
      %3946 = vrot.lane.b32.xlu0 %v3862, 32
      %v3947 = vpop.permute.xlu0 %3946
      %3948 = vrot.lane.b32.xlu0 %v3863, 32
      %v3949 = vpop.permute.xlu0 %3948
      %3950 = vrot.lane.b32.xlu0 %v3864, 32
      %v3951 = vpop.permute.xlu0 %3950
      %3952 = vrot.lane.b32.xlu0 %v3865, 32
      %v3953 = vpop.permute.xlu0 %3952
      %3954 = vrot.lane.b32.xlu0 %v3866, 32
      %v3955 = vpop.permute.xlu0 %3954
      %3956 = vrot.lane.b32.xlu0 %v3867, 32
      %v3957 = vpop.permute.xlu0 %3956
      %3958 = vrot.lane.b32.xlu0 %v3868, 32
      %v3959 = vpop.permute.xlu0 %3958
      %3960 = vrot.lane.b32.xlu0 %v3869, 32
      %v3961 = vpop.permute.xlu0 %3960
      %3962 = vrot.lane.b32.xlu0 %v3870, 32
      %v3963 = vpop.permute.xlu0 %3962
      %3964 = vrot.lane.b32.xlu0 %v3871, 32
      %v3965 = vpop.permute.xlu0 %3964
      %3966 = vrot.lane.b32.xlu0 %v3872, 32
      %v3967 = vpop.permute.xlu0 %3966
      %3968 = vrot.lane.b32.xlu0 %v3873, 32
      %v3969 = vpop.permute.xlu0 %3968
      %3970 = vrot.lane.b32.xlu0 %v3874, 32
      %v3971 = vpop.permute.xlu0 %3970
      %3972 = vrot.lane.b32.xlu0 %v3875, 32
      %v3973 = vpop.permute.xlu0 %3972
      %3974 = vrot.lane.b32.xlu0 %v3876, 32
      %v3975 = vpop.permute.xlu0 %3974
      %3976 = vrot.lane.b32.xlu0 %v3877, 32
      %v3977 = vpop.permute.xlu0 %3976
      %3978 = vrot.lane.b32.xlu0 %v3878, 32
      %v3979 = vpop.permute.xlu0 %3978
      %3980 = vrot.lane.b32.xlu0 %v3879, 32
      %v3981 = vpop.permute.xlu0 %3980
      %3982 = vrot.lane.b32.xlu0 %v3880, 32
      %v3983 = vpop.permute.xlu0 %3982
      %3984 = vrot.lane.b32.xlu0 %v3881, 32
      %v3985 = vpop.permute.xlu0 %3984
      %3986 = vrot.lane.b32.xlu0 %v3882, 32
      %v3987 = vpop.permute.xlu0 %3986
      %3988 = vrot.lane.b32.xlu0 %v3883, 32
      %v3989 = vpop.permute.xlu0 %3988
      %3990 = vrot.lane.b32.xlu0 %v3884, 32
      %v3991 = vpop.permute.xlu0 %3990
      %3992 = vrot.lane.b32.xlu0 %v3885, 32
      %v3993 = vpop.permute.xlu0 %3992
      %v4030 = vmul.f32 %v3288, %v3923
      %v4031 = vmul.f32 %v3303, %v3925
      %v4032 = vmul.f32 %v3318, %v3927
      %v4033 = vmul.f32 %v3333, %v3929
      %v4034 = vmul.f32 %v3348, %v3931
      %v4035 = vmul.f32 %v3363, %v3933
      %v4036 = vmul.f32 %v3378, %v3935
      %v4037 = vmul.f32 %v3393, %v3937
      %v4038 = vmul.f32 %v3408, %v3939
      %v4039 = vmul.f32 %v3423, %v3941
      %v4040 = vmul.f32 %v3438, %v3943
      %v4041 = vmul.f32 %v3453, %v3945
      %v4042 = vmul.f32 %v3468, %v3947
      %v4043 = vmul.f32 %v3483, %v3949
      %v4044 = vmul.f32 %v3498, %v3951
      %v4045 = vmul.f32 %v3513, %v3953
      %v4046 = vmul.f32 %v3528, %v3955
      %v4047 = vmul.f32 %v3543, %v3957
      %v4048 = vmul.f32 %v3558, %v3959
      %v4049 = vmul.f32 %v3573, %v3961
      %v4050 = vmul.f32 %v3588, %v3963
      %v4051 = vmul.f32 %v3603, %v3965
      %v4052 = vmul.f32 %v3618, %v3967
      %v4053 = vmul.f32 %v3633, %v3969
      %v4054 = vmul.f32 %v3648, %v3971
      %v4055 = vmul.f32 %v3663, %v3973
      %v4056 = vmul.f32 %v3678, %v3975
      %v4057 = vmul.f32 %v3693, %v3977
      %v4058 = vmul.f32 %v3708, %v3979
      %v4059 = vmul.f32 %v3723, %v3981
      %v4060 = vmul.f32 %v3738, %v3983
      %v4061 = vmul.f32 %v3753, %v3985
      %v4062 = vmul.f32 %v3768, %v3987
      %v4063 = vmul.f32 %v3783, %v3989
      %v4064 = vmul.f32 %v3798, %v3991
      %v4065 = vmul.f32 %v3813, %v3993
      %4102 = vrot.lane.b32.xlu0 %v3814, 32
      %v4103 = vpop.permute.xlu0 %4102
      %4104 = vrot.lane.b32.xlu0 %v3815, 32
      %v4105 = vpop.permute.xlu0 %4104
      %4106 = vrot.lane.b32.xlu0 %v3816, 32
      %v4107 = vpop.permute.xlu0 %4106
      %4108 = vrot.lane.b32.xlu0 %v3817, 32
      %v4109 = vpop.permute.xlu0 %4108
      %4110 = vrot.lane.b32.xlu0 %v3818, 32
      %v4111 = vpop.permute.xlu0 %4110
      %4112 = vrot.lane.b32.xlu0 %v3819, 32
      %v4113 = vpop.permute.xlu0 %4112
      %4114 = vrot.lane.b32.xlu0 %v3820, 32
      %v4115 = vpop.permute.xlu0 %4114
      %4116 = vrot.lane.b32.xlu0 %v3821, 32
      %v4117 = vpop.permute.xlu0 %4116
      %4118 = vrot.lane.b32.xlu0 %v3822, 32
      %v4119 = vpop.permute.xlu0 %4118
      %4120 = vrot.lane.b32.xlu0 %v3823, 32
      %v4121 = vpop.permute.xlu0 %4120
      %4122 = vrot.lane.b32.xlu0 %v3824, 32
      %v4123 = vpop.permute.xlu0 %4122
      %4124 = vrot.lane.b32.xlu0 %v3825, 32
      %v4125 = vpop.permute.xlu0 %4124
      %4126 = vrot.lane.b32.xlu0 %v3826, 32
      %v4127 = vpop.permute.xlu0 %4126
      %4128 = vrot.lane.b32.xlu0 %v3827, 32
      %v4129 = vpop.permute.xlu0 %4128
      %4130 = vrot.lane.b32.xlu0 %v3828, 32
      %v4131 = vpop.permute.xlu0 %4130
      %4132 = vrot.lane.b32.xlu0 %v3829, 32
      %v4133 = vpop.permute.xlu0 %4132
      %4134 = vrot.lane.b32.xlu0 %v3830, 32
      %v4135 = vpop.permute.xlu0 %4134
      %4136 = vrot.lane.b32.xlu0 %v3831, 32
      %v4137 = vpop.permute.xlu0 %4136
      %4138 = vrot.lane.b32.xlu0 %v3832, 32
      %v4139 = vpop.permute.xlu0 %4138
      %4140 = vrot.lane.b32.xlu0 %v3833, 32
      %v4141 = vpop.permute.xlu0 %4140
      %4142 = vrot.lane.b32.xlu0 %v3834, 32
      %v4143 = vpop.permute.xlu0 %4142
      %4144 = vrot.lane.b32.xlu0 %v3835, 32
      %v4145 = vpop.permute.xlu0 %4144
      %4146 = vrot.lane.b32.xlu0 %v3836, 32
      %v4147 = vpop.permute.xlu0 %4146
      %4148 = vrot.lane.b32.xlu0 %v3837, 32
      %v4149 = vpop.permute.xlu0 %4148
      %4150 = vrot.lane.b32.xlu0 %v3838, 32
      %v4151 = vpop.permute.xlu0 %4150
      %4152 = vrot.lane.b32.xlu0 %v3839, 32
      %v4153 = vpop.permute.xlu0 %4152
      %4154 = vrot.lane.b32.xlu0 %v3840, 32
      %v4155 = vpop.permute.xlu0 %4154
      %4156 = vrot.lane.b32.xlu0 %v3841, 32
      %v4157 = vpop.permute.xlu0 %4156
      %4158 = vrot.lane.b32.xlu0 %v3842, 32
      %v4159 = vpop.permute.xlu0 %4158
      %4160 = vrot.lane.b32.xlu0 %v3843, 32
      %v4161 = vpop.permute.xlu0 %4160
      %4162 = vrot.lane.b32.xlu0 %v3844, 32
      %v4163 = vpop.permute.xlu0 %4162
      %4164 = vrot.lane.b32.xlu0 %v3845, 32
      %v4165 = vpop.permute.xlu0 %4164
      %4166 = vrot.lane.b32.xlu0 %v3846, 32
      %v4167 = vpop.permute.xlu0 %4166
      %4168 = vrot.lane.b32.xlu0 %v3847, 32
      %v4169 = vpop.permute.xlu0 %4168
      %4170 = vrot.lane.b32.xlu0 %v3848, 32
      %v4171 = vpop.permute.xlu0 %4170
      %4172 = vrot.lane.b32.xlu0 %v3849, 32
      %v4173 = vpop.permute.xlu0 %4172
      %v4210 = vmul.f32 %v3288, %v4103
      %v4211 = vmul.f32 %v3303, %v4105
      %v4212 = vmul.f32 %v3318, %v4107
      %v4213 = vmul.f32 %v3333, %v4109
      %v4214 = vmul.f32 %v3348, %v4111
      %v4215 = vmul.f32 %v3363, %v4113
      %v4216 = vmul.f32 %v3378, %v4115
      %v4217 = vmul.f32 %v3393, %v4117
      %v4218 = vmul.f32 %v3408, %v4119
      %v4219 = vmul.f32 %v3423, %v4121
      %v4220 = vmul.f32 %v3438, %v4123
      %v4221 = vmul.f32 %v3453, %v4125
      %v4222 = vmul.f32 %v3468, %v4127
      %v4223 = vmul.f32 %v3483, %v4129
      %v4224 = vmul.f32 %v3498, %v4131
      %v4225 = vmul.f32 %v3513, %v4133
      %v4226 = vmul.f32 %v3528, %v4135
      %v4227 = vmul.f32 %v3543, %v4137
      %v4228 = vmul.f32 %v3558, %v4139
      %v4229 = vmul.f32 %v3573, %v4141
      %v4230 = vmul.f32 %v3588, %v4143
      %v4231 = vmul.f32 %v3603, %v4145
      %v4232 = vmul.f32 %v3618, %v4147
      %v4233 = vmul.f32 %v3633, %v4149
      %v4234 = vmul.f32 %v3648, %v4151
      %v4235 = vmul.f32 %v3663, %v4153
      %v4236 = vmul.f32 %v3678, %v4155
      %v4237 = vmul.f32 %v3693, %v4157
      %v4238 = vmul.f32 %v3708, %v4159
      %v4239 = vmul.f32 %v3723, %v4161
      %v4240 = vmul.f32 %v3738, %v4163
      %v4241 = vmul.f32 %v3753, %v4165
      %v4242 = vmul.f32 %v3768, %v4167
      %v4243 = vmul.f32 %v3783, %v4169
      %v4244 = vmul.f32 %v3798, %v4171
      %v4245 = vmul.f32 %v3813, %v4173
      %4282 = vrot.lane.b32.xlu0 %v4210, 32
      %v4283 = vpop.permute.xlu0 %4282
      %4284 = vrot.lane.b32.xlu0 %v4211, 32
      %v4285 = vpop.permute.xlu0 %4284
      %4286 = vrot.lane.b32.xlu0 %v4212, 32
      %v4287 = vpop.permute.xlu0 %4286
      %4288 = vrot.lane.b32.xlu0 %v4213, 32
      %v4289 = vpop.permute.xlu0 %4288
      %4290 = vrot.lane.b32.xlu0 %v4214, 32
      %v4291 = vpop.permute.xlu0 %4290
      %4292 = vrot.lane.b32.xlu0 %v4215, 32
      %v4293 = vpop.permute.xlu0 %4292
      %4294 = vrot.lane.b32.xlu0 %v4216, 32
      %v4295 = vpop.permute.xlu0 %4294
      %4296 = vrot.lane.b32.xlu0 %v4217, 32
      %v4297 = vpop.permute.xlu0 %4296
      %4298 = vrot.lane.b32.xlu0 %v4218, 32
      %v4299 = vpop.permute.xlu0 %4298
      %4300 = vrot.lane.b32.xlu0 %v4219, 32
      %v4301 = vpop.permute.xlu0 %4300
      %4302 = vrot.lane.b32.xlu0 %v4220, 32
      %v4303 = vpop.permute.xlu0 %4302
      %4304 = vrot.lane.b32.xlu0 %v4221, 32
      %v4305 = vpop.permute.xlu0 %4304
      %4306 = vrot.lane.b32.xlu0 %v4222, 32
      %v4307 = vpop.permute.xlu0 %4306
      %4308 = vrot.lane.b32.xlu0 %v4223, 32
      %v4309 = vpop.permute.xlu0 %4308
      %4310 = vrot.lane.b32.xlu0 %v4224, 32
      %v4311 = vpop.permute.xlu0 %4310
      %4312 = vrot.lane.b32.xlu0 %v4225, 32
      %v4313 = vpop.permute.xlu0 %4312
      %4314 = vrot.lane.b32.xlu0 %v4226, 32
      %v4315 = vpop.permute.xlu0 %4314
      %4316 = vrot.lane.b32.xlu0 %v4227, 32
      %v4317 = vpop.permute.xlu0 %4316
      %4318 = vrot.lane.b32.xlu0 %v4228, 32
      %v4319 = vpop.permute.xlu0 %4318
      %4320 = vrot.lane.b32.xlu0 %v4229, 32
      %v4321 = vpop.permute.xlu0 %4320
      %4322 = vrot.lane.b32.xlu0 %v4230, 32
      %v4323 = vpop.permute.xlu0 %4322
      %4324 = vrot.lane.b32.xlu0 %v4231, 32
      %v4325 = vpop.permute.xlu0 %4324
      %4326 = vrot.lane.b32.xlu0 %v4232, 32
      %v4327 = vpop.permute.xlu0 %4326
      %4328 = vrot.lane.b32.xlu0 %v4233, 32
      %v4329 = vpop.permute.xlu0 %4328
      %4330 = vrot.lane.b32.xlu0 %v4234, 32
      %v4331 = vpop.permute.xlu0 %4330
      %4332 = vrot.lane.b32.xlu0 %v4235, 32
      %v4333 = vpop.permute.xlu0 %4332
      %4334 = vrot.lane.b32.xlu0 %v4236, 32
      %v4335 = vpop.permute.xlu0 %4334
      %4336 = vrot.lane.b32.xlu0 %v4237, 32
      %v4337 = vpop.permute.xlu0 %4336
      %4338 = vrot.lane.b32.xlu0 %v4238, 32
      %v4339 = vpop.permute.xlu0 %4338
      %4340 = vrot.lane.b32.xlu0 %v4239, 32
      %v4341 = vpop.permute.xlu0 %4340
      %4342 = vrot.lane.b32.xlu0 %v4240, 32
      %v4343 = vpop.permute.xlu0 %4342
      %4344 = vrot.lane.b32.xlu0 %v4241, 32
      %v4345 = vpop.permute.xlu0 %4344
      %4346 = vrot.lane.b32.xlu0 %v4242, 32
      %v4347 = vpop.permute.xlu0 %4346
      %4348 = vrot.lane.b32.xlu0 %v4243, 32
      %v4349 = vpop.permute.xlu0 %4348
      %4350 = vrot.lane.b32.xlu0 %v4244, 32
      %v4351 = vpop.permute.xlu0 %4350
      %4352 = vrot.lane.b32.xlu0 %v4245, 32
      %v4353 = vpop.permute.xlu0 %4352
      %v4390 = vadd.f32 %v4030, %v4283
      %v4391 = vadd.f32 %v4031, %v4285
      %v4392 = vadd.f32 %v4032, %v4287
      %v4393 = vadd.f32 %v4033, %v4289
      %v4394 = vadd.f32 %v4034, %v4291
      %v4395 = vadd.f32 %v4035, %v4293
      %v4396 = vadd.f32 %v4036, %v4295
      %v4397 = vadd.f32 %v4037, %v4297
      %v4398 = vadd.f32 %v4038, %v4299
      %v4399 = vadd.f32 %v4039, %v4301
      %v4400 = vadd.f32 %v4040, %v4303
      %v4401 = vadd.f32 %v4041, %v4305
      %v4402 = vadd.f32 %v4042, %v4307
      %v4403 = vadd.f32 %v4043, %v4309
      %v4404 = vadd.f32 %v4044, %v4311
      %v4405 = vadd.f32 %v4045, %v4313
      %v4406 = vadd.f32 %v4046, %v4315
      %v4407 = vadd.f32 %v4047, %v4317
      %v4408 = vadd.f32 %v4048, %v4319
      %v4409 = vadd.f32 %v4049, %v4321
      %v4410 = vadd.f32 %v4050, %v4323
      %v4411 = vadd.f32 %v4051, %v4325
      %v4412 = vadd.f32 %v4052, %v4327
      %v4413 = vadd.f32 %v4053, %v4329
      %v4414 = vadd.f32 %v4054, %v4331
      %v4415 = vadd.f32 %v4055, %v4333
      %v4416 = vadd.f32 %v4056, %v4335
      %v4417 = vadd.f32 %v4057, %v4337
      %v4418 = vadd.f32 %v4058, %v4339
      %v4419 = vadd.f32 %v4059, %v4341
      %v4420 = vadd.f32 %v4060, %v4343
      %v4421 = vadd.f32 %v4061, %v4345
      %v4422 = vadd.f32 %v4062, %v4347
      %v4423 = vadd.f32 %v4063, %v4349
      %v4424 = vadd.f32 %v4064, %v4351
      %v4425 = vadd.f32 %v4065, %v4353
      %v4426 = vtanh.pop %v4390
      %v4427 = vtanh.pop %v4391
      %v4428 = vtanh.pop %v4392
      %v4429 = vtanh.pop %v4393
      %v4430 = vtanh.pop %v4394
      %v4431 = vtanh.pop %v4395
      %v4432 = vtanh.pop %v4396
      %v4433 = vtanh.pop %v4397
      %v4434 = vtanh.pop %v4398
      %v4435 = vtanh.pop %v4399
      %v4436 = vtanh.pop %v4400
      %v4437 = vtanh.pop %v4401
      %v4438 = vtanh.pop %v4402
      %v4439 = vtanh.pop %v4403
      %v4440 = vtanh.pop %v4404
      %v4441 = vtanh.pop %v4405
      %v4442 = vtanh.pop %v4406
      %v4443 = vtanh.pop %v4407
      %v4444 = vtanh.pop %v4408
      %v4445 = vtanh.pop %v4409
      %v4446 = vtanh.pop %v4410
      %v4447 = vtanh.pop %v4411
      %v4448 = vtanh.pop %v4412
      %v4449 = vtanh.pop %v4413
      %v4450 = vtanh.pop %v4414
      %v4451 = vtanh.pop %v4415
      %v4452 = vtanh.pop %v4416
      %v4453 = vtanh.pop %v4417
      %v4454 = vtanh.pop %v4418
      %v4455 = vtanh.pop %v4419
      %v4456 = vtanh.pop %v4420
      %v4457 = vtanh.pop %v4421
      %v4458 = vtanh.pop %v4422
      %v4459 = vtanh.pop %v4423
      %v4460 = vtanh.pop %v4424
      %v4461 = vtanh.pop %v4425
      %4498 = vrot.lane.b32.xlu0 %v4426, 32
      %v4499 = vpop.permute.xlu0 %4498
      %4500 = vrot.lane.b32.xlu0 %v4427, 32
      %v4501 = vpop.permute.xlu0 %4500
      %4502 = vrot.lane.b32.xlu0 %v4428, 32
      %v4503 = vpop.permute.xlu0 %4502
      %4504 = vrot.lane.b32.xlu0 %v4429, 32
      %v4505 = vpop.permute.xlu0 %4504
      %4506 = vrot.lane.b32.xlu0 %v4430, 32
      %v4507 = vpop.permute.xlu0 %4506
      %4508 = vrot.lane.b32.xlu0 %v4431, 32
      %v4509 = vpop.permute.xlu0 %4508
      %4510 = vrot.lane.b32.xlu0 %v4432, 32
      %v4511 = vpop.permute.xlu0 %4510
      %4512 = vrot.lane.b32.xlu0 %v4433, 32
      %v4513 = vpop.permute.xlu0 %4512
      %4514 = vrot.lane.b32.xlu0 %v4434, 32
      %v4515 = vpop.permute.xlu0 %4514
      %4516 = vrot.lane.b32.xlu0 %v4435, 32
      %v4517 = vpop.permute.xlu0 %4516
      %4518 = vrot.lane.b32.xlu0 %v4436, 32
      %v4519 = vpop.permute.xlu0 %4518
      %4520 = vrot.lane.b32.xlu0 %v4437, 32
      %v4521 = vpop.permute.xlu0 %4520
      %4522 = vrot.lane.b32.xlu0 %v4438, 32
      %v4523 = vpop.permute.xlu0 %4522
      %4524 = vrot.lane.b32.xlu0 %v4439, 32
      %v4525 = vpop.permute.xlu0 %4524
      %4526 = vrot.lane.b32.xlu0 %v4440, 32
      %v4527 = vpop.permute.xlu0 %4526
      %4528 = vrot.lane.b32.xlu0 %v4441, 32
      %v4529 = vpop.permute.xlu0 %4528
      %4530 = vrot.lane.b32.xlu0 %v4442, 32
      %v4531 = vpop.permute.xlu0 %4530
      %4532 = vrot.lane.b32.xlu0 %v4443, 32
      %v4533 = vpop.permute.xlu0 %4532
      %4534 = vrot.lane.b32.xlu0 %v4444, 32
      %v4535 = vpop.permute.xlu0 %4534
      %4536 = vrot.lane.b32.xlu0 %v4445, 32
      %v4537 = vpop.permute.xlu0 %4536
      %4538 = vrot.lane.b32.xlu0 %v4446, 32
      %v4539 = vpop.permute.xlu0 %4538
      %4540 = vrot.lane.b32.xlu0 %v4447, 32
      %v4541 = vpop.permute.xlu0 %4540
      %4542 = vrot.lane.b32.xlu0 %v4448, 32
      %v4543 = vpop.permute.xlu0 %4542
      %4544 = vrot.lane.b32.xlu0 %v4449, 32
      %v4545 = vpop.permute.xlu0 %4544
      %4546 = vrot.lane.b32.xlu0 %v4450, 32
      %v4547 = vpop.permute.xlu0 %4546
      %4548 = vrot.lane.b32.xlu0 %v4451, 32
      %v4549 = vpop.permute.xlu0 %4548
      %4550 = vrot.lane.b32.xlu0 %v4452, 32
      %v4551 = vpop.permute.xlu0 %4550
      %4552 = vrot.lane.b32.xlu0 %v4453, 32
      %v4553 = vpop.permute.xlu0 %4552
      %4554 = vrot.lane.b32.xlu0 %v4454, 32
      %v4555 = vpop.permute.xlu0 %4554
      %4556 = vrot.lane.b32.xlu0 %v4455, 32
      %v4557 = vpop.permute.xlu0 %4556
      %4558 = vrot.lane.b32.xlu0 %v4456, 32
      %v4559 = vpop.permute.xlu0 %4558
      %4560 = vrot.lane.b32.xlu0 %v4457, 32
      %v4561 = vpop.permute.xlu0 %4560
      %4562 = vrot.lane.b32.xlu0 %v4458, 32
      %v4563 = vpop.permute.xlu0 %4562
      %4564 = vrot.lane.b32.xlu0 %v4459, 32
      %v4565 = vpop.permute.xlu0 %4564
      %4566 = vrot.lane.b32.xlu0 %v4460, 32
      %v4567 = vpop.permute.xlu0 %4566
      %4568 = vrot.lane.b32.xlu0 %v4461, 32
      %v4569 = vpop.permute.xlu0 %4568
      %v4606 = vmul.f32 %v3288, %v4499
      %v4607 = vmul.f32 %v3303, %v4501
      %v4608 = vmul.f32 %v3318, %v4503
      %v4609 = vmul.f32 %v3333, %v4505
      %v4610 = vmul.f32 %v3348, %v4507
      %v4611 = vmul.f32 %v3363, %v4509
      %v4612 = vmul.f32 %v3378, %v4511
      %v4613 = vmul.f32 %v3393, %v4513
      %v4614 = vmul.f32 %v3408, %v4515
      %v4615 = vmul.f32 %v3423, %v4517
      %v4616 = vmul.f32 %v3438, %v4519
      %v4617 = vmul.f32 %v3453, %v4521
      %v4618 = vmul.f32 %v3468, %v4523
      %v4619 = vmul.f32 %v3483, %v4525
      %v4620 = vmul.f32 %v3498, %v4527
      %v4621 = vmul.f32 %v3513, %v4529
      %v4622 = vmul.f32 %v3528, %v4531
      %v4623 = vmul.f32 %v3543, %v4533
      %v4624 = vmul.f32 %v3558, %v4535
      %v4625 = vmul.f32 %v3573, %v4537
      %v4626 = vmul.f32 %v3588, %v4539
      %v4627 = vmul.f32 %v3603, %v4541
      %v4628 = vmul.f32 %v3618, %v4543
      %v4629 = vmul.f32 %v3633, %v4545
      %v4630 = vmul.f32 %v3648, %v4547
      %v4631 = vmul.f32 %v3663, %v4549
      %v4632 = vmul.f32 %v3678, %v4551
      %v4633 = vmul.f32 %v3693, %v4553
      %v4634 = vmul.f32 %v3708, %v4555
      %v4635 = vmul.f32 %v3723, %v4557
      %v4636 = vmul.f32 %v3738, %v4559
      %v4637 = vmul.f32 %v3753, %v4561
      %v4638 = vmul.f32 %v3768, %v4563
      %v4639 = vmul.f32 %v3783, %v4565
      %v4640 = vmul.f32 %v3798, %v4567
      %v4641 = vmul.f32 %v3813, %v4569
      %4678 = vrot.lane.b32.xlu0 %v4390, 96
      %v4679 = vpop.permute.xlu0 %4678
      %4680 = vrot.lane.b32.xlu0 %v4391, 96
      %v4681 = vpop.permute.xlu0 %4680
      %4682 = vrot.lane.b32.xlu0 %v4392, 96
      %v4683 = vpop.permute.xlu0 %4682
      %4684 = vrot.lane.b32.xlu0 %v4393, 96
      %v4685 = vpop.permute.xlu0 %4684
      %4686 = vrot.lane.b32.xlu0 %v4394, 96
      %v4687 = vpop.permute.xlu0 %4686
      %4688 = vrot.lane.b32.xlu0 %v4395, 96
      %v4689 = vpop.permute.xlu0 %4688
      %4690 = vrot.lane.b32.xlu0 %v4396, 96
      %v4691 = vpop.permute.xlu0 %4690
      %4692 = vrot.lane.b32.xlu0 %v4397, 96
      %v4693 = vpop.permute.xlu0 %4692
      %4694 = vrot.lane.b32.xlu0 %v4398, 96
      %v4695 = vpop.permute.xlu0 %4694
      %4696 = vrot.lane.b32.xlu0 %v4399, 96
      %v4697 = vpop.permute.xlu0 %4696
      %4698 = vrot.lane.b32.xlu0 %v4400, 96
      %v4699 = vpop.permute.xlu0 %4698
      %4700 = vrot.lane.b32.xlu0 %v4401, 96
      %v4701 = vpop.permute.xlu0 %4700
      %4702 = vrot.lane.b32.xlu0 %v4402, 96
      %v4703 = vpop.permute.xlu0 %4702
      %4704 = vrot.lane.b32.xlu0 %v4403, 96
      %v4705 = vpop.permute.xlu0 %4704
      %4706 = vrot.lane.b32.xlu0 %v4404, 96
      %v4707 = vpop.permute.xlu0 %4706
      %4708 = vrot.lane.b32.xlu0 %v4405, 96
      %v4709 = vpop.permute.xlu0 %4708
      %4710 = vrot.lane.b32.xlu0 %v4406, 96
      %v4711 = vpop.permute.xlu0 %4710
      %4712 = vrot.lane.b32.xlu0 %v4407, 96
      %v4713 = vpop.permute.xlu0 %4712
      %4714 = vrot.lane.b32.xlu0 %v4408, 96
      %v4715 = vpop.permute.xlu0 %4714
      %4716 = vrot.lane.b32.xlu0 %v4409, 96
      %v4717 = vpop.permute.xlu0 %4716
      %4718 = vrot.lane.b32.xlu0 %v4410, 96
      %v4719 = vpop.permute.xlu0 %4718
      %4720 = vrot.lane.b32.xlu0 %v4411, 96
      %v4721 = vpop.permute.xlu0 %4720
      %4722 = vrot.lane.b32.xlu0 %v4412, 96
      %v4723 = vpop.permute.xlu0 %4722
      %4724 = vrot.lane.b32.xlu0 %v4413, 96
      %v4725 = vpop.permute.xlu0 %4724
      %4726 = vrot.lane.b32.xlu0 %v4414, 96
      %v4727 = vpop.permute.xlu0 %4726
      %4728 = vrot.lane.b32.xlu0 %v4415, 96
      %v4729 = vpop.permute.xlu0 %4728
      %4730 = vrot.lane.b32.xlu0 %v4416, 96
      %v4731 = vpop.permute.xlu0 %4730
      %4732 = vrot.lane.b32.xlu0 %v4417, 96
      %v4733 = vpop.permute.xlu0 %4732
      %4734 = vrot.lane.b32.xlu0 %v4418, 96
      %v4735 = vpop.permute.xlu0 %4734
      %4736 = vrot.lane.b32.xlu0 %v4419, 96
      %v4737 = vpop.permute.xlu0 %4736
      %4738 = vrot.lane.b32.xlu0 %v4420, 96
      %v4739 = vpop.permute.xlu0 %4738
      %4740 = vrot.lane.b32.xlu0 %v4421, 96
      %v4741 = vpop.permute.xlu0 %4740
      %4742 = vrot.lane.b32.xlu0 %v4422, 96
      %v4743 = vpop.permute.xlu0 %4742
      %4744 = vrot.lane.b32.xlu0 %v4423, 96
      %v4745 = vpop.permute.xlu0 %4744
      %4746 = vrot.lane.b32.xlu0 %v4424, 96
      %v4747 = vpop.permute.xlu0 %4746
      %4748 = vrot.lane.b32.xlu0 %v4425, 96
      %v4749 = vpop.permute.xlu0 %4748
      %4786 = vst.msk [vmem:[#allocation3] sm:$0xff] %vm601, %v4679
      %4787 = vst.msk [vmem:[#allocation3 + $0x8] sm:$0xff] %vm601, %v4681
      %4788 = vst.msk [vmem:[#allocation3 + $0x10] sm:$0xff] %vm601, %v4683
      %4789 = vst.msk [vmem:[#allocation3 + $0x18] sm:$0xff] %vm601, %v4685
      %4790 = vst.msk [vmem:[#allocation3 + $0x20] sm:$0xff] %vm601, %v4687
      %4791 = vst.msk [vmem:[#allocation3 + $0x28] sm:$0xff] %vm601, %v4689
      %4792 = vst.msk [vmem:[#allocation3 + $0x30] sm:$0xff] %vm601, %v4691
      %4793 = vst.msk [vmem:[#allocation3 + $0x38] sm:$0xff] %vm601, %v4693
      %4794 = vst.msk [vmem:[#allocation3 + $0x40] sm:$0xff] %vm601, %v4695
      %4795 = vst.msk [vmem:[#allocation3 + $0x48] sm:$0xff] %vm601, %v4697
      %4796 = vst.msk [vmem:[#allocation3 + $0x50] sm:$0xff] %vm601, %v4699
      %4797 = vst.msk [vmem:[#allocation3 + $0x58] sm:$0xff] %vm601, %v4701
      %4798 = vst.msk [vmem:[#allocation3 + $0x60] sm:$0xff] %vm601, %v4703
      %4799 = vst.msk [vmem:[#allocation3 + $0x68] sm:$0xff] %vm601, %v4705
      %4800 = vst.msk [vmem:[#allocation3 + $0x70] sm:$0xff] %vm601, %v4707
      %4801 = vst.msk [vmem:[#allocation3 + $0x78] sm:$0xff] %vm601, %v4709
      %4802 = vst.msk [vmem:[#allocation3 + $0x80] sm:$0xff] %vm601, %v4711
      %4803 = vst.msk [vmem:[#allocation3 + $0x88] sm:$0xff] %vm601, %v4713
      %4804 = vst.msk [vmem:[#allocation3 + $0x90] sm:$0xff] %vm601, %v4715
      %4805 = vst.msk [vmem:[#allocation3 + $0x98] sm:$0xff] %vm601, %v4717
      %4806 = vst.msk [vmem:[#allocation3 + $0xa0] sm:$0xff] %vm601, %v4719
      %4807 = vst.msk [vmem:[#allocation3 + $0xa8] sm:$0xff] %vm601, %v4721
      %4808 = vst.msk [vmem:[#allocation3 + $0xb0] sm:$0xff] %vm601, %v4723
      %4809 = vst.msk [vmem:[#allocation3 + $0xb8] sm:$0xff] %vm601, %v4725
      %4810 = vst.msk [vmem:[#allocation3 + $0xc0] sm:$0xff] %vm601, %v4727
      %4811 = vst.msk [vmem:[#allocation3 + $0xc8] sm:$0xff] %vm601, %v4729
      %4812 = vst.msk [vmem:[#allocation3 + $0xd0] sm:$0xff] %vm601, %v4731
      %4813 = vst.msk [vmem:[#allocation3 + $0xd8] sm:$0xff] %vm601, %v4733
      %4814 = vst.msk [vmem:[#allocation3 + $0xe0] sm:$0xff] %vm601, %v4735
      %4815 = vst.msk [vmem:[#allocation3 + $0xe8] sm:$0xff] %vm601, %v4737
      %4816 = vst.msk [vmem:[#allocation3 + $0xf0] sm:$0xff] %vm601, %v4739
      %4817 = vst.msk [vmem:[#allocation3 + $0xf8] sm:$0xff] %vm601, %v4741
      %4818 = vst.msk [vmem:[#allocation3 + $0x100] sm:$0xff] %vm601, %v4743
      %4819 = vst.msk [vmem:[#allocation3 + $0x108] sm:$0xff] %vm601, %v4745
      %4820 = vst.msk [vmem:[#allocation3 + $0x110] sm:$0xff] %vm601, %v4747
      %4821 = vst.msk [vmem:[#allocation3 + $0x118] sm:$0xff] %vm601, %v4749
      %4823 = vset.pattern.permute.xlu0 0
      %4824 = vperm.xlu0 %4823, %v443
      %v4825 = vpop.permute.xlu0 %4824
      %4828 = vset.pattern.permute.xlu0 0
      %4829 = vperm.xlu0 %4828, %v444
      %v4830 = vpop.permute.xlu0 %4829
      %4833 = vset.pattern.permute.xlu0 0
      %4834 = vperm.xlu0 %4833, %v445
      %v4835 = vpop.permute.xlu0 %4834
      %4838 = vset.pattern.permute.xlu0 0
      %4839 = vperm.xlu0 %4838, %v446
      %v4840 = vpop.permute.xlu0 %4839
      %4843 = vset.pattern.permute.xlu0 0
      %4844 = vperm.xlu0 %4843, %v447
      %v4845 = vpop.permute.xlu0 %4844
      %4848 = vset.pattern.permute.xlu0 0
      %4849 = vperm.xlu0 %4848, %v448
      %v4850 = vpop.permute.xlu0 %4849
      %4853 = vset.pattern.permute.xlu0 0
      %4854 = vperm.xlu0 %4853, %v449
      %v4855 = vpop.permute.xlu0 %4854
      %4858 = vset.pattern.permute.xlu0 0
      %4859 = vperm.xlu0 %4858, %v450
      %v4860 = vpop.permute.xlu0 %4859
      %4863 = vset.pattern.permute.xlu0 0
      %4864 = vperm.xlu0 %4863, %v451
      %v4865 = vpop.permute.xlu0 %4864
      %4868 = vset.pattern.permute.xlu0 0
      %4869 = vperm.xlu0 %4868, %v452
      %v4870 = vpop.permute.xlu0 %4869
      %4873 = vset.pattern.permute.xlu0 0
      %4874 = vperm.xlu0 %4873, %v453
      %v4875 = vpop.permute.xlu0 %4874
      %4878 = vset.pattern.permute.xlu0 0
      %4879 = vperm.xlu0 %4878, %v454
      %v4880 = vpop.permute.xlu0 %4879
      %4883 = vset.pattern.permute.xlu0 0
      %4884 = vperm.xlu0 %4883, %v455
      %v4885 = vpop.permute.xlu0 %4884
      %4888 = vset.pattern.permute.xlu0 0
      %4889 = vperm.xlu0 %4888, %v456
      %v4890 = vpop.permute.xlu0 %4889
      %4893 = vset.pattern.permute.xlu0 0
      %4894 = vperm.xlu0 %4893, %v457
      %v4895 = vpop.permute.xlu0 %4894
      %4898 = vset.pattern.permute.xlu0 0
      %4899 = vperm.xlu0 %4898, %v458
      %v4900 = vpop.permute.xlu0 %4899
      %4903 = vset.pattern.permute.xlu0 0
      %4904 = vperm.xlu0 %4903, %v459
      %v4905 = vpop.permute.xlu0 %4904
      %4908 = vset.pattern.permute.xlu0 0
      %4909 = vperm.xlu0 %4908, %v460
      %v4910 = vpop.permute.xlu0 %4909
      %4913 = vset.pattern.permute.xlu0 0
      %4914 = vperm.xlu0 %4913, %v461
      %v4915 = vpop.permute.xlu0 %4914
      %4918 = vset.pattern.permute.xlu0 0
      %4919 = vperm.xlu0 %4918, %v462
      %v4920 = vpop.permute.xlu0 %4919
      %4923 = vset.pattern.permute.xlu0 0
      %4924 = vperm.xlu0 %4923, %v463
      %v4925 = vpop.permute.xlu0 %4924
      %4928 = vset.pattern.permute.xlu0 0
      %4929 = vperm.xlu0 %4928, %v464
      %v4930 = vpop.permute.xlu0 %4929
      %4933 = vset.pattern.permute.xlu0 0
      %4934 = vperm.xlu0 %4933, %v465
      %v4935 = vpop.permute.xlu0 %4934
      %4938 = vset.pattern.permute.xlu0 0
      %4939 = vperm.xlu0 %4938, %v466
      %v4940 = vpop.permute.xlu0 %4939
      %4943 = vset.pattern.permute.xlu0 0
      %4944 = vperm.xlu0 %4943, %v467
      %v4945 = vpop.permute.xlu0 %4944
      %4948 = vset.pattern.permute.xlu0 0
      %4949 = vperm.xlu0 %4948, %v468
      %v4950 = vpop.permute.xlu0 %4949
      %4953 = vset.pattern.permute.xlu0 0
      %4954 = vperm.xlu0 %4953, %v469
      %v4955 = vpop.permute.xlu0 %4954
      %4958 = vset.pattern.permute.xlu0 0
      %4959 = vperm.xlu0 %4958, %v470
      %v4960 = vpop.permute.xlu0 %4959
      %4963 = vset.pattern.permute.xlu0 0
      %4964 = vperm.xlu0 %4963, %v471
      %v4965 = vpop.permute.xlu0 %4964
      %4968 = vset.pattern.permute.xlu0 0
      %4969 = vperm.xlu0 %4968, %v472
      %v4970 = vpop.permute.xlu0 %4969
      %4973 = vset.pattern.permute.xlu0 0
      %4974 = vperm.xlu0 %4973, %v473
      %v4975 = vpop.permute.xlu0 %4974
      %4978 = vset.pattern.permute.xlu0 0
      %4979 = vperm.xlu0 %4978, %v474
      %v4980 = vpop.permute.xlu0 %4979
      %4983 = vset.pattern.permute.xlu0 0
      %4984 = vperm.xlu0 %4983, %v475
      %v4985 = vpop.permute.xlu0 %4984
      %4988 = vset.pattern.permute.xlu0 0
      %4989 = vperm.xlu0 %4988, %v476
      %v4990 = vpop.permute.xlu0 %4989
      %4993 = vset.pattern.permute.xlu0 0
      %4994 = vperm.xlu0 %4993, %v477
      %v4995 = vpop.permute.xlu0 %4994
      %4998 = vset.pattern.permute.xlu0 0
      %4999 = vperm.xlu0 %4998, %v478
      %v5000 = vpop.permute.xlu0 %4999
      %v5002 = vmul.f32 %v4606, %v4825
      %v5003 = vmul.f32 %v4607, %v4830
      %v5004 = vmul.f32 %v4608, %v4835
      %v5005 = vmul.f32 %v4609, %v4840
      %v5006 = vmul.f32 %v4610, %v4845
      %v5007 = vmul.f32 %v4611, %v4850
      %v5008 = vmul.f32 %v4612, %v4855
      %v5009 = vmul.f32 %v4613, %v4860
      %v5010 = vmul.f32 %v4614, %v4865
      %v5011 = vmul.f32 %v4615, %v4870
      %v5012 = vmul.f32 %v4616, %v4875
      %v5013 = vmul.f32 %v4617, %v4880
      %v5014 = vmul.f32 %v4618, %v4885
      %v5015 = vmul.f32 %v4619, %v4890
      %v5016 = vmul.f32 %v4620, %v4895
      %v5017 = vmul.f32 %v4621, %v4900
      %v5018 = vmul.f32 %v4622, %v4905
      %v5019 = vmul.f32 %v4623, %v4910
      %v5020 = vmul.f32 %v4624, %v4915
      %v5021 = vmul.f32 %v4625, %v4920
      %v5022 = vmul.f32 %v4626, %v4925
      %v5023 = vmul.f32 %v4627, %v4930
      %v5024 = vmul.f32 %v4628, %v4935
      %v5025 = vmul.f32 %v4629, %v4940
      %v5026 = vmul.f32 %v4630, %v4945
      %v5027 = vmul.f32 %v4631, %v4950
      %v5028 = vmul.f32 %v4632, %v4955
      %v5029 = vmul.f32 %v4633, %v4960
      %v5030 = vmul.f32 %v4634, %v4965
      %v5031 = vmul.f32 %v4635, %v4970
      %v5032 = vmul.f32 %v4636, %v4975
      %v5033 = vmul.f32 %v4637, %v4980
      %v5034 = vmul.f32 %v4638, %v4985
      %v5035 = vmul.f32 %v4639, %v4990
      %v5036 = vmul.f32 %v4640, %v4995
      %v5037 = vmul.f32 %v4641, %v5000
      %5074 = vrot.lane.b32.xlu0 %v5002, 64
      %v5075 = vpop.permute.xlu0 %5074
      %5076 = vrot.lane.b32.xlu0 %v5003, 64
      %v5077 = vpop.permute.xlu0 %5076
      %5078 = vrot.lane.b32.xlu0 %v5004, 64
      %v5079 = vpop.permute.xlu0 %5078
      %5080 = vrot.lane.b32.xlu0 %v5005, 64
      %v5081 = vpop.permute.xlu0 %5080
      %5082 = vrot.lane.b32.xlu0 %v5006, 64
      %v5083 = vpop.permute.xlu0 %5082
      %5084 = vrot.lane.b32.xlu0 %v5007, 64
      %v5085 = vpop.permute.xlu0 %5084
      %5086 = vrot.lane.b32.xlu0 %v5008, 64
      %v5087 = vpop.permute.xlu0 %5086
      %5088 = vrot.lane.b32.xlu0 %v5009, 64
      %v5089 = vpop.permute.xlu0 %5088
      %5090 = vrot.lane.b32.xlu0 %v5010, 64
      %v5091 = vpop.permute.xlu0 %5090
      %5092 = vrot.lane.b32.xlu0 %v5011, 64
      %v5093 = vpop.permute.xlu0 %5092
      %5094 = vrot.lane.b32.xlu0 %v5012, 64
      %v5095 = vpop.permute.xlu0 %5094
      %5096 = vrot.lane.b32.xlu0 %v5013, 64
      %v5097 = vpop.permute.xlu0 %5096
      %5098 = vrot.lane.b32.xlu0 %v5014, 64
      %v5099 = vpop.permute.xlu0 %5098
      %5100 = vrot.lane.b32.xlu0 %v5015, 64
      %v5101 = vpop.permute.xlu0 %5100
      %5102 = vrot.lane.b32.xlu0 %v5016, 64
      %v5103 = vpop.permute.xlu0 %5102
      %5104 = vrot.lane.b32.xlu0 %v5017, 64
      %v5105 = vpop.permute.xlu0 %5104
      %5106 = vrot.lane.b32.xlu0 %v5018, 64
      %v5107 = vpop.permute.xlu0 %5106
      %5108 = vrot.lane.b32.xlu0 %v5019, 64
      %v5109 = vpop.permute.xlu0 %5108
      %5110 = vrot.lane.b32.xlu0 %v5020, 64
      %v5111 = vpop.permute.xlu0 %5110
      %5112 = vrot.lane.b32.xlu0 %v5021, 64
      %v5113 = vpop.permute.xlu0 %5112
      %5114 = vrot.lane.b32.xlu0 %v5022, 64
      %v5115 = vpop.permute.xlu0 %5114
      %5116 = vrot.lane.b32.xlu0 %v5023, 64
      %v5117 = vpop.permute.xlu0 %5116
      %5118 = vrot.lane.b32.xlu0 %v5024, 64
      %v5119 = vpop.permute.xlu0 %5118
      %5120 = vrot.lane.b32.xlu0 %v5025, 64
      %v5121 = vpop.permute.xlu0 %5120
      %5122 = vrot.lane.b32.xlu0 %v5026, 64
      %v5123 = vpop.permute.xlu0 %5122
      %5124 = vrot.lane.b32.xlu0 %v5027, 64
      %v5125 = vpop.permute.xlu0 %5124
      %5126 = vrot.lane.b32.xlu0 %v5028, 64
      %v5127 = vpop.permute.xlu0 %5126
      %5128 = vrot.lane.b32.xlu0 %v5029, 64
      %v5129 = vpop.permute.xlu0 %5128
      %5130 = vrot.lane.b32.xlu0 %v5030, 64
      %v5131 = vpop.permute.xlu0 %5130
      %5132 = vrot.lane.b32.xlu0 %v5031, 64
      %v5133 = vpop.permute.xlu0 %5132
      %5134 = vrot.lane.b32.xlu0 %v5032, 64
      %v5135 = vpop.permute.xlu0 %5134
      %5136 = vrot.lane.b32.xlu0 %v5033, 64
      %v5137 = vpop.permute.xlu0 %5136
      %5138 = vrot.lane.b32.xlu0 %v5034, 64
      %v5139 = vpop.permute.xlu0 %5138
      %5140 = vrot.lane.b32.xlu0 %v5035, 64
      %v5141 = vpop.permute.xlu0 %5140
      %5142 = vrot.lane.b32.xlu0 %v5036, 64
      %v5143 = vpop.permute.xlu0 %5142
      %5144 = vrot.lane.b32.xlu0 %v5037, 64
      %v5145 = vpop.permute.xlu0 %5144
      %5182 = vst.msk [vmem:[#allocation2 + $0x13] sm:$0xff] %vm601, %v5075
      %5183 = vst.msk [vmem:[#allocation2 + $0x1b] sm:$0xff] %vm601, %v5077
      %5184 = vst.msk [vmem:[#allocation2 + $0x23] sm:$0xff] %vm601, %v5079
      %5185 = vst.msk [vmem:[#allocation2 + $0x2b] sm:$0xff] %vm601, %v5081
      %5186 = vst.msk [vmem:[#allocation2 + $0x33] sm:$0xff] %vm601, %v5083
      %5187 = vst.msk [vmem:[#allocation2 + $0x3b] sm:$0xff] %vm601, %v5085
      %5188 = vst.msk [vmem:[#allocation2 + $0x43] sm:$0xff] %vm601, %v5087
      %5189 = vst.msk [vmem:[#allocation2 + $0x4b] sm:$0xff] %vm601, %v5089
      %5190 = vst.msk [vmem:[#allocation2 + $0x53] sm:$0xff] %vm601, %v5091
      %5191 = vst.msk [vmem:[#allocation2 + $0x5b] sm:$0xff] %vm601, %v5093
      %5192 = vst.msk [vmem:[#allocation2 + $0x63] sm:$0xff] %vm601, %v5095
      %5193 = vst.msk [vmem:[#allocation2 + $0x6b] sm:$0xff] %vm601, %v5097
      %5194 = vst.msk [vmem:[#allocation2 + $0x73] sm:$0xff] %vm601, %v5099
      %5195 = vst.msk [vmem:[#allocation2 + $0x7b] sm:$0xff] %vm601, %v5101
      %5196 = vst.msk [vmem:[#allocation2 + $0x83] sm:$0xff] %vm601, %v5103
      %5197 = vst.msk [vmem:[#allocation2 + $0x8b] sm:$0xff] %vm601, %v5105
      %5198 = vst.msk [vmem:[#allocation2 + $0x93] sm:$0xff] %vm601, %v5107
      %5199 = vst.msk [vmem:[#allocation2 + $0x9b] sm:$0xff] %vm601, %v5109
      %5200 = vst.msk [vmem:[#allocation2 + $0xa3] sm:$0xff] %vm601, %v5111
      %5201 = vst.msk [vmem:[#allocation2 + $0xab] sm:$0xff] %vm601, %v5113
      %5202 = vst.msk [vmem:[#allocation2 + $0xb3] sm:$0xff] %vm601, %v5115
      %5203 = vst.msk [vmem:[#allocation2 + $0xbb] sm:$0xff] %vm601, %v5117
      %5204 = vst.msk [vmem:[#allocation2 + $0xc3] sm:$0xff] %vm601, %v5119
      %5205 = vst.msk [vmem:[#allocation2 + $0xcb] sm:$0xff] %vm601, %v5121
      %5206 = vst.msk [vmem:[#allocation2 + $0xd3] sm:$0xff] %vm601, %v5123
      %5207 = vst.msk [vmem:[#allocation2 + $0xdb] sm:$0xff] %vm601, %v5125
      %5208 = vst.msk [vmem:[#allocation2 + $0xe3] sm:$0xff] %vm601, %v5127
      %5209 = vst.msk [vmem:[#allocation2 + $0xeb] sm:$0xff] %vm601, %v5129
      %5210 = vst.msk [vmem:[#allocation2 + $0xf3] sm:$0xff] %vm601, %v5131
      %5211 = vst.msk [vmem:[#allocation2 + $0xfb] sm:$0xff] %vm601, %v5133
      %5212 = vst.msk [vmem:[#allocation2 + $0x103] sm:$0xff] %vm601, %v5135
      %5213 = vst.msk [vmem:[#allocation2 + $0x10b] sm:$0xff] %vm601, %v5137
      %5214 = vst.msk [vmem:[#allocation2 + $0x113] sm:$0xff] %vm601, %v5139
      %5215 = vst.msk [vmem:[#allocation2 + $0x11b] sm:$0xff] %vm601, %v5141
      %5216 = vst.msk [vmem:[#allocation2 + $0x123] sm:$0xff] %vm601, %v5143
      %5217 = vst.msk [vmem:[#allocation2 + $0x12b] sm:$0xff] %vm601, %v5145
      %v5218 = vld [vmem:[#allocation2] sm:$0xff]
      %v5219 = vld [vmem:[#allocation2 + $0x8] sm:$0xff]
      %v5220 = vld [vmem:[#allocation2 + $0x10] sm:$0xff]
      %v5221 = vld [vmem:[#allocation2 + $0x18] sm:$0xff]
      %v5222 = vld [vmem:[#allocation2 + $0x20] sm:$0xff]
      %v5223 = vld [vmem:[#allocation2 + $0x28] sm:$0xff]
      %v5224 = vld [vmem:[#allocation2 + $0x30] sm:$0xff]
      %v5225 = vld [vmem:[#allocation2 + $0x38] sm:$0xff]
      %v5226 = vld [vmem:[#allocation2 + $0x40] sm:$0xff]
      %v5227 = vld [vmem:[#allocation2 + $0x48] sm:$0xff]
      %v5228 = vld [vmem:[#allocation2 + $0x50] sm:$0xff]
      %v5229 = vld [vmem:[#allocation2 + $0x58] sm:$0xff]
      %v5230 = vld [vmem:[#allocation2 + $0x60] sm:$0xff]
      %v5231 = vld [vmem:[#allocation2 + $0x68] sm:$0xff]
      %v5232 = vld [vmem:[#allocation2 + $0x70] sm:$0xff]
      %v5233 = vld [vmem:[#allocation2 + $0x78] sm:$0xff]
      %v5234 = vld [vmem:[#allocation2 + $0x80] sm:$0xff]
      %v5235 = vld [vmem:[#allocation2 + $0x88] sm:$0xff]
      %v5236 = vld [vmem:[#allocation2 + $0x90] sm:$0xff]
      %v5237 = vld [vmem:[#allocation2 + $0x98] sm:$0xff]
      %v5238 = vld [vmem:[#allocation2 + $0xa0] sm:$0xff]
      %v5239 = vld [vmem:[#allocation2 + $0xa8] sm:$0xff]
      %v5240 = vld [vmem:[#allocation2 + $0xb0] sm:$0xff]
      %v5241 = vld [vmem:[#allocation2 + $0xb8] sm:$0xff]
      %v5242 = vld [vmem:[#allocation2 + $0xc0] sm:$0xff]
      %v5243 = vld [vmem:[#allocation2 + $0xc8] sm:$0xff]
      %v5244 = vld [vmem:[#allocation2 + $0xd0] sm:$0xff]
      %v5245 = vld [vmem:[#allocation2 + $0xd8] sm:$0xff]
      %v5246 = vld [vmem:[#allocation2 + $0xe0] sm:$0xff]
      %v5247 = vld [vmem:[#allocation2 + $0xe8] sm:$0xff]
      %v5248 = vld [vmem:[#allocation2 + $0xf0] sm:$0xff]
      %v5249 = vld [vmem:[#allocation2 + $0xf8] sm:$0xff]
      %v5250 = vld [vmem:[#allocation2 + $0x100] sm:$0xff]
      %v5251 = vld [vmem:[#allocation2 + $0x108] sm:$0xff]
      %v5252 = vld [vmem:[#allocation2 + $0x110] sm:$0xff]
      %v5253 = vld [vmem:[#allocation2 + $0x118] sm:$0xff]
      %v5254 = vpack.c.bf16 %v5219, %v5218
      %v5255 = vpack.c.bf16 %v5221, %v5220
      %v5256 = vpack.c.bf16 %v5223, %v5222
      %v5257 = vpack.c.bf16 %v5225, %v5224
      %v5258 = vpack.c.bf16 %v5227, %v5226
      %v5259 = vpack.c.bf16 %v5229, %v5228
      %v5260 = vpack.c.bf16 %v5231, %v5230
      %v5261 = vpack.c.bf16 %v5233, %v5232
      %v5262 = vpack.c.bf16 %v5235, %v5234
      %v5263 = vpack.c.bf16 %v5237, %v5236
      %v5264 = vpack.c.bf16 %v5239, %v5238
      %v5265 = vpack.c.bf16 %v5241, %v5240
      %v5266 = vpack.c.bf16 %v5243, %v5242
      %v5267 = vpack.c.bf16 %v5245, %v5244
      %v5268 = vpack.c.bf16 %v5247, %v5246
      %v5269 = vpack.c.bf16 %v5249, %v5248
      %v5270 = vpack.c.bf16 %v5251, %v5250
      %v5271 = vpack.c.bf16 %v5253, %v5252
      %v5272 = vld [vmem:[%s3] sm:$0xf]
      %v5273 = vld [vmem:[%s3 + $0x4] sm:$0xf]
      %v5274 = vld [vmem:[%s3 + $0x8] sm:$0xf]
      %v5275 = vld [vmem:[%s3 + $0xc] sm:$0xf]
      %v5276 = vld [vmem:[#allocation2 + $0x1] sm:$0xff]
      %v5277 = vld [vmem:[#allocation2 + $0x9] sm:$0xff]
      %v5278 = vld [vmem:[#allocation2 + $0x11] sm:$0xff]
      %v5279 = vld [vmem:[#allocation2 + $0x19] sm:$0xff]
      %v5280 = vld [vmem:[#allocation2 + $0x21] sm:$0xff]
      %v5281 = vld [vmem:[#allocation2 + $0x29] sm:$0xff]
      %v5282 = vld [vmem:[#allocation2 + $0x31] sm:$0xff]
      %v5283 = vld [vmem:[#allocation2 + $0x39] sm:$0xff]
      %v5284 = vld [vmem:[#allocation2 + $0x41] sm:$0xff]
      %v5285 = vld [vmem:[#allocation2 + $0x49] sm:$0xff]
      %v5286 = vld [vmem:[#allocation2 + $0x51] sm:$0xff]
      %v5287 = vld [vmem:[#allocation2 + $0x59] sm:$0xff]
      %v5288 = vld [vmem:[#allocation2 + $0x61] sm:$0xff]
      %v5289 = vld [vmem:[#allocation2 + $0x69] sm:$0xff]
      %v5290 = vld [vmem:[#allocation2 + $0x71] sm:$0xff]
      %v5291 = vld [vmem:[#allocation2 + $0x79] sm:$0xff]
      %v5292 = vld [vmem:[#allocation2 + $0x81] sm:$0xff]
      %v5293 = vld [vmem:[#allocation2 + $0x89] sm:$0xff]
      %v5294 = vld [vmem:[#allocation2 + $0x91] sm:$0xff]
      %v5295 = vld [vmem:[#allocation2 + $0x99] sm:$0xff]
      %v5296 = vld [vmem:[#allocation2 + $0xa1] sm:$0xff]
      %v5297 = vld [vmem:[#allocation2 + $0xa9] sm:$0xff]
      %v5298 = vld [vmem:[#allocation2 + $0xb1] sm:$0xff]
      %v5299 = vld [vmem:[#allocation2 + $0xb9] sm:$0xff]
      %v5300 = vld [vmem:[#allocation2 + $0xc1] sm:$0xff]
      %v5301 = vld [vmem:[#allocation2 + $0xc9] sm:$0xff]
      %v5302 = vld [vmem:[#allocation2 + $0xd1] sm:$0xff]
      %v5303 = vld [vmem:[#allocation2 + $0xd9] sm:$0xff]
      %v5304 = vld [vmem:[#allocation2 + $0xe1] sm:$0xff]
      %v5305 = vld [vmem:[#allocation2 + $0xe9] sm:$0xff]
      %v5306 = vld [vmem:[#allocation2 + $0xf1] sm:$0xff]
      %v5307 = vld [vmem:[#allocation2 + $0xf9] sm:$0xff]
      %v5308 = vld [vmem:[#allocation2 + $0x101] sm:$0xff]
      %v5309 = vld [vmem:[#allocation2 + $0x109] sm:$0xff]
      %v5310 = vld [vmem:[#allocation2 + $0x111] sm:$0xff]
      %v5311 = vld [vmem:[#allocation2 + $0x119] sm:$0xff]
      %v5312 = vpack.c.bf16 %v5277, %v5276
      %v5313 = vpack.c.bf16 %v5279, %v5278
      %v5314 = vpack.c.bf16 %v5281, %v5280
      %v5315 = vpack.c.bf16 %v5283, %v5282
      %v5316 = vpack.c.bf16 %v5285, %v5284
      %v5317 = vpack.c.bf16 %v5287, %v5286
      %v5318 = vpack.c.bf16 %v5289, %v5288
      %v5319 = vpack.c.bf16 %v5291, %v5290
      %v5320 = vpack.c.bf16 %v5293, %v5292
      %v5321 = vpack.c.bf16 %v5295, %v5294
      %v5322 = vpack.c.bf16 %v5297, %v5296
      %v5323 = vpack.c.bf16 %v5299, %v5298
      %v5324 = vpack.c.bf16 %v5301, %v5300
      %v5325 = vpack.c.bf16 %v5303, %v5302
      %v5326 = vpack.c.bf16 %v5305, %v5304
      %v5327 = vpack.c.bf16 %v5307, %v5306
      %v5328 = vpack.c.bf16 %v5309, %v5308
      %v5329 = vpack.c.bf16 %v5311, %v5310
      %s5330 = scalar_lea.vmem %s3, 16
      %v5331 = vld [vmem:[%s5330] sm:$0xf]
      %v5332 = vld [vmem:[%s5330 + $0x4] sm:$0xf]
      %v5333 = vld [vmem:[%s5330 + $0x8] sm:$0xf]
      %v5334 = vld [vmem:[%s5330 + $0xc] sm:$0xf]
      %v5339 = vunpack.c.l.b16 %v5331
      %v5340 = vunpack.c.l.b16 %v5332
      %v5341 = vunpack.c.l.b16 %v5333
      %v5342 = vunpack.c.l.b16 %v5334
      %v5343 = vpack.c.b16 %v5340, %v5339
      %v5344 = vpack.c.b16 %v5342, %v5341
      %v5348 = vsel %vm601, %v5312, 0
      %v5351 = vsel %vm601, %v5313, 0
      %v5354 = vsel %vm601, %v5314, 0
      %v5357 = vsel %vm601, %v5315, 0
      %v5360 = vsel %vm601, %v5316, 0
      %v5363 = vsel %vm601, %v5317, 0
      %v5366 = vsel %vm601, %v5318, 0
      %v5369 = vsel %vm601, %v5319, 0
      %v5372 = vsel %vm601, %v5320, 0
      %v5375 = vsel %vm601, %v5321, 0
      %v5378 = vsel %vm601, %v5322, 0
      %v5381 = vsel %vm601, %v5323, 0
      %v5384 = vsel %vm601, %v5324, 0
      %v5387 = vsel %vm601, %v5325, 0
      %v5390 = vsel %vm601, %v5326, 0
      %v5393 = vsel %vm601, %v5327, 0
      %v5396 = vsel %vm601, %v5328, 0
      %v5399 = vsel %vm601, %v5329, 0
      %5401 = vmatpush.bf16.msra.mxu0 0
      %5402 = vmatpush.bf16.msra.mxu0 0
      %5403 = vmatpush.bf16.msra.mxu0 0
      %5404 = vmatpush.bf16.msra.mxu0 0
      %5405 = vmatpush.bf16.msra.mxu0 0
      %5406 = vmatpush.bf16.msra.mxu0 0
      %5407 = vmatpush.bf16.msra.mxu0 %v5344
      %5408 = vmatpush.bf16.msra.mxu0 %v5343
      %5409 = vmatmul.bf16.gmra.mxu0 %v5348
      %v5410 = vpop.f32.mrf.mxu0
      %v5411 = vadd.f32 0.0, %v5410
      %v5412 = vpop.f32.mrf.mxu0
      %v5413 = vadd.f32 0.0, %v5412
      %5414 = vmatmul.bf16.gmra.mxu0 %v5351
      %v5415 = vpop.f32.mrf.mxu0
      %v5416 = vadd.f32 0.0, %v5415
      %v5417 = vpop.f32.mrf.mxu0
      %v5418 = vadd.f32 0.0, %v5417
      %5419 = vmatmul.bf16.gmra.mxu0 %v5354
      %v5420 = vpop.f32.mrf.mxu0
      %v5421 = vadd.f32 0.0, %v5420
      %v5422 = vpop.f32.mrf.mxu0
      %v5423 = vadd.f32 0.0, %v5422
      %5424 = vmatmul.bf16.gmra.mxu0 %v5357
      %v5425 = vpop.f32.mrf.mxu0
      %v5426 = vadd.f32 0.0, %v5425
      %v5427 = vpop.f32.mrf.mxu0
      %v5428 = vadd.f32 0.0, %v5427
      %5429 = vmatmul.bf16.gmra.mxu0 %v5360
      %v5430 = vpop.f32.mrf.mxu0
      %v5431 = vadd.f32 0.0, %v5430
      %v5432 = vpop.f32.mrf.mxu0
      %v5433 = vadd.f32 0.0, %v5432
      %5434 = vmatmul.bf16.gmra.mxu0 %v5363
      %v5435 = vpop.f32.mrf.mxu0
      %v5436 = vadd.f32 0.0, %v5435
      %v5437 = vpop.f32.mrf.mxu0
      %v5438 = vadd.f32 0.0, %v5437
      %5439 = vmatmul.bf16.gmra.mxu0 %v5366
      %v5440 = vpop.f32.mrf.mxu0
      %v5441 = vadd.f32 0.0, %v5440
      %v5442 = vpop.f32.mrf.mxu0
      %v5443 = vadd.f32 0.0, %v5442
      %5444 = vmatmul.bf16.gmra.mxu0 %v5369
      %v5445 = vpop.f32.mrf.mxu0
      %v5446 = vadd.f32 0.0, %v5445
      %v5447 = vpop.f32.mrf.mxu0
      %v5448 = vadd.f32 0.0, %v5447
      %5449 = vmatmul.bf16.gmra.mxu0 %v5372
      %v5450 = vpop.f32.mrf.mxu0
      %v5451 = vadd.f32 0.0, %v5450
      %v5452 = vpop.f32.mrf.mxu0
      %v5453 = vadd.f32 0.0, %v5452
      %5454 = vmatmul.bf16.gmra.mxu0 %v5375
      %v5455 = vpop.f32.mrf.mxu0
      %v5456 = vadd.f32 0.0, %v5455
      %v5457 = vpop.f32.mrf.mxu0
      %v5458 = vadd.f32 0.0, %v5457
      %5459 = vmatmul.bf16.gmra.mxu0 %v5378
      %v5460 = vpop.f32.mrf.mxu0
      %v5461 = vadd.f32 0.0, %v5460
      %v5462 = vpop.f32.mrf.mxu0
      %v5463 = vadd.f32 0.0, %v5462
      %5464 = vmatmul.bf16.gmra.mxu0 %v5381
      %v5465 = vpop.f32.mrf.mxu0
      %v5466 = vadd.f32 0.0, %v5465
      %v5467 = vpop.f32.mrf.mxu0
      %v5468 = vadd.f32 0.0, %v5467
      %5469 = vmatmul.bf16.gmra.mxu0 %v5384
      %v5470 = vpop.f32.mrf.mxu0
      %v5471 = vadd.f32 0.0, %v5470
      %v5472 = vpop.f32.mrf.mxu0
      %v5473 = vadd.f32 0.0, %v5472
      %5474 = vmatmul.bf16.gmra.mxu0 %v5387
      %v5475 = vpop.f32.mrf.mxu0
      %v5476 = vadd.f32 0.0, %v5475
      %v5477 = vpop.f32.mrf.mxu0
      %v5478 = vadd.f32 0.0, %v5477
      %5479 = vmatmul.bf16.gmra.mxu0 %v5390
      %v5480 = vpop.f32.mrf.mxu0
      %v5481 = vadd.f32 0.0, %v5480
      %v5482 = vpop.f32.mrf.mxu0
      %v5483 = vadd.f32 0.0, %v5482
      %5484 = vmatmul.bf16.gmra.mxu0 %v5393
      %v5485 = vpop.f32.mrf.mxu0
      %v5486 = vadd.f32 0.0, %v5485
      %v5487 = vpop.f32.mrf.mxu0
      %v5488 = vadd.f32 0.0, %v5487
      %5489 = vmatmul.bf16.gmra.mxu0 %v5396
      %v5490 = vpop.f32.mrf.mxu0
      %v5491 = vadd.f32 0.0, %v5490
      %v5492 = vpop.f32.mrf.mxu0
      %v5493 = vadd.f32 0.0, %v5492
      %5494 = vmatmul.bf16.gmra.mxu0 %v5399
      %v5495 = vpop.f32.mrf.mxu0
      %v5496 = vadd.f32 0.0, %v5495
      %v5497 = vpop.f32.mrf.mxu0
      %v5498 = vadd.f32 0.0, %v5497
      %5499 = vdwg.mxu0
      %v5504 = vunpack.c.l.b16 %v5272
      %v5505 = vunpack.c.l.b16 %v5273
      %v5506 = vunpack.c.l.b16 %v5274
      %v5507 = vunpack.c.l.b16 %v5275
      %v5508 = vpack.c.b16 %v5505, %v5504
      %v5509 = vpack.c.b16 %v5507, %v5506
      %v5513 = vsel %vm601, %v5254, 0
      %v5516 = vsel %vm601, %v5255, 0
      %v5519 = vsel %vm601, %v5256, 0
      %v5522 = vsel %vm601, %v5257, 0
      %v5525 = vsel %vm601, %v5258, 0
      %v5528 = vsel %vm601, %v5259, 0
      %v5531 = vsel %vm601, %v5260, 0
      %v5534 = vsel %vm601, %v5261, 0
      %v5537 = vsel %vm601, %v5262, 0
      %v5540 = vsel %vm601, %v5263, 0
      %v5543 = vsel %vm601, %v5264, 0
      %v5546 = vsel %vm601, %v5265, 0
      %v5549 = vsel %vm601, %v5266, 0
      %v5552 = vsel %vm601, %v5267, 0
      %v5555 = vsel %vm601, %v5268, 0
      %v5558 = vsel %vm601, %v5269, 0
      %v5561 = vsel %vm601, %v5270, 0
      %v5564 = vsel %vm601, %v5271, 0
      %5566 = vmatpush.bf16.msra.mxu0 0
      %5567 = vmatpush.bf16.msra.mxu0 0
      %5568 = vmatpush.bf16.msra.mxu0 0
      %5569 = vmatpush.bf16.msra.mxu0 0
      %5570 = vmatpush.bf16.msra.mxu0 0
      %5571 = vmatpush.bf16.msra.mxu0 0
      %5572 = vmatpush.bf16.msra.mxu0 %v5509
      %5573 = vmatpush.bf16.msra.mxu0 %v5508
      %5574 = vmatmul.bf16.gmra.mxu0 %v5513
      %v5575 = vpop.f32.mrf.mxu0
      %v5576 = vadd.f32 %v5411, %v5575
      %v5577 = vpop.f32.mrf.mxu0
      %v5578 = vadd.f32 %v5413, %v5577
      %5579 = vmatmul.bf16.gmra.mxu0 %v5516
      %v5580 = vpop.f32.mrf.mxu0
      %v5581 = vadd.f32 %v5416, %v5580
      %v5582 = vpop.f32.mrf.mxu0
      %v5583 = vadd.f32 %v5418, %v5582
      %5584 = vmatmul.bf16.gmra.mxu0 %v5519
      %v5585 = vpop.f32.mrf.mxu0
      %v5586 = vadd.f32 %v5421, %v5585
      %v5587 = vpop.f32.mrf.mxu0
      %v5588 = vadd.f32 %v5423, %v5587
      %5589 = vmatmul.bf16.gmra.mxu0 %v5522
      %v5590 = vpop.f32.mrf.mxu0
      %v5591 = vadd.f32 %v5426, %v5590
      %v5592 = vpop.f32.mrf.mxu0
      %v5593 = vadd.f32 %v5428, %v5592
      %5594 = vmatmul.bf16.gmra.mxu0 %v5525
      %v5595 = vpop.f32.mrf.mxu0
      %v5596 = vadd.f32 %v5431, %v5595
      %v5597 = vpop.f32.mrf.mxu0
      %v5598 = vadd.f32 %v5433, %v5597
      %5599 = vmatmul.bf16.gmra.mxu0 %v5528
      %v5600 = vpop.f32.mrf.mxu0
      %v5601 = vadd.f32 %v5436, %v5600
      %v5602 = vpop.f32.mrf.mxu0
      %v5603 = vadd.f32 %v5438, %v5602
      %5604 = vmatmul.bf16.gmra.mxu0 %v5531
      %v5605 = vpop.f32.mrf.mxu0
      %v5606 = vadd.f32 %v5441, %v5605
      %v5607 = vpop.f32.mrf.mxu0
      %v5608 = vadd.f32 %v5443, %v5607
      %5609 = vmatmul.bf16.gmra.mxu0 %v5534
      %v5610 = vpop.f32.mrf.mxu0
      %v5611 = vadd.f32 %v5446, %v5610
      %v5612 = vpop.f32.mrf.mxu0
      %v5613 = vadd.f32 %v5448, %v5612
      %5614 = vmatmul.bf16.gmra.mxu0 %v5537
      %v5615 = vpop.f32.mrf.mxu0
      %v5616 = vadd.f32 %v5451, %v5615
      %v5617 = vpop.f32.mrf.mxu0
      %v5618 = vadd.f32 %v5453, %v5617
      %5619 = vmatmul.bf16.gmra.mxu0 %v5540
      %v5620 = vpop.f32.mrf.mxu0
      %v5621 = vadd.f32 %v5456, %v5620
      %v5622 = vpop.f32.mrf.mxu0
      %v5623 = vadd.f32 %v5458, %v5622
      %5624 = vmatmul.bf16.gmra.mxu0 %v5543
      %v5625 = vpop.f32.mrf.mxu0
      %v5626 = vadd.f32 %v5461, %v5625
      %v5627 = vpop.f32.mrf.mxu0
      %v5628 = vadd.f32 %v5463, %v5627
      %5629 = vmatmul.bf16.gmra.mxu0 %v5546
      %v5630 = vpop.f32.mrf.mxu0
      %v5631 = vadd.f32 %v5466, %v5630
      %v5632 = vpop.f32.mrf.mxu0
      %v5633 = vadd.f32 %v5468, %v5632
      %5634 = vmatmul.bf16.gmra.mxu0 %v5549
      %v5635 = vpop.f32.mrf.mxu0
      %v5636 = vadd.f32 %v5471, %v5635
      %v5637 = vpop.f32.mrf.mxu0
      %v5638 = vadd.f32 %v5473, %v5637
      %5639 = vmatmul.bf16.gmra.mxu0 %v5552
      %v5640 = vpop.f32.mrf.mxu0
      %v5641 = vadd.f32 %v5476, %v5640
      %v5642 = vpop.f32.mrf.mxu0
      %v5643 = vadd.f32 %v5478, %v5642
      %5644 = vmatmul.bf16.gmra.mxu0 %v5555
      %v5645 = vpop.f32.mrf.mxu0
      %v5646 = vadd.f32 %v5481, %v5645
      %v5647 = vpop.f32.mrf.mxu0
      %v5648 = vadd.f32 %v5483, %v5647
      %5649 = vmatmul.bf16.gmra.mxu0 %v5558
      %v5650 = vpop.f32.mrf.mxu0
      %v5651 = vadd.f32 %v5486, %v5650
      %v5652 = vpop.f32.mrf.mxu0
      %v5653 = vadd.f32 %v5488, %v5652
      %5654 = vmatmul.bf16.gmra.mxu0 %v5561
      %v5655 = vpop.f32.mrf.mxu0
      %v5656 = vadd.f32 %v5491, %v5655
      %v5657 = vpop.f32.mrf.mxu0
      %v5658 = vadd.f32 %v5493, %v5657
      %5659 = vmatmul.bf16.gmra.mxu0 %v5564
      %v5660 = vpop.f32.mrf.mxu0
      %v5661 = vadd.f32 %v5496, %v5660
      %v5662 = vpop.f32.mrf.mxu0
      %v5663 = vadd.f32 %v5498, %v5662
      %5664 = vdwg.mxu0
      %v5665 = vld [vmem:[#allocation2 + $0x2] sm:$0xff]
      %v5666 = vld [vmem:[#allocation2 + $0xa] sm:$0xff]
      %v5667 = vld [vmem:[#allocation2 + $0x12] sm:$0xff]
      %v5668 = vld [vmem:[#allocation2 + $0x1a] sm:$0xff]
      %v5669 = vld [vmem:[#allocation2 + $0x22] sm:$0xff]
      %v5670 = vld [vmem:[#allocation2 + $0x2a] sm:$0xff]
      %v5671 = vld [vmem:[#allocation2 + $0x32] sm:$0xff]
      %v5672 = vld [vmem:[#allocation2 + $0x3a] sm:$0xff]
      %v5673 = vld [vmem:[#allocation2 + $0x42] sm:$0xff]
      %v5674 = vld [vmem:[#allocation2 + $0x4a] sm:$0xff]
      %v5675 = vld [vmem:[#allocation2 + $0x52] sm:$0xff]
      %v5676 = vld [vmem:[#allocation2 + $0x5a] sm:$0xff]
      %v5677 = vld [vmem:[#allocation2 + $0x62] sm:$0xff]
      %v5678 = vld [vmem:[#allocation2 + $0x6a] sm:$0xff]
      %v5679 = vld [vmem:[#allocation2 + $0x72] sm:$0xff]
      %v5680 = vld [vmem:[#allocation2 + $0x7a] sm:$0xff]
      %v5681 = vld [vmem:[#allocation2 + $0x82] sm:$0xff]
      %v5682 = vld [vmem:[#allocation2 + $0x8a] sm:$0xff]
      %v5683 = vld [vmem:[#allocation2 + $0x92] sm:$0xff]
      %v5684 = vld [vmem:[#allocation2 + $0x9a] sm:$0xff]
      %v5685 = vld [vmem:[#allocation2 + $0xa2] sm:$0xff]
      %v5686 = vld [vmem:[#allocation2 + $0xaa] sm:$0xff]
      %v5687 = vld [vmem:[#allocation2 + $0xb2] sm:$0xff]
      %v5688 = vld [vmem:[#allocation2 + $0xba] sm:$0xff]
      %v5689 = vld [vmem:[#allocation2 + $0xc2] sm:$0xff]
      %v5690 = vld [vmem:[#allocation2 + $0xca] sm:$0xff]
      %v5691 = vld [vmem:[#allocation2 + $0xd2] sm:$0xff]
      %v5692 = vld [vmem:[#allocation2 + $0xda] sm:$0xff]
      %v5693 = vld [vmem:[#allocation2 + $0xe2] sm:$0xff]
      %v5694 = vld [vmem:[#allocation2 + $0xea] sm:$0xff]
      %v5695 = vld [vmem:[#allocation2 + $0xf2] sm:$0xff]
      %v5696 = vld [vmem:[#allocation2 + $0xfa] sm:$0xff]
      %v5697 = vld [vmem:[#allocation2 + $0x102] sm:$0xff]
      %v5698 = vld [vmem:[#allocation2 + $0x10a] sm:$0xff]
      %v5699 = vld [vmem:[#allocation2 + $0x112] sm:$0xff]
      %v5700 = vld [vmem:[#allocation2 + $0x11a] sm:$0xff]
      %v5701 = vpack.c.bf16 %v5666, %v5665
      %v5702 = vpack.c.bf16 %v5668, %v5667
      %v5703 = vpack.c.bf16 %v5670, %v5669
      %v5704 = vpack.c.bf16 %v5672, %v5671
      %v5705 = vpack.c.bf16 %v5674, %v5673
      %v5706 = vpack.c.bf16 %v5676, %v5675
      %v5707 = vpack.c.bf16 %v5678, %v5677
      %v5708 = vpack.c.bf16 %v5680, %v5679
      %v5709 = vpack.c.bf16 %v5682, %v5681
      %v5710 = vpack.c.bf16 %v5684, %v5683
      %v5711 = vpack.c.bf16 %v5686, %v5685
      %v5712 = vpack.c.bf16 %v5688, %v5687
      %v5713 = vpack.c.bf16 %v5690, %v5689
      %v5714 = vpack.c.bf16 %v5692, %v5691
      %v5715 = vpack.c.bf16 %v5694, %v5693
      %v5716 = vpack.c.bf16 %v5696, %v5695
      %v5717 = vpack.c.bf16 %v5698, %v5697
      %v5718 = vpack.c.bf16 %v5700, %v5699
      %s5719 = scalar_lea.vmem %s3, 32
      %v5720 = vld [vmem:[%s5719] sm:$0xf]
      %v5721 = vld [vmem:[%s5719 + $0x4] sm:$0xf]
      %v5722 = vld [vmem:[%s5719 + $0x8] sm:$0xf]
      %v5723 = vld [vmem:[%s5719 + $0xc] sm:$0xf]
      %v5728 = vunpack.c.l.b16 %v5720
      %v5729 = vunpack.c.l.b16 %v5721
      %v5730 = vunpack.c.l.b16 %v5722
      %v5731 = vunpack.c.l.b16 %v5723
      %v5732 = vpack.c.b16 %v5729, %v5728
      %v5733 = vpack.c.b16 %v5731, %v5730
      %v5737 = vsel %vm601, %v5701, 0
      %v5740 = vsel %vm601, %v5702, 0
      %v5743 = vsel %vm601, %v5703, 0
      %v5746 = vsel %vm601, %v5704, 0
      %v5749 = vsel %vm601, %v5705, 0
      %v5752 = vsel %vm601, %v5706, 0
      %v5755 = vsel %vm601, %v5707, 0
      %v5758 = vsel %vm601, %v5708, 0
      %v5761 = vsel %vm601, %v5709, 0
      %v5764 = vsel %vm601, %v5710, 0
      %v5767 = vsel %vm601, %v5711, 0
      %v5770 = vsel %vm601, %v5712, 0
      %v5773 = vsel %vm601, %v5713, 0
      %v5776 = vsel %vm601, %v5714, 0
      %v5779 = vsel %vm601, %v5715, 0
      %v5782 = vsel %vm601, %v5716, 0
      %v5785 = vsel %vm601, %v5717, 0
      %v5788 = vsel %vm601, %v5718, 0
      %5790 = vmatpush.bf16.msra.mxu0 0
      %5791 = vmatpush.bf16.msra.mxu0 0
      %5792 = vmatpush.bf16.msra.mxu0 0
      %5793 = vmatpush.bf16.msra.mxu0 0
      %5794 = vmatpush.bf16.msra.mxu0 0
      %5795 = vmatpush.bf16.msra.mxu0 0
      %5796 = vmatpush.bf16.msra.mxu0 %v5733
      %5797 = vmatpush.bf16.msra.mxu0 %v5732
      %5798 = vmatmul.bf16.gmra.mxu0 %v5737
      %v5799 = vpop.f32.mrf.mxu0
      %v5800 = vadd.f32 0.0, %v5799
      %v5801 = vpop.f32.mrf.mxu0
      %v5802 = vadd.f32 0.0, %v5801
      %5803 = vmatmul.bf16.gmra.mxu0 %v5740
      %v5804 = vpop.f32.mrf.mxu0
      %v5805 = vadd.f32 0.0, %v5804
      %v5806 = vpop.f32.mrf.mxu0
      %v5807 = vadd.f32 0.0, %v5806
      %5808 = vmatmul.bf16.gmra.mxu0 %v5743
      %v5809 = vpop.f32.mrf.mxu0
      %v5810 = vadd.f32 0.0, %v5809
      %v5811 = vpop.f32.mrf.mxu0
      %v5812 = vadd.f32 0.0, %v5811
      %5813 = vmatmul.bf16.gmra.mxu0 %v5746
      %v5814 = vpop.f32.mrf.mxu0
      %v5815 = vadd.f32 0.0, %v5814
      %v5816 = vpop.f32.mrf.mxu0
      %v5817 = vadd.f32 0.0, %v5816
      %5818 = vmatmul.bf16.gmra.mxu0 %v5749
      %v5819 = vpop.f32.mrf.mxu0
      %v5820 = vadd.f32 0.0, %v5819
      %v5821 = vpop.f32.mrf.mxu0
      %v5822 = vadd.f32 0.0, %v5821
      %5823 = vmatmul.bf16.gmra.mxu0 %v5752
      %v5824 = vpop.f32.mrf.mxu0
      %v5825 = vadd.f32 0.0, %v5824
      %v5826 = vpop.f32.mrf.mxu0
      %v5827 = vadd.f32 0.0, %v5826
      %5828 = vmatmul.bf16.gmra.mxu0 %v5755
      %v5829 = vpop.f32.mrf.mxu0
      %v5830 = vadd.f32 0.0, %v5829
      %v5831 = vpop.f32.mrf.mxu0
      %v5832 = vadd.f32 0.0, %v5831
      %5833 = vmatmul.bf16.gmra.mxu0 %v5758
      %v5834 = vpop.f32.mrf.mxu0
      %v5835 = vadd.f32 0.0, %v5834
      %v5836 = vpop.f32.mrf.mxu0
      %v5837 = vadd.f32 0.0, %v5836
      %5838 = vmatmul.bf16.gmra.mxu0 %v5761
      %v5839 = vpop.f32.mrf.mxu0
      %v5840 = vadd.f32 0.0, %v5839
      %v5841 = vpop.f32.mrf.mxu0
      %v5842 = vadd.f32 0.0, %v5841
      %5843 = vmatmul.bf16.gmra.mxu0 %v5764
      %v5844 = vpop.f32.mrf.mxu0
      %v5845 = vadd.f32 0.0, %v5844
      %v5846 = vpop.f32.mrf.mxu0
      %v5847 = vadd.f32 0.0, %v5846
      %5848 = vmatmul.bf16.gmra.mxu0 %v5767
      %v5849 = vpop.f32.mrf.mxu0
      %v5850 = vadd.f32 0.0, %v5849
      %v5851 = vpop.f32.mrf.mxu0
      %v5852 = vadd.f32 0.0, %v5851
      %5853 = vmatmul.bf16.gmra.mxu0 %v5770
      %v5854 = vpop.f32.mrf.mxu0
      %v5855 = vadd.f32 0.0, %v5854
      %v5856 = vpop.f32.mrf.mxu0
      %v5857 = vadd.f32 0.0, %v5856
      %5858 = vmatmul.bf16.gmra.mxu0 %v5773
      %v5859 = vpop.f32.mrf.mxu0
      %v5860 = vadd.f32 0.0, %v5859
      %v5861 = vpop.f32.mrf.mxu0
      %v5862 = vadd.f32 0.0, %v5861
      %5863 = vmatmul.bf16.gmra.mxu0 %v5776
      %v5864 = vpop.f32.mrf.mxu0
      %v5865 = vadd.f32 0.0, %v5864
      %v5866 = vpop.f32.mrf.mxu0
      %v5867 = vadd.f32 0.0, %v5866
      %5868 = vmatmul.bf16.gmra.mxu0 %v5779
      %v5869 = vpop.f32.mrf.mxu0
      %v5870 = vadd.f32 0.0, %v5869
      %v5871 = vpop.f32.mrf.mxu0
      %v5872 = vadd.f32 0.0, %v5871
      %5873 = vmatmul.bf16.gmra.mxu0 %v5782
      %v5874 = vpop.f32.mrf.mxu0
      %v5875 = vadd.f32 0.0, %v5874
      %v5876 = vpop.f32.mrf.mxu0
      %v5877 = vadd.f32 0.0, %v5876
      %5878 = vmatmul.bf16.gmra.mxu0 %v5785
      %v5879 = vpop.f32.mrf.mxu0
      %v5880 = vadd.f32 0.0, %v5879
      %v5881 = vpop.f32.mrf.mxu0
      %v5882 = vadd.f32 0.0, %v5881
      %5883 = vmatmul.bf16.gmra.mxu0 %v5788
      %v5884 = vpop.f32.mrf.mxu0
      %v5885 = vadd.f32 0.0, %v5884
      %v5886 = vpop.f32.mrf.mxu0
      %v5887 = vadd.f32 0.0, %v5886
      %5888 = vdwg.mxu0
      %v5889 = vadd.f32 %v5576, %v5800
      %v5890 = vadd.f32 %v5578, %v5802
      %v5891 = vadd.f32 %v5581, %v5805
      %v5892 = vadd.f32 %v5583, %v5807
      %v5893 = vadd.f32 %v5586, %v5810
      %v5894 = vadd.f32 %v5588, %v5812
      %v5895 = vadd.f32 %v5591, %v5815
      %v5896 = vadd.f32 %v5593, %v5817
      %v5897 = vadd.f32 %v5596, %v5820
      %v5898 = vadd.f32 %v5598, %v5822
      %v5899 = vadd.f32 %v5601, %v5825
      %v5900 = vadd.f32 %v5603, %v5827
      %v5901 = vadd.f32 %v5606, %v5830
      %v5902 = vadd.f32 %v5608, %v5832
      %v5903 = vadd.f32 %v5611, %v5835
      %v5904 = vadd.f32 %v5613, %v5837
      %v5905 = vadd.f32 %v5616, %v5840
      %v5906 = vadd.f32 %v5618, %v5842
      %v5907 = vadd.f32 %v5621, %v5845
      %v5908 = vadd.f32 %v5623, %v5847
      %v5909 = vadd.f32 %v5626, %v5850
      %v5910 = vadd.f32 %v5628, %v5852
      %v5911 = vadd.f32 %v5631, %v5855
      %v5912 = vadd.f32 %v5633, %v5857
      %v5913 = vadd.f32 %v5636, %v5860
      %v5914 = vadd.f32 %v5638, %v5862
      %v5915 = vadd.f32 %v5641, %v5865
      %v5916 = vadd.f32 %v5643, %v5867
      %v5917 = vadd.f32 %v5646, %v5870
      %v5918 = vadd.f32 %v5648, %v5872
      %v5919 = vadd.f32 %v5651, %v5875
      %v5920 = vadd.f32 %v5653, %v5877
      %v5921 = vadd.f32 %v5656, %v5880
      %v5922 = vadd.f32 %v5658, %v5882
      %v5923 = vadd.f32 %v5661, %v5885
      %v5924 = vadd.f32 %v5663, %v5887
      %v5925 = vld [vmem:[#allocation2 + $0x12] sm:$0xff]
      %v5926 = vld [vmem:[#allocation2 + $0x1a] sm:$0xff]
      %v5927 = vld [vmem:[#allocation2 + $0x22] sm:$0xff]
      %v5928 = vld [vmem:[#allocation2 + $0x2a] sm:$0xff]
      %v5929 = vld [vmem:[#allocation2 + $0x32] sm:$0xff]
      %v5930 = vld [vmem:[#allocation2 + $0x3a] sm:$0xff]
      %v5931 = vld [vmem:[#allocation2 + $0x42] sm:$0xff]
      %v5932 = vld [vmem:[#allocation2 + $0x4a] sm:$0xff]
      %v5933 = vld [vmem:[#allocation2 + $0x52] sm:$0xff]
      %v5934 = vld [vmem:[#allocation2 + $0x5a] sm:$0xff]
      %v5935 = vld [vmem:[#allocation2 + $0x62] sm:$0xff]
      %v5936 = vld [vmem:[#allocation2 + $0x6a] sm:$0xff]
      %v5937 = vld [vmem:[#allocation2 + $0x72] sm:$0xff]
      %v5938 = vld [vmem:[#allocation2 + $0x7a] sm:$0xff]
      %v5939 = vld [vmem:[#allocation2 + $0x82] sm:$0xff]
      %v5940 = vld [vmem:[#allocation2 + $0x8a] sm:$0xff]
      %v5941 = vld [vmem:[#allocation2 + $0x92] sm:$0xff]
      %v5942 = vld [vmem:[#allocation2 + $0x9a] sm:$0xff]
      %v5943 = vld [vmem:[#allocation2 + $0xa2] sm:$0xff]
      %v5944 = vld [vmem:[#allocation2 + $0xaa] sm:$0xff]
      %v5945 = vld [vmem:[#allocation2 + $0xb2] sm:$0xff]
      %v5946 = vld [vmem:[#allocation2 + $0xba] sm:$0xff]
      %v5947 = vld [vmem:[#allocation2 + $0xc2] sm:$0xff]
      %v5948 = vld [vmem:[#allocation2 + $0xca] sm:$0xff]
      %v5949 = vld [vmem:[#allocation2 + $0xd2] sm:$0xff]
      %v5950 = vld [vmem:[#allocation2 + $0xda] sm:$0xff]
      %v5951 = vld [vmem:[#allocation2 + $0xe2] sm:$0xff]
      %v5952 = vld [vmem:[#allocation2 + $0xea] sm:$0xff]
      %v5953 = vld [vmem:[#allocation2 + $0xf2] sm:$0xff]
      %v5954 = vld [vmem:[#allocation2 + $0xfa] sm:$0xff]
      %v5955 = vld [vmem:[#allocation2 + $0x102] sm:$0xff]
      %v5956 = vld [vmem:[#allocation2 + $0x10a] sm:$0xff]
      %v5957 = vld [vmem:[#allocation2 + $0x112] sm:$0xff]
      %v5958 = vld [vmem:[#allocation2 + $0x11a] sm:$0xff]
      %v5959 = vld [vmem:[#allocation2 + $0x122] sm:$0xff]
      %v5960 = vld [vmem:[#allocation2 + $0x12a] sm:$0xff]
      %v5961 = vpack.c.bf16 %v5926, %v5925
      %v5962 = vpack.c.bf16 %v5928, %v5927
      %v5963 = vpack.c.bf16 %v5930, %v5929
      %v5964 = vpack.c.bf16 %v5932, %v5931
      %v5965 = vpack.c.bf16 %v5934, %v5933
      %v5966 = vpack.c.bf16 %v5936, %v5935
      %v5967 = vpack.c.bf16 %v5938, %v5937
      %v5968 = vpack.c.bf16 %v5940, %v5939
      %v5969 = vpack.c.bf16 %v5942, %v5941
      %v5970 = vpack.c.bf16 %v5944, %v5943
      %v5971 = vpack.c.bf16 %v5946, %v5945
      %v5972 = vpack.c.bf16 %v5948, %v5947
      %v5973 = vpack.c.bf16 %v5950, %v5949
      %v5974 = vpack.c.bf16 %v5952, %v5951
      %v5975 = vpack.c.bf16 %v5954, %v5953
      %v5976 = vpack.c.bf16 %v5956, %v5955
      %v5977 = vpack.c.bf16 %v5958, %v5957
      %v5978 = vpack.c.bf16 %v5960, %v5959
      %s5979 = scalar_lea.vmem %s3, 48
      %v5980 = vld [vmem:[%s5979] sm:$0xf]
      %v5981 = vld [vmem:[%s5979 + $0x4] sm:$0xf]
      %v5982 = vld [vmem:[%s5979 + $0x8] sm:$0xf]
      %v5983 = vld [vmem:[%s5979 + $0xc] sm:$0xf]
      %v5988 = vunpack.c.l.b16 %v5980
      %v5989 = vunpack.c.l.b16 %v5981
      %v5990 = vunpack.c.l.b16 %v5982
      %v5991 = vunpack.c.l.b16 %v5983
      %v5992 = vpack.c.b16 %v5989, %v5988
      %v5993 = vpack.c.b16 %v5991, %v5990
      %v5997 = vsel %vm601, %v5961, 0
      %v6000 = vsel %vm601, %v5962, 0
      %v6003 = vsel %vm601, %v5963, 0
      %v6006 = vsel %vm601, %v5964, 0
      %v6009 = vsel %vm601, %v5965, 0
      %v6012 = vsel %vm601, %v5966, 0
      %v6015 = vsel %vm601, %v5967, 0
      %v6018 = vsel %vm601, %v5968, 0
      %v6021 = vsel %vm601, %v5969, 0
      %v6024 = vsel %vm601, %v5970, 0
      %v6027 = vsel %vm601, %v5971, 0
      %v6030 = vsel %vm601, %v5972, 0
      %v6033 = vsel %vm601, %v5973, 0
      %v6036 = vsel %vm601, %v5974, 0
      %v6039 = vsel %vm601, %v5975, 0
      %v6042 = vsel %vm601, %v5976, 0
      %v6045 = vsel %vm601, %v5977, 0
      %v6048 = vsel %vm601, %v5978, 0
      %6050 = vmatpush.bf16.msra.mxu0 0
      %6051 = vmatpush.bf16.msra.mxu0 0
      %6052 = vmatpush.bf16.msra.mxu0 0
      %6053 = vmatpush.bf16.msra.mxu0 0
      %6054 = vmatpush.bf16.msra.mxu0 0
      %6055 = vmatpush.bf16.msra.mxu0 0
      %6056 = vmatpush.bf16.msra.mxu0 %v5993
      %6057 = vmatpush.bf16.msra.mxu0 %v5992
      %6058 = vmatmul.bf16.gmra.mxu0 %v5997
      %v6059 = vpop.f32.mrf.mxu0
      %v6060 = vadd.f32 0.0, %v6059
      %v6061 = vpop.f32.mrf.mxu0
      %v6062 = vadd.f32 0.0, %v6061
      %6063 = vmatmul.bf16.gmra.mxu0 %v6000
      %v6064 = vpop.f32.mrf.mxu0
      %v6065 = vadd.f32 0.0, %v6064
      %v6066 = vpop.f32.mrf.mxu0
      %v6067 = vadd.f32 0.0, %v6066
      %6068 = vmatmul.bf16.gmra.mxu0 %v6003
      %v6069 = vpop.f32.mrf.mxu0
      %v6070 = vadd.f32 0.0, %v6069
      %v6071 = vpop.f32.mrf.mxu0
      %v6072 = vadd.f32 0.0, %v6071
      %6073 = vmatmul.bf16.gmra.mxu0 %v6006
      %v6074 = vpop.f32.mrf.mxu0
      %v6075 = vadd.f32 0.0, %v6074
      %v6076 = vpop.f32.mrf.mxu0
      %v6077 = vadd.f32 0.0, %v6076
      %6078 = vmatmul.bf16.gmra.mxu0 %v6009
      %v6079 = vpop.f32.mrf.mxu0
      %v6080 = vadd.f32 0.0, %v6079
      %v6081 = vpop.f32.mrf.mxu0
      %v6082 = vadd.f32 0.0, %v6081
      %6083 = vmatmul.bf16.gmra.mxu0 %v6012
      %v6084 = vpop.f32.mrf.mxu0
      %v6085 = vadd.f32 0.0, %v6084
      %v6086 = vpop.f32.mrf.mxu0
      %v6087 = vadd.f32 0.0, %v6086
      %6088 = vmatmul.bf16.gmra.mxu0 %v6015
      %v6089 = vpop.f32.mrf.mxu0
      %v6090 = vadd.f32 0.0, %v6089
      %v6091 = vpop.f32.mrf.mxu0
      %v6092 = vadd.f32 0.0, %v6091
      %6093 = vmatmul.bf16.gmra.mxu0 %v6018
      %v6094 = vpop.f32.mrf.mxu0
      %v6095 = vadd.f32 0.0, %v6094
      %v6096 = vpop.f32.mrf.mxu0
      %v6097 = vadd.f32 0.0, %v6096
      %6098 = vmatmul.bf16.gmra.mxu0 %v6021
      %v6099 = vpop.f32.mrf.mxu0
      %v6100 = vadd.f32 0.0, %v6099
      %v6101 = vpop.f32.mrf.mxu0
      %v6102 = vadd.f32 0.0, %v6101
      %6103 = vmatmul.bf16.gmra.mxu0 %v6024
      %v6104 = vpop.f32.mrf.mxu0
      %v6105 = vadd.f32 0.0, %v6104
      %v6106 = vpop.f32.mrf.mxu0
      %v6107 = vadd.f32 0.0, %v6106
      %6108 = vmatmul.bf16.gmra.mxu0 %v6027
      %v6109 = vpop.f32.mrf.mxu0
      %v6110 = vadd.f32 0.0, %v6109
      %v6111 = vpop.f32.mrf.mxu0
      %v6112 = vadd.f32 0.0, %v6111
      %6113 = vmatmul.bf16.gmra.mxu0 %v6030
      %v6114 = vpop.f32.mrf.mxu0
      %v6115 = vadd.f32 0.0, %v6114
      %v6116 = vpop.f32.mrf.mxu0
      %v6117 = vadd.f32 0.0, %v6116
      %6118 = vmatmul.bf16.gmra.mxu0 %v6033
      %v6119 = vpop.f32.mrf.mxu0
      %v6120 = vadd.f32 0.0, %v6119
      %v6121 = vpop.f32.mrf.mxu0
      %v6122 = vadd.f32 0.0, %v6121
      %6123 = vmatmul.bf16.gmra.mxu0 %v6036
      %v6124 = vpop.f32.mrf.mxu0
      %v6125 = vadd.f32 0.0, %v6124
      %v6126 = vpop.f32.mrf.mxu0
      %v6127 = vadd.f32 0.0, %v6126
      %6128 = vmatmul.bf16.gmra.mxu0 %v6039
      %v6129 = vpop.f32.mrf.mxu0
      %v6130 = vadd.f32 0.0, %v6129
      %v6131 = vpop.f32.mrf.mxu0
      %v6132 = vadd.f32 0.0, %v6131
      %6133 = vmatmul.bf16.gmra.mxu0 %v6042
      %v6134 = vpop.f32.mrf.mxu0
      %v6135 = vadd.f32 0.0, %v6134
      %v6136 = vpop.f32.mrf.mxu0
      %v6137 = vadd.f32 0.0, %v6136
      %6138 = vmatmul.bf16.gmra.mxu0 %v6045
      %v6139 = vpop.f32.mrf.mxu0
      %v6140 = vadd.f32 0.0, %v6139
      %v6141 = vpop.f32.mrf.mxu0
      %v6142 = vadd.f32 0.0, %v6141
      %6143 = vmatmul.bf16.gmra.mxu0 %v6048
      %v6144 = vpop.f32.mrf.mxu0
      %v6145 = vadd.f32 0.0, %v6144
      %v6146 = vpop.f32.mrf.mxu0
      %v6147 = vadd.f32 0.0, %v6146
      %6148 = vdwg.mxu0
      %v6149 = vadd.f32 %v5889, %v6060
      %v6150 = vadd.f32 %v5890, %v6062
      %v6151 = vadd.f32 %v5891, %v6065
      %v6152 = vadd.f32 %v5892, %v6067
      %v6153 = vadd.f32 %v5893, %v6070
      %v6154 = vadd.f32 %v5894, %v6072
      %v6155 = vadd.f32 %v5895, %v6075
      %v6156 = vadd.f32 %v5896, %v6077
      %v6157 = vadd.f32 %v5897, %v6080
      %v6158 = vadd.f32 %v5898, %v6082
      %v6159 = vadd.f32 %v5899, %v6085
      %v6160 = vadd.f32 %v5900, %v6087
      %v6161 = vadd.f32 %v5901, %v6090
      %v6162 = vadd.f32 %v5902, %v6092
      %v6163 = vadd.f32 %v5903, %v6095
      %v6164 = vadd.f32 %v5904, %v6097
      %v6165 = vadd.f32 %v5905, %v6100
      %v6166 = vadd.f32 %v5906, %v6102
      %v6167 = vadd.f32 %v5907, %v6105
      %v6168 = vadd.f32 %v5908, %v6107
      %v6169 = vadd.f32 %v5909, %v6110
      %v6170 = vadd.f32 %v5910, %v6112
      %v6171 = vadd.f32 %v5911, %v6115
      %v6172 = vadd.f32 %v5912, %v6117
      %v6173 = vadd.f32 %v5913, %v6120
      %v6174 = vadd.f32 %v5914, %v6122
      %v6175 = vadd.f32 %v5915, %v6125
      %v6176 = vadd.f32 %v5916, %v6127
      %v6177 = vadd.f32 %v5917, %v6130
      %v6178 = vadd.f32 %v5918, %v6132
      %v6179 = vadd.f32 %v5919, %v6135
      %v6180 = vadd.f32 %v5920, %v6137
      %v6181 = vadd.f32 %v5921, %v6140
      %v6182 = vadd.f32 %v5922, %v6142
      %v6183 = vadd.f32 %v5923, %v6145
      %v6184 = vadd.f32 %v5924, %v6147
      %v6185 = vld [vmem:[#allocation2 + $0x13] sm:$0xff]
      %v6186 = vld [vmem:[#allocation2 + $0x1b] sm:$0xff]
      %v6187 = vld [vmem:[#allocation2 + $0x23] sm:$0xff]
      %v6188 = vld [vmem:[#allocation2 + $0x2b] sm:$0xff]
      %v6189 = vld [vmem:[#allocation2 + $0x33] sm:$0xff]
      %v6190 = vld [vmem:[#allocation2 + $0x3b] sm:$0xff]
      %v6191 = vld [vmem:[#allocation2 + $0x43] sm:$0xff]
      %v6192 = vld [vmem:[#allocation2 + $0x4b] sm:$0xff]
      %v6193 = vld [vmem:[#allocation2 + $0x53] sm:$0xff]
      %v6194 = vld [vmem:[#allocation2 + $0x5b] sm:$0xff]
      %v6195 = vld [vmem:[#allocation2 + $0x63] sm:$0xff]
      %v6196 = vld [vmem:[#allocation2 + $0x6b] sm:$0xff]
      %v6197 = vld [vmem:[#allocation2 + $0x73] sm:$0xff]
      %v6198 = vld [vmem:[#allocation2 + $0x7b] sm:$0xff]
      %v6199 = vld [vmem:[#allocation2 + $0x83] sm:$0xff]
      %v6200 = vld [vmem:[#allocation2 + $0x8b] sm:$0xff]
      %v6201 = vld [vmem:[#allocation2 + $0x93] sm:$0xff]
      %v6202 = vld [vmem:[#allocation2 + $0x9b] sm:$0xff]
      %v6203 = vld [vmem:[#allocation2 + $0xa3] sm:$0xff]
      %v6204 = vld [vmem:[#allocation2 + $0xab] sm:$0xff]
      %v6205 = vld [vmem:[#allocation2 + $0xb3] sm:$0xff]
      %v6206 = vld [vmem:[#allocation2 + $0xbb] sm:$0xff]
      %v6207 = vld [vmem:[#allocation2 + $0xc3] sm:$0xff]
      %v6208 = vld [vmem:[#allocation2 + $0xcb] sm:$0xff]
      %v6209 = vld [vmem:[#allocation2 + $0xd3] sm:$0xff]
      %v6210 = vld [vmem:[#allocation2 + $0xdb] sm:$0xff]
      %v6211 = vld [vmem:[#allocation2 + $0xe3] sm:$0xff]
      %v6212 = vld [vmem:[#allocation2 + $0xeb] sm:$0xff]
      %v6213 = vld [vmem:[#allocation2 + $0xf3] sm:$0xff]
      %v6214 = vld [vmem:[#allocation2 + $0xfb] sm:$0xff]
      %v6215 = vld [vmem:[#allocation2 + $0x103] sm:$0xff]
      %v6216 = vld [vmem:[#allocation2 + $0x10b] sm:$0xff]
      %v6217 = vld [vmem:[#allocation2 + $0x113] sm:$0xff]
      %v6218 = vld [vmem:[#allocation2 + $0x11b] sm:$0xff]
      %v6219 = vld [vmem:[#allocation2 + $0x123] sm:$0xff]
      %v6220 = vld [vmem:[#allocation2 + $0x12b] sm:$0xff]
      %v6221 = vpack.c.bf16 %v6186, %v6185
      %v6222 = vpack.c.bf16 %v6188, %v6187
      %v6223 = vpack.c.bf16 %v6190, %v6189
      %v6224 = vpack.c.bf16 %v6192, %v6191
      %v6225 = vpack.c.bf16 %v6194, %v6193
      %v6226 = vpack.c.bf16 %v6196, %v6195
      %v6227 = vpack.c.bf16 %v6198, %v6197
      %v6228 = vpack.c.bf16 %v6200, %v6199
      %v6229 = vpack.c.bf16 %v6202, %v6201
      %v6230 = vpack.c.bf16 %v6204, %v6203
      %v6231 = vpack.c.bf16 %v6206, %v6205
      %v6232 = vpack.c.bf16 %v6208, %v6207
      %v6233 = vpack.c.bf16 %v6210, %v6209
      %v6234 = vpack.c.bf16 %v6212, %v6211
      %v6235 = vpack.c.bf16 %v6214, %v6213
      %v6236 = vpack.c.bf16 %v6216, %v6215
      %v6237 = vpack.c.bf16 %v6218, %v6217
      %v6238 = vpack.c.bf16 %v6220, %v6219
      %s6239 = scalar_lea.vmem %s3, 64
      %v6240 = vld [vmem:[%s6239] sm:$0xf]
      %v6241 = vld [vmem:[%s6239 + $0x4] sm:$0xf]
      %v6242 = vld [vmem:[%s6239 + $0x8] sm:$0xf]
      %v6243 = vld [vmem:[%s6239 + $0xc] sm:$0xf]
      %v6248 = vunpack.c.l.b16 %v6240
      %v6249 = vunpack.c.l.b16 %v6241
      %v6250 = vunpack.c.l.b16 %v6242
      %v6251 = vunpack.c.l.b16 %v6243
      %v6252 = vpack.c.b16 %v6249, %v6248
      %v6253 = vpack.c.b16 %v6251, %v6250
      %v6257 = vsel %vm601, %v6221, 0
      %v6260 = vsel %vm601, %v6222, 0
      %v6263 = vsel %vm601, %v6223, 0
      %v6266 = vsel %vm601, %v6224, 0
      %v6269 = vsel %vm601, %v6225, 0
      %v6272 = vsel %vm601, %v6226, 0
      %v6275 = vsel %vm601, %v6227, 0
      %v6278 = vsel %vm601, %v6228, 0
      %v6281 = vsel %vm601, %v6229, 0
      %v6284 = vsel %vm601, %v6230, 0
      %v6287 = vsel %vm601, %v6231, 0
      %v6290 = vsel %vm601, %v6232, 0
      %v6293 = vsel %vm601, %v6233, 0
      %v6296 = vsel %vm601, %v6234, 0
      %v6299 = vsel %vm601, %v6235, 0
      %v6302 = vsel %vm601, %v6236, 0
      %v6305 = vsel %vm601, %v6237, 0
      %v6308 = vsel %vm601, %v6238, 0
      %6310 = vmatpush.bf16.msra.mxu0 0
      %6311 = vmatpush.bf16.msra.mxu0 0
      %6312 = vmatpush.bf16.msra.mxu0 0
      %6313 = vmatpush.bf16.msra.mxu0 0
      %6314 = vmatpush.bf16.msra.mxu0 0
      %6315 = vmatpush.bf16.msra.mxu0 0
      %6316 = vmatpush.bf16.msra.mxu0 %v6253
      %6317 = vmatpush.bf16.msra.mxu0 %v6252
      %6318 = vmatmul.bf16.gmra.mxu0 %v6257
      %v6319 = vpop.f32.mrf.mxu0
      %v6320 = vadd.f32 0.0, %v6319
      %v6321 = vpop.f32.mrf.mxu0
      %v6322 = vadd.f32 0.0, %v6321
      %6323 = vmatmul.bf16.gmra.mxu0 %v6260
      %v6324 = vpop.f32.mrf.mxu0
      %v6325 = vadd.f32 0.0, %v6324
      %v6326 = vpop.f32.mrf.mxu0
      %v6327 = vadd.f32 0.0, %v6326
      %6328 = vmatmul.bf16.gmra.mxu0 %v6263
      %v6329 = vpop.f32.mrf.mxu0
      %v6330 = vadd.f32 0.0, %v6329
      %v6331 = vpop.f32.mrf.mxu0
      %v6332 = vadd.f32 0.0, %v6331
      %6333 = vmatmul.bf16.gmra.mxu0 %v6266
      %v6334 = vpop.f32.mrf.mxu0
      %v6335 = vadd.f32 0.0, %v6334
      %v6336 = vpop.f32.mrf.mxu0
      %v6337 = vadd.f32 0.0, %v6336
      %6338 = vmatmul.bf16.gmra.mxu0 %v6269
      %v6339 = vpop.f32.mrf.mxu0
      %v6340 = vadd.f32 0.0, %v6339
      %v6341 = vpop.f32.mrf.mxu0
      %v6342 = vadd.f32 0.0, %v6341
      %6343 = vmatmul.bf16.gmra.mxu0 %v6272
      %v6344 = vpop.f32.mrf.mxu0
      %v6345 = vadd.f32 0.0, %v6344
      %v6346 = vpop.f32.mrf.mxu0
      %v6347 = vadd.f32 0.0, %v6346
      %6348 = vmatmul.bf16.gmra.mxu0 %v6275
      %v6349 = vpop.f32.mrf.mxu0
      %v6350 = vadd.f32 0.0, %v6349
      %v6351 = vpop.f32.mrf.mxu0
      %v6352 = vadd.f32 0.0, %v6351
      %6353 = vmatmul.bf16.gmra.mxu0 %v6278
      %v6354 = vpop.f32.mrf.mxu0
      %v6355 = vadd.f32 0.0, %v6354
      %v6356 = vpop.f32.mrf.mxu0
      %v6357 = vadd.f32 0.0, %v6356
      %6358 = vmatmul.bf16.gmra.mxu0 %v6281
      %v6359 = vpop.f32.mrf.mxu0
      %v6360 = vadd.f32 0.0, %v6359
      %v6361 = vpop.f32.mrf.mxu0
      %v6362 = vadd.f32 0.0, %v6361
      %6363 = vmatmul.bf16.gmra.mxu0 %v6284
      %v6364 = vpop.f32.mrf.mxu0
      %v6365 = vadd.f32 0.0, %v6364
      %v6366 = vpop.f32.mrf.mxu0
      %v6367 = vadd.f32 0.0, %v6366
      %6368 = vmatmul.bf16.gmra.mxu0 %v6287
      %v6369 = vpop.f32.mrf.mxu0
      %v6370 = vadd.f32 0.0, %v6369
      %v6371 = vpop.f32.mrf.mxu0
      %v6372 = vadd.f32 0.0, %v6371
      %6373 = vmatmul.bf16.gmra.mxu0 %v6290
      %v6374 = vpop.f32.mrf.mxu0
      %v6375 = vadd.f32 0.0, %v6374
      %v6376 = vpop.f32.mrf.mxu0
      %v6377 = vadd.f32 0.0, %v6376
      %6378 = vmatmul.bf16.gmra.mxu0 %v6293
      %v6379 = vpop.f32.mrf.mxu0
      %v6380 = vadd.f32 0.0, %v6379
      %v6381 = vpop.f32.mrf.mxu0
      %v6382 = vadd.f32 0.0, %v6381
      %6383 = vmatmul.bf16.gmra.mxu0 %v6296
      %v6384 = vpop.f32.mrf.mxu0
      %v6385 = vadd.f32 0.0, %v6384
      %v6386 = vpop.f32.mrf.mxu0
      %v6387 = vadd.f32 0.0, %v6386
      %6388 = vmatmul.bf16.gmra.mxu0 %v6299
      %v6389 = vpop.f32.mrf.mxu0
      %v6390 = vadd.f32 0.0, %v6389
      %v6391 = vpop.f32.mrf.mxu0
      %v6392 = vadd.f32 0.0, %v6391
      %6393 = vmatmul.bf16.gmra.mxu0 %v6302
      %v6394 = vpop.f32.mrf.mxu0
      %v6395 = vadd.f32 0.0, %v6394
      %v6396 = vpop.f32.mrf.mxu0
      %v6397 = vadd.f32 0.0, %v6396
      %6398 = vmatmul.bf16.gmra.mxu0 %v6305
      %v6399 = vpop.f32.mrf.mxu0
      %v6400 = vadd.f32 0.0, %v6399
      %v6401 = vpop.f32.mrf.mxu0
      %v6402 = vadd.f32 0.0, %v6401
      %6403 = vmatmul.bf16.gmra.mxu0 %v6308
      %v6404 = vpop.f32.mrf.mxu0
      %v6405 = vadd.f32 0.0, %v6404
      %v6406 = vpop.f32.mrf.mxu0
      %v6407 = vadd.f32 0.0, %v6406
      %6408 = vdwg.mxu0
      %v6409 = vadd.f32 %v6149, %v6320
      %v6410 = vadd.f32 %v6150, %v6322
      %v6411 = vadd.f32 %v6151, %v6325
      %v6412 = vadd.f32 %v6152, %v6327
      %v6413 = vadd.f32 %v6153, %v6330
      %v6414 = vadd.f32 %v6154, %v6332
      %v6415 = vadd.f32 %v6155, %v6335
      %v6416 = vadd.f32 %v6156, %v6337
      %v6417 = vadd.f32 %v6157, %v6340
      %v6418 = vadd.f32 %v6158, %v6342
      %v6419 = vadd.f32 %v6159, %v6345
      %v6420 = vadd.f32 %v6160, %v6347
      %v6421 = vadd.f32 %v6161, %v6350
      %v6422 = vadd.f32 %v6162, %v6352
      %v6423 = vadd.f32 %v6163, %v6355
      %v6424 = vadd.f32 %v6164, %v6357
      %v6425 = vadd.f32 %v6165, %v6360
      %v6426 = vadd.f32 %v6166, %v6362
      %v6427 = vadd.f32 %v6167, %v6365
      %v6428 = vadd.f32 %v6168, %v6367
      %v6429 = vadd.f32 %v6169, %v6370
      %v6430 = vadd.f32 %v6170, %v6372
      %v6431 = vadd.f32 %v6171, %v6375
      %v6432 = vadd.f32 %v6172, %v6377
      %v6433 = vadd.f32 %v6173, %v6380
      %v6434 = vadd.f32 %v6174, %v6382
      %v6435 = vadd.f32 %v6175, %v6385
      %v6436 = vadd.f32 %v6176, %v6387
      %v6437 = vadd.f32 %v6177, %v6390
      %v6438 = vadd.f32 %v6178, %v6392
      %v6439 = vadd.f32 %v6179, %v6395
      %v6440 = vadd.f32 %v6180, %v6397
      %v6441 = vadd.f32 %v6181, %v6400
      %v6442 = vadd.f32 %v6182, %v6402
      %v6443 = vadd.f32 %v6183, %v6405
      %v6444 = vadd.f32 %v6184, %v6407
      %v6445 = vld [vmem:[#allocation2 + $0x14] sm:$0xff]
      %v6446 = vld [vmem:[#allocation2 + $0x1c] sm:$0xff]
      %v6447 = vld [vmem:[#allocation2 + $0x24] sm:$0xff]
      %v6448 = vld [vmem:[#allocation2 + $0x2c] sm:$0xff]
      %v6449 = vld [vmem:[#allocation2 + $0x34] sm:$0xff]
      %v6450 = vld [vmem:[#allocation2 + $0x3c] sm:$0xff]
      %v6451 = vld [vmem:[#allocation2 + $0x44] sm:$0xff]
      %v6452 = vld [vmem:[#allocation2 + $0x4c] sm:$0xff]
      %v6453 = vld [vmem:[#allocation2 + $0x54] sm:$0xff]
      %v6454 = vld [vmem:[#allocation2 + $0x5c] sm:$0xff]
      %v6455 = vld [vmem:[#allocation2 + $0x64] sm:$0xff]
      %v6456 = vld [vmem:[#allocation2 + $0x6c] sm:$0xff]
      %v6457 = vld [vmem:[#allocation2 + $0x74] sm:$0xff]
      %v6458 = vld [vmem:[#allocation2 + $0x7c] sm:$0xff]
      %v6459 = vld [vmem:[#allocation2 + $0x84] sm:$0xff]
      %v6460 = vld [vmem:[#allocation2 + $0x8c] sm:$0xff]
      %v6461 = vld [vmem:[#allocation2 + $0x94] sm:$0xff]
      %v6462 = vld [vmem:[#allocation2 + $0x9c] sm:$0xff]
      %v6463 = vld [vmem:[#allocation2 + $0xa4] sm:$0xff]
      %v6464 = vld [vmem:[#allocation2 + $0xac] sm:$0xff]
      %v6465 = vld [vmem:[#allocation2 + $0xb4] sm:$0xff]
      %v6466 = vld [vmem:[#allocation2 + $0xbc] sm:$0xff]
      %v6467 = vld [vmem:[#allocation2 + $0xc4] sm:$0xff]
      %v6468 = vld [vmem:[#allocation2 + $0xcc] sm:$0xff]
      %v6469 = vld [vmem:[#allocation2 + $0xd4] sm:$0xff]
      %v6470 = vld [vmem:[#allocation2 + $0xdc] sm:$0xff]
      %v6471 = vld [vmem:[#allocation2 + $0xe4] sm:$0xff]
      %v6472 = vld [vmem:[#allocation2 + $0xec] sm:$0xff]
      %v6473 = vld [vmem:[#allocation2 + $0xf4] sm:$0xff]
      %v6474 = vld [vmem:[#allocation2 + $0xfc] sm:$0xff]
      %v6475 = vld [vmem:[#allocation2 + $0x104] sm:$0xff]
      %v6476 = vld [vmem:[#allocation2 + $0x10c] sm:$0xff]
      %v6477 = vld [vmem:[#allocation2 + $0x114] sm:$0xff]
      %v6478 = vld [vmem:[#allocation2 + $0x11c] sm:$0xff]
      %v6479 = vld [vmem:[#allocation2 + $0x124] sm:$0xff]
      %v6480 = vld [vmem:[#allocation2 + $0x12c] sm:$0xff]
      %v6481 = vpack.c.bf16 %v6446, %v6445
      %v6482 = vpack.c.bf16 %v6448, %v6447
      %v6483 = vpack.c.bf16 %v6450, %v6449
      %v6484 = vpack.c.bf16 %v6452, %v6451
      %v6485 = vpack.c.bf16 %v6454, %v6453
      %v6486 = vpack.c.bf16 %v6456, %v6455
      %v6487 = vpack.c.bf16 %v6458, %v6457
      %v6488 = vpack.c.bf16 %v6460, %v6459
      %v6489 = vpack.c.bf16 %v6462, %v6461
      %v6490 = vpack.c.bf16 %v6464, %v6463
      %v6491 = vpack.c.bf16 %v6466, %v6465
      %v6492 = vpack.c.bf16 %v6468, %v6467
      %v6493 = vpack.c.bf16 %v6470, %v6469
      %v6494 = vpack.c.bf16 %v6472, %v6471
      %v6495 = vpack.c.bf16 %v6474, %v6473
      %v6496 = vpack.c.bf16 %v6476, %v6475
      %v6497 = vpack.c.bf16 %v6478, %v6477
      %v6498 = vpack.c.bf16 %v6480, %v6479
      %s6499 = scalar_lea.vmem %s3, 80
      %v6500 = vld [vmem:[%s6499] sm:$0xf]
      %v6501 = vld [vmem:[%s6499 + $0x4] sm:$0xf]
      %v6502 = vld [vmem:[%s6499 + $0x8] sm:$0xf]
      %v6503 = vld [vmem:[%s6499 + $0xc] sm:$0xf]
      %v6508 = vunpack.c.l.b16 %v6500
      %v6509 = vunpack.c.l.b16 %v6501
      %v6510 = vunpack.c.l.b16 %v6502
      %v6511 = vunpack.c.l.b16 %v6503
      %v6512 = vpack.c.b16 %v6509, %v6508
      %v6513 = vpack.c.b16 %v6511, %v6510
      %v6517 = vsel %vm601, %v6481, 0
      %v6520 = vsel %vm601, %v6482, 0
      %v6523 = vsel %vm601, %v6483, 0
      %v6526 = vsel %vm601, %v6484, 0
      %v6529 = vsel %vm601, %v6485, 0
      %v6532 = vsel %vm601, %v6486, 0
      %v6535 = vsel %vm601, %v6487, 0
      %v6538 = vsel %vm601, %v6488, 0
      %v6541 = vsel %vm601, %v6489, 0
      %v6544 = vsel %vm601, %v6490, 0
      %v6547 = vsel %vm601, %v6491, 0
      %v6550 = vsel %vm601, %v6492, 0
      %v6553 = vsel %vm601, %v6493, 0
      %v6556 = vsel %vm601, %v6494, 0
      %v6559 = vsel %vm601, %v6495, 0
      %v6562 = vsel %vm601, %v6496, 0
      %v6565 = vsel %vm601, %v6497, 0
      %v6568 = vsel %vm601, %v6498, 0
      %6570 = vmatpush.bf16.msra.mxu0 0
      %6571 = vmatpush.bf16.msra.mxu0 0
      %6572 = vmatpush.bf16.msra.mxu0 0
      %6573 = vmatpush.bf16.msra.mxu0 0
      %6574 = vmatpush.bf16.msra.mxu0 0
      %6575 = vmatpush.bf16.msra.mxu0 0
      %6576 = vmatpush.bf16.msra.mxu0 %v6513
      %6577 = vmatpush.bf16.msra.mxu0 %v6512
      %6578 = vmatmul.bf16.gmra.mxu0 %v6517
      %v6579 = vpop.f32.mrf.mxu0
      %v6580 = vadd.f32 0.0, %v6579
      %v6581 = vpop.f32.mrf.mxu0
      %v6582 = vadd.f32 0.0, %v6581
      %6583 = vmatmul.bf16.gmra.mxu0 %v6520
      %v6584 = vpop.f32.mrf.mxu0
      %v6585 = vadd.f32 0.0, %v6584
      %v6586 = vpop.f32.mrf.mxu0
      %v6587 = vadd.f32 0.0, %v6586
      %6588 = vmatmul.bf16.gmra.mxu0 %v6523
      %v6589 = vpop.f32.mrf.mxu0
      %v6590 = vadd.f32 0.0, %v6589
      %v6591 = vpop.f32.mrf.mxu0
      %v6592 = vadd.f32 0.0, %v6591
      %6593 = vmatmul.bf16.gmra.mxu0 %v6526
      %v6594 = vpop.f32.mrf.mxu0
      %v6595 = vadd.f32 0.0, %v6594
      %v6596 = vpop.f32.mrf.mxu0
      %v6597 = vadd.f32 0.0, %v6596
      %6598 = vmatmul.bf16.gmra.mxu0 %v6529
      %v6599 = vpop.f32.mrf.mxu0
      %v6600 = vadd.f32 0.0, %v6599
      %v6601 = vpop.f32.mrf.mxu0
      %v6602 = vadd.f32 0.0, %v6601
      %6603 = vmatmul.bf16.gmra.mxu0 %v6532
      %v6604 = vpop.f32.mrf.mxu0
      %v6605 = vadd.f32 0.0, %v6604
      %v6606 = vpop.f32.mrf.mxu0
      %v6607 = vadd.f32 0.0, %v6606
      %6608 = vmatmul.bf16.gmra.mxu0 %v6535
      %v6609 = vpop.f32.mrf.mxu0
      %v6610 = vadd.f32 0.0, %v6609
      %v6611 = vpop.f32.mrf.mxu0
      %v6612 = vadd.f32 0.0, %v6611
      %6613 = vmatmul.bf16.gmra.mxu0 %v6538
      %v6614 = vpop.f32.mrf.mxu0
      %v6615 = vadd.f32 0.0, %v6614
      %v6616 = vpop.f32.mrf.mxu0
      %v6617 = vadd.f32 0.0, %v6616
      %6618 = vmatmul.bf16.gmra.mxu0 %v6541
      %v6619 = vpop.f32.mrf.mxu0
      %v6620 = vadd.f32 0.0, %v6619
      %v6621 = vpop.f32.mrf.mxu0
      %v6622 = vadd.f32 0.0, %v6621
      %6623 = vmatmul.bf16.gmra.mxu0 %v6544
      %v6624 = vpop.f32.mrf.mxu0
      %v6625 = vadd.f32 0.0, %v6624
      %v6626 = vpop.f32.mrf.mxu0
      %v6627 = vadd.f32 0.0, %v6626
      %6628 = vmatmul.bf16.gmra.mxu0 %v6547
      %v6629 = vpop.f32.mrf.mxu0
      %v6630 = vadd.f32 0.0, %v6629
      %v6631 = vpop.f32.mrf.mxu0
      %v6632 = vadd.f32 0.0, %v6631
      %6633 = vmatmul.bf16.gmra.mxu0 %v6550
      %v6634 = vpop.f32.mrf.mxu0
      %v6635 = vadd.f32 0.0, %v6634
      %v6636 = vpop.f32.mrf.mxu0
      %v6637 = vadd.f32 0.0, %v6636
      %6638 = vmatmul.bf16.gmra.mxu0 %v6553
      %v6639 = vpop.f32.mrf.mxu0
      %v6640 = vadd.f32 0.0, %v6639
      %v6641 = vpop.f32.mrf.mxu0
      %v6642 = vadd.f32 0.0, %v6641
      %6643 = vmatmul.bf16.gmra.mxu0 %v6556
      %v6644 = vpop.f32.mrf.mxu0
      %v6645 = vadd.f32 0.0, %v6644
      %v6646 = vpop.f32.mrf.mxu0
      %v6647 = vadd.f32 0.0, %v6646
      %6648 = vmatmul.bf16.gmra.mxu0 %v6559
      %v6649 = vpop.f32.mrf.mxu0
      %v6650 = vadd.f32 0.0, %v6649
      %v6651 = vpop.f32.mrf.mxu0
      %v6652 = vadd.f32 0.0, %v6651
      %6653 = vmatmul.bf16.gmra.mxu0 %v6562
      %v6654 = vpop.f32.mrf.mxu0
      %v6655 = vadd.f32 0.0, %v6654
      %v6656 = vpop.f32.mrf.mxu0
      %v6657 = vadd.f32 0.0, %v6656
      %6658 = vmatmul.bf16.gmra.mxu0 %v6565
      %v6659 = vpop.f32.mrf.mxu0
      %v6660 = vadd.f32 0.0, %v6659
      %v6661 = vpop.f32.mrf.mxu0
      %v6662 = vadd.f32 0.0, %v6661
      %6663 = vmatmul.bf16.gmra.mxu0 %v6568
      %v6664 = vpop.f32.mrf.mxu0
      %v6665 = vadd.f32 0.0, %v6664
      %v6666 = vpop.f32.mrf.mxu0
      %v6667 = vadd.f32 0.0, %v6666
      %6668 = vdwg.mxu0
      %v6669 = vadd.f32 %v6409, %v6580
      %v6670 = vadd.f32 %v6410, %v6582
      %v6671 = vadd.f32 %v6411, %v6585
      %v6672 = vadd.f32 %v6412, %v6587
      %v6673 = vadd.f32 %v6413, %v6590
      %v6674 = vadd.f32 %v6414, %v6592
      %v6675 = vadd.f32 %v6415, %v6595
      %v6676 = vadd.f32 %v6416, %v6597
      %v6677 = vadd.f32 %v6417, %v6600
      %v6678 = vadd.f32 %v6418, %v6602
      %v6679 = vadd.f32 %v6419, %v6605
      %v6680 = vadd.f32 %v6420, %v6607
      %v6681 = vadd.f32 %v6421, %v6610
      %v6682 = vadd.f32 %v6422, %v6612
      %v6683 = vadd.f32 %v6423, %v6615
      %v6684 = vadd.f32 %v6424, %v6617
      %v6685 = vadd.f32 %v6425, %v6620
      %v6686 = vadd.f32 %v6426, %v6622
      %v6687 = vadd.f32 %v6427, %v6625
      %v6688 = vadd.f32 %v6428, %v6627
      %v6689 = vadd.f32 %v6429, %v6630
      %v6690 = vadd.f32 %v6430, %v6632
      %v6691 = vadd.f32 %v6431, %v6635
      %v6692 = vadd.f32 %v6432, %v6637
      %v6693 = vadd.f32 %v6433, %v6640
      %v6694 = vadd.f32 %v6434, %v6642
      %v6695 = vadd.f32 %v6435, %v6645
      %v6696 = vadd.f32 %v6436, %v6647
      %v6697 = vadd.f32 %v6437, %v6650
      %v6698 = vadd.f32 %v6438, %v6652
      %v6699 = vadd.f32 %v6439, %v6655
      %v6700 = vadd.f32 %v6440, %v6657
      %v6701 = vadd.f32 %v6441, %v6660
      %v6702 = vadd.f32 %v6442, %v6662
      %v6703 = vadd.f32 %v6443, %v6665
      %v6704 = vadd.f32 %v6444, %v6667
      %v6705 = vld [vmem:[#allocation2 + $0x24] sm:$0xff]
      %v6706 = vld [vmem:[#allocation2 + $0x2c] sm:$0xff]
      %v6707 = vld [vmem:[#allocation2 + $0x34] sm:$0xff]
      %v6708 = vld [vmem:[#allocation2 + $0x3c] sm:$0xff]
      %v6709 = vld [vmem:[#allocation2 + $0x44] sm:$0xff]
      %v6710 = vld [vmem:[#allocation2 + $0x4c] sm:$0xff]
      %v6711 = vld [vmem:[#allocation2 + $0x54] sm:$0xff]
      %v6712 = vld [vmem:[#allocation2 + $0x5c] sm:$0xff]
      %v6713 = vld [vmem:[#allocation2 + $0x64] sm:$0xff]
      %v6714 = vld [vmem:[#allocation2 + $0x6c] sm:$0xff]
      %v6715 = vld [vmem:[#allocation2 + $0x74] sm:$0xff]
      %v6716 = vld [vmem:[#allocation2 + $0x7c] sm:$0xff]
      %v6717 = vld [vmem:[#allocation2 + $0x84] sm:$0xff]
      %v6718 = vld [vmem:[#allocation2 + $0x8c] sm:$0xff]
      %v6719 = vld [vmem:[#allocation2 + $0x94] sm:$0xff]
      %v6720 = vld [vmem:[#allocation2 + $0x9c] sm:$0xff]
      %v6721 = vld [vmem:[#allocation2 + $0xa4] sm:$0xff]
      %v6722 = vld [vmem:[#allocation2 + $0xac] sm:$0xff]
      %v6723 = vld [vmem:[#allocation2 + $0xb4] sm:$0xff]
      %v6724 = vld [vmem:[#allocation2 + $0xbc] sm:$0xff]
      %v6725 = vld [vmem:[#allocation2 + $0xc4] sm:$0xff]
      %v6726 = vld [vmem:[#allocation2 + $0xcc] sm:$0xff]
      %v6727 = vld [vmem:[#allocation2 + $0xd4] sm:$0xff]
      %v6728 = vld [vmem:[#allocation2 + $0xdc] sm:$0xff]
      %v6729 = vld [vmem:[#allocation2 + $0xe4] sm:$0xff]
      %v6730 = vld [vmem:[#allocation2 + $0xec] sm:$0xff]
      %v6731 = vld [vmem:[#allocation2 + $0xf4] sm:$0xff]
      %v6732 = vld [vmem:[#allocation2 + $0xfc] sm:$0xff]
      %v6733 = vld [vmem:[#allocation2 + $0x104] sm:$0xff]
      %v6734 = vld [vmem:[#allocation2 + $0x10c] sm:$0xff]
      %v6735 = vld [vmem:[#allocation2 + $0x114] sm:$0xff]
      %v6736 = vld [vmem:[#allocation2 + $0x11c] sm:$0xff]
      %v6737 = vld [vmem:[#allocation2 + $0x124] sm:$0xff]
      %v6738 = vld [vmem:[#allocation2 + $0x12c] sm:$0xff]
      %v6739 = vld [vmem:[#allocation2 + $0x134] sm:$0xff]
      %v6740 = vld [vmem:[#allocation2 + $0x13c] sm:$0xff]
      %v6741 = vpack.c.bf16 %v6706, %v6705
      %v6742 = vpack.c.bf16 %v6708, %v6707
      %v6743 = vpack.c.bf16 %v6710, %v6709
      %v6744 = vpack.c.bf16 %v6712, %v6711
      %v6745 = vpack.c.bf16 %v6714, %v6713
      %v6746 = vpack.c.bf16 %v6716, %v6715
      %v6747 = vpack.c.bf16 %v6718, %v6717
      %v6748 = vpack.c.bf16 %v6720, %v6719
      %v6749 = vpack.c.bf16 %v6722, %v6721
      %v6750 = vpack.c.bf16 %v6724, %v6723
      %v6751 = vpack.c.bf16 %v6726, %v6725
      %v6752 = vpack.c.bf16 %v6728, %v6727
      %v6753 = vpack.c.bf16 %v6730, %v6729
      %v6754 = vpack.c.bf16 %v6732, %v6731
      %v6755 = vpack.c.bf16 %v6734, %v6733
      %v6756 = vpack.c.bf16 %v6736, %v6735
      %v6757 = vpack.c.bf16 %v6738, %v6737
      %v6758 = vpack.c.bf16 %v6740, %v6739
      %s6759 = scalar_lea.vmem %s3, 96
      %v6760 = vld [vmem:[%s6759] sm:$0xf]
      %v6761 = vld [vmem:[%s6759 + $0x4] sm:$0xf]
      %v6762 = vld [vmem:[%s6759 + $0x8] sm:$0xf]
      %v6763 = vld [vmem:[%s6759 + $0xc] sm:$0xf]
      %v6768 = vunpack.c.l.b16 %v6760
      %v6769 = vunpack.c.l.b16 %v6761
      %v6770 = vunpack.c.l.b16 %v6762
      %v6771 = vunpack.c.l.b16 %v6763
      %v6772 = vpack.c.b16 %v6769, %v6768
      %v6773 = vpack.c.b16 %v6771, %v6770
      %v6777 = vsel %vm601, %v6741, 0
      %v6780 = vsel %vm601, %v6742, 0
      %v6783 = vsel %vm601, %v6743, 0
      %v6786 = vsel %vm601, %v6744, 0
      %v6789 = vsel %vm601, %v6745, 0
      %v6792 = vsel %vm601, %v6746, 0
      %v6795 = vsel %vm601, %v6747, 0
      %v6798 = vsel %vm601, %v6748, 0
      %v6801 = vsel %vm601, %v6749, 0
      %v6804 = vsel %vm601, %v6750, 0
      %v6807 = vsel %vm601, %v6751, 0
      %v6810 = vsel %vm601, %v6752, 0
      %v6813 = vsel %vm601, %v6753, 0
      %v6816 = vsel %vm601, %v6754, 0
      %v6819 = vsel %vm601, %v6755, 0
      %v6822 = vsel %vm601, %v6756, 0
      %v6825 = vsel %vm601, %v6757, 0
      %v6828 = vsel %vm601, %v6758, 0
      %6830 = vmatpush.bf16.msra.mxu0 0
      %6831 = vmatpush.bf16.msra.mxu0 0
      %6832 = vmatpush.bf16.msra.mxu0 0
      %6833 = vmatpush.bf16.msra.mxu0 0
      %6834 = vmatpush.bf16.msra.mxu0 0
      %6835 = vmatpush.bf16.msra.mxu0 0
      %6836 = vmatpush.bf16.msra.mxu0 %v6773
      %6837 = vmatpush.bf16.msra.mxu0 %v6772
      %6838 = vmatmul.bf16.gmra.mxu0 %v6777
      %v6839 = vpop.f32.mrf.mxu0
      %v6840 = vadd.f32 0.0, %v6839
      %v6841 = vpop.f32.mrf.mxu0
      %v6842 = vadd.f32 0.0, %v6841
      %6843 = vmatmul.bf16.gmra.mxu0 %v6780
      %v6844 = vpop.f32.mrf.mxu0
      %v6845 = vadd.f32 0.0, %v6844
      %v6846 = vpop.f32.mrf.mxu0
      %v6847 = vadd.f32 0.0, %v6846
      %6848 = vmatmul.bf16.gmra.mxu0 %v6783
      %v6849 = vpop.f32.mrf.mxu0
      %v6850 = vadd.f32 0.0, %v6849
      %v6851 = vpop.f32.mrf.mxu0
      %v6852 = vadd.f32 0.0, %v6851
      %6853 = vmatmul.bf16.gmra.mxu0 %v6786
      %v6854 = vpop.f32.mrf.mxu0
      %v6855 = vadd.f32 0.0, %v6854
      %v6856 = vpop.f32.mrf.mxu0
      %v6857 = vadd.f32 0.0, %v6856
      %6858 = vmatmul.bf16.gmra.mxu0 %v6789
      %v6859 = vpop.f32.mrf.mxu0
      %v6860 = vadd.f32 0.0, %v6859
      %v6861 = vpop.f32.mrf.mxu0
      %v6862 = vadd.f32 0.0, %v6861
      %6863 = vmatmul.bf16.gmra.mxu0 %v6792
      %v6864 = vpop.f32.mrf.mxu0
      %v6865 = vadd.f32 0.0, %v6864
      %v6866 = vpop.f32.mrf.mxu0
      %v6867 = vadd.f32 0.0, %v6866
      %6868 = vmatmul.bf16.gmra.mxu0 %v6795
      %v6869 = vpop.f32.mrf.mxu0
      %v6870 = vadd.f32 0.0, %v6869
      %v6871 = vpop.f32.mrf.mxu0
      %v6872 = vadd.f32 0.0, %v6871
      %6873 = vmatmul.bf16.gmra.mxu0 %v6798
      %v6874 = vpop.f32.mrf.mxu0
      %v6875 = vadd.f32 0.0, %v6874
      %v6876 = vpop.f32.mrf.mxu0
      %v6877 = vadd.f32 0.0, %v6876
      %6878 = vmatmul.bf16.gmra.mxu0 %v6801
      %v6879 = vpop.f32.mrf.mxu0
      %v6880 = vadd.f32 0.0, %v6879
      %v6881 = vpop.f32.mrf.mxu0
      %v6882 = vadd.f32 0.0, %v6881
      %6883 = vmatmul.bf16.gmra.mxu0 %v6804
      %v6884 = vpop.f32.mrf.mxu0
      %v6885 = vadd.f32 0.0, %v6884
      %v6886 = vpop.f32.mrf.mxu0
      %v6887 = vadd.f32 0.0, %v6886
      %6888 = vmatmul.bf16.gmra.mxu0 %v6807
      %v6889 = vpop.f32.mrf.mxu0
      %v6890 = vadd.f32 0.0, %v6889
      %v6891 = vpop.f32.mrf.mxu0
      %v6892 = vadd.f32 0.0, %v6891
      %6893 = vmatmul.bf16.gmra.mxu0 %v6810
      %v6894 = vpop.f32.mrf.mxu0
      %v6895 = vadd.f32 0.0, %v6894
      %v6896 = vpop.f32.mrf.mxu0
      %v6897 = vadd.f32 0.0, %v6896
      %6898 = vmatmul.bf16.gmra.mxu0 %v6813
      %v6899 = vpop.f32.mrf.mxu0
      %v6900 = vadd.f32 0.0, %v6899
      %v6901 = vpop.f32.mrf.mxu0
      %v6902 = vadd.f32 0.0, %v6901
      %6903 = vmatmul.bf16.gmra.mxu0 %v6816
      %v6904 = vpop.f32.mrf.mxu0
      %v6905 = vadd.f32 0.0, %v6904
      %v6906 = vpop.f32.mrf.mxu0
      %v6907 = vadd.f32 0.0, %v6906
      %6908 = vmatmul.bf16.gmra.mxu0 %v6819
      %v6909 = vpop.f32.mrf.mxu0
      %v6910 = vadd.f32 0.0, %v6909
      %v6911 = vpop.f32.mrf.mxu0
      %v6912 = vadd.f32 0.0, %v6911
      %6913 = vmatmul.bf16.gmra.mxu0 %v6822
      %v6914 = vpop.f32.mrf.mxu0
      %v6915 = vadd.f32 0.0, %v6914
      %v6916 = vpop.f32.mrf.mxu0
      %v6917 = vadd.f32 0.0, %v6916
      %6918 = vmatmul.bf16.gmra.mxu0 %v6825
      %v6919 = vpop.f32.mrf.mxu0
      %v6920 = vadd.f32 0.0, %v6919
      %v6921 = vpop.f32.mrf.mxu0
      %v6922 = vadd.f32 0.0, %v6921
      %6923 = vmatmul.bf16.gmra.mxu0 %v6828
      %v6924 = vpop.f32.mrf.mxu0
      %v6925 = vadd.f32 0.0, %v6924
      %v6926 = vpop.f32.mrf.mxu0
      %v6927 = vadd.f32 0.0, %v6926
      %6928 = vdwg.mxu0
      %v6929 = vadd.f32 %v6669, %v6840
      %v6930 = vadd.f32 %v6670, %v6842
      %v6931 = vadd.f32 %v6671, %v6845
      %v6932 = vadd.f32 %v6672, %v6847
      %v6933 = vadd.f32 %v6673, %v6850
      %v6934 = vadd.f32 %v6674, %v6852
      %v6935 = vadd.f32 %v6675, %v6855
      %v6936 = vadd.f32 %v6676, %v6857
      %v6937 = vadd.f32 %v6677, %v6860
      %v6938 = vadd.f32 %v6678, %v6862
      %v6939 = vadd.f32 %v6679, %v6865
      %v6940 = vadd.f32 %v6680, %v6867
      %v6941 = vadd.f32 %v6681, %v6870
      %v6942 = vadd.f32 %v6682, %v6872
      %v6943 = vadd.f32 %v6683, %v6875
      %v6944 = vadd.f32 %v6684, %v6877
      %v6945 = vadd.f32 %v6685, %v6880
      %v6946 = vadd.f32 %v6686, %v6882
      %v6947 = vadd.f32 %v6687, %v6885
      %v6948 = vadd.f32 %v6688, %v6887
      %v6949 = vadd.f32 %v6689, %v6890
      %v6950 = vadd.f32 %v6690, %v6892
      %v6951 = vadd.f32 %v6691, %v6895
      %v6952 = vadd.f32 %v6692, %v6897
      %v6953 = vadd.f32 %v6693, %v6900
      %v6954 = vadd.f32 %v6694, %v6902
      %v6955 = vadd.f32 %v6695, %v6905
      %v6956 = vadd.f32 %v6696, %v6907
      %v6957 = vadd.f32 %v6697, %v6910
      %v6958 = vadd.f32 %v6698, %v6912
      %v6959 = vadd.f32 %v6699, %v6915
      %v6960 = vadd.f32 %v6700, %v6917
      %v6961 = vadd.f32 %v6701, %v6920
      %v6962 = vadd.f32 %v6702, %v6922
      %v6963 = vadd.f32 %v6703, %v6925
      %v6964 = vadd.f32 %v6704, %v6927
      %v6965 = vld [vmem:[#allocation2 + $0x25] sm:$0xff]
      %v6966 = vld [vmem:[#allocation2 + $0x2d] sm:$0xff]
      %v6967 = vld [vmem:[#allocation2 + $0x35] sm:$0xff]
      %v6968 = vld [vmem:[#allocation2 + $0x3d] sm:$0xff]
      %v6969 = vld [vmem:[#allocation2 + $0x45] sm:$0xff]
      %v6970 = vld [vmem:[#allocation2 + $0x4d] sm:$0xff]
      %v6971 = vld [vmem:[#allocation2 + $0x55] sm:$0xff]
      %v6972 = vld [vmem:[#allocation2 + $0x5d] sm:$0xff]
      %v6973 = vld [vmem:[#allocation2 + $0x65] sm:$0xff]
      %v6974 = vld [vmem:[#allocation2 + $0x6d] sm:$0xff]
      %v6975 = vld [vmem:[#allocation2 + $0x75] sm:$0xff]
      %v6976 = vld [vmem:[#allocation2 + $0x7d] sm:$0xff]
      %v6977 = vld [vmem:[#allocation2 + $0x85] sm:$0xff]
      %v6978 = vld [vmem:[#allocation2 + $0x8d] sm:$0xff]
      %v6979 = vld [vmem:[#allocation2 + $0x95] sm:$0xff]
      %v6980 = vld [vmem:[#allocation2 + $0x9d] sm:$0xff]
      %v6981 = vld [vmem:[#allocation2 + $0xa5] sm:$0xff]
      %v6982 = vld [vmem:[#allocation2 + $0xad] sm:$0xff]
      %v6983 = vld [vmem:[#allocation2 + $0xb5] sm:$0xff]
      %v6984 = vld [vmem:[#allocation2 + $0xbd] sm:$0xff]
      %v6985 = vld [vmem:[#allocation2 + $0xc5] sm:$0xff]
      %v6986 = vld [vmem:[#allocation2 + $0xcd] sm:$0xff]
      %v6987 = vld [vmem:[#allocation2 + $0xd5] sm:$0xff]
      %v6988 = vld [vmem:[#allocation2 + $0xdd] sm:$0xff]
      %v6989 = vld [vmem:[#allocation2 + $0xe5] sm:$0xff]
      %v6990 = vld [vmem:[#allocation2 + $0xed] sm:$0xff]
      %v6991 = vld [vmem:[#allocation2 + $0xf5] sm:$0xff]
      %v6992 = vld [vmem:[#allocation2 + $0xfd] sm:$0xff]
      %v6993 = vld [vmem:[#allocation2 + $0x105] sm:$0xff]
      %v6994 = vld [vmem:[#allocation2 + $0x10d] sm:$0xff]
      %v6995 = vld [vmem:[#allocation2 + $0x115] sm:$0xff]
      %v6996 = vld [vmem:[#allocation2 + $0x11d] sm:$0xff]
      %v6997 = vld [vmem:[#allocation2 + $0x125] sm:$0xff]
      %v6998 = vld [vmem:[#allocation2 + $0x12d] sm:$0xff]
      %v6999 = vld [vmem:[#allocation2 + $0x135] sm:$0xff]
      %v7000 = vld [vmem:[#allocation2 + $0x13d] sm:$0xff]
      %v7001 = vpack.c.bf16 %v6966, %v6965
      %v7002 = vpack.c.bf16 %v6968, %v6967
      %v7003 = vpack.c.bf16 %v6970, %v6969
      %v7004 = vpack.c.bf16 %v6972, %v6971
      %v7005 = vpack.c.bf16 %v6974, %v6973
      %v7006 = vpack.c.bf16 %v6976, %v6975
      %v7007 = vpack.c.bf16 %v6978, %v6977
      %v7008 = vpack.c.bf16 %v6980, %v6979
      %v7009 = vpack.c.bf16 %v6982, %v6981
      %v7010 = vpack.c.bf16 %v6984, %v6983
      %v7011 = vpack.c.bf16 %v6986, %v6985
      %v7012 = vpack.c.bf16 %v6988, %v6987
      %v7013 = vpack.c.bf16 %v6990, %v6989
      %v7014 = vpack.c.bf16 %v6992, %v6991
      %v7015 = vpack.c.bf16 %v6994, %v6993
      %v7016 = vpack.c.bf16 %v6996, %v6995
      %v7017 = vpack.c.bf16 %v6998, %v6997
      %v7018 = vpack.c.bf16 %v7000, %v6999
      %s7019 = scalar_lea.vmem %s3, 112
      %v7020 = vld [vmem:[%s7019] sm:$0xf]
      %v7021 = vld [vmem:[%s7019 + $0x4] sm:$0xf]
      %v7022 = vld [vmem:[%s7019 + $0x8] sm:$0xf]
      %v7023 = vld [vmem:[%s7019 + $0xc] sm:$0xf]
      %v7028 = vunpack.c.l.b16 %v7020
      %v7029 = vunpack.c.l.b16 %v7021
      %v7030 = vunpack.c.l.b16 %v7022
      %v7031 = vunpack.c.l.b16 %v7023
      %v7032 = vpack.c.b16 %v7029, %v7028
      %v7033 = vpack.c.b16 %v7031, %v7030
      %v7037 = vsel %vm601, %v7001, 0
      %v7040 = vsel %vm601, %v7002, 0
      %v7043 = vsel %vm601, %v7003, 0
      %v7046 = vsel %vm601, %v7004, 0
      %v7049 = vsel %vm601, %v7005, 0
      %v7052 = vsel %vm601, %v7006, 0
      %v7055 = vsel %vm601, %v7007, 0
      %v7058 = vsel %vm601, %v7008, 0
      %v7061 = vsel %vm601, %v7009, 0
      %v7064 = vsel %vm601, %v7010, 0
      %v7067 = vsel %vm601, %v7011, 0
      %v7070 = vsel %vm601, %v7012, 0
      %v7073 = vsel %vm601, %v7013, 0
      %v7076 = vsel %vm601, %v7014, 0
      %v7079 = vsel %vm601, %v7015, 0
      %v7082 = vsel %vm601, %v7016, 0
      %v7085 = vsel %vm601, %v7017, 0
      %v7088 = vsel %vm601, %v7018, 0
      %7090 = vmatpush.bf16.msra.mxu0 0
      %7091 = vmatpush.bf16.msra.mxu0 0
      %7092 = vmatpush.bf16.msra.mxu0 0
      %7093 = vmatpush.bf16.msra.mxu0 0
      %7094 = vmatpush.bf16.msra.mxu0 0
      %7095 = vmatpush.bf16.msra.mxu0 0
      %7096 = vmatpush.bf16.msra.mxu0 %v7033
      %7097 = vmatpush.bf16.msra.mxu0 %v7032
      %7098 = vmatmul.bf16.gmra.mxu0 %v7037
      %v7099 = vpop.f32.mrf.mxu0
      %v7100 = vadd.f32 0.0, %v7099
      %v7101 = vpop.f32.mrf.mxu0
      %v7102 = vadd.f32 0.0, %v7101
      %7103 = vmatmul.bf16.gmra.mxu0 %v7040
      %v7104 = vpop.f32.mrf.mxu0
      %v7105 = vadd.f32 0.0, %v7104
      %v7106 = vpop.f32.mrf.mxu0
      %v7107 = vadd.f32 0.0, %v7106
      %7108 = vmatmul.bf16.gmra.mxu0 %v7043
      %v7109 = vpop.f32.mrf.mxu0
      %v7110 = vadd.f32 0.0, %v7109
      %v7111 = vpop.f32.mrf.mxu0
      %v7112 = vadd.f32 0.0, %v7111
      %7113 = vmatmul.bf16.gmra.mxu0 %v7046
      %v7114 = vpop.f32.mrf.mxu0
      %v7115 = vadd.f32 0.0, %v7114
      %v7116 = vpop.f32.mrf.mxu0
      %v7117 = vadd.f32 0.0, %v7116
      %7118 = vmatmul.bf16.gmra.mxu0 %v7049
      %v7119 = vpop.f32.mrf.mxu0
      %v7120 = vadd.f32 0.0, %v7119
      %v7121 = vpop.f32.mrf.mxu0
      %v7122 = vadd.f32 0.0, %v7121
      %7123 = vmatmul.bf16.gmra.mxu0 %v7052
      %v7124 = vpop.f32.mrf.mxu0
      %v7125 = vadd.f32 0.0, %v7124
      %v7126 = vpop.f32.mrf.mxu0
      %v7127 = vadd.f32 0.0, %v7126
      %7128 = vmatmul.bf16.gmra.mxu0 %v7055
      %v7129 = vpop.f32.mrf.mxu0
      %v7130 = vadd.f32 0.0, %v7129
      %v7131 = vpop.f32.mrf.mxu0
      %v7132 = vadd.f32 0.0, %v7131
      %7133 = vmatmul.bf16.gmra.mxu0 %v7058
      %v7134 = vpop.f32.mrf.mxu0
      %v7135 = vadd.f32 0.0, %v7134
      %v7136 = vpop.f32.mrf.mxu0
      %v7137 = vadd.f32 0.0, %v7136
      %7138 = vmatmul.bf16.gmra.mxu0 %v7061
      %v7139 = vpop.f32.mrf.mxu0
      %v7140 = vadd.f32 0.0, %v7139
      %v7141 = vpop.f32.mrf.mxu0
      %v7142 = vadd.f32 0.0, %v7141
      %7143 = vmatmul.bf16.gmra.mxu0 %v7064
      %v7144 = vpop.f32.mrf.mxu0
      %v7145 = vadd.f32 0.0, %v7144
      %v7146 = vpop.f32.mrf.mxu0
      %v7147 = vadd.f32 0.0, %v7146
      %7148 = vmatmul.bf16.gmra.mxu0 %v7067
      %v7149 = vpop.f32.mrf.mxu0
      %v7150 = vadd.f32 0.0, %v7149
      %v7151 = vpop.f32.mrf.mxu0
      %v7152 = vadd.f32 0.0, %v7151
      %7153 = vmatmul.bf16.gmra.mxu0 %v7070
      %v7154 = vpop.f32.mrf.mxu0
      %v7155 = vadd.f32 0.0, %v7154
      %v7156 = vpop.f32.mrf.mxu0
      %v7157 = vadd.f32 0.0, %v7156
      %7158 = vmatmul.bf16.gmra.mxu0 %v7073
      %v7159 = vpop.f32.mrf.mxu0
      %v7160 = vadd.f32 0.0, %v7159
      %v7161 = vpop.f32.mrf.mxu0
      %v7162 = vadd.f32 0.0, %v7161
      %7163 = vmatmul.bf16.gmra.mxu0 %v7076
      %v7164 = vpop.f32.mrf.mxu0
      %v7165 = vadd.f32 0.0, %v7164
      %v7166 = vpop.f32.mrf.mxu0
      %v7167 = vadd.f32 0.0, %v7166
      %7168 = vmatmul.bf16.gmra.mxu0 %v7079
      %v7169 = vpop.f32.mrf.mxu0
      %v7170 = vadd.f32 0.0, %v7169
      %v7171 = vpop.f32.mrf.mxu0
      %v7172 = vadd.f32 0.0, %v7171
      %7173 = vmatmul.bf16.gmra.mxu0 %v7082
      %v7174 = vpop.f32.mrf.mxu0
      %v7175 = vadd.f32 0.0, %v7174
      %v7176 = vpop.f32.mrf.mxu0
      %v7177 = vadd.f32 0.0, %v7176
      %7178 = vmatmul.bf16.gmra.mxu0 %v7085
      %v7179 = vpop.f32.mrf.mxu0
      %v7180 = vadd.f32 0.0, %v7179
      %v7181 = vpop.f32.mrf.mxu0
      %v7182 = vadd.f32 0.0, %v7181
      %7183 = vmatmul.bf16.gmra.mxu0 %v7088
      %v7184 = vpop.f32.mrf.mxu0
      %v7185 = vadd.f32 0.0, %v7184
      %v7186 = vpop.f32.mrf.mxu0
      %v7187 = vadd.f32 0.0, %v7186
      %7188 = vdwg.mxu0
      %v7189 = vadd.f32 %v6929, %v7100
      %v7190 = vadd.f32 %v6930, %v7102
      %v7191 = vadd.f32 %v6931, %v7105
      %v7192 = vadd.f32 %v6932, %v7107
      %v7193 = vadd.f32 %v6933, %v7110
      %v7194 = vadd.f32 %v6934, %v7112
      %v7195 = vadd.f32 %v6935, %v7115
      %v7196 = vadd.f32 %v6936, %v7117
      %v7197 = vadd.f32 %v6937, %v7120
      %v7198 = vadd.f32 %v6938, %v7122
      %v7199 = vadd.f32 %v6939, %v7125
      %v7200 = vadd.f32 %v6940, %v7127
      %v7201 = vadd.f32 %v6941, %v7130
      %v7202 = vadd.f32 %v6942, %v7132
      %v7203 = vadd.f32 %v6943, %v7135
      %v7204 = vadd.f32 %v6944, %v7137
      %v7205 = vadd.f32 %v6945, %v7140
      %v7206 = vadd.f32 %v6946, %v7142
      %v7207 = vadd.f32 %v6947, %v7145
      %v7208 = vadd.f32 %v6948, %v7147
      %v7209 = vadd.f32 %v6949, %v7150
      %v7210 = vadd.f32 %v6950, %v7152
      %v7211 = vadd.f32 %v6951, %v7155
      %v7212 = vadd.f32 %v6952, %v7157
      %v7213 = vadd.f32 %v6953, %v7160
      %v7214 = vadd.f32 %v6954, %v7162
      %v7215 = vadd.f32 %v6955, %v7165
      %v7216 = vadd.f32 %v6956, %v7167
      %v7217 = vadd.f32 %v6957, %v7170
      %v7218 = vadd.f32 %v6958, %v7172
      %v7219 = vadd.f32 %v6959, %v7175
      %v7220 = vadd.f32 %v6960, %v7177
      %v7221 = vadd.f32 %v6961, %v7180
      %v7222 = vadd.f32 %v6962, %v7182
      %v7223 = vadd.f32 %v6963, %v7185
      %v7224 = vadd.f32 %v6964, %v7187
      %v7225 = vld [vmem:[#allocation2 + $0x26] sm:$0xff]
      %v7226 = vld [vmem:[#allocation2 + $0x2e] sm:$0xff]
      %v7227 = vld [vmem:[#allocation2 + $0x36] sm:$0xff]
      %v7228 = vld [vmem:[#allocation2 + $0x3e] sm:$0xff]
      %v7229 = vld [vmem:[#allocation2 + $0x46] sm:$0xff]
      %v7230 = vld [vmem:[#allocation2 + $0x4e] sm:$0xff]
      %v7231 = vld [vmem:[#allocation2 + $0x56] sm:$0xff]
      %v7232 = vld [vmem:[#allocation2 + $0x5e] sm:$0xff]
      %v7233 = vld [vmem:[#allocation2 + $0x66] sm:$0xff]
      %v7234 = vld [vmem:[#allocation2 + $0x6e] sm:$0xff]
      %v7235 = vld [vmem:[#allocation2 + $0x76] sm:$0xff]
      %v7236 = vld [vmem:[#allocation2 + $0x7e] sm:$0xff]
      %v7237 = vld [vmem:[#allocation2 + $0x86] sm:$0xff]
      %v7238 = vld [vmem:[#allocation2 + $0x8e] sm:$0xff]
      %v7239 = vld [vmem:[#allocation2 + $0x96] sm:$0xff]
      %v7240 = vld [vmem:[#allocation2 + $0x9e] sm:$0xff]
      %v7241 = vld [vmem:[#allocation2 + $0xa6] sm:$0xff]
      %v7242 = vld [vmem:[#allocation2 + $0xae] sm:$0xff]
      %v7243 = vld [vmem:[#allocation2 + $0xb6] sm:$0xff]
      %v7244 = vld [vmem:[#allocation2 + $0xbe] sm:$0xff]
      %v7245 = vld [vmem:[#allocation2 + $0xc6] sm:$0xff]
      %v7246 = vld [vmem:[#allocation2 + $0xce] sm:$0xff]
      %v7247 = vld [vmem:[#allocation2 + $0xd6] sm:$0xff]
      %v7248 = vld [vmem:[#allocation2 + $0xde] sm:$0xff]
      %v7249 = vld [vmem:[#allocation2 + $0xe6] sm:$0xff]
      %v7250 = vld [vmem:[#allocation2 + $0xee] sm:$0xff]
      %v7251 = vld [vmem:[#allocation2 + $0xf6] sm:$0xff]
      %v7252 = vld [vmem:[#allocation2 + $0xfe] sm:$0xff]
      %v7253 = vld [vmem:[#allocation2 + $0x106] sm:$0xff]
      %v7254 = vld [vmem:[#allocation2 + $0x10e] sm:$0xff]
      %v7255 = vld [vmem:[#allocation2 + $0x116] sm:$0xff]
      %v7256 = vld [vmem:[#allocation2 + $0x11e] sm:$0xff]
      %v7257 = vld [vmem:[#allocation2 + $0x126] sm:$0xff]
      %v7258 = vld [vmem:[#allocation2 + $0x12e] sm:$0xff]
      %v7259 = vld [vmem:[#allocation2 + $0x136] sm:$0xff]
      %v7260 = vld [vmem:[#allocation2 + $0x13e] sm:$0xff]
      %v7261 = vpack.c.bf16 %v7226, %v7225
      %v7262 = vpack.c.bf16 %v7228, %v7227
      %v7263 = vpack.c.bf16 %v7230, %v7229
      %v7264 = vpack.c.bf16 %v7232, %v7231
      %v7265 = vpack.c.bf16 %v7234, %v7233
      %v7266 = vpack.c.bf16 %v7236, %v7235
      %v7267 = vpack.c.bf16 %v7238, %v7237
      %v7268 = vpack.c.bf16 %v7240, %v7239
      %v7269 = vpack.c.bf16 %v7242, %v7241
      %v7270 = vpack.c.bf16 %v7244, %v7243
      %v7271 = vpack.c.bf16 %v7246, %v7245
      %v7272 = vpack.c.bf16 %v7248, %v7247
      %v7273 = vpack.c.bf16 %v7250, %v7249
      %v7274 = vpack.c.bf16 %v7252, %v7251
      %v7275 = vpack.c.bf16 %v7254, %v7253
      %v7276 = vpack.c.bf16 %v7256, %v7255
      %v7277 = vpack.c.bf16 %v7258, %v7257
      %v7278 = vpack.c.bf16 %v7260, %v7259
      %s7279 = scalar_lea.vmem %s3, 128
      %v7280 = vld [vmem:[%s7279] sm:$0xf]
      %v7281 = vld [vmem:[%s7279 + $0x4] sm:$0xf]
      %v7282 = vld [vmem:[%s7279 + $0x8] sm:$0xf]
      %v7283 = vld [vmem:[%s7279 + $0xc] sm:$0xf]
      %v7288 = vunpack.c.l.b16 %v7280
      %v7289 = vunpack.c.l.b16 %v7281
      %v7290 = vunpack.c.l.b16 %v7282
      %v7291 = vunpack.c.l.b16 %v7283
      %v7292 = vpack.c.b16 %v7289, %v7288
      %v7293 = vpack.c.b16 %v7291, %v7290
      %v7297 = vsel %vm601, %v7261, 0
      %v7300 = vsel %vm601, %v7262, 0
      %v7303 = vsel %vm601, %v7263, 0
      %v7306 = vsel %vm601, %v7264, 0
      %v7309 = vsel %vm601, %v7265, 0
      %v7312 = vsel %vm601, %v7266, 0
      %v7315 = vsel %vm601, %v7267, 0
      %v7318 = vsel %vm601, %v7268, 0
      %v7321 = vsel %vm601, %v7269, 0
      %v7324 = vsel %vm601, %v7270, 0
      %v7327 = vsel %vm601, %v7271, 0
      %v7330 = vsel %vm601, %v7272, 0
      %v7333 = vsel %vm601, %v7273, 0
      %v7336 = vsel %vm601, %v7274, 0
      %v7339 = vsel %vm601, %v7275, 0
      %v7342 = vsel %vm601, %v7276, 0
      %v7345 = vsel %vm601, %v7277, 0
      %v7348 = vsel %vm601, %v7278, 0
      %7350 = vmatpush.bf16.msra.mxu0 0
      %7351 = vmatpush.bf16.msra.mxu0 0
      %7352 = vmatpush.bf16.msra.mxu0 0
      %7353 = vmatpush.bf16.msra.mxu0 0
      %7354 = vmatpush.bf16.msra.mxu0 0
      %7355 = vmatpush.bf16.msra.mxu0 0
      %7356 = vmatpush.bf16.msra.mxu0 %v7293
      %7357 = vmatpush.bf16.msra.mxu0 %v7292
      %7358 = vmatmul.bf16.gmra.mxu0 %v7297
      %v7359 = vpop.f32.mrf.mxu0
      %v7360 = vadd.f32 0.0, %v7359
      %v7361 = vpop.f32.mrf.mxu0
      %v7362 = vadd.f32 0.0, %v7361
      %7363 = vmatmul.bf16.gmra.mxu0 %v7300
      %v7364 = vpop.f32.mrf.mxu0
      %v7365 = vadd.f32 0.0, %v7364
      %v7366 = vpop.f32.mrf.mxu0
      %v7367 = vadd.f32 0.0, %v7366
      %7368 = vmatmul.bf16.gmra.mxu0 %v7303
      %v7369 = vpop.f32.mrf.mxu0
      %v7370 = vadd.f32 0.0, %v7369
      %v7371 = vpop.f32.mrf.mxu0
      %v7372 = vadd.f32 0.0, %v7371
      %7373 = vmatmul.bf16.gmra.mxu0 %v7306
      %v7374 = vpop.f32.mrf.mxu0
      %v7375 = vadd.f32 0.0, %v7374
      %v7376 = vpop.f32.mrf.mxu0
      %v7377 = vadd.f32 0.0, %v7376
      %7378 = vmatmul.bf16.gmra.mxu0 %v7309
      %v7379 = vpop.f32.mrf.mxu0
      %v7380 = vadd.f32 0.0, %v7379
      %v7381 = vpop.f32.mrf.mxu0
      %v7382 = vadd.f32 0.0, %v7381
      %7383 = vmatmul.bf16.gmra.mxu0 %v7312
      %v7384 = vpop.f32.mrf.mxu0
      %v7385 = vadd.f32 0.0, %v7384
      %v7386 = vpop.f32.mrf.mxu0
      %v7387 = vadd.f32 0.0, %v7386
      %7388 = vmatmul.bf16.gmra.mxu0 %v7315
      %v7389 = vpop.f32.mrf.mxu0
      %v7390 = vadd.f32 0.0, %v7389
      %v7391 = vpop.f32.mrf.mxu0
      %v7392 = vadd.f32 0.0, %v7391
      %7393 = vmatmul.bf16.gmra.mxu0 %v7318
      %v7394 = vpop.f32.mrf.mxu0
      %v7395 = vadd.f32 0.0, %v7394
      %v7396 = vpop.f32.mrf.mxu0
      %v7397 = vadd.f32 0.0, %v7396
      %7398 = vmatmul.bf16.gmra.mxu0 %v7321
      %v7399 = vpop.f32.mrf.mxu0
      %v7400 = vadd.f32 0.0, %v7399
      %v7401 = vpop.f32.mrf.mxu0
      %v7402 = vadd.f32 0.0, %v7401
      %7403 = vmatmul.bf16.gmra.mxu0 %v7324
      %v7404 = vpop.f32.mrf.mxu0
      %v7405 = vadd.f32 0.0, %v7404
      %v7406 = vpop.f32.mrf.mxu0
      %v7407 = vadd.f32 0.0, %v7406
      %7408 = vmatmul.bf16.gmra.mxu0 %v7327
      %v7409 = vpop.f32.mrf.mxu0
      %v7410 = vadd.f32 0.0, %v7409
      %v7411 = vpop.f32.mrf.mxu0
      %v7412 = vadd.f32 0.0, %v7411
      %7413 = vmatmul.bf16.gmra.mxu0 %v7330
      %v7414 = vpop.f32.mrf.mxu0
      %v7415 = vadd.f32 0.0, %v7414
      %v7416 = vpop.f32.mrf.mxu0
      %v7417 = vadd.f32 0.0, %v7416
      %7418 = vmatmul.bf16.gmra.mxu0 %v7333
      %v7419 = vpop.f32.mrf.mxu0
      %v7420 = vadd.f32 0.0, %v7419
      %v7421 = vpop.f32.mrf.mxu0
      %v7422 = vadd.f32 0.0, %v7421
      %7423 = vmatmul.bf16.gmra.mxu0 %v7336
      %v7424 = vpop.f32.mrf.mxu0
      %v7425 = vadd.f32 0.0, %v7424
      %v7426 = vpop.f32.mrf.mxu0
      %v7427 = vadd.f32 0.0, %v7426
      %7428 = vmatmul.bf16.gmra.mxu0 %v7339
      %v7429 = vpop.f32.mrf.mxu0
      %v7430 = vadd.f32 0.0, %v7429
      %v7431 = vpop.f32.mrf.mxu0
      %v7432 = vadd.f32 0.0, %v7431
      %7433 = vmatmul.bf16.gmra.mxu0 %v7342
      %v7434 = vpop.f32.mrf.mxu0
      %v7435 = vadd.f32 0.0, %v7434
      %v7436 = vpop.f32.mrf.mxu0
      %v7437 = vadd.f32 0.0, %v7436
      %7438 = vmatmul.bf16.gmra.mxu0 %v7345
      %v7439 = vpop.f32.mrf.mxu0
      %v7440 = vadd.f32 0.0, %v7439
      %v7441 = vpop.f32.mrf.mxu0
      %v7442 = vadd.f32 0.0, %v7441
      %7443 = vmatmul.bf16.gmra.mxu0 %v7348
      %v7444 = vpop.f32.mrf.mxu0
      %v7445 = vadd.f32 0.0, %v7444
      %v7446 = vpop.f32.mrf.mxu0
      %v7447 = vadd.f32 0.0, %v7446
      %7448 = vdwg.mxu0
      %v7449 = vadd.f32 %v7189, %v7360
      %v7450 = vadd.f32 %v7190, %v7362
      %v7451 = vadd.f32 %v7191, %v7365
      %v7452 = vadd.f32 %v7192, %v7367
      %v7453 = vadd.f32 %v7193, %v7370
      %v7454 = vadd.f32 %v7194, %v7372
      %v7455 = vadd.f32 %v7195, %v7375
      %v7456 = vadd.f32 %v7196, %v7377
      %v7457 = vadd.f32 %v7197, %v7380
      %v7458 = vadd.f32 %v7198, %v7382
      %v7459 = vadd.f32 %v7199, %v7385
      %v7460 = vadd.f32 %v7200, %v7387
      %v7461 = vadd.f32 %v7201, %v7390
      %v7462 = vadd.f32 %v7202, %v7392
      %v7463 = vadd.f32 %v7203, %v7395
      %v7464 = vadd.f32 %v7204, %v7397
      %v7465 = vadd.f32 %v7205, %v7400
      %v7466 = vadd.f32 %v7206, %v7402
      %v7467 = vadd.f32 %v7207, %v7405
      %v7468 = vadd.f32 %v7208, %v7407
      %v7469 = vadd.f32 %v7209, %v7410
      %v7470 = vadd.f32 %v7210, %v7412
      %v7471 = vadd.f32 %v7211, %v7415
      %v7472 = vadd.f32 %v7212, %v7417
      %v7473 = vadd.f32 %v7213, %v7420
      %v7474 = vadd.f32 %v7214, %v7422
      %v7475 = vadd.f32 %v7215, %v7425
      %v7476 = vadd.f32 %v7216, %v7427
      %v7477 = vadd.f32 %v7217, %v7430
      %v7478 = vadd.f32 %v7218, %v7432
      %v7479 = vadd.f32 %v7219, %v7435
      %v7480 = vadd.f32 %v7220, %v7437
      %v7481 = vadd.f32 %v7221, %v7440
      %v7482 = vadd.f32 %v7222, %v7442
      %v7483 = vadd.f32 %v7223, %v7445
      %v7484 = vadd.f32 %v7224, %v7447
      %s7485 = scalar_lea.vmem [#allocation2], 344
      %v7486 = vld [vmem:[%s7485] sm:$0xff]
      %v7487 = vld [vmem:[%s7485 + $0x8] sm:$0xff]
      %v7488 = vld [vmem:[%s7485 + $0x10] sm:$0xff]
      %v7489 = vld [vmem:[%s7485 + $0x18] sm:$0xff]
      %v7490 = vld [vmem:[%s7485 + $0x20] sm:$0xff]
      %v7491 = vld [vmem:[%s7485 + $0x28] sm:$0xff]
      %v7492 = vld [vmem:[%s7485 + $0x30] sm:$0xff]
      %v7493 = vld [vmem:[%s7485 + $0x38] sm:$0xff]
      %v7494 = vld [vmem:[%s7485 + $0x40] sm:$0xff]
      %v7495 = vld [vmem:[%s7485 + $0x48] sm:$0xff]
      %v7496 = vld [vmem:[%s7485 + $0x50] sm:$0xff]
      %v7497 = vld [vmem:[%s7485 + $0x58] sm:$0xff]
      %v7498 = vld [vmem:[%s7485 + $0x60] sm:$0xff]
      %v7499 = vld [vmem:[%s7485 + $0x68] sm:$0xff]
      %v7500 = vld [vmem:[%s7485 + $0x70] sm:$0xff]
      %v7501 = vld [vmem:[%s7485 + $0x78] sm:$0xff]
      %v7502 = vld [vmem:[%s7485 + $0x80] sm:$0xff]
      %v7503 = vld [vmem:[%s7485 + $0x88] sm:$0xff]
      %v7504 = vld [vmem:[%s7485 + $0x90] sm:$0xff]
      %v7505 = vld [vmem:[%s7485 + $0x98] sm:$0xff]
      %v7506 = vld [vmem:[%s7485 + $0xa0] sm:$0xff]
      %v7507 = vld [vmem:[%s7485 + $0xa8] sm:$0xff]
      %v7508 = vld [vmem:[%s7485 + $0xb0] sm:$0xff]
      %v7509 = vld [vmem:[%s7485 + $0xb8] sm:$0xff]
      %v7510 = vld [vmem:[%s7485 + $0xc0] sm:$0xff]
      %v7511 = vld [vmem:[%s7485 + $0xc8] sm:$0xff]
      %v7512 = vld [vmem:[%s7485 + $0xd0] sm:$0xff]
      %v7513 = vld [vmem:[%s7485 + $0xd8] sm:$0xff]
      %v7514 = vld [vmem:[%s7485 + $0xe0] sm:$0xff]
      %v7515 = vld [vmem:[%s7485 + $0xe8] sm:$0xff]
      %v7516 = vld [vmem:[%s7485 + $0xf0] sm:$0xff]
      %v7517 = vld [vmem:[%s7485 + $0xf8] sm:$0xff]
      %v7518 = vld [vmem:[%s7485 + $0x100] sm:$0xff]
      %v7519 = vld [vmem:[%s7485 + $0x108] sm:$0xff]
      %v7520 = vld [vmem:[%s7485 + $0x110] sm:$0xff]
      %v7521 = vld [vmem:[%s7485 + $0x118] sm:$0xff]
      %v7522 = vpack.c.bf16 %v7487, %v7486
      %v7523 = vpack.c.bf16 %v7489, %v7488
      %v7524 = vpack.c.bf16 %v7491, %v7490
      %v7525 = vpack.c.bf16 %v7493, %v7492
      %v7526 = vpack.c.bf16 %v7495, %v7494
      %v7527 = vpack.c.bf16 %v7497, %v7496
      %v7528 = vpack.c.bf16 %v7499, %v7498
      %v7529 = vpack.c.bf16 %v7501, %v7500
      %v7530 = vpack.c.bf16 %v7503, %v7502
      %v7531 = vpack.c.bf16 %v7505, %v7504
      %v7532 = vpack.c.bf16 %v7507, %v7506
      %v7533 = vpack.c.bf16 %v7509, %v7508
      %v7534 = vpack.c.bf16 %v7511, %v7510
      %v7535 = vpack.c.bf16 %v7513, %v7512
      %v7536 = vpack.c.bf16 %v7515, %v7514
      %v7537 = vpack.c.bf16 %v7517, %v7516
      %v7538 = vpack.c.bf16 %v7519, %v7518
      %v7539 = vpack.c.bf16 %v7521, %v7520
      %s7540 = scalar_lea.vmem %s2, 144
      %v7541 = vld [vmem:[%s7540] sm:$0xf]
      %v7542 = vld [vmem:[%s7540 + $0x4] sm:$0xf]
      %v7543 = vld [vmem:[%s7540 + $0x8] sm:$0xf]
      %v7544 = vld [vmem:[%s7540 + $0xc] sm:$0xf]
      %v7549 = vunpack.c.l.b16 %v7541
      %v7550 = vunpack.c.l.b16 %v7542
      %v7551 = vunpack.c.l.b16 %v7543
      %v7552 = vunpack.c.l.b16 %v7544
      %v7553 = vpack.c.b16 %v7550, %v7549
      %v7554 = vpack.c.b16 %v7552, %v7551
      %v7558 = vsel %vm601, %v7522, 0
      %v7561 = vsel %vm601, %v7523, 0
      %v7564 = vsel %vm601, %v7524, 0
      %v7567 = vsel %vm601, %v7525, 0
      %v7570 = vsel %vm601, %v7526, 0
      %v7573 = vsel %vm601, %v7527, 0
      %v7576 = vsel %vm601, %v7528, 0
      %v7579 = vsel %vm601, %v7529, 0
      %v7582 = vsel %vm601, %v7530, 0
      %v7585 = vsel %vm601, %v7531, 0
      %v7588 = vsel %vm601, %v7532, 0
      %v7591 = vsel %vm601, %v7533, 0
      %v7594 = vsel %vm601, %v7534, 0
      %v7597 = vsel %vm601, %v7535, 0
      %v7600 = vsel %vm601, %v7536, 0
      %v7603 = vsel %vm601, %v7537, 0
      %v7606 = vsel %vm601, %v7538, 0
      %v7609 = vsel %vm601, %v7539, 0
      %7611 = vmatpush.bf16.msra.mxu0 0
      %7612 = vmatpush.bf16.msra.mxu0 0
      %7613 = vmatpush.bf16.msra.mxu0 0
      %7614 = vmatpush.bf16.msra.mxu0 0
      %7615 = vmatpush.bf16.msra.mxu0 0
      %7616 = vmatpush.bf16.msra.mxu0 0
      %7617 = vmatpush.bf16.msra.mxu0 %v7554
      %7618 = vmatpush.bf16.msra.mxu0 %v7553
      %7619 = vmatmul.bf16.gmra.mxu0 %v7558
      %v7620 = vpop.f32.mrf.mxu0
      %v7621 = vadd.f32 0.0, %v7620
      %v7622 = vpop.f32.mrf.mxu0
      %v7623 = vadd.f32 0.0, %v7622
      %7624 = vmatmul.bf16.gmra.mxu0 %v7561
      %v7625 = vpop.f32.mrf.mxu0
      %v7626 = vadd.f32 0.0, %v7625
      %v7627 = vpop.f32.mrf.mxu0
      %v7628 = vadd.f32 0.0, %v7627
      %7629 = vmatmul.bf16.gmra.mxu0 %v7564
      %v7630 = vpop.f32.mrf.mxu0
      %v7631 = vadd.f32 0.0, %v7630
      %v7632 = vpop.f32.mrf.mxu0
      %v7633 = vadd.f32 0.0, %v7632
      %7634 = vmatmul.bf16.gmra.mxu0 %v7567
      %v7635 = vpop.f32.mrf.mxu0
      %v7636 = vadd.f32 0.0, %v7635
      %v7637 = vpop.f32.mrf.mxu0
      %v7638 = vadd.f32 0.0, %v7637
      %7639 = vmatmul.bf16.gmra.mxu0 %v7570
      %v7640 = vpop.f32.mrf.mxu0
      %v7641 = vadd.f32 0.0, %v7640
      %v7642 = vpop.f32.mrf.mxu0
      %v7643 = vadd.f32 0.0, %v7642
      %7644 = vmatmul.bf16.gmra.mxu0 %v7573
      %v7645 = vpop.f32.mrf.mxu0
      %v7646 = vadd.f32 0.0, %v7645
      %v7647 = vpop.f32.mrf.mxu0
      %v7648 = vadd.f32 0.0, %v7647
      %7649 = vmatmul.bf16.gmra.mxu0 %v7576
      %v7650 = vpop.f32.mrf.mxu0
      %v7651 = vadd.f32 0.0, %v7650
      %v7652 = vpop.f32.mrf.mxu0
      %v7653 = vadd.f32 0.0, %v7652
      %7654 = vmatmul.bf16.gmra.mxu0 %v7579
      %v7655 = vpop.f32.mrf.mxu0
      %v7656 = vadd.f32 0.0, %v7655
      %v7657 = vpop.f32.mrf.mxu0
      %v7658 = vadd.f32 0.0, %v7657
      %7659 = vmatmul.bf16.gmra.mxu0 %v7582
      %v7660 = vpop.f32.mrf.mxu0
      %v7661 = vadd.f32 0.0, %v7660
      %v7662 = vpop.f32.mrf.mxu0
      %v7663 = vadd.f32 0.0, %v7662
      %7664 = vmatmul.bf16.gmra.mxu0 %v7585
      %v7665 = vpop.f32.mrf.mxu0
      %v7666 = vadd.f32 0.0, %v7665
      %v7667 = vpop.f32.mrf.mxu0
      %v7668 = vadd.f32 0.0, %v7667
      %7669 = vmatmul.bf16.gmra.mxu0 %v7588
      %v7670 = vpop.f32.mrf.mxu0
      %v7671 = vadd.f32 0.0, %v7670
      %v7672 = vpop.f32.mrf.mxu0
      %v7673 = vadd.f32 0.0, %v7672
      %7674 = vmatmul.bf16.gmra.mxu0 %v7591
      %v7675 = vpop.f32.mrf.mxu0
      %v7676 = vadd.f32 0.0, %v7675
      %v7677 = vpop.f32.mrf.mxu0
      %v7678 = vadd.f32 0.0, %v7677
      %7679 = vmatmul.bf16.gmra.mxu0 %v7594
      %v7680 = vpop.f32.mrf.mxu0
      %v7681 = vadd.f32 0.0, %v7680
      %v7682 = vpop.f32.mrf.mxu0
      %v7683 = vadd.f32 0.0, %v7682
      %7684 = vmatmul.bf16.gmra.mxu0 %v7597
      %v7685 = vpop.f32.mrf.mxu0
      %v7686 = vadd.f32 0.0, %v7685
      %v7687 = vpop.f32.mrf.mxu0
      %v7688 = vadd.f32 0.0, %v7687
      %7689 = vmatmul.bf16.gmra.mxu0 %v7600
      %v7690 = vpop.f32.mrf.mxu0
      %v7691 = vadd.f32 0.0, %v7690
      %v7692 = vpop.f32.mrf.mxu0
      %v7693 = vadd.f32 0.0, %v7692
      %7694 = vmatmul.bf16.gmra.mxu0 %v7603
      %v7695 = vpop.f32.mrf.mxu0
      %v7696 = vadd.f32 0.0, %v7695
      %v7697 = vpop.f32.mrf.mxu0
      %v7698 = vadd.f32 0.0, %v7697
      %7699 = vmatmul.bf16.gmra.mxu0 %v7606
      %v7700 = vpop.f32.mrf.mxu0
      %v7701 = vadd.f32 0.0, %v7700
      %v7702 = vpop.f32.mrf.mxu0
      %v7703 = vadd.f32 0.0, %v7702
      %7704 = vmatmul.bf16.gmra.mxu0 %v7609
      %v7705 = vpop.f32.mrf.mxu0
      %v7706 = vadd.f32 0.0, %v7705
      %v7707 = vpop.f32.mrf.mxu0
      %v7708 = vadd.f32 0.0, %v7707
      %7709 = vdwg.mxu0
      %v7710 = vadd.f32 %v7449, %v7621
      %v7711 = vadd.f32 %v7450, %v7623
      %v7712 = vadd.f32 %v7451, %v7626
      %v7713 = vadd.f32 %v7452, %v7628
      %v7714 = vadd.f32 %v7453, %v7631
      %v7715 = vadd.f32 %v7454, %v7633
      %v7716 = vadd.f32 %v7455, %v7636
      %v7717 = vadd.f32 %v7456, %v7638
      %v7718 = vadd.f32 %v7457, %v7641
      %v7719 = vadd.f32 %v7458, %v7643
      %v7720 = vadd.f32 %v7459, %v7646
      %v7721 = vadd.f32 %v7460, %v7648
      %v7722 = vadd.f32 %v7461, %v7651
      %v7723 = vadd.f32 %v7462, %v7653
      %v7724 = vadd.f32 %v7463, %v7656
      %v7725 = vadd.f32 %v7464, %v7658
      %v7726 = vadd.f32 %v7465, %v7661
      %v7727 = vadd.f32 %v7466, %v7663
      %v7728 = vadd.f32 %v7467, %v7666
      %v7729 = vadd.f32 %v7468, %v7668
      %v7730 = vadd.f32 %v7469, %v7671
      %v7731 = vadd.f32 %v7470, %v7673
      %v7732 = vadd.f32 %v7471, %v7676
      %v7733 = vadd.f32 %v7472, %v7678
      %v7734 = vadd.f32 %v7473, %v7681
      %v7735 = vadd.f32 %v7474, %v7683
      %v7736 = vadd.f32 %v7475, %v7686
      %v7737 = vadd.f32 %v7476, %v7688
      %v7738 = vadd.f32 %v7477, %v7691
      %v7739 = vadd.f32 %v7478, %v7693
      %v7740 = vadd.f32 %v7479, %v7696
      %v7741 = vadd.f32 %v7480, %v7698
      %v7742 = vadd.f32 %v7481, %v7701
      %v7743 = vadd.f32 %v7482, %v7703
      %v7744 = vadd.f32 %v7483, %v7706
      %v7745 = vadd.f32 %v7484, %v7708
      %v7746 = vld [vmem:[%s7485 + $0x1] sm:$0xff]
      %v7747 = vld [vmem:[%s7485 + $0x9] sm:$0xff]
      %v7748 = vld [vmem:[%s7485 + $0x11] sm:$0xff]
      %v7749 = vld [vmem:[%s7485 + $0x19] sm:$0xff]
      %v7750 = vld [vmem:[%s7485 + $0x21] sm:$0xff]
      %v7751 = vld [vmem:[%s7485 + $0x29] sm:$0xff]
      %v7752 = vld [vmem:[%s7485 + $0x31] sm:$0xff]
      %v7753 = vld [vmem:[%s7485 + $0x39] sm:$0xff]
      %v7754 = vld [vmem:[%s7485 + $0x41] sm:$0xff]
      %v7755 = vld [vmem:[%s7485 + $0x49] sm:$0xff]
      %v7756 = vld [vmem:[%s7485 + $0x51] sm:$0xff]
      %v7757 = vld [vmem:[%s7485 + $0x59] sm:$0xff]
      %v7758 = vld [vmem:[%s7485 + $0x61] sm:$0xff]
      %v7759 = vld [vmem:[%s7485 + $0x69] sm:$0xff]
      %v7760 = vld [vmem:[%s7485 + $0x71] sm:$0xff]
      %v7761 = vld [vmem:[%s7485 + $0x79] sm:$0xff]
      %v7762 = vld [vmem:[%s7485 + $0x81] sm:$0xff]
      %v7763 = vld [vmem:[%s7485 + $0x89] sm:$0xff]
      %v7764 = vld [vmem:[%s7485 + $0x91] sm:$0xff]
      %v7765 = vld [vmem:[%s7485 + $0x99] sm:$0xff]
      %v7766 = vld [vmem:[%s7485 + $0xa1] sm:$0xff]
      %v7767 = vld [vmem:[%s7485 + $0xa9] sm:$0xff]
      %v7768 = vld [vmem:[%s7485 + $0xb1] sm:$0xff]
      %v7769 = vld [vmem:[%s7485 + $0xb9] sm:$0xff]
      %v7770 = vld [vmem:[%s7485 + $0xc1] sm:$0xff]
      %v7771 = vld [vmem:[%s7485 + $0xc9] sm:$0xff]
      %v7772 = vld [vmem:[%s7485 + $0xd1] sm:$0xff]
      %v7773 = vld [vmem:[%s7485 + $0xd9] sm:$0xff]
      %v7774 = vld [vmem:[%s7485 + $0xe1] sm:$0xff]
      %v7775 = vld [vmem:[%s7485 + $0xe9] sm:$0xff]
      %v7776 = vld [vmem:[%s7485 + $0xf1] sm:$0xff]
      %v7777 = vld [vmem:[%s7485 + $0xf9] sm:$0xff]
      %v7778 = vld [vmem:[%s7485 + $0x101] sm:$0xff]
      %v7779 = vld [vmem:[%s7485 + $0x109] sm:$0xff]
      %v7780 = vld [vmem:[%s7485 + $0x111] sm:$0xff]
      %v7781 = vld [vmem:[%s7485 + $0x119] sm:$0xff]
      %v7782 = vpack.c.bf16 %v7747, %v7746
      %v7783 = vpack.c.bf16 %v7749, %v7748
      %v7784 = vpack.c.bf16 %v7751, %v7750
      %v7785 = vpack.c.bf16 %v7753, %v7752
      %v7786 = vpack.c.bf16 %v7755, %v7754
      %v7787 = vpack.c.bf16 %v7757, %v7756
      %v7788 = vpack.c.bf16 %v7759, %v7758
      %v7789 = vpack.c.bf16 %v7761, %v7760
      %v7790 = vpack.c.bf16 %v7763, %v7762
      %v7791 = vpack.c.bf16 %v7765, %v7764
      %v7792 = vpack.c.bf16 %v7767, %v7766
      %v7793 = vpack.c.bf16 %v7769, %v7768
      %v7794 = vpack.c.bf16 %v7771, %v7770
      %v7795 = vpack.c.bf16 %v7773, %v7772
      %v7796 = vpack.c.bf16 %v7775, %v7774
      %v7797 = vpack.c.bf16 %v7777, %v7776
      %v7798 = vpack.c.bf16 %v7779, %v7778
      %v7799 = vpack.c.bf16 %v7781, %v7780
      %s7800 = scalar_lea.vmem %s2, 160
      %v7801 = vld [vmem:[%s7800] sm:$0xf]
      %v7802 = vld [vmem:[%s7800 + $0x4] sm:$0xf]
      %v7803 = vld [vmem:[%s7800 + $0x8] sm:$0xf]
      %v7804 = vld [vmem:[%s7800 + $0xc] sm:$0xf]
      %v7809 = vunpack.c.l.b16 %v7801
      %v7810 = vunpack.c.l.b16 %v7802
      %v7811 = vunpack.c.l.b16 %v7803
      %v7812 = vunpack.c.l.b16 %v7804
      %v7813 = vpack.c.b16 %v7810, %v7809
      %v7814 = vpack.c.b16 %v7812, %v7811
      %v7818 = vsel %vm601, %v7782, 0
      %v7821 = vsel %vm601, %v7783, 0
      %v7824 = vsel %vm601, %v7784, 0
      %v7827 = vsel %vm601, %v7785, 0
      %v7830 = vsel %vm601, %v7786, 0
      %v7833 = vsel %vm601, %v7787, 0
      %v7836 = vsel %vm601, %v7788, 0
      %v7839 = vsel %vm601, %v7789, 0
      %v7842 = vsel %vm601, %v7790, 0
      %v7845 = vsel %vm601, %v7791, 0
      %v7848 = vsel %vm601, %v7792, 0
      %v7851 = vsel %vm601, %v7793, 0
      %v7854 = vsel %vm601, %v7794, 0
      %v7857 = vsel %vm601, %v7795, 0
      %v7860 = vsel %vm601, %v7796, 0
      %v7863 = vsel %vm601, %v7797, 0
      %v7866 = vsel %vm601, %v7798, 0
      %v7869 = vsel %vm601, %v7799, 0
      %7871 = vmatpush.bf16.msra.mxu0 0
      %7872 = vmatpush.bf16.msra.mxu0 0
      %7873 = vmatpush.bf16.msra.mxu0 0
      %7874 = vmatpush.bf16.msra.mxu0 0
      %7875 = vmatpush.bf16.msra.mxu0 0
      %7876 = vmatpush.bf16.msra.mxu0 0
      %7877 = vmatpush.bf16.msra.mxu0 %v7814
      %7878 = vmatpush.bf16.msra.mxu0 %v7813
      %7879 = vmatmul.bf16.gmra.mxu0 %v7818
      %v7880 = vpop.f32.mrf.mxu0
      %v7881 = vadd.f32 0.0, %v7880
      %v7882 = vpop.f32.mrf.mxu0
      %v7883 = vadd.f32 0.0, %v7882
      %7884 = vmatmul.bf16.gmra.mxu0 %v7821
      %v7885 = vpop.f32.mrf.mxu0
      %v7886 = vadd.f32 0.0, %v7885
      %v7887 = vpop.f32.mrf.mxu0
      %v7888 = vadd.f32 0.0, %v7887
      %7889 = vmatmul.bf16.gmra.mxu0 %v7824
      %v7890 = vpop.f32.mrf.mxu0
      %v7891 = vadd.f32 0.0, %v7890
      %v7892 = vpop.f32.mrf.mxu0
      %v7893 = vadd.f32 0.0, %v7892
      %7894 = vmatmul.bf16.gmra.mxu0 %v7827
      %v7895 = vpop.f32.mrf.mxu0
      %v7896 = vadd.f32 0.0, %v7895
      %v7897 = vpop.f32.mrf.mxu0
      %v7898 = vadd.f32 0.0, %v7897
      %7899 = vmatmul.bf16.gmra.mxu0 %v7830
      %v7900 = vpop.f32.mrf.mxu0
      %v7901 = vadd.f32 0.0, %v7900
      %v7902 = vpop.f32.mrf.mxu0
      %v7903 = vadd.f32 0.0, %v7902
      %7904 = vmatmul.bf16.gmra.mxu0 %v7833
      %v7905 = vpop.f32.mrf.mxu0
      %v7906 = vadd.f32 0.0, %v7905
      %v7907 = vpop.f32.mrf.mxu0
      %v7908 = vadd.f32 0.0, %v7907
      %7909 = vmatmul.bf16.gmra.mxu0 %v7836
      %v7910 = vpop.f32.mrf.mxu0
      %v7911 = vadd.f32 0.0, %v7910
      %v7912 = vpop.f32.mrf.mxu0
      %v7913 = vadd.f32 0.0, %v7912
      %7914 = vmatmul.bf16.gmra.mxu0 %v7839
      %v7915 = vpop.f32.mrf.mxu0
      %v7916 = vadd.f32 0.0, %v7915
      %v7917 = vpop.f32.mrf.mxu0
      %v7918 = vadd.f32 0.0, %v7917
      %7919 = vmatmul.bf16.gmra.mxu0 %v7842
      %v7920 = vpop.f32.mrf.mxu0
      %v7921 = vadd.f32 0.0, %v7920
      %v7922 = vpop.f32.mrf.mxu0
      %v7923 = vadd.f32 0.0, %v7922
      %7924 = vmatmul.bf16.gmra.mxu0 %v7845
      %v7925 = vpop.f32.mrf.mxu0
      %v7926 = vadd.f32 0.0, %v7925
      %v7927 = vpop.f32.mrf.mxu0
      %v7928 = vadd.f32 0.0, %v7927
      %7929 = vmatmul.bf16.gmra.mxu0 %v7848
      %v7930 = vpop.f32.mrf.mxu0
      %v7931 = vadd.f32 0.0, %v7930
      %v7932 = vpop.f32.mrf.mxu0
      %v7933 = vadd.f32 0.0, %v7932
      %7934 = vmatmul.bf16.gmra.mxu0 %v7851
      %v7935 = vpop.f32.mrf.mxu0
      %v7936 = vadd.f32 0.0, %v7935
      %v7937 = vpop.f32.mrf.mxu0
      %v7938 = vadd.f32 0.0, %v7937
      %7939 = vmatmul.bf16.gmra.mxu0 %v7854
      %v7940 = vpop.f32.mrf.mxu0
      %v7941 = vadd.f32 0.0, %v7940
      %v7942 = vpop.f32.mrf.mxu0
      %v7943 = vadd.f32 0.0, %v7942
      %7944 = vmatmul.bf16.gmra.mxu0 %v7857
      %v7945 = vpop.f32.mrf.mxu0
      %v7946 = vadd.f32 0.0, %v7945
      %v7947 = vpop.f32.mrf.mxu0
      %v7948 = vadd.f32 0.0, %v7947
      %7949 = vmatmul.bf16.gmra.mxu0 %v7860
      %v7950 = vpop.f32.mrf.mxu0
      %v7951 = vadd.f32 0.0, %v7950
      %v7952 = vpop.f32.mrf.mxu0
      %v7953 = vadd.f32 0.0, %v7952
      %7954 = vmatmul.bf16.gmra.mxu0 %v7863
      %v7955 = vpop.f32.mrf.mxu0
      %v7956 = vadd.f32 0.0, %v7955
      %v7957 = vpop.f32.mrf.mxu0
      %v7958 = vadd.f32 0.0, %v7957
      %7959 = vmatmul.bf16.gmra.mxu0 %v7866
      %v7960 = vpop.f32.mrf.mxu0
      %v7961 = vadd.f32 0.0, %v7960
      %v7962 = vpop.f32.mrf.mxu0
      %v7963 = vadd.f32 0.0, %v7962
      %7964 = vmatmul.bf16.gmra.mxu0 %v7869
      %v7965 = vpop.f32.mrf.mxu0
      %v7966 = vadd.f32 0.0, %v7965
      %v7967 = vpop.f32.mrf.mxu0
      %v7968 = vadd.f32 0.0, %v7967
      %7969 = vdwg.mxu0
      %v7970 = vadd.f32 %v7710, %v7881
      %v7971 = vadd.f32 %v7711, %v7883
      %v7972 = vadd.f32 %v7712, %v7886
      %v7973 = vadd.f32 %v7713, %v7888
      %v7974 = vadd.f32 %v7714, %v7891
      %v7975 = vadd.f32 %v7715, %v7893
      %v7976 = vadd.f32 %v7716, %v7896
      %v7977 = vadd.f32 %v7717, %v7898
      %v7978 = vadd.f32 %v7718, %v7901
      %v7979 = vadd.f32 %v7719, %v7903
      %v7980 = vadd.f32 %v7720, %v7906
      %v7981 = vadd.f32 %v7721, %v7908
      %v7982 = vadd.f32 %v7722, %v7911
      %v7983 = vadd.f32 %v7723, %v7913
      %v7984 = vadd.f32 %v7724, %v7916
      %v7985 = vadd.f32 %v7725, %v7918
      %v7986 = vadd.f32 %v7726, %v7921
      %v7987 = vadd.f32 %v7727, %v7923
      %v7988 = vadd.f32 %v7728, %v7926
      %v7989 = vadd.f32 %v7729, %v7928
      %v7990 = vadd.f32 %v7730, %v7931
      %v7991 = vadd.f32 %v7731, %v7933
      %v7992 = vadd.f32 %v7732, %v7936
      %v7993 = vadd.f32 %v7733, %v7938
      %v7994 = vadd.f32 %v7734, %v7941
      %v7995 = vadd.f32 %v7735, %v7943
      %v7996 = vadd.f32 %v7736, %v7946
      %v7997 = vadd.f32 %v7737, %v7948
      %v7998 = vadd.f32 %v7738, %v7951
      %v7999 = vadd.f32 %v7739, %v7953
      %v8000 = vadd.f32 %v7740, %v7956
      %v8001 = vadd.f32 %v7741, %v7958
      %v8002 = vadd.f32 %v7742, %v7961
      %v8003 = vadd.f32 %v7743, %v7963
      %v8004 = vadd.f32 %v7744, %v7966
      %v8005 = vadd.f32 %v7745, %v7968
      %v8006 = vld [vmem:[%s7485 + $0x2] sm:$0xff]
      %v8007 = vld [vmem:[%s7485 + $0xa] sm:$0xff]
      %v8008 = vld [vmem:[%s7485 + $0x12] sm:$0xff]
      %v8009 = vld [vmem:[%s7485 + $0x1a] sm:$0xff]
      %v8010 = vld [vmem:[%s7485 + $0x22] sm:$0xff]
      %v8011 = vld [vmem:[%s7485 + $0x2a] sm:$0xff]
      %v8012 = vld [vmem:[%s7485 + $0x32] sm:$0xff]
      %v8013 = vld [vmem:[%s7485 + $0x3a] sm:$0xff]
      %v8014 = vld [vmem:[%s7485 + $0x42] sm:$0xff]
      %v8015 = vld [vmem:[%s7485 + $0x4a] sm:$0xff]
      %v8016 = vld [vmem:[%s7485 + $0x52] sm:$0xff]
      %v8017 = vld [vmem:[%s7485 + $0x5a] sm:$0xff]
      %v8018 = vld [vmem:[%s7485 + $0x62] sm:$0xff]
      %v8019 = vld [vmem:[%s7485 + $0x6a] sm:$0xff]
      %v8020 = vld [vmem:[%s7485 + $0x72] sm:$0xff]
      %v8021 = vld [vmem:[%s7485 + $0x7a] sm:$0xff]
      %v8022 = vld [vmem:[%s7485 + $0x82] sm:$0xff]
      %v8023 = vld [vmem:[%s7485 + $0x8a] sm:$0xff]
      %v8024 = vld [vmem:[%s7485 + $0x92] sm:$0xff]
      %v8025 = vld [vmem:[%s7485 + $0x9a] sm:$0xff]
      %v8026 = vld [vmem:[%s7485 + $0xa2] sm:$0xff]
      %v8027 = vld [vmem:[%s7485 + $0xaa] sm:$0xff]
      %v8028 = vld [vmem:[%s7485 + $0xb2] sm:$0xff]
      %v8029 = vld [vmem:[%s7485 + $0xba] sm:$0xff]
      %v8030 = vld [vmem:[%s7485 + $0xc2] sm:$0xff]
      %v8031 = vld [vmem:[%s7485 + $0xca] sm:$0xff]
      %v8032 = vld [vmem:[%s7485 + $0xd2] sm:$0xff]
      %v8033 = vld [vmem:[%s7485 + $0xda] sm:$0xff]
      %v8034 = vld [vmem:[%s7485 + $0xe2] sm:$0xff]
      %v8035 = vld [vmem:[%s7485 + $0xea] sm:$0xff]
      %v8036 = vld [vmem:[%s7485 + $0xf2] sm:$0xff]
      %v8037 = vld [vmem:[%s7485 + $0xfa] sm:$0xff]
      %v8038 = vld [vmem:[%s7485 + $0x102] sm:$0xff]
      %v8039 = vld [vmem:[%s7485 + $0x10a] sm:$0xff]
      %v8040 = vld [vmem:[%s7485 + $0x112] sm:$0xff]
      %v8041 = vld [vmem:[%s7485 + $0x11a] sm:$0xff]
      %v8042 = vpack.c.bf16 %v8007, %v8006
      %v8043 = vpack.c.bf16 %v8009, %v8008
      %v8044 = vpack.c.bf16 %v8011, %v8010
      %v8045 = vpack.c.bf16 %v8013, %v8012
      %v8046 = vpack.c.bf16 %v8015, %v8014
      %v8047 = vpack.c.bf16 %v8017, %v8016
      %v8048 = vpack.c.bf16 %v8019, %v8018
      %v8049 = vpack.c.bf16 %v8021, %v8020
      %v8050 = vpack.c.bf16 %v8023, %v8022
      %v8051 = vpack.c.bf16 %v8025, %v8024
      %v8052 = vpack.c.bf16 %v8027, %v8026
      %v8053 = vpack.c.bf16 %v8029, %v8028
      %v8054 = vpack.c.bf16 %v8031, %v8030
      %v8055 = vpack.c.bf16 %v8033, %v8032
      %v8056 = vpack.c.bf16 %v8035, %v8034
      %v8057 = vpack.c.bf16 %v8037, %v8036
      %v8058 = vpack.c.bf16 %v8039, %v8038
      %v8059 = vpack.c.bf16 %v8041, %v8040
      %s8060 = scalar_lea.vmem %s2, 176
      %v8061 = vld [vmem:[%s8060] sm:$0xf]
      %v8062 = vld [vmem:[%s8060 + $0x4] sm:$0xf]
      %v8063 = vld [vmem:[%s8060 + $0x8] sm:$0xf]
      %v8064 = vld [vmem:[%s8060 + $0xc] sm:$0xf]
      %v8069 = vunpack.c.l.b16 %v8061
      %v8070 = vunpack.c.l.b16 %v8062
      %v8071 = vunpack.c.l.b16 %v8063
      %v8072 = vunpack.c.l.b16 %v8064
      %v8073 = vpack.c.b16 %v8070, %v8069
      %v8074 = vpack.c.b16 %v8072, %v8071
      %v8078 = vsel %vm601, %v8042, 0
      %v8081 = vsel %vm601, %v8043, 0
      %v8084 = vsel %vm601, %v8044, 0
      %v8087 = vsel %vm601, %v8045, 0
      %v8090 = vsel %vm601, %v8046, 0
      %v8093 = vsel %vm601, %v8047, 0
      %v8096 = vsel %vm601, %v8048, 0
      %v8099 = vsel %vm601, %v8049, 0
      %v8102 = vsel %vm601, %v8050, 0
      %v8105 = vsel %vm601, %v8051, 0
      %v8108 = vsel %vm601, %v8052, 0
      %v8111 = vsel %vm601, %v8053, 0
      %v8114 = vsel %vm601, %v8054, 0
      %v8117 = vsel %vm601, %v8055, 0
      %v8120 = vsel %vm601, %v8056, 0
      %v8123 = vsel %vm601, %v8057, 0
      %v8126 = vsel %vm601, %v8058, 0
      %v8129 = vsel %vm601, %v8059, 0
      %8131 = vmatpush.bf16.msra.mxu0 0
      %8132 = vmatpush.bf16.msra.mxu0 0
      %8133 = vmatpush.bf16.msra.mxu0 0
      %8134 = vmatpush.bf16.msra.mxu0 0
      %8135 = vmatpush.bf16.msra.mxu0 0
      %8136 = vmatpush.bf16.msra.mxu0 0
      %8137 = vmatpush.bf16.msra.mxu0 %v8074
      %8138 = vmatpush.bf16.msra.mxu0 %v8073
      %8139 = vmatmul.bf16.gmra.mxu0 %v8078
      %v8140 = vpop.f32.mrf.mxu0
      %v8141 = vadd.f32 0.0, %v8140
      %v8142 = vpop.f32.mrf.mxu0
      %v8143 = vadd.f32 0.0, %v8142
      %8144 = vmatmul.bf16.gmra.mxu0 %v8081
      %v8145 = vpop.f32.mrf.mxu0
      %v8146 = vadd.f32 0.0, %v8145
      %v8147 = vpop.f32.mrf.mxu0
      %v8148 = vadd.f32 0.0, %v8147
      %8149 = vmatmul.bf16.gmra.mxu0 %v8084
      %v8150 = vpop.f32.mrf.mxu0
      %v8151 = vadd.f32 0.0, %v8150
      %v8152 = vpop.f32.mrf.mxu0
      %v8153 = vadd.f32 0.0, %v8152
      %8154 = vmatmul.bf16.gmra.mxu0 %v8087
      %v8155 = vpop.f32.mrf.mxu0
      %v8156 = vadd.f32 0.0, %v8155
      %v8157 = vpop.f32.mrf.mxu0
      %v8158 = vadd.f32 0.0, %v8157
      %8159 = vmatmul.bf16.gmra.mxu0 %v8090
      %v8160 = vpop.f32.mrf.mxu0
      %v8161 = vadd.f32 0.0, %v8160
      %v8162 = vpop.f32.mrf.mxu0
      %v8163 = vadd.f32 0.0, %v8162
      %8164 = vmatmul.bf16.gmra.mxu0 %v8093
      %v8165 = vpop.f32.mrf.mxu0
      %v8166 = vadd.f32 0.0, %v8165
      %v8167 = vpop.f32.mrf.mxu0
      %v8168 = vadd.f32 0.0, %v8167
      %8169 = vmatmul.bf16.gmra.mxu0 %v8096
      %v8170 = vpop.f32.mrf.mxu0
      %v8171 = vadd.f32 0.0, %v8170
      %v8172 = vpop.f32.mrf.mxu0
      %v8173 = vadd.f32 0.0, %v8172
      %8174 = vmatmul.bf16.gmra.mxu0 %v8099
      %v8175 = vpop.f32.mrf.mxu0
      %v8176 = vadd.f32 0.0, %v8175
      %v8177 = vpop.f32.mrf.mxu0
      %v8178 = vadd.f32 0.0, %v8177
      %8179 = vmatmul.bf16.gmra.mxu0 %v8102
      %v8180 = vpop.f32.mrf.mxu0
      %v8181 = vadd.f32 0.0, %v8180
      %v8182 = vpop.f32.mrf.mxu0
      %v8183 = vadd.f32 0.0, %v8182
      %8184 = vmatmul.bf16.gmra.mxu0 %v8105
      %v8185 = vpop.f32.mrf.mxu0
      %v8186 = vadd.f32 0.0, %v8185
      %v8187 = vpop.f32.mrf.mxu0
      %v8188 = vadd.f32 0.0, %v8187
      %8189 = vmatmul.bf16.gmra.mxu0 %v8108
      %v8190 = vpop.f32.mrf.mxu0
      %v8191 = vadd.f32 0.0, %v8190
      %v8192 = vpop.f32.mrf.mxu0
      %v8193 = vadd.f32 0.0, %v8192
      %8194 = vmatmul.bf16.gmra.mxu0 %v8111
      %v8195 = vpop.f32.mrf.mxu0
      %v8196 = vadd.f32 0.0, %v8195
      %v8197 = vpop.f32.mrf.mxu0
      %v8198 = vadd.f32 0.0, %v8197
      %8199 = vmatmul.bf16.gmra.mxu0 %v8114
      %v8200 = vpop.f32.mrf.mxu0
      %v8201 = vadd.f32 0.0, %v8200
      %v8202 = vpop.f32.mrf.mxu0
      %v8203 = vadd.f32 0.0, %v8202
      %8204 = vmatmul.bf16.gmra.mxu0 %v8117
      %v8205 = vpop.f32.mrf.mxu0
      %v8206 = vadd.f32 0.0, %v8205
      %v8207 = vpop.f32.mrf.mxu0
      %v8208 = vadd.f32 0.0, %v8207
      %8209 = vmatmul.bf16.gmra.mxu0 %v8120
      %v8210 = vpop.f32.mrf.mxu0
      %v8211 = vadd.f32 0.0, %v8210
      %v8212 = vpop.f32.mrf.mxu0
      %v8213 = vadd.f32 0.0, %v8212
      %8214 = vmatmul.bf16.gmra.mxu0 %v8123
      %v8215 = vpop.f32.mrf.mxu0
      %v8216 = vadd.f32 0.0, %v8215
      %v8217 = vpop.f32.mrf.mxu0
      %v8218 = vadd.f32 0.0, %v8217
      %8219 = vmatmul.bf16.gmra.mxu0 %v8126
      %v8220 = vpop.f32.mrf.mxu0
      %v8221 = vadd.f32 0.0, %v8220
      %v8222 = vpop.f32.mrf.mxu0
      %v8223 = vadd.f32 0.0, %v8222
      %8224 = vmatmul.bf16.gmra.mxu0 %v8129
      %v8225 = vpop.f32.mrf.mxu0
      %v8226 = vadd.f32 0.0, %v8225
      %v8227 = vpop.f32.mrf.mxu0
      %v8228 = vadd.f32 0.0, %v8227
      %8229 = vdwg.mxu0
      %v8230 = vadd.f32 %v7970, %v8141
      %v8231 = vadd.f32 %v7971, %v8143
      %v8232 = vadd.f32 %v7972, %v8146
      %v8233 = vadd.f32 %v7973, %v8148
      %v8234 = vadd.f32 %v7974, %v8151
      %v8235 = vadd.f32 %v7975, %v8153
      %v8236 = vadd.f32 %v7976, %v8156
      %v8237 = vadd.f32 %v7977, %v8158
      %v8238 = vadd.f32 %v7978, %v8161
      %v8239 = vadd.f32 %v7979, %v8163
      %v8240 = vadd.f32 %v7980, %v8166
      %v8241 = vadd.f32 %v7981, %v8168
      %v8242 = vadd.f32 %v7982, %v8171
      %v8243 = vadd.f32 %v7983, %v8173
      %v8244 = vadd.f32 %v7984, %v8176
      %v8245 = vadd.f32 %v7985, %v8178
      %v8246 = vadd.f32 %v7986, %v8181
      %v8247 = vadd.f32 %v7987, %v8183
      %v8248 = vadd.f32 %v7988, %v8186
      %v8249 = vadd.f32 %v7989, %v8188
      %v8250 = vadd.f32 %v7990, %v8191
      %v8251 = vadd.f32 %v7991, %v8193
      %v8252 = vadd.f32 %v7992, %v8196
      %v8253 = vadd.f32 %v7993, %v8198
      %v8254 = vadd.f32 %v7994, %v8201
      %v8255 = vadd.f32 %v7995, %v8203
      %v8256 = vadd.f32 %v7996, %v8206
      %v8257 = vadd.f32 %v7997, %v8208
      %v8258 = vadd.f32 %v7998, %v8211
      %v8259 = vadd.f32 %v7999, %v8213
      %v8260 = vadd.f32 %v8000, %v8216
      %v8261 = vadd.f32 %v8001, %v8218
      %v8262 = vadd.f32 %v8002, %v8221
      %v8263 = vadd.f32 %v8003, %v8223
      %v8264 = vadd.f32 %v8004, %v8226
      %v8265 = vadd.f32 %v8005, %v8228
      %v8266 = vld [vmem:[%s7485 + $0x12] sm:$0xff]
      %v8267 = vld [vmem:[%s7485 + $0x1a] sm:$0xff]
      %v8268 = vld [vmem:[%s7485 + $0x22] sm:$0xff]
      %v8269 = vld [vmem:[%s7485 + $0x2a] sm:$0xff]
      %v8270 = vld [vmem:[%s7485 + $0x32] sm:$0xff]
      %v8271 = vld [vmem:[%s7485 + $0x3a] sm:$0xff]
      %v8272 = vld [vmem:[%s7485 + $0x42] sm:$0xff]
      %v8273 = vld [vmem:[%s7485 + $0x4a] sm:$0xff]
      %v8274 = vld [vmem:[%s7485 + $0x52] sm:$0xff]
      %v8275 = vld [vmem:[%s7485 + $0x5a] sm:$0xff]
      %v8276 = vld [vmem:[%s7485 + $0x62] sm:$0xff]
      %v8277 = vld [vmem:[%s7485 + $0x6a] sm:$0xff]
      %v8278 = vld [vmem:[%s7485 + $0x72] sm:$0xff]
      %v8279 = vld [vmem:[%s7485 + $0x7a] sm:$0xff]
      %v8280 = vld [vmem:[%s7485 + $0x82] sm:$0xff]
      %v8281 = vld [vmem:[%s7485 + $0x8a] sm:$0xff]
      %v8282 = vld [vmem:[%s7485 + $0x92] sm:$0xff]
      %v8283 = vld [vmem:[%s7485 + $0x9a] sm:$0xff]
      %v8284 = vld [vmem:[%s7485 + $0xa2] sm:$0xff]
      %v8285 = vld [vmem:[%s7485 + $0xaa] sm:$0xff]
      %v8286 = vld [vmem:[%s7485 + $0xb2] sm:$0xff]
      %v8287 = vld [vmem:[%s7485 + $0xba] sm:$0xff]
      %v8288 = vld [vmem:[%s7485 + $0xc2] sm:$0xff]
      %v8289 = vld [vmem:[%s7485 + $0xca] sm:$0xff]
      %v8290 = vld [vmem:[%s7485 + $0xd2] sm:$0xff]
      %v8291 = vld [vmem:[%s7485 + $0xda] sm:$0xff]
      %v8292 = vld [vmem:[%s7485 + $0xe2] sm:$0xff]
      %v8293 = vld [vmem:[%s7485 + $0xea] sm:$0xff]
      %v8294 = vld [vmem:[%s7485 + $0xf2] sm:$0xff]
      %v8295 = vld [vmem:[%s7485 + $0xfa] sm:$0xff]
      %v8296 = vld [vmem:[%s7485 + $0x102] sm:$0xff]
      %v8297 = vld [vmem:[%s7485 + $0x10a] sm:$0xff]
      %v8298 = vld [vmem:[%s7485 + $0x112] sm:$0xff]
      %v8299 = vld [vmem:[%s7485 + $0x11a] sm:$0xff]
      %v8300 = vld [vmem:[%s7485 + $0x122] sm:$0xff]
      %v8301 = vld [vmem:[%s7485 + $0x12a] sm:$0xff]
      %v8302 = vpack.c.bf16 %v8267, %v8266
      %v8303 = vpack.c.bf16 %v8269, %v8268
      %v8304 = vpack.c.bf16 %v8271, %v8270
      %v8305 = vpack.c.bf16 %v8273, %v8272
      %v8306 = vpack.c.bf16 %v8275, %v8274
      %v8307 = vpack.c.bf16 %v8277, %v8276
      %v8308 = vpack.c.bf16 %v8279, %v8278
      %v8309 = vpack.c.bf16 %v8281, %v8280
      %v8310 = vpack.c.bf16 %v8283, %v8282
      %v8311 = vpack.c.bf16 %v8285, %v8284
      %v8312 = vpack.c.bf16 %v8287, %v8286
      %v8313 = vpack.c.bf16 %v8289, %v8288
      %v8314 = vpack.c.bf16 %v8291, %v8290
      %v8315 = vpack.c.bf16 %v8293, %v8292
      %v8316 = vpack.c.bf16 %v8295, %v8294
      %v8317 = vpack.c.bf16 %v8297, %v8296
      %v8318 = vpack.c.bf16 %v8299, %v8298
      %v8319 = vpack.c.bf16 %v8301, %v8300
      %s8320 = scalar_lea.vmem %s2, 192
      %v8321 = vld [vmem:[%s8320] sm:$0xf]
      %v8322 = vld [vmem:[%s8320 + $0x4] sm:$0xf]
      %v8323 = vld [vmem:[%s8320 + $0x8] sm:$0xf]
      %v8324 = vld [vmem:[%s8320 + $0xc] sm:$0xf]
      %v8329 = vunpack.c.l.b16 %v8321
      %v8330 = vunpack.c.l.b16 %v8322
      %v8331 = vunpack.c.l.b16 %v8323
      %v8332 = vunpack.c.l.b16 %v8324
      %v8333 = vpack.c.b16 %v8330, %v8329
      %v8334 = vpack.c.b16 %v8332, %v8331
      %v8338 = vsel %vm601, %v8302, 0
      %v8341 = vsel %vm601, %v8303, 0
      %v8344 = vsel %vm601, %v8304, 0
      %v8347 = vsel %vm601, %v8305, 0
      %v8350 = vsel %vm601, %v8306, 0
      %v8353 = vsel %vm601, %v8307, 0
      %v8356 = vsel %vm601, %v8308, 0
      %v8359 = vsel %vm601, %v8309, 0
      %v8362 = vsel %vm601, %v8310, 0
      %v8365 = vsel %vm601, %v8311, 0
      %v8368 = vsel %vm601, %v8312, 0
      %v8371 = vsel %vm601, %v8313, 0
      %v8374 = vsel %vm601, %v8314, 0
      %v8377 = vsel %vm601, %v8315, 0
      %v8380 = vsel %vm601, %v8316, 0
      %v8383 = vsel %vm601, %v8317, 0
      %v8386 = vsel %vm601, %v8318, 0
      %v8389 = vsel %vm601, %v8319, 0
      %8391 = vmatpush.bf16.msra.mxu0 0
      %8392 = vmatpush.bf16.msra.mxu0 0
      %8393 = vmatpush.bf16.msra.mxu0 0
      %8394 = vmatpush.bf16.msra.mxu0 0
      %8395 = vmatpush.bf16.msra.mxu0 0
      %8396 = vmatpush.bf16.msra.mxu0 0
      %8397 = vmatpush.bf16.msra.mxu0 %v8334
      %8398 = vmatpush.bf16.msra.mxu0 %v8333
      %8399 = vmatmul.bf16.gmra.mxu0 %v8338
      %v8400 = vpop.f32.mrf.mxu0
      %v8401 = vadd.f32 0.0, %v8400
      %v8402 = vpop.f32.mrf.mxu0
      %v8403 = vadd.f32 0.0, %v8402
      %8404 = vmatmul.bf16.gmra.mxu0 %v8341
      %v8405 = vpop.f32.mrf.mxu0
      %v8406 = vadd.f32 0.0, %v8405
      %v8407 = vpop.f32.mrf.mxu0
      %v8408 = vadd.f32 0.0, %v8407
      %8409 = vmatmul.bf16.gmra.mxu0 %v8344
      %v8410 = vpop.f32.mrf.mxu0
      %v8411 = vadd.f32 0.0, %v8410
      %v8412 = vpop.f32.mrf.mxu0
      %v8413 = vadd.f32 0.0, %v8412
      %8414 = vmatmul.bf16.gmra.mxu0 %v8347
      %v8415 = vpop.f32.mrf.mxu0
      %v8416 = vadd.f32 0.0, %v8415
      %v8417 = vpop.f32.mrf.mxu0
      %v8418 = vadd.f32 0.0, %v8417
      %8419 = vmatmul.bf16.gmra.mxu0 %v8350
      %v8420 = vpop.f32.mrf.mxu0
      %v8421 = vadd.f32 0.0, %v8420
      %v8422 = vpop.f32.mrf.mxu0
      %v8423 = vadd.f32 0.0, %v8422
      %8424 = vmatmul.bf16.gmra.mxu0 %v8353
      %v8425 = vpop.f32.mrf.mxu0
      %v8426 = vadd.f32 0.0, %v8425
      %v8427 = vpop.f32.mrf.mxu0
      %v8428 = vadd.f32 0.0, %v8427
      %8429 = vmatmul.bf16.gmra.mxu0 %v8356
      %v8430 = vpop.f32.mrf.mxu0
      %v8431 = vadd.f32 0.0, %v8430
      %v8432 = vpop.f32.mrf.mxu0
      %v8433 = vadd.f32 0.0, %v8432
      %8434 = vmatmul.bf16.gmra.mxu0 %v8359
      %v8435 = vpop.f32.mrf.mxu0
      %v8436 = vadd.f32 0.0, %v8435
      %v8437 = vpop.f32.mrf.mxu0
      %v8438 = vadd.f32 0.0, %v8437
      %8439 = vmatmul.bf16.gmra.mxu0 %v8362
      %v8440 = vpop.f32.mrf.mxu0
      %v8441 = vadd.f32 0.0, %v8440
      %v8442 = vpop.f32.mrf.mxu0
      %v8443 = vadd.f32 0.0, %v8442
      %8444 = vmatmul.bf16.gmra.mxu0 %v8365
      %v8445 = vpop.f32.mrf.mxu0
      %v8446 = vadd.f32 0.0, %v8445
      %v8447 = vpop.f32.mrf.mxu0
      %v8448 = vadd.f32 0.0, %v8447
      %8449 = vmatmul.bf16.gmra.mxu0 %v8368
      %v8450 = vpop.f32.mrf.mxu0
      %v8451 = vadd.f32 0.0, %v8450
      %v8452 = vpop.f32.mrf.mxu0
      %v8453 = vadd.f32 0.0, %v8452
      %8454 = vmatmul.bf16.gmra.mxu0 %v8371
      %v8455 = vpop.f32.mrf.mxu0
      %v8456 = vadd.f32 0.0, %v8455
      %v8457 = vpop.f32.mrf.mxu0
      %v8458 = vadd.f32 0.0, %v8457
      %8459 = vmatmul.bf16.gmra.mxu0 %v8374
      %v8460 = vpop.f32.mrf.mxu0
      %v8461 = vadd.f32 0.0, %v8460
      %v8462 = vpop.f32.mrf.mxu0
      %v8463 = vadd.f32 0.0, %v8462
      %8464 = vmatmul.bf16.gmra.mxu0 %v8377
      %v8465 = vpop.f32.mrf.mxu0
      %v8466 = vadd.f32 0.0, %v8465
      %v8467 = vpop.f32.mrf.mxu0
      %v8468 = vadd.f32 0.0, %v8467
      %8469 = vmatmul.bf16.gmra.mxu0 %v8380
      %v8470 = vpop.f32.mrf.mxu0
      %v8471 = vadd.f32 0.0, %v8470
      %v8472 = vpop.f32.mrf.mxu0
      %v8473 = vadd.f32 0.0, %v8472
      %8474 = vmatmul.bf16.gmra.mxu0 %v8383
      %v8475 = vpop.f32.mrf.mxu0
      %v8476 = vadd.f32 0.0, %v8475
      %v8477 = vpop.f32.mrf.mxu0
      %v8478 = vadd.f32 0.0, %v8477
      %8479 = vmatmul.bf16.gmra.mxu0 %v8386
      %v8480 = vpop.f32.mrf.mxu0
      %v8481 = vadd.f32 0.0, %v8480
      %v8482 = vpop.f32.mrf.mxu0
      %v8483 = vadd.f32 0.0, %v8482
      %8484 = vmatmul.bf16.gmra.mxu0 %v8389
      %v8485 = vpop.f32.mrf.mxu0
      %v8486 = vadd.f32 0.0, %v8485
      %v8487 = vpop.f32.mrf.mxu0
      %v8488 = vadd.f32 0.0, %v8487
      %8489 = vdwg.mxu0
      %v8490 = vadd.f32 %v8230, %v8401
      %v8491 = vadd.f32 %v8231, %v8403
      %v8492 = vadd.f32 %v8232, %v8406
      %v8493 = vadd.f32 %v8233, %v8408
      %v8494 = vadd.f32 %v8234, %v8411
      %v8495 = vadd.f32 %v8235, %v8413
      %v8496 = vadd.f32 %v8236, %v8416
      %v8497 = vadd.f32 %v8237, %v8418
      %v8498 = vadd.f32 %v8238, %v8421
      %v8499 = vadd.f32 %v8239, %v8423
      %v8500 = vadd.f32 %v8240, %v8426
      %v8501 = vadd.f32 %v8241, %v8428
      %v8502 = vadd.f32 %v8242, %v8431
      %v8503 = vadd.f32 %v8243, %v8433
      %v8504 = vadd.f32 %v8244, %v8436
      %v8505 = vadd.f32 %v8245, %v8438
      %v8506 = vadd.f32 %v8246, %v8441
      %v8507 = vadd.f32 %v8247, %v8443
      %v8508 = vadd.f32 %v8248, %v8446
      %v8509 = vadd.f32 %v8249, %v8448
      %v8510 = vadd.f32 %v8250, %v8451
      %v8511 = vadd.f32 %v8251, %v8453
      %v8512 = vadd.f32 %v8252, %v8456
      %v8513 = vadd.f32 %v8253, %v8458
      %v8514 = vadd.f32 %v8254, %v8461
      %v8515 = vadd.f32 %v8255, %v8463
      %v8516 = vadd.f32 %v8256, %v8466
      %v8517 = vadd.f32 %v8257, %v8468
      %v8518 = vadd.f32 %v8258, %v8471
      %v8519 = vadd.f32 %v8259, %v8473
      %v8520 = vadd.f32 %v8260, %v8476
      %v8521 = vadd.f32 %v8261, %v8478
      %v8522 = vadd.f32 %v8262, %v8481
      %v8523 = vadd.f32 %v8263, %v8483
      %v8524 = vadd.f32 %v8264, %v8486
      %v8525 = vadd.f32 %v8265, %v8488
      %v8526 = vld [vmem:[%s7485 + $0x13] sm:$0xff]
      %v8527 = vld [vmem:[%s7485 + $0x1b] sm:$0xff]
      %v8528 = vld [vmem:[%s7485 + $0x23] sm:$0xff]
      %v8529 = vld [vmem:[%s7485 + $0x2b] sm:$0xff]
      %v8530 = vld [vmem:[%s7485 + $0x33] sm:$0xff]
      %v8531 = vld [vmem:[%s7485 + $0x3b] sm:$0xff]
      %v8532 = vld [vmem:[%s7485 + $0x43] sm:$0xff]
      %v8533 = vld [vmem:[%s7485 + $0x4b] sm:$0xff]
      %v8534 = vld [vmem:[%s7485 + $0x53] sm:$0xff]
      %v8535 = vld [vmem:[%s7485 + $0x5b] sm:$0xff]
      %v8536 = vld [vmem:[%s7485 + $0x63] sm:$0xff]
      %v8537 = vld [vmem:[%s7485 + $0x6b] sm:$0xff]
      %v8538 = vld [vmem:[%s7485 + $0x73] sm:$0xff]
      %v8539 = vld [vmem:[%s7485 + $0x7b] sm:$0xff]
      %v8540 = vld [vmem:[%s7485 + $0x83] sm:$0xff]
      %v8541 = vld [vmem:[%s7485 + $0x8b] sm:$0xff]
      %v8542 = vld [vmem:[%s7485 + $0x93] sm:$0xff]
      %v8543 = vld [vmem:[%s7485 + $0x9b] sm:$0xff]
      %v8544 = vld [vmem:[%s7485 + $0xa3] sm:$0xff]
      %v8545 = vld [vmem:[%s7485 + $0xab] sm:$0xff]
      %v8546 = vld [vmem:[%s7485 + $0xb3] sm:$0xff]
      %v8547 = vld [vmem:[%s7485 + $0xbb] sm:$0xff]
      %v8548 = vld [vmem:[%s7485 + $0xc3] sm:$0xff]
      %v8549 = vld [vmem:[%s7485 + $0xcb] sm:$0xff]
      %v8550 = vld [vmem:[%s7485 + $0xd3] sm:$0xff]
      %v8551 = vld [vmem:[%s7485 + $0xdb] sm:$0xff]
      %v8552 = vld [vmem:[%s7485 + $0xe3] sm:$0xff]
      %v8553 = vld [vmem:[%s7485 + $0xeb] sm:$0xff]
      %v8554 = vld [vmem:[%s7485 + $0xf3] sm:$0xff]
      %v8555 = vld [vmem:[%s7485 + $0xfb] sm:$0xff]
      %v8556 = vld [vmem:[%s7485 + $0x103] sm:$0xff]
      %v8557 = vld [vmem:[%s7485 + $0x10b] sm:$0xff]
      %v8558 = vld [vmem:[%s7485 + $0x113] sm:$0xff]
      %v8559 = vld [vmem:[%s7485 + $0x11b] sm:$0xff]
      %v8560 = vld [vmem:[%s7485 + $0x123] sm:$0xff]
      %v8561 = vld [vmem:[%s7485 + $0x12b] sm:$0xff]
      %v8562 = vpack.c.bf16 %v8527, %v8526
      %v8563 = vpack.c.bf16 %v8529, %v8528
      %v8564 = vpack.c.bf16 %v8531, %v8530
      %v8565 = vpack.c.bf16 %v8533, %v8532
      %v8566 = vpack.c.bf16 %v8535, %v8534
      %v8567 = vpack.c.bf16 %v8537, %v8536
      %v8568 = vpack.c.bf16 %v8539, %v8538
      %v8569 = vpack.c.bf16 %v8541, %v8540
      %v8570 = vpack.c.bf16 %v8543, %v8542
      %v8571 = vpack.c.bf16 %v8545, %v8544
      %v8572 = vpack.c.bf16 %v8547, %v8546
      %v8573 = vpack.c.bf16 %v8549, %v8548
      %v8574 = vpack.c.bf16 %v8551, %v8550
      %v8575 = vpack.c.bf16 %v8553, %v8552
      %v8576 = vpack.c.bf16 %v8555, %v8554
      %v8577 = vpack.c.bf16 %v8557, %v8556
      %v8578 = vpack.c.bf16 %v8559, %v8558
      %v8579 = vpack.c.bf16 %v8561, %v8560
      %s8580 = scalar_lea.vmem %s2, 208
      %v8581 = vld [vmem:[%s8580] sm:$0xf]
      %v8582 = vld [vmem:[%s8580 + $0x4] sm:$0xf]
      %v8583 = vld [vmem:[%s8580 + $0x8] sm:$0xf]
      %v8584 = vld [vmem:[%s8580 + $0xc] sm:$0xf]
      %v8589 = vunpack.c.l.b16 %v8581
      %v8590 = vunpack.c.l.b16 %v8582
      %v8591 = vunpack.c.l.b16 %v8583
      %v8592 = vunpack.c.l.b16 %v8584
      %v8593 = vpack.c.b16 %v8590, %v8589
      %v8594 = vpack.c.b16 %v8592, %v8591
      %v8598 = vsel %vm601, %v8562, 0
      %v8601 = vsel %vm601, %v8563, 0
      %v8604 = vsel %vm601, %v8564, 0
      %v8607 = vsel %vm601, %v8565, 0
      %v8610 = vsel %vm601, %v8566, 0
      %v8613 = vsel %vm601, %v8567, 0
      %v8616 = vsel %vm601, %v8568, 0
      %v8619 = vsel %vm601, %v8569, 0
      %v8622 = vsel %vm601, %v8570, 0
      %v8625 = vsel %vm601, %v8571, 0
      %v8628 = vsel %vm601, %v8572, 0
      %v8631 = vsel %vm601, %v8573, 0
      %v8634 = vsel %vm601, %v8574, 0
      %v8637 = vsel %vm601, %v8575, 0
      %v8640 = vsel %vm601, %v8576, 0
      %v8643 = vsel %vm601, %v8577, 0
      %v8646 = vsel %vm601, %v8578, 0
      %v8649 = vsel %vm601, %v8579, 0
      %8651 = vmatpush.bf16.msra.mxu0 0
      %8652 = vmatpush.bf16.msra.mxu0 0
      %8653 = vmatpush.bf16.msra.mxu0 0
      %8654 = vmatpush.bf16.msra.mxu0 0
      %8655 = vmatpush.bf16.msra.mxu0 0
      %8656 = vmatpush.bf16.msra.mxu0 0
      %8657 = vmatpush.bf16.msra.mxu0 %v8594
      %8658 = vmatpush.bf16.msra.mxu0 %v8593
      %8659 = vmatmul.bf16.gmra.mxu0 %v8598
      %v8660 = vpop.f32.mrf.mxu0
      %v8661 = vadd.f32 0.0, %v8660
      %v8662 = vpop.f32.mrf.mxu0
      %v8663 = vadd.f32 0.0, %v8662
      %8664 = vmatmul.bf16.gmra.mxu0 %v8601
      %v8665 = vpop.f32.mrf.mxu0
      %v8666 = vadd.f32 0.0, %v8665
      %v8667 = vpop.f32.mrf.mxu0
      %v8668 = vadd.f32 0.0, %v8667
      %8669 = vmatmul.bf16.gmra.mxu0 %v8604
      %v8670 = vpop.f32.mrf.mxu0
      %v8671 = vadd.f32 0.0, %v8670
      %v8672 = vpop.f32.mrf.mxu0
      %v8673 = vadd.f32 0.0, %v8672
      %8674 = vmatmul.bf16.gmra.mxu0 %v8607
      %v8675 = vpop.f32.mrf.mxu0
      %v8676 = vadd.f32 0.0, %v8675
      %v8677 = vpop.f32.mrf.mxu0
      %v8678 = vadd.f32 0.0, %v8677
      %8679 = vmatmul.bf16.gmra.mxu0 %v8610
      %v8680 = vpop.f32.mrf.mxu0
      %v8681 = vadd.f32 0.0, %v8680
      %v8682 = vpop.f32.mrf.mxu0
      %v8683 = vadd.f32 0.0, %v8682
      %8684 = vmatmul.bf16.gmra.mxu0 %v8613
      %v8685 = vpop.f32.mrf.mxu0
      %v8686 = vadd.f32 0.0, %v8685
      %v8687 = vpop.f32.mrf.mxu0
      %v8688 = vadd.f32 0.0, %v8687
      %8689 = vmatmul.bf16.gmra.mxu0 %v8616
      %v8690 = vpop.f32.mrf.mxu0
      %v8691 = vadd.f32 0.0, %v8690
      %v8692 = vpop.f32.mrf.mxu0
      %v8693 = vadd.f32 0.0, %v8692
      %8694 = vmatmul.bf16.gmra.mxu0 %v8619
      %v8695 = vpop.f32.mrf.mxu0
      %v8696 = vadd.f32 0.0, %v8695
      %v8697 = vpop.f32.mrf.mxu0
      %v8698 = vadd.f32 0.0, %v8697
      %8699 = vmatmul.bf16.gmra.mxu0 %v8622
      %v8700 = vpop.f32.mrf.mxu0
      %v8701 = vadd.f32 0.0, %v8700
      %v8702 = vpop.f32.mrf.mxu0
      %v8703 = vadd.f32 0.0, %v8702
      %8704 = vmatmul.bf16.gmra.mxu0 %v8625
      %v8705 = vpop.f32.mrf.mxu0
      %v8706 = vadd.f32 0.0, %v8705
      %v8707 = vpop.f32.mrf.mxu0
      %v8708 = vadd.f32 0.0, %v8707
      %8709 = vmatmul.bf16.gmra.mxu0 %v8628
      %v8710 = vpop.f32.mrf.mxu0
      %v8711 = vadd.f32 0.0, %v8710
      %v8712 = vpop.f32.mrf.mxu0
      %v8713 = vadd.f32 0.0, %v8712
      %8714 = vmatmul.bf16.gmra.mxu0 %v8631
      %v8715 = vpop.f32.mrf.mxu0
      %v8716 = vadd.f32 0.0, %v8715
      %v8717 = vpop.f32.mrf.mxu0
      %v8718 = vadd.f32 0.0, %v8717
      %8719 = vmatmul.bf16.gmra.mxu0 %v8634
      %v8720 = vpop.f32.mrf.mxu0
      %v8721 = vadd.f32 0.0, %v8720
      %v8722 = vpop.f32.mrf.mxu0
      %v8723 = vadd.f32 0.0, %v8722
      %8724 = vmatmul.bf16.gmra.mxu0 %v8637
      %v8725 = vpop.f32.mrf.mxu0
      %v8726 = vadd.f32 0.0, %v8725
      %v8727 = vpop.f32.mrf.mxu0
      %v8728 = vadd.f32 0.0, %v8727
      %8729 = vmatmul.bf16.gmra.mxu0 %v8640
      %v8730 = vpop.f32.mrf.mxu0
      %v8731 = vadd.f32 0.0, %v8730
      %v8732 = vpop.f32.mrf.mxu0
      %v8733 = vadd.f32 0.0, %v8732
      %8734 = vmatmul.bf16.gmra.mxu0 %v8643
      %v8735 = vpop.f32.mrf.mxu0
      %v8736 = vadd.f32 0.0, %v8735
      %v8737 = vpop.f32.mrf.mxu0
      %v8738 = vadd.f32 0.0, %v8737
      %8739 = vmatmul.bf16.gmra.mxu0 %v8646
      %v8740 = vpop.f32.mrf.mxu0
      %v8741 = vadd.f32 0.0, %v8740
      %v8742 = vpop.f32.mrf.mxu0
      %v8743 = vadd.f32 0.0, %v8742
      %8744 = vmatmul.bf16.gmra.mxu0 %v8649
      %v8745 = vpop.f32.mrf.mxu0
      %v8746 = vadd.f32 0.0, %v8745
      %v8747 = vpop.f32.mrf.mxu0
      %v8748 = vadd.f32 0.0, %v8747
      %8749 = vdwg.mxu0
      %v8750 = vadd.f32 %v8490, %v8661
      %v8751 = vadd.f32 %v8491, %v8663
      %v8752 = vadd.f32 %v8492, %v8666
      %v8753 = vadd.f32 %v8493, %v8668
      %v8754 = vadd.f32 %v8494, %v8671
      %v8755 = vadd.f32 %v8495, %v8673
      %v8756 = vadd.f32 %v8496, %v8676
      %v8757 = vadd.f32 %v8497, %v8678
      %v8758 = vadd.f32 %v8498, %v8681
      %v8759 = vadd.f32 %v8499, %v8683
      %v8760 = vadd.f32 %v8500, %v8686
      %v8761 = vadd.f32 %v8501, %v8688
      %v8762 = vadd.f32 %v8502, %v8691
      %v8763 = vadd.f32 %v8503, %v8693
      %v8764 = vadd.f32 %v8504, %v8696
      %v8765 = vadd.f32 %v8505, %v8698
      %v8766 = vadd.f32 %v8506, %v8701
      %v8767 = vadd.f32 %v8507, %v8703
      %v8768 = vadd.f32 %v8508, %v8706
      %v8769 = vadd.f32 %v8509, %v8708
      %v8770 = vadd.f32 %v8510, %v8711
      %v8771 = vadd.f32 %v8511, %v8713
      %v8772 = vadd.f32 %v8512, %v8716
      %v8773 = vadd.f32 %v8513, %v8718
      %v8774 = vadd.f32 %v8514, %v8721
      %v8775 = vadd.f32 %v8515, %v8723
      %v8776 = vadd.f32 %v8516, %v8726
      %v8777 = vadd.f32 %v8517, %v8728
      %v8778 = vadd.f32 %v8518, %v8731
      %v8779 = vadd.f32 %v8519, %v8733
      %v8780 = vadd.f32 %v8520, %v8736
      %v8781 = vadd.f32 %v8521, %v8738
      %v8782 = vadd.f32 %v8522, %v8741
      %v8783 = vadd.f32 %v8523, %v8743
      %v8784 = vadd.f32 %v8524, %v8746
      %v8785 = vadd.f32 %v8525, %v8748
      %v8786 = vld [vmem:[%s7485 + $0x14] sm:$0xff]
      %v8787 = vld [vmem:[%s7485 + $0x1c] sm:$0xff]
      %v8788 = vld [vmem:[%s7485 + $0x24] sm:$0xff]
      %v8789 = vld [vmem:[%s7485 + $0x2c] sm:$0xff]
      %v8790 = vld [vmem:[%s7485 + $0x34] sm:$0xff]
      %v8791 = vld [vmem:[%s7485 + $0x3c] sm:$0xff]
      %v8792 = vld [vmem:[%s7485 + $0x44] sm:$0xff]
      %v8793 = vld [vmem:[%s7485 + $0x4c] sm:$0xff]
      %v8794 = vld [vmem:[%s7485 + $0x54] sm:$0xff]
      %v8795 = vld [vmem:[%s7485 + $0x5c] sm:$0xff]
      %v8796 = vld [vmem:[%s7485 + $0x64] sm:$0xff]
      %v8797 = vld [vmem:[%s7485 + $0x6c] sm:$0xff]
      %v8798 = vld [vmem:[%s7485 + $0x74] sm:$0xff]
      %v8799 = vld [vmem:[%s7485 + $0x7c] sm:$0xff]
      %v8800 = vld [vmem:[%s7485 + $0x84] sm:$0xff]
      %v8801 = vld [vmem:[%s7485 + $0x8c] sm:$0xff]
      %v8802 = vld [vmem:[%s7485 + $0x94] sm:$0xff]
      %v8803 = vld [vmem:[%s7485 + $0x9c] sm:$0xff]
      %v8804 = vld [vmem:[%s7485 + $0xa4] sm:$0xff]
      %v8805 = vld [vmem:[%s7485 + $0xac] sm:$0xff]
      %v8806 = vld [vmem:[%s7485 + $0xb4] sm:$0xff]
      %v8807 = vld [vmem:[%s7485 + $0xbc] sm:$0xff]
      %v8808 = vld [vmem:[%s7485 + $0xc4] sm:$0xff]
      %v8809 = vld [vmem:[%s7485 + $0xcc] sm:$0xff]
      %v8810 = vld [vmem:[%s7485 + $0xd4] sm:$0xff]
      %v8811 = vld [vmem:[%s7485 + $0xdc] sm:$0xff]
      %v8812 = vld [vmem:[%s7485 + $0xe4] sm:$0xff]
      %v8813 = vld [vmem:[%s7485 + $0xec] sm:$0xff]
      %v8814 = vld [vmem:[%s7485 + $0xf4] sm:$0xff]
      %v8815 = vld [vmem:[%s7485 + $0xfc] sm:$0xff]
      %v8816 = vld [vmem:[%s7485 + $0x104] sm:$0xff]
      %v8817 = vld [vmem:[%s7485 + $0x10c] sm:$0xff]
      %v8818 = vld [vmem:[%s7485 + $0x114] sm:$0xff]
      %v8819 = vld [vmem:[%s7485 + $0x11c] sm:$0xff]
      %v8820 = vld [vmem:[%s7485 + $0x124] sm:$0xff]
      %v8821 = vld [vmem:[%s7485 + $0x12c] sm:$0xff]
      %v8822 = vpack.c.bf16 %v8787, %v8786
      %v8823 = vpack.c.bf16 %v8789, %v8788
      %v8824 = vpack.c.bf16 %v8791, %v8790
      %v8825 = vpack.c.bf16 %v8793, %v8792
      %v8826 = vpack.c.bf16 %v8795, %v8794
      %v8827 = vpack.c.bf16 %v8797, %v8796
      %v8828 = vpack.c.bf16 %v8799, %v8798
      %v8829 = vpack.c.bf16 %v8801, %v8800
      %v8830 = vpack.c.bf16 %v8803, %v8802
      %v8831 = vpack.c.bf16 %v8805, %v8804
      %v8832 = vpack.c.bf16 %v8807, %v8806
      %v8833 = vpack.c.bf16 %v8809, %v8808
      %v8834 = vpack.c.bf16 %v8811, %v8810
      %v8835 = vpack.c.bf16 %v8813, %v8812
      %v8836 = vpack.c.bf16 %v8815, %v8814
      %v8837 = vpack.c.bf16 %v8817, %v8816
      %v8838 = vpack.c.bf16 %v8819, %v8818
      %v8839 = vpack.c.bf16 %v8821, %v8820
      %s8840 = scalar_lea.vmem %s2, 224
      %v8841 = vld [vmem:[%s8840] sm:$0xf]
      %v8842 = vld [vmem:[%s8840 + $0x4] sm:$0xf]
      %v8843 = vld [vmem:[%s8840 + $0x8] sm:$0xf]
      %v8844 = vld [vmem:[%s8840 + $0xc] sm:$0xf]
      %v8849 = vunpack.c.l.b16 %v8841
      %v8850 = vunpack.c.l.b16 %v8842
      %v8851 = vunpack.c.l.b16 %v8843
      %v8852 = vunpack.c.l.b16 %v8844
      %v8853 = vpack.c.b16 %v8850, %v8849
      %v8854 = vpack.c.b16 %v8852, %v8851
      %v8858 = vsel %vm601, %v8822, 0
      %v8861 = vsel %vm601, %v8823, 0
      %v8864 = vsel %vm601, %v8824, 0
      %v8867 = vsel %vm601, %v8825, 0
      %v8870 = vsel %vm601, %v8826, 0
      %v8873 = vsel %vm601, %v8827, 0
      %v8876 = vsel %vm601, %v8828, 0
      %v8879 = vsel %vm601, %v8829, 0
      %v8882 = vsel %vm601, %v8830, 0
      %v8885 = vsel %vm601, %v8831, 0
      %v8888 = vsel %vm601, %v8832, 0
      %v8891 = vsel %vm601, %v8833, 0
      %v8894 = vsel %vm601, %v8834, 0
      %v8897 = vsel %vm601, %v8835, 0
      %v8900 = vsel %vm601, %v8836, 0
      %v8903 = vsel %vm601, %v8837, 0
      %v8906 = vsel %vm601, %v8838, 0
      %v8909 = vsel %vm601, %v8839, 0
      %8911 = vmatpush.bf16.msra.mxu0 0
      %8912 = vmatpush.bf16.msra.mxu0 0
      %8913 = vmatpush.bf16.msra.mxu0 0
      %8914 = vmatpush.bf16.msra.mxu0 0
      %8915 = vmatpush.bf16.msra.mxu0 0
      %8916 = vmatpush.bf16.msra.mxu0 0
      %8917 = vmatpush.bf16.msra.mxu0 %v8854
      %8918 = vmatpush.bf16.msra.mxu0 %v8853
      %8919 = vmatmul.bf16.gmra.mxu0 %v8858
      %v8920 = vpop.f32.mrf.mxu0
      %v8921 = vadd.f32 0.0, %v8920
      %v8922 = vpop.f32.mrf.mxu0
      %v8923 = vadd.f32 0.0, %v8922
      %8924 = vmatmul.bf16.gmra.mxu0 %v8861
      %v8925 = vpop.f32.mrf.mxu0
      %v8926 = vadd.f32 0.0, %v8925
      %v8927 = vpop.f32.mrf.mxu0
      %v8928 = vadd.f32 0.0, %v8927
      %8929 = vmatmul.bf16.gmra.mxu0 %v8864
      %v8930 = vpop.f32.mrf.mxu0
      %v8931 = vadd.f32 0.0, %v8930
      %v8932 = vpop.f32.mrf.mxu0
      %v8933 = vadd.f32 0.0, %v8932
      %8934 = vmatmul.bf16.gmra.mxu0 %v8867
      %v8935 = vpop.f32.mrf.mxu0
      %v8936 = vadd.f32 0.0, %v8935
      %v8937 = vpop.f32.mrf.mxu0
      %v8938 = vadd.f32 0.0, %v8937
      %8939 = vmatmul.bf16.gmra.mxu0 %v8870
      %v8940 = vpop.f32.mrf.mxu0
      %v8941 = vadd.f32 0.0, %v8940
      %v8942 = vpop.f32.mrf.mxu0
      %v8943 = vadd.f32 0.0, %v8942
      %8944 = vmatmul.bf16.gmra.mxu0 %v8873
      %v8945 = vpop.f32.mrf.mxu0
      %v8946 = vadd.f32 0.0, %v8945
      %v8947 = vpop.f32.mrf.mxu0
      %v8948 = vadd.f32 0.0, %v8947
      %8949 = vmatmul.bf16.gmra.mxu0 %v8876
      %v8950 = vpop.f32.mrf.mxu0
      %v8951 = vadd.f32 0.0, %v8950
      %v8952 = vpop.f32.mrf.mxu0
      %v8953 = vadd.f32 0.0, %v8952
      %8954 = vmatmul.bf16.gmra.mxu0 %v8879
      %v8955 = vpop.f32.mrf.mxu0
      %v8956 = vadd.f32 0.0, %v8955
      %v8957 = vpop.f32.mrf.mxu0
      %v8958 = vadd.f32 0.0, %v8957
      %8959 = vmatmul.bf16.gmra.mxu0 %v8882
      %v8960 = vpop.f32.mrf.mxu0
      %v8961 = vadd.f32 0.0, %v8960
      %v8962 = vpop.f32.mrf.mxu0
      %v8963 = vadd.f32 0.0, %v8962
      %8964 = vmatmul.bf16.gmra.mxu0 %v8885
      %v8965 = vpop.f32.mrf.mxu0
      %v8966 = vadd.f32 0.0, %v8965
      %v8967 = vpop.f32.mrf.mxu0
      %v8968 = vadd.f32 0.0, %v8967
      %8969 = vmatmul.bf16.gmra.mxu0 %v8888
      %v8970 = vpop.f32.mrf.mxu0
      %v8971 = vadd.f32 0.0, %v8970
      %v8972 = vpop.f32.mrf.mxu0
      %v8973 = vadd.f32 0.0, %v8972
      %8974 = vmatmul.bf16.gmra.mxu0 %v8891
      %v8975 = vpop.f32.mrf.mxu0
      %v8976 = vadd.f32 0.0, %v8975
      %v8977 = vpop.f32.mrf.mxu0
      %v8978 = vadd.f32 0.0, %v8977
      %8979 = vmatmul.bf16.gmra.mxu0 %v8894
      %v8980 = vpop.f32.mrf.mxu0
      %v8981 = vadd.f32 0.0, %v8980
      %v8982 = vpop.f32.mrf.mxu0
      %v8983 = vadd.f32 0.0, %v8982
      %8984 = vmatmul.bf16.gmra.mxu0 %v8897
      %v8985 = vpop.f32.mrf.mxu0
      %v8986 = vadd.f32 0.0, %v8985
      %v8987 = vpop.f32.mrf.mxu0
      %v8988 = vadd.f32 0.0, %v8987
      %8989 = vmatmul.bf16.gmra.mxu0 %v8900
      %v8990 = vpop.f32.mrf.mxu0
      %v8991 = vadd.f32 0.0, %v8990
      %v8992 = vpop.f32.mrf.mxu0
      %v8993 = vadd.f32 0.0, %v8992
      %8994 = vmatmul.bf16.gmra.mxu0 %v8903
      %v8995 = vpop.f32.mrf.mxu0
      %v8996 = vadd.f32 0.0, %v8995
      %v8997 = vpop.f32.mrf.mxu0
      %v8998 = vadd.f32 0.0, %v8997
      %8999 = vmatmul.bf16.gmra.mxu0 %v8906
      %v9000 = vpop.f32.mrf.mxu0
      %v9001 = vadd.f32 0.0, %v9000
      %v9002 = vpop.f32.mrf.mxu0
      %v9003 = vadd.f32 0.0, %v9002
      %9004 = vmatmul.bf16.gmra.mxu0 %v8909
      %v9005 = vpop.f32.mrf.mxu0
      %v9006 = vadd.f32 0.0, %v9005
      %v9007 = vpop.f32.mrf.mxu0
      %v9008 = vadd.f32 0.0, %v9007
      %9009 = vdwg.mxu0
      %v9010 = vadd.f32 %v8750, %v8921
      %v9011 = vadd.f32 %v8751, %v8923
      %v9012 = vadd.f32 %v8752, %v8926
      %v9013 = vadd.f32 %v8753, %v8928
      %v9014 = vadd.f32 %v8754, %v8931
      %v9015 = vadd.f32 %v8755, %v8933
      %v9016 = vadd.f32 %v8756, %v8936
      %v9017 = vadd.f32 %v8757, %v8938
      %v9018 = vadd.f32 %v8758, %v8941
      %v9019 = vadd.f32 %v8759, %v8943
      %v9020 = vadd.f32 %v8760, %v8946
      %v9021 = vadd.f32 %v8761, %v8948
      %v9022 = vadd.f32 %v8762, %v8951
      %v9023 = vadd.f32 %v8763, %v8953
      %v9024 = vadd.f32 %v8764, %v8956
      %v9025 = vadd.f32 %v8765, %v8958
      %v9026 = vadd.f32 %v8766, %v8961
      %v9027 = vadd.f32 %v8767, %v8963
      %v9028 = vadd.f32 %v8768, %v8966
      %v9029 = vadd.f32 %v8769, %v8968
      %v9030 = vadd.f32 %v8770, %v8971
      %v9031 = vadd.f32 %v8771, %v8973
      %v9032 = vadd.f32 %v8772, %v8976
      %v9033 = vadd.f32 %v8773, %v8978
      %v9034 = vadd.f32 %v8774, %v8981
      %v9035 = vadd.f32 %v8775, %v8983
      %v9036 = vadd.f32 %v8776, %v8986
      %v9037 = vadd.f32 %v8777, %v8988
      %v9038 = vadd.f32 %v8778, %v8991
      %v9039 = vadd.f32 %v8779, %v8993
      %v9040 = vadd.f32 %v8780, %v8996
      %v9041 = vadd.f32 %v8781, %v8998
      %v9042 = vadd.f32 %v8782, %v9001
      %v9043 = vadd.f32 %v8783, %v9003
      %v9044 = vadd.f32 %v8784, %v9006
      %v9045 = vadd.f32 %v8785, %v9008
      %v9046 = vld [vmem:[%s7485 + $0x24] sm:$0xff]
      %v9047 = vld [vmem:[%s7485 + $0x2c] sm:$0xff]
      %v9048 = vld [vmem:[%s7485 + $0x34] sm:$0xff]
      %v9049 = vld [vmem:[%s7485 + $0x3c] sm:$0xff]
      %v9050 = vld [vmem:[%s7485 + $0x44] sm:$0xff]
      %v9051 = vld [vmem:[%s7485 + $0x4c] sm:$0xff]
      %v9052 = vld [vmem:[%s7485 + $0x54] sm:$0xff]
      %v9053 = vld [vmem:[%s7485 + $0x5c] sm:$0xff]
      %v9054 = vld [vmem:[%s7485 + $0x64] sm:$0xff]
      %v9055 = vld [vmem:[%s7485 + $0x6c] sm:$0xff]
      %v9056 = vld [vmem:[%s7485 + $0x74] sm:$0xff]
      %v9057 = vld [vmem:[%s7485 + $0x7c] sm:$0xff]
      %v9058 = vld [vmem:[%s7485 + $0x84] sm:$0xff]
      %v9059 = vld [vmem:[%s7485 + $0x8c] sm:$0xff]
      %v9060 = vld [vmem:[%s7485 + $0x94] sm:$0xff]
      %v9061 = vld [vmem:[%s7485 + $0x9c] sm:$0xff]
      %v9062 = vld [vmem:[%s7485 + $0xa4] sm:$0xff]
      %v9063 = vld [vmem:[%s7485 + $0xac] sm:$0xff]
      %v9064 = vld [vmem:[%s7485 + $0xb4] sm:$0xff]
      %v9065 = vld [vmem:[%s7485 + $0xbc] sm:$0xff]
      %v9066 = vld [vmem:[%s7485 + $0xc4] sm:$0xff]
      %v9067 = vld [vmem:[%s7485 + $0xcc] sm:$0xff]
      %v9068 = vld [vmem:[%s7485 + $0xd4] sm:$0xff]
      %v9069 = vld [vmem:[%s7485 + $0xdc] sm:$0xff]
      %v9070 = vld [vmem:[%s7485 + $0xe4] sm:$0xff]
      %v9071 = vld [vmem:[%s7485 + $0xec] sm:$0xff]
      %v9072 = vld [vmem:[%s7485 + $0xf4] sm:$0xff]
      %v9073 = vld [vmem:[%s7485 + $0xfc] sm:$0xff]
      %v9074 = vld [vmem:[%s7485 + $0x104] sm:$0xff]
      %v9075 = vld [vmem:[%s7485 + $0x10c] sm:$0xff]
      %v9076 = vld [vmem:[%s7485 + $0x114] sm:$0xff]
      %v9077 = vld [vmem:[%s7485 + $0x11c] sm:$0xff]
      %v9078 = vld [vmem:[%s7485 + $0x124] sm:$0xff]
      %v9079 = vld [vmem:[%s7485 + $0x12c] sm:$0xff]
      %v9080 = vld [vmem:[%s7485 + $0x134] sm:$0xff]
      %v9081 = vld [vmem:[%s7485 + $0x13c] sm:$0xff]
      %v9082 = vpack.c.bf16 %v9047, %v9046
      %v9083 = vpack.c.bf16 %v9049, %v9048
      %v9084 = vpack.c.bf16 %v9051, %v9050
      %v9085 = vpack.c.bf16 %v9053, %v9052
      %v9086 = vpack.c.bf16 %v9055, %v9054
      %v9087 = vpack.c.bf16 %v9057, %v9056
      %v9088 = vpack.c.bf16 %v9059, %v9058
      %v9089 = vpack.c.bf16 %v9061, %v9060
      %v9090 = vpack.c.bf16 %v9063, %v9062
      %v9091 = vpack.c.bf16 %v9065, %v9064
      %v9092 = vpack.c.bf16 %v9067, %v9066
      %v9093 = vpack.c.bf16 %v9069, %v9068
      %v9094 = vpack.c.bf16 %v9071, %v9070
      %v9095 = vpack.c.bf16 %v9073, %v9072
      %v9096 = vpack.c.bf16 %v9075, %v9074
      %v9097 = vpack.c.bf16 %v9077, %v9076
      %v9098 = vpack.c.bf16 %v9079, %v9078
      %v9099 = vpack.c.bf16 %v9081, %v9080
      %s9100 = scalar_lea.vmem %s2, 240
      %v9101 = vld [vmem:[%s9100] sm:$0xf]
      %v9102 = vld [vmem:[%s9100 + $0x4] sm:$0xf]
      %v9103 = vld [vmem:[%s9100 + $0x8] sm:$0xf]
      %v9104 = vld [vmem:[%s9100 + $0xc] sm:$0xf]
      %v9109 = vunpack.c.l.b16 %v9101
      %v9110 = vunpack.c.l.b16 %v9102
      %v9111 = vunpack.c.l.b16 %v9103
      %v9112 = vunpack.c.l.b16 %v9104
      %v9113 = vpack.c.b16 %v9110, %v9109
      %v9114 = vpack.c.b16 %v9112, %v9111
      %v9118 = vsel %vm601, %v9082, 0
      %v9121 = vsel %vm601, %v9083, 0
      %v9124 = vsel %vm601, %v9084, 0
      %v9127 = vsel %vm601, %v9085, 0
      %v9130 = vsel %vm601, %v9086, 0
      %v9133 = vsel %vm601, %v9087, 0
      %v9136 = vsel %vm601, %v9088, 0
      %v9139 = vsel %vm601, %v9089, 0
      %v9142 = vsel %vm601, %v9090, 0
      %v9145 = vsel %vm601, %v9091, 0
      %v9148 = vsel %vm601, %v9092, 0
      %v9151 = vsel %vm601, %v9093, 0
      %v9154 = vsel %vm601, %v9094, 0
      %v9157 = vsel %vm601, %v9095, 0
      %v9160 = vsel %vm601, %v9096, 0
      %v9163 = vsel %vm601, %v9097, 0
      %v9166 = vsel %vm601, %v9098, 0
      %v9169 = vsel %vm601, %v9099, 0
      %9171 = vmatpush.bf16.msra.mxu0 0
      %9172 = vmatpush.bf16.msra.mxu0 0
      %9173 = vmatpush.bf16.msra.mxu0 0
      %9174 = vmatpush.bf16.msra.mxu0 0
      %9175 = vmatpush.bf16.msra.mxu0 0
      %9176 = vmatpush.bf16.msra.mxu0 0
      %9177 = vmatpush.bf16.msra.mxu0 %v9114
      %9178 = vmatpush.bf16.msra.mxu0 %v9113
      %9179 = vmatmul.bf16.gmra.mxu0 %v9118
      %v9180 = vpop.f32.mrf.mxu0
      %v9181 = vadd.f32 0.0, %v9180
      %v9182 = vpop.f32.mrf.mxu0
      %v9183 = vadd.f32 0.0, %v9182
      %9184 = vmatmul.bf16.gmra.mxu0 %v9121
      %v9185 = vpop.f32.mrf.mxu0
      %v9186 = vadd.f32 0.0, %v9185
      %v9187 = vpop.f32.mrf.mxu0
      %v9188 = vadd.f32 0.0, %v9187
      %9189 = vmatmul.bf16.gmra.mxu0 %v9124
      %v9190 = vpop.f32.mrf.mxu0
      %v9191 = vadd.f32 0.0, %v9190
      %v9192 = vpop.f32.mrf.mxu0
      %v9193 = vadd.f32 0.0, %v9192
      %9194 = vmatmul.bf16.gmra.mxu0 %v9127
      %v9195 = vpop.f32.mrf.mxu0
      %v9196 = vadd.f32 0.0, %v9195
      %v9197 = vpop.f32.mrf.mxu0
      %v9198 = vadd.f32 0.0, %v9197
      %9199 = vmatmul.bf16.gmra.mxu0 %v9130
      %v9200 = vpop.f32.mrf.mxu0
      %v9201 = vadd.f32 0.0, %v9200
      %v9202 = vpop.f32.mrf.mxu0
      %v9203 = vadd.f32 0.0, %v9202
      %9204 = vmatmul.bf16.gmra.mxu0 %v9133
      %v9205 = vpop.f32.mrf.mxu0
      %v9206 = vadd.f32 0.0, %v9205
      %v9207 = vpop.f32.mrf.mxu0
      %v9208 = vadd.f32 0.0, %v9207
      %9209 = vmatmul.bf16.gmra.mxu0 %v9136
      %v9210 = vpop.f32.mrf.mxu0
      %v9211 = vadd.f32 0.0, %v9210
      %v9212 = vpop.f32.mrf.mxu0
      %v9213 = vadd.f32 0.0, %v9212
      %9214 = vmatmul.bf16.gmra.mxu0 %v9139
      %v9215 = vpop.f32.mrf.mxu0
      %v9216 = vadd.f32 0.0, %v9215
      %v9217 = vpop.f32.mrf.mxu0
      %v9218 = vadd.f32 0.0, %v9217
      %9219 = vmatmul.bf16.gmra.mxu0 %v9142
      %v9220 = vpop.f32.mrf.mxu0
      %v9221 = vadd.f32 0.0, %v9220
      %v9222 = vpop.f32.mrf.mxu0
      %v9223 = vadd.f32 0.0, %v9222
      %9224 = vmatmul.bf16.gmra.mxu0 %v9145
      %v9225 = vpop.f32.mrf.mxu0
      %v9226 = vadd.f32 0.0, %v9225
      %v9227 = vpop.f32.mrf.mxu0
      %v9228 = vadd.f32 0.0, %v9227
      %9229 = vmatmul.bf16.gmra.mxu0 %v9148
      %v9230 = vpop.f32.mrf.mxu0
      %v9231 = vadd.f32 0.0, %v9230
      %v9232 = vpop.f32.mrf.mxu0
      %v9233 = vadd.f32 0.0, %v9232
      %9234 = vmatmul.bf16.gmra.mxu0 %v9151
      %v9235 = vpop.f32.mrf.mxu0
      %v9236 = vadd.f32 0.0, %v9235
      %v9237 = vpop.f32.mrf.mxu0
      %v9238 = vadd.f32 0.0, %v9237
      %9239 = vmatmul.bf16.gmra.mxu0 %v9154
      %v9240 = vpop.f32.mrf.mxu0
      %v9241 = vadd.f32 0.0, %v9240
      %v9242 = vpop.f32.mrf.mxu0
      %v9243 = vadd.f32 0.0, %v9242
      %9244 = vmatmul.bf16.gmra.mxu0 %v9157
      %v9245 = vpop.f32.mrf.mxu0
      %v9246 = vadd.f32 0.0, %v9245
      %v9247 = vpop.f32.mrf.mxu0
      %v9248 = vadd.f32 0.0, %v9247
      %9249 = vmatmul.bf16.gmra.mxu0 %v9160
      %v9250 = vpop.f32.mrf.mxu0
      %v9251 = vadd.f32 0.0, %v9250
      %v9252 = vpop.f32.mrf.mxu0
      %v9253 = vadd.f32 0.0, %v9252
      %9254 = vmatmul.bf16.gmra.mxu0 %v9163
      %v9255 = vpop.f32.mrf.mxu0
      %v9256 = vadd.f32 0.0, %v9255
      %v9257 = vpop.f32.mrf.mxu0
      %v9258 = vadd.f32 0.0, %v9257
      %9259 = vmatmul.bf16.gmra.mxu0 %v9166
      %v9260 = vpop.f32.mrf.mxu0
      %v9261 = vadd.f32 0.0, %v9260
      %v9262 = vpop.f32.mrf.mxu0
      %v9263 = vadd.f32 0.0, %v9262
      %9264 = vmatmul.bf16.gmra.mxu0 %v9169
      %v9265 = vpop.f32.mrf.mxu0
      %v9266 = vadd.f32 0.0, %v9265
      %v9267 = vpop.f32.mrf.mxu0
      %v9268 = vadd.f32 0.0, %v9267
      %9269 = vdwg.mxu0
      %v9270 = vadd.f32 %v9010, %v9181
      %v9271 = vadd.f32 %v9011, %v9183
      %v9272 = vadd.f32 %v9012, %v9186
      %v9273 = vadd.f32 %v9013, %v9188
      %v9274 = vadd.f32 %v9014, %v9191
      %v9275 = vadd.f32 %v9015, %v9193
      %v9276 = vadd.f32 %v9016, %v9196
      %v9277 = vadd.f32 %v9017, %v9198
      %v9278 = vadd.f32 %v9018, %v9201
      %v9279 = vadd.f32 %v9019, %v9203
      %v9280 = vadd.f32 %v9020, %v9206
      %v9281 = vadd.f32 %v9021, %v9208
      %v9282 = vadd.f32 %v9022, %v9211
      %v9283 = vadd.f32 %v9023, %v9213
      %v9284 = vadd.f32 %v9024, %v9216
      %v9285 = vadd.f32 %v9025, %v9218
      %v9286 = vadd.f32 %v9026, %v9221
      %v9287 = vadd.f32 %v9027, %v9223
      %v9288 = vadd.f32 %v9028, %v9226
      %v9289 = vadd.f32 %v9029, %v9228
      %v9290 = vadd.f32 %v9030, %v9231
      %v9291 = vadd.f32 %v9031, %v9233
      %v9292 = vadd.f32 %v9032, %v9236
      %v9293 = vadd.f32 %v9033, %v9238
      %v9294 = vadd.f32 %v9034, %v9241
      %v9295 = vadd.f32 %v9035, %v9243
      %v9296 = vadd.f32 %v9036, %v9246
      %v9297 = vadd.f32 %v9037, %v9248
      %v9298 = vadd.f32 %v9038, %v9251
      %v9299 = vadd.f32 %v9039, %v9253
      %v9300 = vadd.f32 %v9040, %v9256
      %v9301 = vadd.f32 %v9041, %v9258
      %v9302 = vadd.f32 %v9042, %v9261
      %v9303 = vadd.f32 %v9043, %v9263
      %v9304 = vadd.f32 %v9044, %v9266
      %v9305 = vadd.f32 %v9045, %v9268
      %v9306 = vld [vmem:[%s7485 + $0x25] sm:$0xff]
      %v9307 = vld [vmem:[%s7485 + $0x2d] sm:$0xff]
      %v9308 = vld [vmem:[%s7485 + $0x35] sm:$0xff]
      %v9309 = vld [vmem:[%s7485 + $0x3d] sm:$0xff]
      %v9310 = vld [vmem:[%s7485 + $0x45] sm:$0xff]
      %v9311 = vld [vmem:[%s7485 + $0x4d] sm:$0xff]
      %v9312 = vld [vmem:[%s7485 + $0x55] sm:$0xff]
      %v9313 = vld [vmem:[%s7485 + $0x5d] sm:$0xff]
      %v9314 = vld [vmem:[%s7485 + $0x65] sm:$0xff]
      %v9315 = vld [vmem:[%s7485 + $0x6d] sm:$0xff]
      %v9316 = vld [vmem:[%s7485 + $0x75] sm:$0xff]
      %v9317 = vld [vmem:[%s7485 + $0x7d] sm:$0xff]
      %v9318 = vld [vmem:[%s7485 + $0x85] sm:$0xff]
      %v9319 = vld [vmem:[%s7485 + $0x8d] sm:$0xff]
      %v9320 = vld [vmem:[%s7485 + $0x95] sm:$0xff]
      %v9321 = vld [vmem:[%s7485 + $0x9d] sm:$0xff]
      %v9322 = vld [vmem:[%s7485 + $0xa5] sm:$0xff]
      %v9323 = vld [vmem:[%s7485 + $0xad] sm:$0xff]
      %v9324 = vld [vmem:[%s7485 + $0xb5] sm:$0xff]
      %v9325 = vld [vmem:[%s7485 + $0xbd] sm:$0xff]
      %v9326 = vld [vmem:[%s7485 + $0xc5] sm:$0xff]
      %v9327 = vld [vmem:[%s7485 + $0xcd] sm:$0xff]
      %v9328 = vld [vmem:[%s7485 + $0xd5] sm:$0xff]
      %v9329 = vld [vmem:[%s7485 + $0xdd] sm:$0xff]
      %v9330 = vld [vmem:[%s7485 + $0xe5] sm:$0xff]
      %v9331 = vld [vmem:[%s7485 + $0xed] sm:$0xff]
      %v9332 = vld [vmem:[%s7485 + $0xf5] sm:$0xff]
      %v9333 = vld [vmem:[%s7485 + $0xfd] sm:$0xff]
      %v9334 = vld [vmem:[%s7485 + $0x105] sm:$0xff]
      %v9335 = vld [vmem:[%s7485 + $0x10d] sm:$0xff]
      %v9336 = vld [vmem:[%s7485 + $0x115] sm:$0xff]
      %v9337 = vld [vmem:[%s7485 + $0x11d] sm:$0xff]
      %v9338 = vld [vmem:[%s7485 + $0x125] sm:$0xff]
      %v9339 = vld [vmem:[%s7485 + $0x12d] sm:$0xff]
      %v9340 = vld [vmem:[%s7485 + $0x135] sm:$0xff]
      %v9341 = vld [vmem:[%s7485 + $0x13d] sm:$0xff]
      %v9342 = vpack.c.bf16 %v9307, %v9306
      %v9343 = vpack.c.bf16 %v9309, %v9308
      %v9344 = vpack.c.bf16 %v9311, %v9310
      %v9345 = vpack.c.bf16 %v9313, %v9312
      %v9346 = vpack.c.bf16 %v9315, %v9314
      %v9347 = vpack.c.bf16 %v9317, %v9316
      %v9348 = vpack.c.bf16 %v9319, %v9318
      %v9349 = vpack.c.bf16 %v9321, %v9320
      %v9350 = vpack.c.bf16 %v9323, %v9322
      %v9351 = vpack.c.bf16 %v9325, %v9324
      %v9352 = vpack.c.bf16 %v9327, %v9326
      %v9353 = vpack.c.bf16 %v9329, %v9328
      %v9354 = vpack.c.bf16 %v9331, %v9330
      %v9355 = vpack.c.bf16 %v9333, %v9332
      %v9356 = vpack.c.bf16 %v9335, %v9334
      %v9357 = vpack.c.bf16 %v9337, %v9336
      %v9358 = vpack.c.bf16 %v9339, %v9338
      %v9359 = vpack.c.bf16 %v9341, %v9340
      %s9360 = scalar_lea.vmem %s2, 256
      %v9361 = vld [vmem:[%s9360] sm:$0xf]
      %v9362 = vld [vmem:[%s9360 + $0x4] sm:$0xf]
      %v9363 = vld [vmem:[%s9360 + $0x8] sm:$0xf]
      %v9364 = vld [vmem:[%s9360 + $0xc] sm:$0xf]
      %v9369 = vunpack.c.l.b16 %v9361
      %v9370 = vunpack.c.l.b16 %v9362
      %v9371 = vunpack.c.l.b16 %v9363
      %v9372 = vunpack.c.l.b16 %v9364
      %v9373 = vpack.c.b16 %v9370, %v9369
      %v9374 = vpack.c.b16 %v9372, %v9371
      %v9378 = vsel %vm601, %v9342, 0
      %v9381 = vsel %vm601, %v9343, 0
      %v9384 = vsel %vm601, %v9344, 0
      %v9387 = vsel %vm601, %v9345, 0
      %v9390 = vsel %vm601, %v9346, 0
      %v9393 = vsel %vm601, %v9347, 0
      %v9396 = vsel %vm601, %v9348, 0
      %v9399 = vsel %vm601, %v9349, 0
      %v9402 = vsel %vm601, %v9350, 0
      %v9405 = vsel %vm601, %v9351, 0
      %v9408 = vsel %vm601, %v9352, 0
      %v9411 = vsel %vm601, %v9353, 0
      %v9414 = vsel %vm601, %v9354, 0
      %v9417 = vsel %vm601, %v9355, 0
      %v9420 = vsel %vm601, %v9356, 0
      %v9423 = vsel %vm601, %v9357, 0
      %v9426 = vsel %vm601, %v9358, 0
      %v9429 = vsel %vm601, %v9359, 0
      %9431 = vmatpush.bf16.msra.mxu0 0
      %9432 = vmatpush.bf16.msra.mxu0 0
      %9433 = vmatpush.bf16.msra.mxu0 0
      %9434 = vmatpush.bf16.msra.mxu0 0
      %9435 = vmatpush.bf16.msra.mxu0 0
      %9436 = vmatpush.bf16.msra.mxu0 0
      %9437 = vmatpush.bf16.msra.mxu0 %v9374
      %9438 = vmatpush.bf16.msra.mxu0 %v9373
      %9439 = vmatmul.bf16.gmra.mxu0 %v9378
      %v9440 = vpop.f32.mrf.mxu0
      %v9441 = vadd.f32 0.0, %v9440
      %v9442 = vpop.f32.mrf.mxu0
      %v9443 = vadd.f32 0.0, %v9442
      %9444 = vmatmul.bf16.gmra.mxu0 %v9381
      %v9445 = vpop.f32.mrf.mxu0
      %v9446 = vadd.f32 0.0, %v9445
      %v9447 = vpop.f32.mrf.mxu0
      %v9448 = vadd.f32 0.0, %v9447
      %9449 = vmatmul.bf16.gmra.mxu0 %v9384
      %v9450 = vpop.f32.mrf.mxu0
      %v9451 = vadd.f32 0.0, %v9450
      %v9452 = vpop.f32.mrf.mxu0
      %v9453 = vadd.f32 0.0, %v9452
      %9454 = vmatmul.bf16.gmra.mxu0 %v9387
      %v9455 = vpop.f32.mrf.mxu0
      %v9456 = vadd.f32 0.0, %v9455
      %v9457 = vpop.f32.mrf.mxu0
      %v9458 = vadd.f32 0.0, %v9457
      %9459 = vmatmul.bf16.gmra.mxu0 %v9390
      %v9460 = vpop.f32.mrf.mxu0
      %v9461 = vadd.f32 0.0, %v9460
      %v9462 = vpop.f32.mrf.mxu0
      %v9463 = vadd.f32 0.0, %v9462
      %9464 = vmatmul.bf16.gmra.mxu0 %v9393
      %v9465 = vpop.f32.mrf.mxu0
      %v9466 = vadd.f32 0.0, %v9465
      %v9467 = vpop.f32.mrf.mxu0
      %v9468 = vadd.f32 0.0, %v9467
      %9469 = vmatmul.bf16.gmra.mxu0 %v9396
      %v9470 = vpop.f32.mrf.mxu0
      %v9471 = vadd.f32 0.0, %v9470
      %v9472 = vpop.f32.mrf.mxu0
      %v9473 = vadd.f32 0.0, %v9472
      %9474 = vmatmul.bf16.gmra.mxu0 %v9399
      %v9475 = vpop.f32.mrf.mxu0
      %v9476 = vadd.f32 0.0, %v9475
      %v9477 = vpop.f32.mrf.mxu0
      %v9478 = vadd.f32 0.0, %v9477
      %9479 = vmatmul.bf16.gmra.mxu0 %v9402
      %v9480 = vpop.f32.mrf.mxu0
      %v9481 = vadd.f32 0.0, %v9480
      %v9482 = vpop.f32.mrf.mxu0
      %v9483 = vadd.f32 0.0, %v9482
      %9484 = vmatmul.bf16.gmra.mxu0 %v9405
      %v9485 = vpop.f32.mrf.mxu0
      %v9486 = vadd.f32 0.0, %v9485
      %v9487 = vpop.f32.mrf.mxu0
      %v9488 = vadd.f32 0.0, %v9487
      %9489 = vmatmul.bf16.gmra.mxu0 %v9408
      %v9490 = vpop.f32.mrf.mxu0
      %v9491 = vadd.f32 0.0, %v9490
      %v9492 = vpop.f32.mrf.mxu0
      %v9493 = vadd.f32 0.0, %v9492
      %9494 = vmatmul.bf16.gmra.mxu0 %v9411
      %v9495 = vpop.f32.mrf.mxu0
      %v9496 = vadd.f32 0.0, %v9495
      %v9497 = vpop.f32.mrf.mxu0
      %v9498 = vadd.f32 0.0, %v9497
      %9499 = vmatmul.bf16.gmra.mxu0 %v9414
      %v9500 = vpop.f32.mrf.mxu0
      %v9501 = vadd.f32 0.0, %v9500
      %v9502 = vpop.f32.mrf.mxu0
      %v9503 = vadd.f32 0.0, %v9502
      %9504 = vmatmul.bf16.gmra.mxu0 %v9417
      %v9505 = vpop.f32.mrf.mxu0
      %v9506 = vadd.f32 0.0, %v9505
      %v9507 = vpop.f32.mrf.mxu0
      %v9508 = vadd.f32 0.0, %v9507
      %9509 = vmatmul.bf16.gmra.mxu0 %v9420
      %v9510 = vpop.f32.mrf.mxu0
      %v9511 = vadd.f32 0.0, %v9510
      %v9512 = vpop.f32.mrf.mxu0
      %v9513 = vadd.f32 0.0, %v9512
      %9514 = vmatmul.bf16.gmra.mxu0 %v9423
      %v9515 = vpop.f32.mrf.mxu0
      %v9516 = vadd.f32 0.0, %v9515
      %v9517 = vpop.f32.mrf.mxu0
      %v9518 = vadd.f32 0.0, %v9517
      %9519 = vmatmul.bf16.gmra.mxu0 %v9426
      %v9520 = vpop.f32.mrf.mxu0
      %v9521 = vadd.f32 0.0, %v9520
      %v9522 = vpop.f32.mrf.mxu0
      %v9523 = vadd.f32 0.0, %v9522
      %9524 = vmatmul.bf16.gmra.mxu0 %v9429
      %v9525 = vpop.f32.mrf.mxu0
      %v9526 = vadd.f32 0.0, %v9525
      %v9527 = vpop.f32.mrf.mxu0
      %v9528 = vadd.f32 0.0, %v9527
      %9529 = vdwg.mxu0
      %v9530 = vadd.f32 %v9270, %v9441
      %v9531 = vadd.f32 %v9271, %v9443
      %v9532 = vadd.f32 %v9272, %v9446
      %v9533 = vadd.f32 %v9273, %v9448
      %v9534 = vadd.f32 %v9274, %v9451
      %v9535 = vadd.f32 %v9275, %v9453
      %v9536 = vadd.f32 %v9276, %v9456
      %v9537 = vadd.f32 %v9277, %v9458
      %v9538 = vadd.f32 %v9278, %v9461
      %v9539 = vadd.f32 %v9279, %v9463
      %v9540 = vadd.f32 %v9280, %v9466
      %v9541 = vadd.f32 %v9281, %v9468
      %v9542 = vadd.f32 %v9282, %v9471
      %v9543 = vadd.f32 %v9283, %v9473
      %v9544 = vadd.f32 %v9284, %v9476
      %v9545 = vadd.f32 %v9285, %v9478
      %v9546 = vadd.f32 %v9286, %v9481
      %v9547 = vadd.f32 %v9287, %v9483
      %v9548 = vadd.f32 %v9288, %v9486
      %v9549 = vadd.f32 %v9289, %v9488
      %v9550 = vadd.f32 %v9290, %v9491
      %v9551 = vadd.f32 %v9291, %v9493
      %v9552 = vadd.f32 %v9292, %v9496
      %v9553 = vadd.f32 %v9293, %v9498
      %v9554 = vadd.f32 %v9294, %v9501
      %v9555 = vadd.f32 %v9295, %v9503
      %v9556 = vadd.f32 %v9296, %v9506
      %v9557 = vadd.f32 %v9297, %v9508
      %v9558 = vadd.f32 %v9298, %v9511
      %v9559 = vadd.f32 %v9299, %v9513
      %v9560 = vadd.f32 %v9300, %v9516
      %v9561 = vadd.f32 %v9301, %v9518
      %v9562 = vadd.f32 %v9302, %v9521
      %v9563 = vadd.f32 %v9303, %v9523
      %v9564 = vadd.f32 %v9304, %v9526
      %v9565 = vadd.f32 %v9305, %v9528
      %v9566 = vld [vmem:[%s7485 + $0x26] sm:$0xff]
      %v9567 = vld [vmem:[%s7485 + $0x2e] sm:$0xff]
      %v9568 = vld [vmem:[%s7485 + $0x36] sm:$0xff]
      %v9569 = vld [vmem:[%s7485 + $0x3e] sm:$0xff]
      %v9570 = vld [vmem:[%s7485 + $0x46] sm:$0xff]
      %v9571 = vld [vmem:[%s7485 + $0x4e] sm:$0xff]
      %v9572 = vld [vmem:[%s7485 + $0x56] sm:$0xff]
      %v9573 = vld [vmem:[%s7485 + $0x5e] sm:$0xff]
      %v9574 = vld [vmem:[%s7485 + $0x66] sm:$0xff]
      %v9575 = vld [vmem:[%s7485 + $0x6e] sm:$0xff]
      %v9576 = vld [vmem:[%s7485 + $0x76] sm:$0xff]
      %v9577 = vld [vmem:[%s7485 + $0x7e] sm:$0xff]
      %v9578 = vld [vmem:[%s7485 + $0x86] sm:$0xff]
      %v9579 = vld [vmem:[%s7485 + $0x8e] sm:$0xff]
      %v9580 = vld [vmem:[%s7485 + $0x96] sm:$0xff]
      %v9581 = vld [vmem:[%s7485 + $0x9e] sm:$0xff]
      %v9582 = vld [vmem:[%s7485 + $0xa6] sm:$0xff]
      %v9583 = vld [vmem:[%s7485 + $0xae] sm:$0xff]
      %v9584 = vld [vmem:[%s7485 + $0xb6] sm:$0xff]
      %v9585 = vld [vmem:[%s7485 + $0xbe] sm:$0xff]
      %v9586 = vld [vmem:[%s7485 + $0xc6] sm:$0xff]
      %v9587 = vld [vmem:[%s7485 + $0xce] sm:$0xff]
      %v9588 = vld [vmem:[%s7485 + $0xd6] sm:$0xff]
      %v9589 = vld [vmem:[%s7485 + $0xde] sm:$0xff]
      %v9590 = vld [vmem:[%s7485 + $0xe6] sm:$0xff]
      %v9591 = vld [vmem:[%s7485 + $0xee] sm:$0xff]
      %v9592 = vld [vmem:[%s7485 + $0xf6] sm:$0xff]
      %v9593 = vld [vmem:[%s7485 + $0xfe] sm:$0xff]
      %v9594 = vld [vmem:[%s7485 + $0x106] sm:$0xff]
      %v9595 = vld [vmem:[%s7485 + $0x10e] sm:$0xff]
      %v9596 = vld [vmem:[%s7485 + $0x116] sm:$0xff]
      %v9597 = vld [vmem:[%s7485 + $0x11e] sm:$0xff]
      %v9598 = vld [vmem:[%s7485 + $0x126] sm:$0xff]
      %v9599 = vld [vmem:[%s7485 + $0x12e] sm:$0xff]
      %v9600 = vld [vmem:[%s7485 + $0x136] sm:$0xff]
      %v9601 = vld [vmem:[%s7485 + $0x13e] sm:$0xff]
      %v9602 = vpack.c.bf16 %v9567, %v9566
      %v9603 = vpack.c.bf16 %v9569, %v9568
      %v9604 = vpack.c.bf16 %v9571, %v9570
      %v9605 = vpack.c.bf16 %v9573, %v9572
      %v9606 = vpack.c.bf16 %v9575, %v9574
      %v9607 = vpack.c.bf16 %v9577, %v9576
      %v9608 = vpack.c.bf16 %v9579, %v9578
      %v9609 = vpack.c.bf16 %v9581, %v9580
      %v9610 = vpack.c.bf16 %v9583, %v9582
      %v9611 = vpack.c.bf16 %v9585, %v9584
      %v9612 = vpack.c.bf16 %v9587, %v9586
      %v9613 = vpack.c.bf16 %v9589, %v9588
      %v9614 = vpack.c.bf16 %v9591, %v9590
      %v9615 = vpack.c.bf16 %v9593, %v9592
      %v9616 = vpack.c.bf16 %v9595, %v9594
      %v9617 = vpack.c.bf16 %v9597, %v9596
      %v9618 = vpack.c.bf16 %v9599, %v9598
      %v9619 = vpack.c.bf16 %v9601, %v9600
      %s9620 = scalar_lea.vmem %s2, 272
      %v9621 = vld [vmem:[%s9620] sm:$0xf]
      %v9622 = vld [vmem:[%s9620 + $0x4] sm:$0xf]
      %v9623 = vld [vmem:[%s9620 + $0x8] sm:$0xf]
      %v9624 = vld [vmem:[%s9620 + $0xc] sm:$0xf]
      %v9629 = vunpack.c.l.b16 %v9621
      %v9630 = vunpack.c.l.b16 %v9622
      %v9631 = vunpack.c.l.b16 %v9623
      %v9632 = vunpack.c.l.b16 %v9624
      %v9633 = vpack.c.b16 %v9630, %v9629
      %v9634 = vpack.c.b16 %v9632, %v9631
      %v9638 = vsel %vm601, %v9602, 0
      %v9641 = vsel %vm601, %v9603, 0
      %v9644 = vsel %vm601, %v9604, 0
      %v9647 = vsel %vm601, %v9605, 0
      %v9650 = vsel %vm601, %v9606, 0
      %v9653 = vsel %vm601, %v9607, 0
      %v9656 = vsel %vm601, %v9608, 0
      %v9659 = vsel %vm601, %v9609, 0
      %v9662 = vsel %vm601, %v9610, 0
      %v9665 = vsel %vm601, %v9611, 0
      %v9668 = vsel %vm601, %v9612, 0
      %v9671 = vsel %vm601, %v9613, 0
      %v9674 = vsel %vm601, %v9614, 0
      %v9677 = vsel %vm601, %v9615, 0
      %v9680 = vsel %vm601, %v9616, 0
      %v9683 = vsel %vm601, %v9617, 0
      %v9686 = vsel %vm601, %v9618, 0
      %v9689 = vsel %vm601, %v9619, 0
      %9691 = vmatpush.bf16.msra.mxu0 0
      %9692 = vmatpush.bf16.msra.mxu0 0
      %9693 = vmatpush.bf16.msra.mxu0 0
      %9694 = vmatpush.bf16.msra.mxu0 0
      %9695 = vmatpush.bf16.msra.mxu0 0
      %9696 = vmatpush.bf16.msra.mxu0 0
      %9697 = vmatpush.bf16.msra.mxu0 %v9634
      %9698 = vmatpush.bf16.msra.mxu0 %v9633
      %9699 = vmatmul.bf16.gmra.mxu0 %v9638
      %v9700 = vpop.f32.mrf.mxu0
      %v9701 = vadd.f32 0.0, %v9700
      %v9702 = vpop.f32.mrf.mxu0
      %v9703 = vadd.f32 0.0, %v9702
      %9704 = vmatmul.bf16.gmra.mxu0 %v9641
      %v9705 = vpop.f32.mrf.mxu0
      %v9706 = vadd.f32 0.0, %v9705
      %v9707 = vpop.f32.mrf.mxu0
      %v9708 = vadd.f32 0.0, %v9707
      %9709 = vmatmul.bf16.gmra.mxu0 %v9644
      %v9710 = vpop.f32.mrf.mxu0
      %v9711 = vadd.f32 0.0, %v9710
      %v9712 = vpop.f32.mrf.mxu0
      %v9713 = vadd.f32 0.0, %v9712
      %9714 = vmatmul.bf16.gmra.mxu0 %v9647
      %v9715 = vpop.f32.mrf.mxu0
      %v9716 = vadd.f32 0.0, %v9715
      %v9717 = vpop.f32.mrf.mxu0
      %v9718 = vadd.f32 0.0, %v9717
      %9719 = vmatmul.bf16.gmra.mxu0 %v9650
      %v9720 = vpop.f32.mrf.mxu0
      %v9721 = vadd.f32 0.0, %v9720
      %v9722 = vpop.f32.mrf.mxu0
      %v9723 = vadd.f32 0.0, %v9722
      %9724 = vmatmul.bf16.gmra.mxu0 %v9653
      %v9725 = vpop.f32.mrf.mxu0
      %v9726 = vadd.f32 0.0, %v9725
      %v9727 = vpop.f32.mrf.mxu0
      %v9728 = vadd.f32 0.0, %v9727
      %9729 = vmatmul.bf16.gmra.mxu0 %v9656
      %v9730 = vpop.f32.mrf.mxu0
      %v9731 = vadd.f32 0.0, %v9730
      %v9732 = vpop.f32.mrf.mxu0
      %v9733 = vadd.f32 0.0, %v9732
      %9734 = vmatmul.bf16.gmra.mxu0 %v9659
      %v9735 = vpop.f32.mrf.mxu0
      %v9736 = vadd.f32 0.0, %v9735
      %v9737 = vpop.f32.mrf.mxu0
      %v9738 = vadd.f32 0.0, %v9737
      %9739 = vmatmul.bf16.gmra.mxu0 %v9662
      %v9740 = vpop.f32.mrf.mxu0
      %v9741 = vadd.f32 0.0, %v9740
      %v9742 = vpop.f32.mrf.mxu0
      %v9743 = vadd.f32 0.0, %v9742
      %9744 = vmatmul.bf16.gmra.mxu0 %v9665
      %v9745 = vpop.f32.mrf.mxu0
      %v9746 = vadd.f32 0.0, %v9745
      %v9747 = vpop.f32.mrf.mxu0
      %v9748 = vadd.f32 0.0, %v9747
      %9749 = vmatmul.bf16.gmra.mxu0 %v9668
      %v9750 = vpop.f32.mrf.mxu0
      %v9751 = vadd.f32 0.0, %v9750
      %v9752 = vpop.f32.mrf.mxu0
      %v9753 = vadd.f32 0.0, %v9752
      %9754 = vmatmul.bf16.gmra.mxu0 %v9671
      %v9755 = vpop.f32.mrf.mxu0
      %v9756 = vadd.f32 0.0, %v9755
      %v9757 = vpop.f32.mrf.mxu0
      %v9758 = vadd.f32 0.0, %v9757
      %9759 = vmatmul.bf16.gmra.mxu0 %v9674
      %v9760 = vpop.f32.mrf.mxu0
      %v9761 = vadd.f32 0.0, %v9760
      %v9762 = vpop.f32.mrf.mxu0
      %v9763 = vadd.f32 0.0, %v9762
      %9764 = vmatmul.bf16.gmra.mxu0 %v9677
      %v9765 = vpop.f32.mrf.mxu0
      %v9766 = vadd.f32 0.0, %v9765
      %v9767 = vpop.f32.mrf.mxu0
      %v9768 = vadd.f32 0.0, %v9767
      %9769 = vmatmul.bf16.gmra.mxu0 %v9680
      %v9770 = vpop.f32.mrf.mxu0
      %v9771 = vadd.f32 0.0, %v9770
      %v9772 = vpop.f32.mrf.mxu0
      %v9773 = vadd.f32 0.0, %v9772
      %9774 = vmatmul.bf16.gmra.mxu0 %v9683
      %v9775 = vpop.f32.mrf.mxu0
      %v9776 = vadd.f32 0.0, %v9775
      %v9777 = vpop.f32.mrf.mxu0
      %v9778 = vadd.f32 0.0, %v9777
      %9779 = vmatmul.bf16.gmra.mxu0 %v9686
      %v9780 = vpop.f32.mrf.mxu0
      %v9781 = vadd.f32 0.0, %v9780
      %v9782 = vpop.f32.mrf.mxu0
      %v9783 = vadd.f32 0.0, %v9782
      %9784 = vmatmul.bf16.gmra.mxu0 %v9689
      %v9785 = vpop.f32.mrf.mxu0
      %v9786 = vadd.f32 0.0, %v9785
      %v9787 = vpop.f32.mrf.mxu0
      %v9788 = vadd.f32 0.0, %v9787
      %9789 = vdwg.mxu0
      %v9790 = vadd.f32 %v9530, %v9701
      %v9791 = vadd.f32 %v9531, %v9703
      %v9792 = vadd.f32 %v9532, %v9706
      %v9793 = vadd.f32 %v9533, %v9708
      %v9794 = vadd.f32 %v9534, %v9711
      %v9795 = vadd.f32 %v9535, %v9713
      %v9796 = vadd.f32 %v9536, %v9716
      %v9797 = vadd.f32 %v9537, %v9718
      %v9798 = vadd.f32 %v9538, %v9721
      %v9799 = vadd.f32 %v9539, %v9723
      %v9800 = vadd.f32 %v9540, %v9726
      %v9801 = vadd.f32 %v9541, %v9728
      %v9802 = vadd.f32 %v9542, %v9731
      %v9803 = vadd.f32 %v9543, %v9733
      %v9804 = vadd.f32 %v9544, %v9736
      %v9805 = vadd.f32 %v9545, %v9738
      %v9806 = vadd.f32 %v9546, %v9741
      %v9807 = vadd.f32 %v9547, %v9743
      %v9808 = vadd.f32 %v9548, %v9746
      %v9809 = vadd.f32 %v9549, %v9748
      %v9810 = vadd.f32 %v9550, %v9751
      %v9811 = vadd.f32 %v9551, %v9753
      %v9812 = vadd.f32 %v9552, %v9756
      %v9813 = vadd.f32 %v9553, %v9758
      %v9814 = vadd.f32 %v9554, %v9761
      %v9815 = vadd.f32 %v9555, %v9763
      %v9816 = vadd.f32 %v9556, %v9766
      %v9817 = vadd.f32 %v9557, %v9768
      %v9818 = vadd.f32 %v9558, %v9771
      %v9819 = vadd.f32 %v9559, %v9773
      %v9820 = vadd.f32 %v9560, %v9776
      %v9821 = vadd.f32 %v9561, %v9778
      %v9822 = vadd.f32 %v9562, %v9781
      %v9823 = vadd.f32 %v9563, %v9783
      %v9824 = vadd.f32 %v9564, %v9786
      %v9825 = vadd.f32 %v9565, %v9788
      %s9826 = scalar_lea.vmem %s4, 1
      %v9827 = vld [vmem:[%s9826] sm:$0x1]
      %v9829 = vperm.slane %v9827, 0
      %v9831 = vadd.f32 %v9790, %v9829
      %v9832 = vadd.f32 %v9791, %v9829
      %v9833 = vadd.f32 %v9792, %v9829
      %v9834 = vadd.f32 %v9793, %v9829
      %v9835 = vadd.f32 %v9794, %v9829
      %v9836 = vadd.f32 %v9795, %v9829
      %v9837 = vadd.f32 %v9796, %v9829
      %v9838 = vadd.f32 %v9797, %v9829
      %v9839 = vadd.f32 %v9798, %v9829
      %v9840 = vadd.f32 %v9799, %v9829
      %v9841 = vadd.f32 %v9800, %v9829
      %v9842 = vadd.f32 %v9801, %v9829
      %v9843 = vadd.f32 %v9802, %v9829
      %v9844 = vadd.f32 %v9803, %v9829
      %v9845 = vadd.f32 %v9804, %v9829
      %v9846 = vadd.f32 %v9805, %v9829
      %v9847 = vadd.f32 %v9806, %v9829
      %v9848 = vadd.f32 %v9807, %v9829
      %v9849 = vadd.f32 %v9808, %v9829
      %v9850 = vadd.f32 %v9809, %v9829
      %v9851 = vadd.f32 %v9810, %v9829
      %v9852 = vadd.f32 %v9811, %v9829
      %v9853 = vadd.f32 %v9812, %v9829
      %v9854 = vadd.f32 %v9813, %v9829
      %v9855 = vadd.f32 %v9814, %v9829
      %v9856 = vadd.f32 %v9815, %v9829
      %v9857 = vadd.f32 %v9816, %v9829
      %v9858 = vadd.f32 %v9817, %v9829
      %v9859 = vadd.f32 %v9818, %v9829
      %v9860 = vadd.f32 %v9819, %v9829
      %v9861 = vadd.f32 %v9820, %v9829
      %v9862 = vadd.f32 %v9821, %v9829
      %v9863 = vadd.f32 %v9822, %v9829
      %v9864 = vadd.f32 %v9823, %v9829
      %v9865 = vadd.f32 %v9824, %v9829
      %v9866 = vadd.f32 %v9825, %v9829
      %v9867 = vxor.u32 %v9831, 2147483648
      %v9868 = vxor.u32 %v9832, 2147483648
      %v9869 = vxor.u32 %v9833, 2147483648
      %v9870 = vxor.u32 %v9834, 2147483648
      %v9871 = vxor.u32 %v9835, 2147483648
      %v9872 = vxor.u32 %v9836, 2147483648
      %v9873 = vxor.u32 %v9837, 2147483648
      %v9874 = vxor.u32 %v9838, 2147483648
      %v9875 = vxor.u32 %v9839, 2147483648
      %v9876 = vxor.u32 %v9840, 2147483648
      %v9877 = vxor.u32 %v9841, 2147483648
      %v9878 = vxor.u32 %v9842, 2147483648
      %v9879 = vxor.u32 %v9843, 2147483648
      %v9880 = vxor.u32 %v9844, 2147483648
      %v9881 = vxor.u32 %v9845, 2147483648
      %v9882 = vxor.u32 %v9846, 2147483648
      %v9883 = vxor.u32 %v9847, 2147483648
      %v9884 = vxor.u32 %v9848, 2147483648
      %v9885 = vxor.u32 %v9849, 2147483648
      %v9886 = vxor.u32 %v9850, 2147483648
      %v9887 = vxor.u32 %v9851, 2147483648
      %v9888 = vxor.u32 %v9852, 2147483648
      %v9889 = vxor.u32 %v9853, 2147483648
      %v9890 = vxor.u32 %v9854, 2147483648
      %v9891 = vxor.u32 %v9855, 2147483648
      %v9892 = vxor.u32 %v9856, 2147483648
      %v9893 = vxor.u32 %v9857, 2147483648
      %v9894 = vxor.u32 %v9858, 2147483648
      %v9895 = vxor.u32 %v9859, 2147483648
      %v9896 = vxor.u32 %v9860, 2147483648
      %v9897 = vxor.u32 %v9861, 2147483648
      %v9898 = vxor.u32 %v9862, 2147483648
      %v9899 = vxor.u32 %v9863, 2147483648
      %v9900 = vxor.u32 %v9864, 2147483648
      %v9901 = vxor.u32 %v9865, 2147483648
      %v9902 = vxor.u32 %v9866, 2147483648
      %v9903 = vmul.f32 %v9867, 1.442695
      %v9904 = vpow.pop %v9903
      %v9905 = vmul.f32 %v9868, 1.442695
      %v9906 = vpow.pop %v9905
      %v9907 = vmul.f32 %v9869, 1.442695
      %v9908 = vpow.pop %v9907
      %v9909 = vmul.f32 %v9870, 1.442695
      %v9910 = vpow.pop %v9909
      %v9911 = vmul.f32 %v9871, 1.442695
      %v9912 = vpow.pop %v9911
      %v9913 = vmul.f32 %v9872, 1.442695
      %v9914 = vpow.pop %v9913
      %v9915 = vmul.f32 %v9873, 1.442695
      %v9916 = vpow.pop %v9915
      %v9917 = vmul.f32 %v9874, 1.442695
      %v9918 = vpow.pop %v9917
      %v9919 = vmul.f32 %v9875, 1.442695
      %v9920 = vpow.pop %v9919
      %v9921 = vmul.f32 %v9876, 1.442695
      %v9922 = vpow.pop %v9921
      %v9923 = vmul.f32 %v9877, 1.442695
      %v9924 = vpow.pop %v9923
      %v9925 = vmul.f32 %v9878, 1.442695
      %v9926 = vpow.pop %v9925
      %v9927 = vmul.f32 %v9879, 1.442695
      %v9928 = vpow.pop %v9927
      %v9929 = vmul.f32 %v9880, 1.442695
      %v9930 = vpow.pop %v9929
      %v9931 = vmul.f32 %v9881, 1.442695
      %v9932 = vpow.pop %v9931
      %v9933 = vmul.f32 %v9882, 1.442695
      %v9934 = vpow.pop %v9933
      %v9935 = vmul.f32 %v9883, 1.442695
      %v9936 = vpow.pop %v9935
      %v9937 = vmul.f32 %v9884, 1.442695
      %v9938 = vpow.pop %v9937
      %v9939 = vmul.f32 %v9885, 1.442695
      %v9940 = vpow.pop %v9939
      %v9941 = vmul.f32 %v9886, 1.442695
      %v9942 = vpow.pop %v9941
      %v9943 = vmul.f32 %v9887, 1.442695
      %v9944 = vpow.pop %v9943
      %v9945 = vmul.f32 %v9888, 1.442695
      %v9946 = vpow.pop %v9945
      %v9947 = vmul.f32 %v9889, 1.442695
      %v9948 = vpow.pop %v9947
      %v9949 = vmul.f32 %v9890, 1.442695
      %v9950 = vpow.pop %v9949
      %v9951 = vmul.f32 %v9891, 1.442695
      %v9952 = vpow.pop %v9951
      %v9953 = vmul.f32 %v9892, 1.442695
      %v9954 = vpow.pop %v9953
      %v9955 = vmul.f32 %v9893, 1.442695
      %v9956 = vpow.pop %v9955
      %v9957 = vmul.f32 %v9894, 1.442695
      %v9958 = vpow.pop %v9957
      %v9959 = vmul.f32 %v9895, 1.442695
      %v9960 = vpow.pop %v9959
      %v9961 = vmul.f32 %v9896, 1.442695
      %v9962 = vpow.pop %v9961
      %v9963 = vmul.f32 %v9897, 1.442695
      %v9964 = vpow.pop %v9963
      %v9965 = vmul.f32 %v9898, 1.442695
      %v9966 = vpow.pop %v9965
      %v9967 = vmul.f32 %v9899, 1.442695
      %v9968 = vpow.pop %v9967
      %v9969 = vmul.f32 %v9900, 1.442695
      %v9970 = vpow.pop %v9969
      %v9971 = vmul.f32 %v9901, 1.442695
      %v9972 = vpow.pop %v9971
      %v9973 = vmul.f32 %v9902, 1.442695
      %v9974 = vpow.pop %v9973
      %v9975 = vadd.f32 %v9904, 1.0
      %v9976 = vadd.f32 %v9906, 1.0
      %v9977 = vadd.f32 %v9908, 1.0
      %v9978 = vadd.f32 %v9910, 1.0
      %v9979 = vadd.f32 %v9912, 1.0
      %v9980 = vadd.f32 %v9914, 1.0
      %v9981 = vadd.f32 %v9916, 1.0
      %v9982 = vadd.f32 %v9918, 1.0
      %v9983 = vadd.f32 %v9920, 1.0
      %v9984 = vadd.f32 %v9922, 1.0
      %v9985 = vadd.f32 %v9924, 1.0
      %v9986 = vadd.f32 %v9926, 1.0
      %v9987 = vadd.f32 %v9928, 1.0
      %v9988 = vadd.f32 %v9930, 1.0
      %v9989 = vadd.f32 %v9932, 1.0
      %v9990 = vadd.f32 %v9934, 1.0
      %v9991 = vadd.f32 %v9936, 1.0
      %v9992 = vadd.f32 %v9938, 1.0
      %v9993 = vadd.f32 %v9940, 1.0
      %v9994 = vadd.f32 %v9942, 1.0
      %v9995 = vadd.f32 %v9944, 1.0
      %v9996 = vadd.f32 %v9946, 1.0
      %v9997 = vadd.f32 %v9948, 1.0
      %v9998 = vadd.f32 %v9950, 1.0
      %v9999 = vadd.f32 %v9952, 1.0
      %v10000 = vadd.f32 %v9954, 1.0
      %v10001 = vadd.f32 %v9956, 1.0
      %v10002 = vadd.f32 %v9958, 1.0
      %v10003 = vadd.f32 %v9960, 1.0
      %v10004 = vadd.f32 %v9962, 1.0
      %v10005 = vadd.f32 %v9964, 1.0
      %v10006 = vadd.f32 %v9966, 1.0
      %v10007 = vadd.f32 %v9968, 1.0
      %v10008 = vadd.f32 %v9970, 1.0
      %v10009 = vadd.f32 %v9972, 1.0
      %v10010 = vadd.f32 %v9974, 1.0
      %v10011 = vrcp.pop %v9975
      %v10012 = vmul.f32 %v9975, %v10011
      %v10013 = vsub.f32 1.0, %v10012
      %v10014 = vmul.f32 %v10011, %v10013
      %v10015 = vadd.f32 %v10011, %v10014
      %vm10016 = vweird.f32 %v9975
      %vm10017 = vweird.f32 %v10011
      %vm10018 = vmor %vm10016, %vm10017
      %v10019 = vsel %vm10018, %v10011, %v10015
      %v10020 = vand.u32 2147483647, %v9975
      %vm10021 = vcmp.eq.f32.partialorder %v10020, 8.507059e+37
      %v10022 = vand.u32 %v9975, 2147483648
      %v10023 = vor.u32 1.1754944e-38, %v10022
      %v10024 = vsel %vm10021, %v10023, %v10019
      %v10025 = vmul.f32 1.0, %v10024
      %v10026 = vrcp.pop %v9976
      %v10027 = vmul.f32 %v9976, %v10026
      %v10028 = vsub.f32 1.0, %v10027
      %v10029 = vmul.f32 %v10026, %v10028
      %v10030 = vadd.f32 %v10026, %v10029
      %vm10031 = vweird.f32 %v9976
      %vm10032 = vweird.f32 %v10026
      %vm10033 = vmor %vm10031, %vm10032
      %v10034 = vsel %vm10033, %v10026, %v10030
      %v10035 = vand.u32 2147483647, %v9976
      %vm10036 = vcmp.eq.f32.partialorder %v10035, 8.507059e+37
      %v10037 = vand.u32 %v9976, 2147483648
      %v10038 = vor.u32 1.1754944e-38, %v10037
      %v10039 = vsel %vm10036, %v10038, %v10034
      %v10040 = vmul.f32 1.0, %v10039
      %v10041 = vrcp.pop %v9977
      %v10042 = vmul.f32 %v9977, %v10041
      %v10043 = vsub.f32 1.0, %v10042
      %v10044 = vmul.f32 %v10041, %v10043
      %v10045 = vadd.f32 %v10041, %v10044
      %vm10046 = vweird.f32 %v9977
      %vm10047 = vweird.f32 %v10041
      %vm10048 = vmor %vm10046, %vm10047
      %v10049 = vsel %vm10048, %v10041, %v10045
      %v10050 = vand.u32 2147483647, %v9977
      %vm10051 = vcmp.eq.f32.partialorder %v10050, 8.507059e+37
      %v10052 = vand.u32 %v9977, 2147483648
      %v10053 = vor.u32 1.1754944e-38, %v10052
      %v10054 = vsel %vm10051, %v10053, %v10049
      %v10055 = vmul.f32 1.0, %v10054
      %v10056 = vrcp.pop %v9978
      %v10057 = vmul.f32 %v9978, %v10056
      %v10058 = vsub.f32 1.0, %v10057
      %v10059 = vmul.f32 %v10056, %v10058
      %v10060 = vadd.f32 %v10056, %v10059
      %vm10061 = vweird.f32 %v9978
      %vm10062 = vweird.f32 %v10056
      %vm10063 = vmor %vm10061, %vm10062
      %v10064 = vsel %vm10063, %v10056, %v10060
      %v10065 = vand.u32 2147483647, %v9978
      %vm10066 = vcmp.eq.f32.partialorder %v10065, 8.507059e+37
      %v10067 = vand.u32 %v9978, 2147483648
      %v10068 = vor.u32 1.1754944e-38, %v10067
      %v10069 = vsel %vm10066, %v10068, %v10064
      %v10070 = vmul.f32 1.0, %v10069
      %v10071 = vrcp.pop %v9979
      %v10072 = vmul.f32 %v9979, %v10071
      %v10073 = vsub.f32 1.0, %v10072
      %v10074 = vmul.f32 %v10071, %v10073
      %v10075 = vadd.f32 %v10071, %v10074
      %vm10076 = vweird.f32 %v9979
      %vm10077 = vweird.f32 %v10071
      %vm10078 = vmor %vm10076, %vm10077
      %v10079 = vsel %vm10078, %v10071, %v10075
      %v10080 = vand.u32 2147483647, %v9979
      %vm10081 = vcmp.eq.f32.partialorder %v10080, 8.507059e+37
      %v10082 = vand.u32 %v9979, 2147483648
      %v10083 = vor.u32 1.1754944e-38, %v10082
      %v10084 = vsel %vm10081, %v10083, %v10079
      %v10085 = vmul.f32 1.0, %v10084
      %v10086 = vrcp.pop %v9980
      %v10087 = vmul.f32 %v9980, %v10086
      %v10088 = vsub.f32 1.0, %v10087
      %v10089 = vmul.f32 %v10086, %v10088
      %v10090 = vadd.f32 %v10086, %v10089
      %vm10091 = vweird.f32 %v9980
      %vm10092 = vweird.f32 %v10086
      %vm10093 = vmor %vm10091, %vm10092
      %v10094 = vsel %vm10093, %v10086, %v10090
      %v10095 = vand.u32 2147483647, %v9980
      %vm10096 = vcmp.eq.f32.partialorder %v10095, 8.507059e+37
      %v10097 = vand.u32 %v9980, 2147483648
      %v10098 = vor.u32 1.1754944e-38, %v10097
      %v10099 = vsel %vm10096, %v10098, %v10094
      %v10100 = vmul.f32 1.0, %v10099
      %v10101 = vrcp.pop %v9981
      %v10102 = vmul.f32 %v9981, %v10101
      %v10103 = vsub.f32 1.0, %v10102
      %v10104 = vmul.f32 %v10101, %v10103
      %v10105 = vadd.f32 %v10101, %v10104
      %vm10106 = vweird.f32 %v9981
      %vm10107 = vweird.f32 %v10101
      %vm10108 = vmor %vm10106, %vm10107
      %v10109 = vsel %vm10108, %v10101, %v10105
      %v10110 = vand.u32 2147483647, %v9981
      %vm10111 = vcmp.eq.f32.partialorder %v10110, 8.507059e+37
      %v10112 = vand.u32 %v9981, 2147483648
      %v10113 = vor.u32 1.1754944e-38, %v10112
      %v10114 = vsel %vm10111, %v10113, %v10109
      %v10115 = vmul.f32 1.0, %v10114
      %v10116 = vrcp.pop %v9982
      %v10117 = vmul.f32 %v9982, %v10116
      %v10118 = vsub.f32 1.0, %v10117
      %v10119 = vmul.f32 %v10116, %v10118
      %v10120 = vadd.f32 %v10116, %v10119
      %vm10121 = vweird.f32 %v9982
      %vm10122 = vweird.f32 %v10116
      %vm10123 = vmor %vm10121, %vm10122
      %v10124 = vsel %vm10123, %v10116, %v10120
      %v10125 = vand.u32 2147483647, %v9982
      %vm10126 = vcmp.eq.f32.partialorder %v10125, 8.507059e+37
      %v10127 = vand.u32 %v9982, 2147483648
      %v10128 = vor.u32 1.1754944e-38, %v10127
      %v10129 = vsel %vm10126, %v10128, %v10124
      %v10130 = vmul.f32 1.0, %v10129
      %v10131 = vrcp.pop %v9983
      %v10132 = vmul.f32 %v9983, %v10131
      %v10133 = vsub.f32 1.0, %v10132
      %v10134 = vmul.f32 %v10131, %v10133
      %v10135 = vadd.f32 %v10131, %v10134
      %vm10136 = vweird.f32 %v9983
      %vm10137 = vweird.f32 %v10131
      %vm10138 = vmor %vm10136, %vm10137
      %v10139 = vsel %vm10138, %v10131, %v10135
      %v10140 = vand.u32 2147483647, %v9983
      %vm10141 = vcmp.eq.f32.partialorder %v10140, 8.507059e+37
      %v10142 = vand.u32 %v9983, 2147483648
      %v10143 = vor.u32 1.1754944e-38, %v10142
      %v10144 = vsel %vm10141, %v10143, %v10139
      %v10145 = vmul.f32 1.0, %v10144
      %v10146 = vrcp.pop %v9984
      %v10147 = vmul.f32 %v9984, %v10146
      %v10148 = vsub.f32 1.0, %v10147
      %v10149 = vmul.f32 %v10146, %v10148
      %v10150 = vadd.f32 %v10146, %v10149
      %vm10151 = vweird.f32 %v9984
      %vm10152 = vweird.f32 %v10146
      %vm10153 = vmor %vm10151, %vm10152
      %v10154 = vsel %vm10153, %v10146, %v10150
      %v10155 = vand.u32 2147483647, %v9984
      %vm10156 = vcmp.eq.f32.partialorder %v10155, 8.507059e+37
      %v10157 = vand.u32 %v9984, 2147483648
      %v10158 = vor.u32 1.1754944e-38, %v10157
      %v10159 = vsel %vm10156, %v10158, %v10154
      %v10160 = vmul.f32 1.0, %v10159
      %v10161 = vrcp.pop %v9985
      %v10162 = vmul.f32 %v9985, %v10161
      %v10163 = vsub.f32 1.0, %v10162
      %v10164 = vmul.f32 %v10161, %v10163
      %v10165 = vadd.f32 %v10161, %v10164
      %vm10166 = vweird.f32 %v9985
      %vm10167 = vweird.f32 %v10161
      %vm10168 = vmor %vm10166, %vm10167
      %v10169 = vsel %vm10168, %v10161, %v10165
      %v10170 = vand.u32 2147483647, %v9985
      %vm10171 = vcmp.eq.f32.partialorder %v10170, 8.507059e+37
      %v10172 = vand.u32 %v9985, 2147483648
      %v10173 = vor.u32 1.1754944e-38, %v10172
      %v10174 = vsel %vm10171, %v10173, %v10169
      %v10175 = vmul.f32 1.0, %v10174
      %v10176 = vrcp.pop %v9986
      %v10177 = vmul.f32 %v9986, %v10176
      %v10178 = vsub.f32 1.0, %v10177
      %v10179 = vmul.f32 %v10176, %v10178
      %v10180 = vadd.f32 %v10176, %v10179
      %vm10181 = vweird.f32 %v9986
      %vm10182 = vweird.f32 %v10176
      %vm10183 = vmor %vm10181, %vm10182
      %v10184 = vsel %vm10183, %v10176, %v10180
      %v10185 = vand.u32 2147483647, %v9986
      %vm10186 = vcmp.eq.f32.partialorder %v10185, 8.507059e+37
      %v10187 = vand.u32 %v9986, 2147483648
      %v10188 = vor.u32 1.1754944e-38, %v10187
      %v10189 = vsel %vm10186, %v10188, %v10184
      %v10190 = vmul.f32 1.0, %v10189
      %v10191 = vrcp.pop %v9987
      %v10192 = vmul.f32 %v9987, %v10191
      %v10193 = vsub.f32 1.0, %v10192
      %v10194 = vmul.f32 %v10191, %v10193
      %v10195 = vadd.f32 %v10191, %v10194
      %vm10196 = vweird.f32 %v9987
      %vm10197 = vweird.f32 %v10191
      %vm10198 = vmor %vm10196, %vm10197
      %v10199 = vsel %vm10198, %v10191, %v10195
      %v10200 = vand.u32 2147483647, %v9987
      %vm10201 = vcmp.eq.f32.partialorder %v10200, 8.507059e+37
      %v10202 = vand.u32 %v9987, 2147483648
      %v10203 = vor.u32 1.1754944e-38, %v10202
      %v10204 = vsel %vm10201, %v10203, %v10199
      %v10205 = vmul.f32 1.0, %v10204
      %v10206 = vrcp.pop %v9988
      %v10207 = vmul.f32 %v9988, %v10206
      %v10208 = vsub.f32 1.0, %v10207
      %v10209 = vmul.f32 %v10206, %v10208
      %v10210 = vadd.f32 %v10206, %v10209
      %vm10211 = vweird.f32 %v9988
      %vm10212 = vweird.f32 %v10206
      %vm10213 = vmor %vm10211, %vm10212
      %v10214 = vsel %vm10213, %v10206, %v10210
      %v10215 = vand.u32 2147483647, %v9988
      %vm10216 = vcmp.eq.f32.partialorder %v10215, 8.507059e+37
      %v10217 = vand.u32 %v9988, 2147483648
      %v10218 = vor.u32 1.1754944e-38, %v10217
      %v10219 = vsel %vm10216, %v10218, %v10214
      %v10220 = vmul.f32 1.0, %v10219
      %v10221 = vrcp.pop %v9989
      %v10222 = vmul.f32 %v9989, %v10221
      %v10223 = vsub.f32 1.0, %v10222
      %v10224 = vmul.f32 %v10221, %v10223
      %v10225 = vadd.f32 %v10221, %v10224
      %vm10226 = vweird.f32 %v9989
      %vm10227 = vweird.f32 %v10221
      %vm10228 = vmor %vm10226, %vm10227
      %v10229 = vsel %vm10228, %v10221, %v10225
      %v10230 = vand.u32 2147483647, %v9989
      %vm10231 = vcmp.eq.f32.partialorder %v10230, 8.507059e+37
      %v10232 = vand.u32 %v9989, 2147483648
      %v10233 = vor.u32 1.1754944e-38, %v10232
      %v10234 = vsel %vm10231, %v10233, %v10229
      %v10235 = vmul.f32 1.0, %v10234
      %v10236 = vrcp.pop %v9990
      %v10237 = vmul.f32 %v9990, %v10236
      %v10238 = vsub.f32 1.0, %v10237
      %v10239 = vmul.f32 %v10236, %v10238
      %v10240 = vadd.f32 %v10236, %v10239
      %vm10241 = vweird.f32 %v9990
      %vm10242 = vweird.f32 %v10236
      %vm10243 = vmor %vm10241, %vm10242
      %v10244 = vsel %vm10243, %v10236, %v10240
      %v10245 = vand.u32 2147483647, %v9990
      %vm10246 = vcmp.eq.f32.partialorder %v10245, 8.507059e+37
      %v10247 = vand.u32 %v9990, 2147483648
      %v10248 = vor.u32 1.1754944e-38, %v10247
      %v10249 = vsel %vm10246, %v10248, %v10244
      %v10250 = vmul.f32 1.0, %v10249
      %v10251 = vrcp.pop %v9991
      %v10252 = vmul.f32 %v9991, %v10251
      %v10253 = vsub.f32 1.0, %v10252
      %v10254 = vmul.f32 %v10251, %v10253
      %v10255 = vadd.f32 %v10251, %v10254
      %vm10256 = vweird.f32 %v9991
      %vm10257 = vweird.f32 %v10251
      %vm10258 = vmor %vm10256, %vm10257
      %v10259 = vsel %vm10258, %v10251, %v10255
      %v10260 = vand.u32 2147483647, %v9991
      %vm10261 = vcmp.eq.f32.partialorder %v10260, 8.507059e+37
      %v10262 = vand.u32 %v9991, 2147483648
      %v10263 = vor.u32 1.1754944e-38, %v10262
      %v10264 = vsel %vm10261, %v10263, %v10259
      %v10265 = vmul.f32 1.0, %v10264
      %v10266 = vrcp.pop %v9992
      %v10267 = vmul.f32 %v9992, %v10266
      %v10268 = vsub.f32 1.0, %v10267
      %v10269 = vmul.f32 %v10266, %v10268
      %v10270 = vadd.f32 %v10266, %v10269
      %vm10271 = vweird.f32 %v9992
      %vm10272 = vweird.f32 %v10266
      %vm10273 = vmor %vm10271, %vm10272
      %v10274 = vsel %vm10273, %v10266, %v10270
      %v10275 = vand.u32 2147483647, %v9992
      %vm10276 = vcmp.eq.f32.partialorder %v10275, 8.507059e+37
      %v10277 = vand.u32 %v9992, 2147483648
      %v10278 = vor.u32 1.1754944e-38, %v10277
      %v10279 = vsel %vm10276, %v10278, %v10274
      %v10280 = vmul.f32 1.0, %v10279
      %v10281 = vrcp.pop %v9993
      %v10282 = vmul.f32 %v9993, %v10281
      %v10283 = vsub.f32 1.0, %v10282
      %v10284 = vmul.f32 %v10281, %v10283
      %v10285 = vadd.f32 %v10281, %v10284
      %vm10286 = vweird.f32 %v9993
      %vm10287 = vweird.f32 %v10281
      %vm10288 = vmor %vm10286, %vm10287
      %v10289 = vsel %vm10288, %v10281, %v10285
      %v10290 = vand.u32 2147483647, %v9993
      %vm10291 = vcmp.eq.f32.partialorder %v10290, 8.507059e+37
      %v10292 = vand.u32 %v9993, 2147483648
      %v10293 = vor.u32 1.1754944e-38, %v10292
      %v10294 = vsel %vm10291, %v10293, %v10289
      %v10295 = vmul.f32 1.0, %v10294
      %v10296 = vrcp.pop %v9994
      %v10297 = vmul.f32 %v9994, %v10296
      %v10298 = vsub.f32 1.0, %v10297
      %v10299 = vmul.f32 %v10296, %v10298
      %v10300 = vadd.f32 %v10296, %v10299
      %vm10301 = vweird.f32 %v9994
      %vm10302 = vweird.f32 %v10296
      %vm10303 = vmor %vm10301, %vm10302
      %v10304 = vsel %vm10303, %v10296, %v10300
      %v10305 = vand.u32 2147483647, %v9994
      %vm10306 = vcmp.eq.f32.partialorder %v10305, 8.507059e+37
      %v10307 = vand.u32 %v9994, 2147483648
      %v10308 = vor.u32 1.1754944e-38, %v10307
      %v10309 = vsel %vm10306, %v10308, %v10304
      %v10310 = vmul.f32 1.0, %v10309
      %v10311 = vrcp.pop %v9995
      %v10312 = vmul.f32 %v9995, %v10311
      %v10313 = vsub.f32 1.0, %v10312
      %v10314 = vmul.f32 %v10311, %v10313
      %v10315 = vadd.f32 %v10311, %v10314
      %vm10316 = vweird.f32 %v9995
      %vm10317 = vweird.f32 %v10311
      %vm10318 = vmor %vm10316, %vm10317
      %v10319 = vsel %vm10318, %v10311, %v10315
      %v10320 = vand.u32 2147483647, %v9995
      %vm10321 = vcmp.eq.f32.partialorder %v10320, 8.507059e+37
      %v10322 = vand.u32 %v9995, 2147483648
      %v10323 = vor.u32 1.1754944e-38, %v10322
      %v10324 = vsel %vm10321, %v10323, %v10319
      %v10325 = vmul.f32 1.0, %v10324
      %v10326 = vrcp.pop %v9996
      %v10327 = vmul.f32 %v9996, %v10326
      %v10328 = vsub.f32 1.0, %v10327
      %v10329 = vmul.f32 %v10326, %v10328
      %v10330 = vadd.f32 %v10326, %v10329
      %vm10331 = vweird.f32 %v9996
      %vm10332 = vweird.f32 %v10326
      %vm10333 = vmor %vm10331, %vm10332
      %v10334 = vsel %vm10333, %v10326, %v10330
      %v10335 = vand.u32 2147483647, %v9996
      %vm10336 = vcmp.eq.f32.partialorder %v10335, 8.507059e+37
      %v10337 = vand.u32 %v9996, 2147483648
      %v10338 = vor.u32 1.1754944e-38, %v10337
      %v10339 = vsel %vm10336, %v10338, %v10334
      %v10340 = vmul.f32 1.0, %v10339
      %v10341 = vrcp.pop %v9997
      %v10342 = vmul.f32 %v9997, %v10341
      %v10343 = vsub.f32 1.0, %v10342
      %v10344 = vmul.f32 %v10341, %v10343
      %v10345 = vadd.f32 %v10341, %v10344
      %vm10346 = vweird.f32 %v9997
      %vm10347 = vweird.f32 %v10341
      %vm10348 = vmor %vm10346, %vm10347
      %v10349 = vsel %vm10348, %v10341, %v10345
      %v10350 = vand.u32 2147483647, %v9997
      %vm10351 = vcmp.eq.f32.partialorder %v10350, 8.507059e+37
      %v10352 = vand.u32 %v9997, 2147483648
      %v10353 = vor.u32 1.1754944e-38, %v10352
      %v10354 = vsel %vm10351, %v10353, %v10349
      %v10355 = vmul.f32 1.0, %v10354
      %v10356 = vrcp.pop %v9998
      %v10357 = vmul.f32 %v9998, %v10356
      %v10358 = vsub.f32 1.0, %v10357
      %v10359 = vmul.f32 %v10356, %v10358
      %v10360 = vadd.f32 %v10356, %v10359
      %vm10361 = vweird.f32 %v9998
      %vm10362 = vweird.f32 %v10356
      %vm10363 = vmor %vm10361, %vm10362
      %v10364 = vsel %vm10363, %v10356, %v10360
      %v10365 = vand.u32 2147483647, %v9998
      %vm10366 = vcmp.eq.f32.partialorder %v10365, 8.507059e+37
      %v10367 = vand.u32 %v9998, 2147483648
      %v10368 = vor.u32 1.1754944e-38, %v10367
      %v10369 = vsel %vm10366, %v10368, %v10364
      %v10370 = vmul.f32 1.0, %v10369
      %v10371 = vrcp.pop %v9999
      %v10372 = vmul.f32 %v9999, %v10371
      %v10373 = vsub.f32 1.0, %v10372
      %v10374 = vmul.f32 %v10371, %v10373
      %v10375 = vadd.f32 %v10371, %v10374
      %vm10376 = vweird.f32 %v9999
      %vm10377 = vweird.f32 %v10371
      %vm10378 = vmor %vm10376, %vm10377
      %v10379 = vsel %vm10378, %v10371, %v10375
      %v10380 = vand.u32 2147483647, %v9999
      %vm10381 = vcmp.eq.f32.partialorder %v10380, 8.507059e+37
      %v10382 = vand.u32 %v9999, 2147483648
      %v10383 = vor.u32 1.1754944e-38, %v10382
      %v10384 = vsel %vm10381, %v10383, %v10379
      %v10385 = vmul.f32 1.0, %v10384
      %v10386 = vrcp.pop %v10000
      %v10387 = vmul.f32 %v10000, %v10386
      %v10388 = vsub.f32 1.0, %v10387
      %v10389 = vmul.f32 %v10386, %v10388
      %v10390 = vadd.f32 %v10386, %v10389
      %vm10391 = vweird.f32 %v10000
      %vm10392 = vweird.f32 %v10386
      %vm10393 = vmor %vm10391, %vm10392
      %v10394 = vsel %vm10393, %v10386, %v10390
      %v10395 = vand.u32 2147483647, %v10000
      %vm10396 = vcmp.eq.f32.partialorder %v10395, 8.507059e+37
      %v10397 = vand.u32 %v10000, 2147483648
      %v10398 = vor.u32 1.1754944e-38, %v10397
      %v10399 = vsel %vm10396, %v10398, %v10394
      %v10400 = vmul.f32 1.0, %v10399
      %v10401 = vrcp.pop %v10001
      %v10402 = vmul.f32 %v10001, %v10401
      %v10403 = vsub.f32 1.0, %v10402
      %v10404 = vmul.f32 %v10401, %v10403
      %v10405 = vadd.f32 %v10401, %v10404
      %vm10406 = vweird.f32 %v10001
      %vm10407 = vweird.f32 %v10401
      %vm10408 = vmor %vm10406, %vm10407
      %v10409 = vsel %vm10408, %v10401, %v10405
      %v10410 = vand.u32 2147483647, %v10001
      %vm10411 = vcmp.eq.f32.partialorder %v10410, 8.507059e+37
      %v10412 = vand.u32 %v10001, 2147483648
      %v10413 = vor.u32 1.1754944e-38, %v10412
      %v10414 = vsel %vm10411, %v10413, %v10409
      %v10415 = vmul.f32 1.0, %v10414
      %v10416 = vrcp.pop %v10002
      %v10417 = vmul.f32 %v10002, %v10416
      %v10418 = vsub.f32 1.0, %v10417
      %v10419 = vmul.f32 %v10416, %v10418
      %v10420 = vadd.f32 %v10416, %v10419
      %vm10421 = vweird.f32 %v10002
      %vm10422 = vweird.f32 %v10416
      %vm10423 = vmor %vm10421, %vm10422
      %v10424 = vsel %vm10423, %v10416, %v10420
      %v10425 = vand.u32 2147483647, %v10002
      %vm10426 = vcmp.eq.f32.partialorder %v10425, 8.507059e+37
      %v10427 = vand.u32 %v10002, 2147483648
      %v10428 = vor.u32 1.1754944e-38, %v10427
      %v10429 = vsel %vm10426, %v10428, %v10424
      %v10430 = vmul.f32 1.0, %v10429
      %v10431 = vrcp.pop %v10003
      %v10432 = vmul.f32 %v10003, %v10431
      %v10433 = vsub.f32 1.0, %v10432
      %v10434 = vmul.f32 %v10431, %v10433
      %v10435 = vadd.f32 %v10431, %v10434
      %vm10436 = vweird.f32 %v10003
      %vm10437 = vweird.f32 %v10431
      %vm10438 = vmor %vm10436, %vm10437
      %v10439 = vsel %vm10438, %v10431, %v10435
      %v10440 = vand.u32 2147483647, %v10003
      %vm10441 = vcmp.eq.f32.partialorder %v10440, 8.507059e+37
      %v10442 = vand.u32 %v10003, 2147483648
      %v10443 = vor.u32 1.1754944e-38, %v10442
      %v10444 = vsel %vm10441, %v10443, %v10439
      %v10445 = vmul.f32 1.0, %v10444
      %v10446 = vrcp.pop %v10004
      %v10447 = vmul.f32 %v10004, %v10446
      %v10448 = vsub.f32 1.0, %v10447
      %v10449 = vmul.f32 %v10446, %v10448
      %v10450 = vadd.f32 %v10446, %v10449
      %vm10451 = vweird.f32 %v10004
      %vm10452 = vweird.f32 %v10446
      %vm10453 = vmor %vm10451, %vm10452
      %v10454 = vsel %vm10453, %v10446, %v10450
      %v10455 = vand.u32 2147483647, %v10004
      %vm10456 = vcmp.eq.f32.partialorder %v10455, 8.507059e+37
      %v10457 = vand.u32 %v10004, 2147483648
      %v10458 = vor.u32 1.1754944e-38, %v10457
      %v10459 = vsel %vm10456, %v10458, %v10454
      %v10460 = vmul.f32 1.0, %v10459
      %v10461 = vrcp.pop %v10005
      %v10462 = vmul.f32 %v10005, %v10461
      %v10463 = vsub.f32 1.0, %v10462
      %v10464 = vmul.f32 %v10461, %v10463
      %v10465 = vadd.f32 %v10461, %v10464
      %vm10466 = vweird.f32 %v10005
      %vm10467 = vweird.f32 %v10461
      %vm10468 = vmor %vm10466, %vm10467
      %v10469 = vsel %vm10468, %v10461, %v10465
      %v10470 = vand.u32 2147483647, %v10005
      %vm10471 = vcmp.eq.f32.partialorder %v10470, 8.507059e+37
      %v10472 = vand.u32 %v10005, 2147483648
      %v10473 = vor.u32 1.1754944e-38, %v10472
      %v10474 = vsel %vm10471, %v10473, %v10469
      %v10475 = vmul.f32 1.0, %v10474
      %v10476 = vrcp.pop %v10006
      %v10477 = vmul.f32 %v10006, %v10476
      %v10478 = vsub.f32 1.0, %v10477
      %v10479 = vmul.f32 %v10476, %v10478
      %v10480 = vadd.f32 %v10476, %v10479
      %vm10481 = vweird.f32 %v10006
      %vm10482 = vweird.f32 %v10476
      %vm10483 = vmor %vm10481, %vm10482
      %v10484 = vsel %vm10483, %v10476, %v10480
      %v10485 = vand.u32 2147483647, %v10006
      %vm10486 = vcmp.eq.f32.partialorder %v10485, 8.507059e+37
      %v10487 = vand.u32 %v10006, 2147483648
      %v10488 = vor.u32 1.1754944e-38, %v10487
      %v10489 = vsel %vm10486, %v10488, %v10484
      %v10490 = vmul.f32 1.0, %v10489
      %v10491 = vrcp.pop %v10007
      %v10492 = vmul.f32 %v10007, %v10491
      %v10493 = vsub.f32 1.0, %v10492
      %v10494 = vmul.f32 %v10491, %v10493
      %v10495 = vadd.f32 %v10491, %v10494
      %vm10496 = vweird.f32 %v10007
      %vm10497 = vweird.f32 %v10491
      %vm10498 = vmor %vm10496, %vm10497
      %v10499 = vsel %vm10498, %v10491, %v10495
      %v10500 = vand.u32 2147483647, %v10007
      %vm10501 = vcmp.eq.f32.partialorder %v10500, 8.507059e+37
      %v10502 = vand.u32 %v10007, 2147483648
      %v10503 = vor.u32 1.1754944e-38, %v10502
      %v10504 = vsel %vm10501, %v10503, %v10499
      %v10505 = vmul.f32 1.0, %v10504
      %v10506 = vrcp.pop %v10008
      %v10507 = vmul.f32 %v10008, %v10506
      %v10508 = vsub.f32 1.0, %v10507
      %v10509 = vmul.f32 %v10506, %v10508
      %v10510 = vadd.f32 %v10506, %v10509
      %vm10511 = vweird.f32 %v10008
      %vm10512 = vweird.f32 %v10506
      %vm10513 = vmor %vm10511, %vm10512
      %v10514 = vsel %vm10513, %v10506, %v10510
      %v10515 = vand.u32 2147483647, %v10008
      %vm10516 = vcmp.eq.f32.partialorder %v10515, 8.507059e+37
      %v10517 = vand.u32 %v10008, 2147483648
      %v10518 = vor.u32 1.1754944e-38, %v10517
      %v10519 = vsel %vm10516, %v10518, %v10514
      %v10520 = vmul.f32 1.0, %v10519
      %v10521 = vrcp.pop %v10009
      %v10522 = vmul.f32 %v10009, %v10521
      %v10523 = vsub.f32 1.0, %v10522
      %v10524 = vmul.f32 %v10521, %v10523
      %v10525 = vadd.f32 %v10521, %v10524
      %vm10526 = vweird.f32 %v10009
      %vm10527 = vweird.f32 %v10521
      %vm10528 = vmor %vm10526, %vm10527
      %v10529 = vsel %vm10528, %v10521, %v10525
      %v10530 = vand.u32 2147483647, %v10009
      %vm10531 = vcmp.eq.f32.partialorder %v10530, 8.507059e+37
      %v10532 = vand.u32 %v10009, 2147483648
      %v10533 = vor.u32 1.1754944e-38, %v10532
      %v10534 = vsel %vm10531, %v10533, %v10529
      %v10535 = vmul.f32 1.0, %v10534
      %v10536 = vrcp.pop %v10010
      %v10537 = vmul.f32 %v10010, %v10536
      %v10538 = vsub.f32 1.0, %v10537
      %v10539 = vmul.f32 %v10536, %v10538
      %v10540 = vadd.f32 %v10536, %v10539
      %vm10541 = vweird.f32 %v10010
      %vm10542 = vweird.f32 %v10536
      %vm10543 = vmor %vm10541, %vm10542
      %v10544 = vsel %vm10543, %v10536, %v10540
      %v10545 = vand.u32 2147483647, %v10010
      %vm10546 = vcmp.eq.f32.partialorder %v10545, 8.507059e+37
      %v10547 = vand.u32 %v10010, 2147483648
      %v10548 = vor.u32 1.1754944e-38, %v10547
      %v10549 = vsel %vm10546, %v10548, %v10544
      %v10550 = vmul.f32 1.0, %v10549
      %v10551 = vtanh.pop %v9831
      %v10552 = vtanh.pop %v9832
      %v10553 = vtanh.pop %v9833
      %v10554 = vtanh.pop %v9834
      %v10555 = vtanh.pop %v9835
      %v10556 = vtanh.pop %v9836
      %v10557 = vtanh.pop %v9837
      %v10558 = vtanh.pop %v9838
      %v10559 = vtanh.pop %v9839
      %v10560 = vtanh.pop %v9840
      %v10561 = vtanh.pop %v9841
      %v10562 = vtanh.pop %v9842
      %v10563 = vtanh.pop %v9843
      %v10564 = vtanh.pop %v9844
      %v10565 = vtanh.pop %v9845
      %v10566 = vtanh.pop %v9846
      %v10567 = vtanh.pop %v9847
      %v10568 = vtanh.pop %v9848
      %v10569 = vtanh.pop %v9849
      %v10570 = vtanh.pop %v9850
      %v10571 = vtanh.pop %v9851
      %v10572 = vtanh.pop %v9852
      %v10573 = vtanh.pop %v9853
      %v10574 = vtanh.pop %v9854
      %v10575 = vtanh.pop %v9855
      %v10576 = vtanh.pop %v9856
      %v10577 = vtanh.pop %v9857
      %v10578 = vtanh.pop %v9858
      %v10579 = vtanh.pop %v9859
      %v10580 = vtanh.pop %v9860
      %v10581 = vtanh.pop %v9861
      %v10582 = vtanh.pop %v9862
      %v10583 = vtanh.pop %v9863
      %v10584 = vtanh.pop %v9864
      %v10585 = vtanh.pop %v9865
      %v10586 = vtanh.pop %v9866
      %s10587 = scalar_lea.vmem [#allocation3], 288
      %v10588 = vld [vmem:[%s10587] sm:$0xff]
      %v10589 = vld [vmem:[%s10587 + $0x8] sm:$0xff]
      %v10590 = vld [vmem:[%s10587 + $0x10] sm:$0xff]
      %v10591 = vld [vmem:[%s10587 + $0x18] sm:$0xff]
      %v10592 = vld [vmem:[%s10587 + $0x20] sm:$0xff]
      %v10593 = vld [vmem:[%s10587 + $0x28] sm:$0xff]
      %v10594 = vld [vmem:[%s10587 + $0x30] sm:$0xff]
      %v10595 = vld [vmem:[%s10587 + $0x38] sm:$0xff]
      %v10596 = vld [vmem:[%s10587 + $0x40] sm:$0xff]
      %v10597 = vld [vmem:[%s10587 + $0x48] sm:$0xff]
      %v10598 = vld [vmem:[%s10587 + $0x50] sm:$0xff]
      %v10599 = vld [vmem:[%s10587 + $0x58] sm:$0xff]
      %v10600 = vld [vmem:[%s10587 + $0x60] sm:$0xff]
      %v10601 = vld [vmem:[%s10587 + $0x68] sm:$0xff]
      %v10602 = vld [vmem:[%s10587 + $0x70] sm:$0xff]
      %v10603 = vld [vmem:[%s10587 + $0x78] sm:$0xff]
      %v10604 = vld [vmem:[%s10587 + $0x80] sm:$0xff]
      %v10605 = vld [vmem:[%s10587 + $0x88] sm:$0xff]
      %v10606 = vld [vmem:[%s10587 + $0x90] sm:$0xff]
      %v10607 = vld [vmem:[%s10587 + $0x98] sm:$0xff]
      %v10608 = vld [vmem:[%s10587 + $0xa0] sm:$0xff]
      %v10609 = vld [vmem:[%s10587 + $0xa8] sm:$0xff]
      %v10610 = vld [vmem:[%s10587 + $0xb0] sm:$0xff]
      %v10611 = vld [vmem:[%s10587 + $0xb8] sm:$0xff]
      %v10612 = vld [vmem:[%s10587 + $0xc0] sm:$0xff]
      %v10613 = vld [vmem:[%s10587 + $0xc8] sm:$0xff]
      %v10614 = vld [vmem:[%s10587 + $0xd0] sm:$0xff]
      %v10615 = vld [vmem:[%s10587 + $0xd8] sm:$0xff]
      %v10616 = vld [vmem:[%s10587 + $0xe0] sm:$0xff]
      %v10617 = vld [vmem:[%s10587 + $0xe8] sm:$0xff]
      %v10618 = vld [vmem:[%s10587 + $0xf0] sm:$0xff]
      %v10619 = vld [vmem:[%s10587 + $0xf8] sm:$0xff]
      %v10620 = vld [vmem:[%s10587 + $0x100] sm:$0xff]
      %v10621 = vld [vmem:[%s10587 + $0x108] sm:$0xff]
      %v10622 = vld [vmem:[%s10587 + $0x110] sm:$0xff]
      %v10623 = vld [vmem:[%s10587 + $0x118] sm:$0xff]
      %10660 = vrot.lane.b32.xlu0 %v10588, 32
      %v10661 = vpop.permute.xlu0 %10660
      %10662 = vrot.lane.b32.xlu0 %v10589, 32
      %v10663 = vpop.permute.xlu0 %10662
      %10664 = vrot.lane.b32.xlu0 %v10590, 32
      %v10665 = vpop.permute.xlu0 %10664
      %10666 = vrot.lane.b32.xlu0 %v10591, 32
      %v10667 = vpop.permute.xlu0 %10666
      %10668 = vrot.lane.b32.xlu0 %v10592, 32
      %v10669 = vpop.permute.xlu0 %10668
      %10670 = vrot.lane.b32.xlu0 %v10593, 32
      %v10671 = vpop.permute.xlu0 %10670
      %10672 = vrot.lane.b32.xlu0 %v10594, 32
      %v10673 = vpop.permute.xlu0 %10672
      %10674 = vrot.lane.b32.xlu0 %v10595, 32
      %v10675 = vpop.permute.xlu0 %10674
      %10676 = vrot.lane.b32.xlu0 %v10596, 32
      %v10677 = vpop.permute.xlu0 %10676
      %10678 = vrot.lane.b32.xlu0 %v10597, 32
      %v10679 = vpop.permute.xlu0 %10678
      %10680 = vrot.lane.b32.xlu0 %v10598, 32
      %v10681 = vpop.permute.xlu0 %10680
      %10682 = vrot.lane.b32.xlu0 %v10599, 32
      %v10683 = vpop.permute.xlu0 %10682
      %10684 = vrot.lane.b32.xlu0 %v10600, 32
      %v10685 = vpop.permute.xlu0 %10684
      %10686 = vrot.lane.b32.xlu0 %v10601, 32
      %v10687 = vpop.permute.xlu0 %10686
      %10688 = vrot.lane.b32.xlu0 %v10602, 32
      %v10689 = vpop.permute.xlu0 %10688
      %10690 = vrot.lane.b32.xlu0 %v10603, 32
      %v10691 = vpop.permute.xlu0 %10690
      %10692 = vrot.lane.b32.xlu0 %v10604, 32
      %v10693 = vpop.permute.xlu0 %10692
      %10694 = vrot.lane.b32.xlu0 %v10605, 32
      %v10695 = vpop.permute.xlu0 %10694
      %10696 = vrot.lane.b32.xlu0 %v10606, 32
      %v10697 = vpop.permute.xlu0 %10696
      %10698 = vrot.lane.b32.xlu0 %v10607, 32
      %v10699 = vpop.permute.xlu0 %10698
      %10700 = vrot.lane.b32.xlu0 %v10608, 32
      %v10701 = vpop.permute.xlu0 %10700
      %10702 = vrot.lane.b32.xlu0 %v10609, 32
      %v10703 = vpop.permute.xlu0 %10702
      %10704 = vrot.lane.b32.xlu0 %v10610, 32
      %v10705 = vpop.permute.xlu0 %10704
      %10706 = vrot.lane.b32.xlu0 %v10611, 32
      %v10707 = vpop.permute.xlu0 %10706
      %10708 = vrot.lane.b32.xlu0 %v10612, 32
      %v10709 = vpop.permute.xlu0 %10708
      %10710 = vrot.lane.b32.xlu0 %v10613, 32
      %v10711 = vpop.permute.xlu0 %10710
      %10712 = vrot.lane.b32.xlu0 %v10614, 32
      %v10713 = vpop.permute.xlu0 %10712
      %10714 = vrot.lane.b32.xlu0 %v10615, 32
      %v10715 = vpop.permute.xlu0 %10714
      %10716 = vrot.lane.b32.xlu0 %v10616, 32
      %v10717 = vpop.permute.xlu0 %10716
      %10718 = vrot.lane.b32.xlu0 %v10617, 32
      %v10719 = vpop.permute.xlu0 %10718
      %10720 = vrot.lane.b32.xlu0 %v10618, 32
      %v10721 = vpop.permute.xlu0 %10720
      %10722 = vrot.lane.b32.xlu0 %v10619, 32
      %v10723 = vpop.permute.xlu0 %10722
      %10724 = vrot.lane.b32.xlu0 %v10620, 32
      %v10725 = vpop.permute.xlu0 %10724
      %10726 = vrot.lane.b32.xlu0 %v10621, 32
      %v10727 = vpop.permute.xlu0 %10726
      %10728 = vrot.lane.b32.xlu0 %v10622, 32
      %v10729 = vpop.permute.xlu0 %10728
      %10730 = vrot.lane.b32.xlu0 %v10623, 32
      %v10731 = vpop.permute.xlu0 %10730
      %v10768 = vmul.f32 %v10025, %v10661
      %v10769 = vmul.f32 %v10040, %v10663
      %v10770 = vmul.f32 %v10055, %v10665
      %v10771 = vmul.f32 %v10070, %v10667
      %v10772 = vmul.f32 %v10085, %v10669
      %v10773 = vmul.f32 %v10100, %v10671
      %v10774 = vmul.f32 %v10115, %v10673
      %v10775 = vmul.f32 %v10130, %v10675
      %v10776 = vmul.f32 %v10145, %v10677
      %v10777 = vmul.f32 %v10160, %v10679
      %v10778 = vmul.f32 %v10175, %v10681
      %v10779 = vmul.f32 %v10190, %v10683
      %v10780 = vmul.f32 %v10205, %v10685
      %v10781 = vmul.f32 %v10220, %v10687
      %v10782 = vmul.f32 %v10235, %v10689
      %v10783 = vmul.f32 %v10250, %v10691
      %v10784 = vmul.f32 %v10265, %v10693
      %v10785 = vmul.f32 %v10280, %v10695
      %v10786 = vmul.f32 %v10295, %v10697
      %v10787 = vmul.f32 %v10310, %v10699
      %v10788 = vmul.f32 %v10325, %v10701
      %v10789 = vmul.f32 %v10340, %v10703
      %v10790 = vmul.f32 %v10355, %v10705
      %v10791 = vmul.f32 %v10370, %v10707
      %v10792 = vmul.f32 %v10385, %v10709
      %v10793 = vmul.f32 %v10400, %v10711
      %v10794 = vmul.f32 %v10415, %v10713
      %v10795 = vmul.f32 %v10430, %v10715
      %v10796 = vmul.f32 %v10445, %v10717
      %v10797 = vmul.f32 %v10460, %v10719
      %v10798 = vmul.f32 %v10475, %v10721
      %v10799 = vmul.f32 %v10490, %v10723
      %v10800 = vmul.f32 %v10505, %v10725
      %v10801 = vmul.f32 %v10520, %v10727
      %v10802 = vmul.f32 %v10535, %v10729
      %v10803 = vmul.f32 %v10550, %v10731
      %10840 = vrot.lane.b32.xlu0 %v10551, 32
      %v10841 = vpop.permute.xlu0 %10840
      %10842 = vrot.lane.b32.xlu0 %v10552, 32
      %v10843 = vpop.permute.xlu0 %10842
      %10844 = vrot.lane.b32.xlu0 %v10553, 32
      %v10845 = vpop.permute.xlu0 %10844
      %10846 = vrot.lane.b32.xlu0 %v10554, 32
      %v10847 = vpop.permute.xlu0 %10846
      %10848 = vrot.lane.b32.xlu0 %v10555, 32
      %v10849 = vpop.permute.xlu0 %10848
      %10850 = vrot.lane.b32.xlu0 %v10556, 32
      %v10851 = vpop.permute.xlu0 %10850
      %10852 = vrot.lane.b32.xlu0 %v10557, 32
      %v10853 = vpop.permute.xlu0 %10852
      %10854 = vrot.lane.b32.xlu0 %v10558, 32
      %v10855 = vpop.permute.xlu0 %10854
      %10856 = vrot.lane.b32.xlu0 %v10559, 32
      %v10857 = vpop.permute.xlu0 %10856
      %10858 = vrot.lane.b32.xlu0 %v10560, 32
      %v10859 = vpop.permute.xlu0 %10858
      %10860 = vrot.lane.b32.xlu0 %v10561, 32
      %v10861 = vpop.permute.xlu0 %10860
      %10862 = vrot.lane.b32.xlu0 %v10562, 32
      %v10863 = vpop.permute.xlu0 %10862
      %10864 = vrot.lane.b32.xlu0 %v10563, 32
      %v10865 = vpop.permute.xlu0 %10864
      %10866 = vrot.lane.b32.xlu0 %v10564, 32
      %v10867 = vpop.permute.xlu0 %10866
      %10868 = vrot.lane.b32.xlu0 %v10565, 32
      %v10869 = vpop.permute.xlu0 %10868
      %10870 = vrot.lane.b32.xlu0 %v10566, 32
      %v10871 = vpop.permute.xlu0 %10870
      %10872 = vrot.lane.b32.xlu0 %v10567, 32
      %v10873 = vpop.permute.xlu0 %10872
      %10874 = vrot.lane.b32.xlu0 %v10568, 32
      %v10875 = vpop.permute.xlu0 %10874
      %10876 = vrot.lane.b32.xlu0 %v10569, 32
      %v10877 = vpop.permute.xlu0 %10876
      %10878 = vrot.lane.b32.xlu0 %v10570, 32
      %v10879 = vpop.permute.xlu0 %10878
      %10880 = vrot.lane.b32.xlu0 %v10571, 32
      %v10881 = vpop.permute.xlu0 %10880
      %10882 = vrot.lane.b32.xlu0 %v10572, 32
      %v10883 = vpop.permute.xlu0 %10882
      %10884 = vrot.lane.b32.xlu0 %v10573, 32
      %v10885 = vpop.permute.xlu0 %10884
      %10886 = vrot.lane.b32.xlu0 %v10574, 32
      %v10887 = vpop.permute.xlu0 %10886
      %10888 = vrot.lane.b32.xlu0 %v10575, 32
      %v10889 = vpop.permute.xlu0 %10888
      %10890 = vrot.lane.b32.xlu0 %v10576, 32
      %v10891 = vpop.permute.xlu0 %10890
      %10892 = vrot.lane.b32.xlu0 %v10577, 32
      %v10893 = vpop.permute.xlu0 %10892
      %10894 = vrot.lane.b32.xlu0 %v10578, 32
      %v10895 = vpop.permute.xlu0 %10894
      %10896 = vrot.lane.b32.xlu0 %v10579, 32
      %v10897 = vpop.permute.xlu0 %10896
      %10898 = vrot.lane.b32.xlu0 %v10580, 32
      %v10899 = vpop.permute.xlu0 %10898
      %10900 = vrot.lane.b32.xlu0 %v10581, 32
      %v10901 = vpop.permute.xlu0 %10900
      %10902 = vrot.lane.b32.xlu0 %v10582, 32
      %v10903 = vpop.permute.xlu0 %10902
      %10904 = vrot.lane.b32.xlu0 %v10583, 32
      %v10905 = vpop.permute.xlu0 %10904
      %10906 = vrot.lane.b32.xlu0 %v10584, 32
      %v10907 = vpop.permute.xlu0 %10906
      %10908 = vrot.lane.b32.xlu0 %v10585, 32
      %v10909 = vpop.permute.xlu0 %10908
      %10910 = vrot.lane.b32.xlu0 %v10586, 32
      %v10911 = vpop.permute.xlu0 %10910
      %v10948 = vmul.f32 %v10025, %v10841
      %v10949 = vmul.f32 %v10040, %v10843
      %v10950 = vmul.f32 %v10055, %v10845
      %v10951 = vmul.f32 %v10070, %v10847
      %v10952 = vmul.f32 %v10085, %v10849
      %v10953 = vmul.f32 %v10100, %v10851
      %v10954 = vmul.f32 %v10115, %v10853
      %v10955 = vmul.f32 %v10130, %v10855
      %v10956 = vmul.f32 %v10145, %v10857
      %v10957 = vmul.f32 %v10160, %v10859
      %v10958 = vmul.f32 %v10175, %v10861
      %v10959 = vmul.f32 %v10190, %v10863
      %v10960 = vmul.f32 %v10205, %v10865
      %v10961 = vmul.f32 %v10220, %v10867
      %v10962 = vmul.f32 %v10235, %v10869
      %v10963 = vmul.f32 %v10250, %v10871
      %v10964 = vmul.f32 %v10265, %v10873
      %v10965 = vmul.f32 %v10280, %v10875
      %v10966 = vmul.f32 %v10295, %v10877
      %v10967 = vmul.f32 %v10310, %v10879
      %v10968 = vmul.f32 %v10325, %v10881
      %v10969 = vmul.f32 %v10340, %v10883
      %v10970 = vmul.f32 %v10355, %v10885
      %v10971 = vmul.f32 %v10370, %v10887
      %v10972 = vmul.f32 %v10385, %v10889
      %v10973 = vmul.f32 %v10400, %v10891
      %v10974 = vmul.f32 %v10415, %v10893
      %v10975 = vmul.f32 %v10430, %v10895
      %v10976 = vmul.f32 %v10445, %v10897
      %v10977 = vmul.f32 %v10460, %v10899
      %v10978 = vmul.f32 %v10475, %v10901
      %v10979 = vmul.f32 %v10490, %v10903
      %v10980 = vmul.f32 %v10505, %v10905
      %v10981 = vmul.f32 %v10520, %v10907
      %v10982 = vmul.f32 %v10535, %v10909
      %v10983 = vmul.f32 %v10550, %v10911
      %11020 = vrot.lane.b32.xlu0 %v10948, 32
      %v11021 = vpop.permute.xlu0 %11020
      %11022 = vrot.lane.b32.xlu0 %v10949, 32
      %v11023 = vpop.permute.xlu0 %11022
      %11024 = vrot.lane.b32.xlu0 %v10950, 32
      %v11025 = vpop.permute.xlu0 %11024
      %11026 = vrot.lane.b32.xlu0 %v10951, 32
      %v11027 = vpop.permute.xlu0 %11026
      %11028 = vrot.lane.b32.xlu0 %v10952, 32
      %v11029 = vpop.permute.xlu0 %11028
      %11030 = vrot.lane.b32.xlu0 %v10953, 32
      %v11031 = vpop.permute.xlu0 %11030
      %11032 = vrot.lane.b32.xlu0 %v10954, 32
      %v11033 = vpop.permute.xlu0 %11032
      %11034 = vrot.lane.b32.xlu0 %v10955, 32
      %v11035 = vpop.permute.xlu0 %11034
      %11036 = vrot.lane.b32.xlu0 %v10956, 32
      %v11037 = vpop.permute.xlu0 %11036
      %11038 = vrot.lane.b32.xlu0 %v10957, 32
      %v11039 = vpop.permute.xlu0 %11038
      %11040 = vrot.lane.b32.xlu0 %v10958, 32
      %v11041 = vpop.permute.xlu0 %11040
      %11042 = vrot.lane.b32.xlu0 %v10959, 32
      %v11043 = vpop.permute.xlu0 %11042
      %11044 = vrot.lane.b32.xlu0 %v10960, 32
      %v11045 = vpop.permute.xlu0 %11044
      %11046 = vrot.lane.b32.xlu0 %v10961, 32
      %v11047 = vpop.permute.xlu0 %11046
      %11048 = vrot.lane.b32.xlu0 %v10962, 32
      %v11049 = vpop.permute.xlu0 %11048
      %11050 = vrot.lane.b32.xlu0 %v10963, 32
      %v11051 = vpop.permute.xlu0 %11050
      %11052 = vrot.lane.b32.xlu0 %v10964, 32
      %v11053 = vpop.permute.xlu0 %11052
      %11054 = vrot.lane.b32.xlu0 %v10965, 32
      %v11055 = vpop.permute.xlu0 %11054
      %11056 = vrot.lane.b32.xlu0 %v10966, 32
      %v11057 = vpop.permute.xlu0 %11056
      %11058 = vrot.lane.b32.xlu0 %v10967, 32
      %v11059 = vpop.permute.xlu0 %11058
      %11060 = vrot.lane.b32.xlu0 %v10968, 32
      %v11061 = vpop.permute.xlu0 %11060
      %11062 = vrot.lane.b32.xlu0 %v10969, 32
      %v11063 = vpop.permute.xlu0 %11062
      %11064 = vrot.lane.b32.xlu0 %v10970, 32
      %v11065 = vpop.permute.xlu0 %11064
      %11066 = vrot.lane.b32.xlu0 %v10971, 32
      %v11067 = vpop.permute.xlu0 %11066
      %11068 = vrot.lane.b32.xlu0 %v10972, 32
      %v11069 = vpop.permute.xlu0 %11068
      %11070 = vrot.lane.b32.xlu0 %v10973, 32
      %v11071 = vpop.permute.xlu0 %11070
      %11072 = vrot.lane.b32.xlu0 %v10974, 32
      %v11073 = vpop.permute.xlu0 %11072
      %11074 = vrot.lane.b32.xlu0 %v10975, 32
      %v11075 = vpop.permute.xlu0 %11074
      %11076 = vrot.lane.b32.xlu0 %v10976, 32
      %v11077 = vpop.permute.xlu0 %11076
      %11078 = vrot.lane.b32.xlu0 %v10977, 32
      %v11079 = vpop.permute.xlu0 %11078
      %11080 = vrot.lane.b32.xlu0 %v10978, 32
      %v11081 = vpop.permute.xlu0 %11080
      %11082 = vrot.lane.b32.xlu0 %v10979, 32
      %v11083 = vpop.permute.xlu0 %11082
      %11084 = vrot.lane.b32.xlu0 %v10980, 32
      %v11085 = vpop.permute.xlu0 %11084
      %11086 = vrot.lane.b32.xlu0 %v10981, 32
      %v11087 = vpop.permute.xlu0 %11086
      %11088 = vrot.lane.b32.xlu0 %v10982, 32
      %v11089 = vpop.permute.xlu0 %11088
      %11090 = vrot.lane.b32.xlu0 %v10983, 32
      %v11091 = vpop.permute.xlu0 %11090
      %v11128 = vadd.f32 %v10768, %v11021
      %v11129 = vadd.f32 %v10769, %v11023
      %v11130 = vadd.f32 %v10770, %v11025
      %v11131 = vadd.f32 %v10771, %v11027
      %v11132 = vadd.f32 %v10772, %v11029
      %v11133 = vadd.f32 %v10773, %v11031
      %v11134 = vadd.f32 %v10774, %v11033
      %v11135 = vadd.f32 %v10775, %v11035
      %v11136 = vadd.f32 %v10776, %v11037
      %v11137 = vadd.f32 %v10777, %v11039
      %v11138 = vadd.f32 %v10778, %v11041
      %v11139 = vadd.f32 %v10779, %v11043
      %v11140 = vadd.f32 %v10780, %v11045
      %v11141 = vadd.f32 %v10781, %v11047
      %v11142 = vadd.f32 %v10782, %v11049
      %v11143 = vadd.f32 %v10783, %v11051
      %v11144 = vadd.f32 %v10784, %v11053
      %v11145 = vadd.f32 %v10785, %v11055
      %v11146 = vadd.f32 %v10786, %v11057
      %v11147 = vadd.f32 %v10787, %v11059
      %v11148 = vadd.f32 %v10788, %v11061
      %v11149 = vadd.f32 %v10789, %v11063
      %v11150 = vadd.f32 %v10790, %v11065
      %v11151 = vadd.f32 %v10791, %v11067
      %v11152 = vadd.f32 %v10792, %v11069
      %v11153 = vadd.f32 %v10793, %v11071
      %v11154 = vadd.f32 %v10794, %v11073
      %v11155 = vadd.f32 %v10795, %v11075
      %v11156 = vadd.f32 %v10796, %v11077
      %v11157 = vadd.f32 %v10797, %v11079
      %v11158 = vadd.f32 %v10798, %v11081
      %v11159 = vadd.f32 %v10799, %v11083
      %v11160 = vadd.f32 %v10800, %v11085
      %v11161 = vadd.f32 %v10801, %v11087
      %v11162 = vadd.f32 %v10802, %v11089
      %v11163 = vadd.f32 %v10803, %v11091
      %v11164 = vtanh.pop %v11128
      %v11165 = vtanh.pop %v11129
      %v11166 = vtanh.pop %v11130
      %v11167 = vtanh.pop %v11131
      %v11168 = vtanh.pop %v11132
      %v11169 = vtanh.pop %v11133
      %v11170 = vtanh.pop %v11134
      %v11171 = vtanh.pop %v11135
      %v11172 = vtanh.pop %v11136
      %v11173 = vtanh.pop %v11137
      %v11174 = vtanh.pop %v11138
      %v11175 = vtanh.pop %v11139
      %v11176 = vtanh.pop %v11140
      %v11177 = vtanh.pop %v11141
      %v11178 = vtanh.pop %v11142
      %v11179 = vtanh.pop %v11143
      %v11180 = vtanh.pop %v11144
      %v11181 = vtanh.pop %v11145
      %v11182 = vtanh.pop %v11146
      %v11183 = vtanh.pop %v11147
      %v11184 = vtanh.pop %v11148
      %v11185 = vtanh.pop %v11149
      %v11186 = vtanh.pop %v11150
      %v11187 = vtanh.pop %v11151
      %v11188 = vtanh.pop %v11152
      %v11189 = vtanh.pop %v11153
      %v11190 = vtanh.pop %v11154
      %v11191 = vtanh.pop %v11155
      %v11192 = vtanh.pop %v11156
      %v11193 = vtanh.pop %v11157
      %v11194 = vtanh.pop %v11158
      %v11195 = vtanh.pop %v11159
      %v11196 = vtanh.pop %v11160
      %v11197 = vtanh.pop %v11161
      %v11198 = vtanh.pop %v11162
      %v11199 = vtanh.pop %v11163
      %11236 = vrot.lane.b32.xlu0 %v11164, 32
      %v11237 = vpop.permute.xlu0 %11236
      %11238 = vrot.lane.b32.xlu0 %v11165, 32
      %v11239 = vpop.permute.xlu0 %11238
      %11240 = vrot.lane.b32.xlu0 %v11166, 32
      %v11241 = vpop.permute.xlu0 %11240
      %11242 = vrot.lane.b32.xlu0 %v11167, 32
      %v11243 = vpop.permute.xlu0 %11242
      %11244 = vrot.lane.b32.xlu0 %v11168, 32
      %v11245 = vpop.permute.xlu0 %11244
      %11246 = vrot.lane.b32.xlu0 %v11169, 32
      %v11247 = vpop.permute.xlu0 %11246
      %11248 = vrot.lane.b32.xlu0 %v11170, 32
      %v11249 = vpop.permute.xlu0 %11248
      %11250 = vrot.lane.b32.xlu0 %v11171, 32
      %v11251 = vpop.permute.xlu0 %11250
      %11252 = vrot.lane.b32.xlu0 %v11172, 32
      %v11253 = vpop.permute.xlu0 %11252
      %11254 = vrot.lane.b32.xlu0 %v11173, 32
      %v11255 = vpop.permute.xlu0 %11254
      %11256 = vrot.lane.b32.xlu0 %v11174, 32
      %v11257 = vpop.permute.xlu0 %11256
      %11258 = vrot.lane.b32.xlu0 %v11175, 32
      %v11259 = vpop.permute.xlu0 %11258
      %11260 = vrot.lane.b32.xlu0 %v11176, 32
      %v11261 = vpop.permute.xlu0 %11260
      %11262 = vrot.lane.b32.xlu0 %v11177, 32
      %v11263 = vpop.permute.xlu0 %11262
      %11264 = vrot.lane.b32.xlu0 %v11178, 32
      %v11265 = vpop.permute.xlu0 %11264
      %11266 = vrot.lane.b32.xlu0 %v11179, 32
      %v11267 = vpop.permute.xlu0 %11266
      %11268 = vrot.lane.b32.xlu0 %v11180, 32
      %v11269 = vpop.permute.xlu0 %11268
      %11270 = vrot.lane.b32.xlu0 %v11181, 32
      %v11271 = vpop.permute.xlu0 %11270
      %11272 = vrot.lane.b32.xlu0 %v11182, 32
      %v11273 = vpop.permute.xlu0 %11272
      %11274 = vrot.lane.b32.xlu0 %v11183, 32
      %v11275 = vpop.permute.xlu0 %11274
      %11276 = vrot.lane.b32.xlu0 %v11184, 32
      %v11277 = vpop.permute.xlu0 %11276
      %11278 = vrot.lane.b32.xlu0 %v11185, 32
      %v11279 = vpop.permute.xlu0 %11278
      %11280 = vrot.lane.b32.xlu0 %v11186, 32
      %v11281 = vpop.permute.xlu0 %11280
      %11282 = vrot.lane.b32.xlu0 %v11187, 32
      %v11283 = vpop.permute.xlu0 %11282
      %11284 = vrot.lane.b32.xlu0 %v11188, 32
      %v11285 = vpop.permute.xlu0 %11284
      %11286 = vrot.lane.b32.xlu0 %v11189, 32
      %v11287 = vpop.permute.xlu0 %11286
      %11288 = vrot.lane.b32.xlu0 %v11190, 32
      %v11289 = vpop.permute.xlu0 %11288
      %11290 = vrot.lane.b32.xlu0 %v11191, 32
      %v11291 = vpop.permute.xlu0 %11290
      %11292 = vrot.lane.b32.xlu0 %v11192, 32
      %v11293 = vpop.permute.xlu0 %11292
      %11294 = vrot.lane.b32.xlu0 %v11193, 32
      %v11295 = vpop.permute.xlu0 %11294
      %11296 = vrot.lane.b32.xlu0 %v11194, 32
      %v11297 = vpop.permute.xlu0 %11296
      %11298 = vrot.lane.b32.xlu0 %v11195, 32
      %v11299 = vpop.permute.xlu0 %11298
      %11300 = vrot.lane.b32.xlu0 %v11196, 32
      %v11301 = vpop.permute.xlu0 %11300
      %11302 = vrot.lane.b32.xlu0 %v11197, 32
      %v11303 = vpop.permute.xlu0 %11302
      %11304 = vrot.lane.b32.xlu0 %v11198, 32
      %v11305 = vpop.permute.xlu0 %11304
      %11306 = vrot.lane.b32.xlu0 %v11199, 32
      %v11307 = vpop.permute.xlu0 %11306
      %v11344 = vmul.f32 %v10025, %v11237
      %v11345 = vmul.f32 %v10040, %v11239
      %v11346 = vmul.f32 %v10055, %v11241
      %v11347 = vmul.f32 %v10070, %v11243
      %v11348 = vmul.f32 %v10085, %v11245
      %v11349 = vmul.f32 %v10100, %v11247
      %v11350 = vmul.f32 %v10115, %v11249
      %v11351 = vmul.f32 %v10130, %v11251
      %v11352 = vmul.f32 %v10145, %v11253
      %v11353 = vmul.f32 %v10160, %v11255
      %v11354 = vmul.f32 %v10175, %v11257
      %v11355 = vmul.f32 %v10190, %v11259
      %v11356 = vmul.f32 %v10205, %v11261
      %v11357 = vmul.f32 %v10220, %v11263
      %v11358 = vmul.f32 %v10235, %v11265
      %v11359 = vmul.f32 %v10250, %v11267
      %v11360 = vmul.f32 %v10265, %v11269
      %v11361 = vmul.f32 %v10280, %v11271
      %v11362 = vmul.f32 %v10295, %v11273
      %v11363 = vmul.f32 %v10310, %v11275
      %v11364 = vmul.f32 %v10325, %v11277
      %v11365 = vmul.f32 %v10340, %v11279
      %v11366 = vmul.f32 %v10355, %v11281
      %v11367 = vmul.f32 %v10370, %v11283
      %v11368 = vmul.f32 %v10385, %v11285
      %v11369 = vmul.f32 %v10400, %v11287
      %v11370 = vmul.f32 %v10415, %v11289
      %v11371 = vmul.f32 %v10430, %v11291
      %v11372 = vmul.f32 %v10445, %v11293
      %v11373 = vmul.f32 %v10460, %v11295
      %v11374 = vmul.f32 %v10475, %v11297
      %v11375 = vmul.f32 %v10490, %v11299
      %v11376 = vmul.f32 %v10505, %v11301
      %v11377 = vmul.f32 %v10520, %v11303
      %v11378 = vmul.f32 %v10535, %v11305
      %v11379 = vmul.f32 %v10550, %v11307
      %11416 = vrot.lane.b32.xlu0 %v11128, 96
      %v11417 = vpop.permute.xlu0 %11416
      %11418 = vrot.lane.b32.xlu0 %v11129, 96
      %v11419 = vpop.permute.xlu0 %11418
      %11420 = vrot.lane.b32.xlu0 %v11130, 96
      %v11421 = vpop.permute.xlu0 %11420
      %11422 = vrot.lane.b32.xlu0 %v11131, 96
      %v11423 = vpop.permute.xlu0 %11422
      %11424 = vrot.lane.b32.xlu0 %v11132, 96
      %v11425 = vpop.permute.xlu0 %11424
      %11426 = vrot.lane.b32.xlu0 %v11133, 96
      %v11427 = vpop.permute.xlu0 %11426
      %11428 = vrot.lane.b32.xlu0 %v11134, 96
      %v11429 = vpop.permute.xlu0 %11428
      %11430 = vrot.lane.b32.xlu0 %v11135, 96
      %v11431 = vpop.permute.xlu0 %11430
      %11432 = vrot.lane.b32.xlu0 %v11136, 96
      %v11433 = vpop.permute.xlu0 %11432
      %11434 = vrot.lane.b32.xlu0 %v11137, 96
      %v11435 = vpop.permute.xlu0 %11434
      %11436 = vrot.lane.b32.xlu0 %v11138, 96
      %v11437 = vpop.permute.xlu0 %11436
      %11438 = vrot.lane.b32.xlu0 %v11139, 96
      %v11439 = vpop.permute.xlu0 %11438
      %11440 = vrot.lane.b32.xlu0 %v11140, 96
      %v11441 = vpop.permute.xlu0 %11440
      %11442 = vrot.lane.b32.xlu0 %v11141, 96
      %v11443 = vpop.permute.xlu0 %11442
      %11444 = vrot.lane.b32.xlu0 %v11142, 96
      %v11445 = vpop.permute.xlu0 %11444
      %11446 = vrot.lane.b32.xlu0 %v11143, 96
      %v11447 = vpop.permute.xlu0 %11446
      %11448 = vrot.lane.b32.xlu0 %v11144, 96
      %v11449 = vpop.permute.xlu0 %11448
      %11450 = vrot.lane.b32.xlu0 %v11145, 96
      %v11451 = vpop.permute.xlu0 %11450
      %11452 = vrot.lane.b32.xlu0 %v11146, 96
      %v11453 = vpop.permute.xlu0 %11452
      %11454 = vrot.lane.b32.xlu0 %v11147, 96
      %v11455 = vpop.permute.xlu0 %11454
      %11456 = vrot.lane.b32.xlu0 %v11148, 96
      %v11457 = vpop.permute.xlu0 %11456
      %11458 = vrot.lane.b32.xlu0 %v11149, 96
      %v11459 = vpop.permute.xlu0 %11458
      %11460 = vrot.lane.b32.xlu0 %v11150, 96
      %v11461 = vpop.permute.xlu0 %11460
      %11462 = vrot.lane.b32.xlu0 %v11151, 96
      %v11463 = vpop.permute.xlu0 %11462
      %11464 = vrot.lane.b32.xlu0 %v11152, 96
      %v11465 = vpop.permute.xlu0 %11464
      %11466 = vrot.lane.b32.xlu0 %v11153, 96
      %v11467 = vpop.permute.xlu0 %11466
      %11468 = vrot.lane.b32.xlu0 %v11154, 96
      %v11469 = vpop.permute.xlu0 %11468
      %11470 = vrot.lane.b32.xlu0 %v11155, 96
      %v11471 = vpop.permute.xlu0 %11470
      %11472 = vrot.lane.b32.xlu0 %v11156, 96
      %v11473 = vpop.permute.xlu0 %11472
      %11474 = vrot.lane.b32.xlu0 %v11157, 96
      %v11475 = vpop.permute.xlu0 %11474
      %11476 = vrot.lane.b32.xlu0 %v11158, 96
      %v11477 = vpop.permute.xlu0 %11476
      %11478 = vrot.lane.b32.xlu0 %v11159, 96
      %v11479 = vpop.permute.xlu0 %11478
      %11480 = vrot.lane.b32.xlu0 %v11160, 96
      %v11481 = vpop.permute.xlu0 %11480
      %11482 = vrot.lane.b32.xlu0 %v11161, 96
      %v11483 = vpop.permute.xlu0 %11482
      %11484 = vrot.lane.b32.xlu0 %v11162, 96
      %v11485 = vpop.permute.xlu0 %11484
      %11486 = vrot.lane.b32.xlu0 %v11163, 96
      %v11487 = vpop.permute.xlu0 %11486
      %11524 = vst.msk [vmem:[%s10587] sm:$0xff] %vm601, %v11417
      %11525 = vst.msk [vmem:[%s10587 + $0x8] sm:$0xff] %vm601, %v11419
      %11526 = vst.msk [vmem:[%s10587 + $0x10] sm:$0xff] %vm601, %v11421
      %11527 = vst.msk [vmem:[%s10587 + $0x18] sm:$0xff] %vm601, %v11423
      %11528 = vst.msk [vmem:[%s10587 + $0x20] sm:$0xff] %vm601, %v11425
      %11529 = vst.msk [vmem:[%s10587 + $0x28] sm:$0xff] %vm601, %v11427
      %11530 = vst.msk [vmem:[%s10587 + $0x30] sm:$0xff] %vm601, %v11429
      %11531 = vst.msk [vmem:[%s10587 + $0x38] sm:$0xff] %vm601, %v11431
      %11532 = vst.msk [vmem:[%s10587 + $0x40] sm:$0xff] %vm601, %v11433
      %11533 = vst.msk [vmem:[%s10587 + $0x48] sm:$0xff] %vm601, %v11435
      %11534 = vst.msk [vmem:[%s10587 + $0x50] sm:$0xff] %vm601, %v11437
      %11535 = vst.msk [vmem:[%s10587 + $0x58] sm:$0xff] %vm601, %v11439
      %11536 = vst.msk [vmem:[%s10587 + $0x60] sm:$0xff] %vm601, %v11441
      %11537 = vst.msk [vmem:[%s10587 + $0x68] sm:$0xff] %vm601, %v11443
      %11538 = vst.msk [vmem:[%s10587 + $0x70] sm:$0xff] %vm601, %v11445
      %11539 = vst.msk [vmem:[%s10587 + $0x78] sm:$0xff] %vm601, %v11447
      %11540 = vst.msk [vmem:[%s10587 + $0x80] sm:$0xff] %vm601, %v11449
      %11541 = vst.msk [vmem:[%s10587 + $0x88] sm:$0xff] %vm601, %v11451
      %11542 = vst.msk [vmem:[%s10587 + $0x90] sm:$0xff] %vm601, %v11453
      %11543 = vst.msk [vmem:[%s10587 + $0x98] sm:$0xff] %vm601, %v11455
      %11544 = vst.msk [vmem:[%s10587 + $0xa0] sm:$0xff] %vm601, %v11457
      %11545 = vst.msk [vmem:[%s10587 + $0xa8] sm:$0xff] %vm601, %v11459
      %11546 = vst.msk [vmem:[%s10587 + $0xb0] sm:$0xff] %vm601, %v11461
      %11547 = vst.msk [vmem:[%s10587 + $0xb8] sm:$0xff] %vm601, %v11463
      %11548 = vst.msk [vmem:[%s10587 + $0xc0] sm:$0xff] %vm601, %v11465
      %11549 = vst.msk [vmem:[%s10587 + $0xc8] sm:$0xff] %vm601, %v11467
      %11550 = vst.msk [vmem:[%s10587 + $0xd0] sm:$0xff] %vm601, %v11469
      %11551 = vst.msk [vmem:[%s10587 + $0xd8] sm:$0xff] %vm601, %v11471
      %11552 = vst.msk [vmem:[%s10587 + $0xe0] sm:$0xff] %vm601, %v11473
      %11553 = vst.msk [vmem:[%s10587 + $0xe8] sm:$0xff] %vm601, %v11475
      %11554 = vst.msk [vmem:[%s10587 + $0xf0] sm:$0xff] %vm601, %v11477
      %11555 = vst.msk [vmem:[%s10587 + $0xf8] sm:$0xff] %vm601, %v11479
      %11556 = vst.msk [vmem:[%s10587 + $0x100] sm:$0xff] %vm601, %v11481
      %11557 = vst.msk [vmem:[%s10587 + $0x108] sm:$0xff] %vm601, %v11483
      %11558 = vst.msk [vmem:[%s10587 + $0x110] sm:$0xff] %vm601, %v11485
      %11559 = vst.msk [vmem:[%s10587 + $0x118] sm:$0xff] %vm601, %v11487
      %v11560 = vmul.f32 %v11344, %v4825
      %v11561 = vmul.f32 %v11345, %v4830
      %v11562 = vmul.f32 %v11346, %v4835
      %v11563 = vmul.f32 %v11347, %v4840
      %v11564 = vmul.f32 %v11348, %v4845
      %v11565 = vmul.f32 %v11349, %v4850
      %v11566 = vmul.f32 %v11350, %v4855
      %v11567 = vmul.f32 %v11351, %v4860
      %v11568 = vmul.f32 %v11352, %v4865
      %v11569 = vmul.f32 %v11353, %v4870
      %v11570 = vmul.f32 %v11354, %v4875
      %v11571 = vmul.f32 %v11355, %v4880
      %v11572 = vmul.f32 %v11356, %v4885
      %v11573 = vmul.f32 %v11357, %v4890
      %v11574 = vmul.f32 %v11358, %v4895
      %v11575 = vmul.f32 %v11359, %v4900
      %v11576 = vmul.f32 %v11360, %v4905
      %v11577 = vmul.f32 %v11361, %v4910
      %v11578 = vmul.f32 %v11362, %v4915
      %v11579 = vmul.f32 %v11363, %v4920
      %v11580 = vmul.f32 %v11364, %v4925
      %v11581 = vmul.f32 %v11365, %v4930
      %v11582 = vmul.f32 %v11366, %v4935
      %v11583 = vmul.f32 %v11367, %v4940
      %v11584 = vmul.f32 %v11368, %v4945
      %v11585 = vmul.f32 %v11369, %v4950
      %v11586 = vmul.f32 %v11370, %v4955
      %v11587 = vmul.f32 %v11371, %v4960
      %v11588 = vmul.f32 %v11372, %v4965
      %v11589 = vmul.f32 %v11373, %v4970
      %v11590 = vmul.f32 %v11374, %v4975
      %v11591 = vmul.f32 %v11375, %v4980
      %v11592 = vmul.f32 %v11376, %v4985
      %v11593 = vmul.f32 %v11377, %v4990
      %v11594 = vmul.f32 %v11378, %v4995
      %v11595 = vmul.f32 %v11379, %v5000
      %11632 = vrot.lane.b32.xlu0 %v11560, 64
      %v11633 = vpop.permute.xlu0 %11632
      %11634 = vrot.lane.b32.xlu0 %v11561, 64
      %v11635 = vpop.permute.xlu0 %11634
      %11636 = vrot.lane.b32.xlu0 %v11562, 64
      %v11637 = vpop.permute.xlu0 %11636
      %11638 = vrot.lane.b32.xlu0 %v11563, 64
      %v11639 = vpop.permute.xlu0 %11638
      %11640 = vrot.lane.b32.xlu0 %v11564, 64
      %v11641 = vpop.permute.xlu0 %11640
      %11642 = vrot.lane.b32.xlu0 %v11565, 64
      %v11643 = vpop.permute.xlu0 %11642
      %11644 = vrot.lane.b32.xlu0 %v11566, 64
      %v11645 = vpop.permute.xlu0 %11644
      %11646 = vrot.lane.b32.xlu0 %v11567, 64
      %v11647 = vpop.permute.xlu0 %11646
      %11648 = vrot.lane.b32.xlu0 %v11568, 64
      %v11649 = vpop.permute.xlu0 %11648
      %11650 = vrot.lane.b32.xlu0 %v11569, 64
      %v11651 = vpop.permute.xlu0 %11650
      %11652 = vrot.lane.b32.xlu0 %v11570, 64
      %v11653 = vpop.permute.xlu0 %11652
      %11654 = vrot.lane.b32.xlu0 %v11571, 64
      %v11655 = vpop.permute.xlu0 %11654
      %11656 = vrot.lane.b32.xlu0 %v11572, 64
      %v11657 = vpop.permute.xlu0 %11656
      %11658 = vrot.lane.b32.xlu0 %v11573, 64
      %v11659 = vpop.permute.xlu0 %11658
      %11660 = vrot.lane.b32.xlu0 %v11574, 64
      %v11661 = vpop.permute.xlu0 %11660
      %11662 = vrot.lane.b32.xlu0 %v11575, 64
      %v11663 = vpop.permute.xlu0 %11662
      %11664 = vrot.lane.b32.xlu0 %v11576, 64
      %v11665 = vpop.permute.xlu0 %11664
      %11666 = vrot.lane.b32.xlu0 %v11577, 64
      %v11667 = vpop.permute.xlu0 %11666
      %11668 = vrot.lane.b32.xlu0 %v11578, 64
      %v11669 = vpop.permute.xlu0 %11668
      %11670 = vrot.lane.b32.xlu0 %v11579, 64
      %v11671 = vpop.permute.xlu0 %11670
      %11672 = vrot.lane.b32.xlu0 %v11580, 64
      %v11673 = vpop.permute.xlu0 %11672
      %11674 = vrot.lane.b32.xlu0 %v11581, 64
      %v11675 = vpop.permute.xlu0 %11674
      %11676 = vrot.lane.b32.xlu0 %v11582, 64
      %v11677 = vpop.permute.xlu0 %11676
      %11678 = vrot.lane.b32.xlu0 %v11583, 64
      %v11679 = vpop.permute.xlu0 %11678
      %11680 = vrot.lane.b32.xlu0 %v11584, 64
      %v11681 = vpop.permute.xlu0 %11680
      %11682 = vrot.lane.b32.xlu0 %v11585, 64
      %v11683 = vpop.permute.xlu0 %11682
      %11684 = vrot.lane.b32.xlu0 %v11586, 64
      %v11685 = vpop.permute.xlu0 %11684
      %11686 = vrot.lane.b32.xlu0 %v11587, 64
      %v11687 = vpop.permute.xlu0 %11686
      %11688 = vrot.lane.b32.xlu0 %v11588, 64
      %v11689 = vpop.permute.xlu0 %11688
      %11690 = vrot.lane.b32.xlu0 %v11589, 64
      %v11691 = vpop.permute.xlu0 %11690
      %11692 = vrot.lane.b32.xlu0 %v11590, 64
      %v11693 = vpop.permute.xlu0 %11692
      %11694 = vrot.lane.b32.xlu0 %v11591, 64
      %v11695 = vpop.permute.xlu0 %11694
      %11696 = vrot.lane.b32.xlu0 %v11592, 64
      %v11697 = vpop.permute.xlu0 %11696
      %11698 = vrot.lane.b32.xlu0 %v11593, 64
      %v11699 = vpop.permute.xlu0 %11698
      %11700 = vrot.lane.b32.xlu0 %v11594, 64
      %v11701 = vpop.permute.xlu0 %11700
      %11702 = vrot.lane.b32.xlu0 %v11595, 64
      %v11703 = vpop.permute.xlu0 %11702
      %11740 = vst.msk [vmem:[%s7485 + $0x13] sm:$0xff] %vm601, %v11633
      %11741 = vst.msk [vmem:[%s7485 + $0x1b] sm:$0xff] %vm601, %v11635
      %11742 = vst.msk [vmem:[%s7485 + $0x23] sm:$0xff] %vm601, %v11637
      %11743 = vst.msk [vmem:[%s7485 + $0x2b] sm:$0xff] %vm601, %v11639
      %11744 = vst.msk [vmem:[%s7485 + $0x33] sm:$0xff] %vm601, %v11641
      %11745 = vst.msk [vmem:[%s7485 + $0x3b] sm:$0xff] %vm601, %v11643
      %11746 = vst.msk [vmem:[%s7485 + $0x43] sm:$0xff] %vm601, %v11645
      %11747 = vst.msk [vmem:[%s7485 + $0x4b] sm:$0xff] %vm601, %v11647
      %11748 = vst.msk [vmem:[%s7485 + $0x53] sm:$0xff] %vm601, %v11649
      %11749 = vst.msk [vmem:[%s7485 + $0x5b] sm:$0xff] %vm601, %v11651
      %11750 = vst.msk [vmem:[%s7485 + $0x63] sm:$0xff] %vm601, %v11653
      %11751 = vst.msk [vmem:[%s7485 + $0x6b] sm:$0xff] %vm601, %v11655
      %11752 = vst.msk [vmem:[%s7485 + $0x73] sm:$0xff] %vm601, %v11657
      %11753 = vst.msk [vmem:[%s7485 + $0x7b] sm:$0xff] %vm601, %v11659
      %11754 = vst.msk [vmem:[%s7485 + $0x83] sm:$0xff] %vm601, %v11661
      %11755 = vst.msk [vmem:[%s7485 + $0x8b] sm:$0xff] %vm601, %v11663
      %11756 = vst.msk [vmem:[%s7485 + $0x93] sm:$0xff] %vm601, %v11665
      %11757 = vst.msk [vmem:[%s7485 + $0x9b] sm:$0xff] %vm601, %v11667
      %11758 = vst.msk [vmem:[%s7485 + $0xa3] sm:$0xff] %vm601, %v11669
      %11759 = vst.msk [vmem:[%s7485 + $0xab] sm:$0xff] %vm601, %v11671
      %11760 = vst.msk [vmem:[%s7485 + $0xb3] sm:$0xff] %vm601, %v11673
      %11761 = vst.msk [vmem:[%s7485 + $0xbb] sm:$0xff] %vm601, %v11675
      %11762 = vst.msk [vmem:[%s7485 + $0xc3] sm:$0xff] %vm601, %v11677
      %11763 = vst.msk [vmem:[%s7485 + $0xcb] sm:$0xff] %vm601, %v11679
      %11764 = vst.msk [vmem:[%s7485 + $0xd3] sm:$0xff] %vm601, %v11681
      %11765 = vst.msk [vmem:[%s7485 + $0xdb] sm:$0xff] %vm601, %v11683
      %11766 = vst.msk [vmem:[%s7485 + $0xe3] sm:$0xff] %vm601, %v11685
      %11767 = vst.msk [vmem:[%s7485 + $0xeb] sm:$0xff] %vm601, %v11687
      %11768 = vst.msk [vmem:[%s7485 + $0xf3] sm:$0xff] %vm601, %v11689
      %11769 = vst.msk [vmem:[%s7485 + $0xfb] sm:$0xff] %vm601, %v11691
      %11770 = vst.msk [vmem:[%s7485 + $0x103] sm:$0xff] %vm601, %v11693
      %11771 = vst.msk [vmem:[%s7485 + $0x10b] sm:$0xff] %vm601, %v11695
      %11772 = vst.msk [vmem:[%s7485 + $0x113] sm:$0xff] %vm601, %v11697
      %11773 = vst.msk [vmem:[%s7485 + $0x11b] sm:$0xff] %vm601, %v11699
      %11774 = vst.msk [vmem:[%s7485 + $0x123] sm:$0xff] %vm601, %v11701
      %11775 = vst.msk [vmem:[%s7485 + $0x12b] sm:$0xff] %vm601, %v11703
      %p11776 = scmp.eq.s32.totalorder %s22, 7
      // Predicated region
      $region49: #{convlstm_encoder_forward.1} parent=43 // pred_check
        %p11777 = pneg %p11776
      $region50: #{convlstm_encoder_forward.1} parent=43 // pred_check_branch
        %11779 = sbr.rel (%p11777) target = $region52
      $region51: #{convlstm_encoder_forward.1} parent=43 // pred_region
        %11816 = vrot.lane.b32.xlu0 %v11344, 64
        %v11817 = vpop.permute.xlu0 %11816
        %11818 = vrot.lane.b32.xlu0 %v11345, 64
        %v11819 = vpop.permute.xlu0 %11818
        %11820 = vrot.lane.b32.xlu0 %v11346, 64
        %v11821 = vpop.permute.xlu0 %11820
        %11822 = vrot.lane.b32.xlu0 %v11347, 64
        %v11823 = vpop.permute.xlu0 %11822
        %11824 = vrot.lane.b32.xlu0 %v11348, 64
        %v11825 = vpop.permute.xlu0 %11824
        %11826 = vrot.lane.b32.xlu0 %v11349, 64
        %v11827 = vpop.permute.xlu0 %11826
        %11828 = vrot.lane.b32.xlu0 %v11350, 64
        %v11829 = vpop.permute.xlu0 %11828
        %11830 = vrot.lane.b32.xlu0 %v11351, 64
        %v11831 = vpop.permute.xlu0 %11830
        %11832 = vrot.lane.b32.xlu0 %v11352, 64
        %v11833 = vpop.permute.xlu0 %11832
        %11834 = vrot.lane.b32.xlu0 %v11353, 64
        %v11835 = vpop.permute.xlu0 %11834
        %11836 = vrot.lane.b32.xlu0 %v11354, 64
        %v11837 = vpop.permute.xlu0 %11836
        %11838 = vrot.lane.b32.xlu0 %v11355, 64
        %v11839 = vpop.permute.xlu0 %11838
        %11840 = vrot.lane.b32.xlu0 %v11356, 64
        %v11841 = vpop.permute.xlu0 %11840
        %11842 = vrot.lane.b32.xlu0 %v11357, 64
        %v11843 = vpop.permute.xlu0 %11842
        %11844 = vrot.lane.b32.xlu0 %v11358, 64
        %v11845 = vpop.permute.xlu0 %11844
        %11846 = vrot.lane.b32.xlu0 %v11359, 64
        %v11847 = vpop.permute.xlu0 %11846
        %11848 = vrot.lane.b32.xlu0 %v11360, 64
        %v11849 = vpop.permute.xlu0 %11848
        %11850 = vrot.lane.b32.xlu0 %v11361, 64
        %v11851 = vpop.permute.xlu0 %11850
        %11852 = vrot.lane.b32.xlu0 %v11362, 64
        %v11853 = vpop.permute.xlu0 %11852
        %11854 = vrot.lane.b32.xlu0 %v11363, 64
        %v11855 = vpop.permute.xlu0 %11854
        %11856 = vrot.lane.b32.xlu0 %v11364, 64
        %v11857 = vpop.permute.xlu0 %11856
        %11858 = vrot.lane.b32.xlu0 %v11365, 64
        %v11859 = vpop.permute.xlu0 %11858
        %11860 = vrot.lane.b32.xlu0 %v11366, 64
        %v11861 = vpop.permute.xlu0 %11860
        %11862 = vrot.lane.b32.xlu0 %v11367, 64
        %v11863 = vpop.permute.xlu0 %11862
        %11864 = vrot.lane.b32.xlu0 %v11368, 64
        %v11865 = vpop.permute.xlu0 %11864
        %11866 = vrot.lane.b32.xlu0 %v11369, 64
        %v11867 = vpop.permute.xlu0 %11866
        %11868 = vrot.lane.b32.xlu0 %v11370, 64
        %v11869 = vpop.permute.xlu0 %11868
        %11870 = vrot.lane.b32.xlu0 %v11371, 64
        %v11871 = vpop.permute.xlu0 %11870
        %11872 = vrot.lane.b32.xlu0 %v11372, 64
        %v11873 = vpop.permute.xlu0 %11872
        %11874 = vrot.lane.b32.xlu0 %v11373, 64
        %v11875 = vpop.permute.xlu0 %11874
        %11876 = vrot.lane.b32.xlu0 %v11374, 64
        %v11877 = vpop.permute.xlu0 %11876
        %11878 = vrot.lane.b32.xlu0 %v11375, 64
        %v11879 = vpop.permute.xlu0 %11878
        %11880 = vrot.lane.b32.xlu0 %v11376, 64
        %v11881 = vpop.permute.xlu0 %11880
        %11882 = vrot.lane.b32.xlu0 %v11377, 64
        %v11883 = vpop.permute.xlu0 %11882
        %11884 = vrot.lane.b32.xlu0 %v11378, 64
        %v11885 = vpop.permute.xlu0 %11884
        %11886 = vrot.lane.b32.xlu0 %v11379, 64
        %v11887 = vpop.permute.xlu0 %11886
        %11924 = vst.msk [vmem:[%s277] sm:$0xff] %vm601, %v11817
        %11925 = vst.msk [vmem:[%s277 + $0x8] sm:$0xff] %vm601, %v11819
        %11926 = vst.msk [vmem:[%s277 + $0x10] sm:$0xff] %vm601, %v11821
        %11927 = vst.msk [vmem:[%s277 + $0x18] sm:$0xff] %vm601, %v11823
        %11928 = vst.msk [vmem:[%s277 + $0x20] sm:$0xff] %vm601, %v11825
        %11929 = vst.msk [vmem:[%s277 + $0x28] sm:$0xff] %vm601, %v11827
        %11930 = vst.msk [vmem:[%s277 + $0x30] sm:$0xff] %vm601, %v11829
        %11931 = vst.msk [vmem:[%s277 + $0x38] sm:$0xff] %vm601, %v11831
        %11932 = vst.msk [vmem:[%s277 + $0x40] sm:$0xff] %vm601, %v11833
        %11933 = vst.msk [vmem:[%s277 + $0x48] sm:$0xff] %vm601, %v11835
        %11934 = vst.msk [vmem:[%s277 + $0x50] sm:$0xff] %vm601, %v11837
        %11935 = vst.msk [vmem:[%s277 + $0x58] sm:$0xff] %vm601, %v11839
        %11936 = vst.msk [vmem:[%s277 + $0x60] sm:$0xff] %vm601, %v11841
        %11937 = vst.msk [vmem:[%s277 + $0x68] sm:$0xff] %vm601, %v11843
        %11938 = vst.msk [vmem:[%s277 + $0x70] sm:$0xff] %vm601, %v11845
        %11939 = vst.msk [vmem:[%s277 + $0x78] sm:$0xff] %vm601, %v11847
        %11940 = vst.msk [vmem:[%s277 + $0x80] sm:$0xff] %vm601, %v11849
        %11941 = vst.msk [vmem:[%s277 + $0x88] sm:$0xff] %vm601, %v11851
        %11942 = vst.msk [vmem:[%s277 + $0x90] sm:$0xff] %vm601, %v11853
        %11943 = vst.msk [vmem:[%s277 + $0x98] sm:$0xff] %vm601, %v11855
        %11944 = vst.msk [vmem:[%s277 + $0xa0] sm:$0xff] %vm601, %v11857
        %11945 = vst.msk [vmem:[%s277 + $0xa8] sm:$0xff] %vm601, %v11859
        %11946 = vst.msk [vmem:[%s277 + $0xb0] sm:$0xff] %vm601, %v11861
        %11947 = vst.msk [vmem:[%s277 + $0xb8] sm:$0xff] %vm601, %v11863
        %11948 = vst.msk [vmem:[%s277 + $0xc0] sm:$0xff] %vm601, %v11865
        %11949 = vst.msk [vmem:[%s277 + $0xc8] sm:$0xff] %vm601, %v11867
        %11950 = vst.msk [vmem:[%s277 + $0xd0] sm:$0xff] %vm601, %v11869
        %11951 = vst.msk [vmem:[%s277 + $0xd8] sm:$0xff] %vm601, %v11871
        %11952 = vst.msk [vmem:[%s277 + $0xe0] sm:$0xff] %vm601, %v11873
        %11953 = vst.msk [vmem:[%s277 + $0xe8] sm:$0xff] %vm601, %v11875
        %11954 = vst.msk [vmem:[%s277 + $0xf0] sm:$0xff] %vm601, %v11877
        %11955 = vst.msk [vmem:[%s277 + $0xf8] sm:$0xff] %vm601, %v11879
        %11956 = vst.msk [vmem:[%s277 + $0x100] sm:$0xff] %vm601, %v11881
        %11957 = vst.msk [vmem:[%s277 + $0x108] sm:$0xff] %vm601, %v11883
        %11958 = vst.msk [vmem:[%s277 + $0x110] sm:$0xff] %vm601, %v11885
        %11959 = vst.msk [vmem:[%s277 + $0x118] sm:$0xff] %vm601, %v11887
      $region52: #{convlstm_encoder_forward.1} parent=43 // pred_fallthru
        _
      %p11960 = scmp.lt.s32.totalorder %s21, 1
      %s11961 = scalar_select %p11960, %s21, 1
      %s11962 = smul.addr %s11961, 36
      %s11963 = smul.addr %s11962, 8
      %s11964 = scalar_lea.vmem %s6, %s11963
      // Predicated region
      $region53: #{convlstm_encoder_forward.1} parent=43 // pred_check
        %p11965 = pneg %p180
      $region54: #{convlstm_encoder_forward.1} parent=43 // pred_check_branch
        %11967 = sbr.rel (%p11965) target = $region56
      $region55: #{convlstm_encoder_forward.1} parent=43 // pred_region
        _
      $region56: #{convlstm_encoder_forward.1} parent=43 // pred_fallthru
        _
    $region44: #{convlstm_encoder_forward.1} parent=5 // pred_fallthru
      _
    %p11968 = scmp.le.s32.totalorder 2, %s12
    // Predicated region
    $region57: #{convlstm_encoder_forward.1} parent=5 // pred_check
      %p11969 = pneg %p11968
    $region58: #{convlstm_encoder_forward.1} parent=5 // pred_check_branch
      %11971 = sbr.rel (%p11969) target = $region60
    $region59: #{convlstm_encoder_forward.1} parent=5 // pred_region
      %s11972 = ssub.s32 %s12, 2
      // Predicated region
      $region61: #{convlstm_encoder_forward.1} parent=59 // pred_check
        %p11973 = pneg %p186
      $region62: #{convlstm_encoder_forward.1} parent=59 // pred_check_branch
        %11975 = sbr.rel (%p11973) target = $region64
      $region63: #{convlstm_encoder_forward.1} parent=59 // pred_region
        %p11976 = scmp.lt.s32.totalorder %s23, 1
        %s11977 = scalar_select %p11976, %s23, 1
        %s11978 = smul.addr %s11977, 36
        %s11979 = smul.addr %s11978, 8
        %s11980 = scalar_lea.vmem %s6, %s11979
      $region64: #{convlstm_encoder_forward.1} parent=59 // pred_fallthru
        _
    $region60: #{convlstm_encoder_forward.1} parent=5 // pred_fallthru
      _
  $region6: #{convlstm_encoder_forward.1} parent=0 // loop_footer
    %s16 = sadd.s32 1, %s12
  $region7: #{convlstm_encoder_forward.1} parent=0 // loop_footer_branch
    %11 = sbr.rel target = $region3
  $region8: #{convlstm_encoder_forward.1} parent=0 // loop_exit
    _

</llo_original>
